<compile_context>
chip_gen: v6e
topology: v6e:2x2x1
jax: 0.10.0
libtpu: 0.0.40
codegen_flags: <defaults>
</compile_context>

<pallas_src>
import math

import jax
import jax.numpy as jnp
from jax.experimental import pallas as pl
from jax.experimental.pallas import tpu as pltpu

# ---------------- problem sizes (small, TPU-tile friendly) ----------------
N_ENC = 8        # encoder sequence length
N_DEC = 8        # decoder sequence length
E_DIM = 128      # encoder_dim
D_DIM = 128      # decoder_dim == attention_dim (attention_dim=None in the module)
N_BLOCKS = 8
VOCAB = 256      # synthetic stand-in for GPT2 vocab (50257)
LN_EPS = 1e-5

# rows of the packed per-block vector tensor, shape (8, N_BLOCKS*D_DIM)
ROW_LN1_W, ROW_LN1_B, ROW_FF_B, ROW_FF2_B, ROW_LN2_W, ROW_LN2_B, ROW_NARROW_B = range(7)


def _layer_norm(x, w, b):
    # PyTorch LayerNorm: biased variance, eps inside sqrt; math kept in f32.
    mu = jnp.mean(x, axis=-1, keepdims=True)
    var = jnp.mean((x - mu) ** 2, axis=-1, keepdims=True)
    return (x - mu) * jax.lax.rsqrt(var + LN_EPS) * w + b


# ---------------------------------------------------------------------------
# One fused kernel, single grid point, manual weight prefetch.
# arg order: 9 inputs, 1 output, 5 scratch.
# ---------------------------------------------------------------------------
def _fused_kernel(enc_ref, dec_ref, wq_ref, wkv_ref, vec_ref,       # VMEM inputs
                  ffw_hbm, ff2w_hbm, nw_hbm, lmw_hbm,               # HBM (pl.ANY) inputs
                  out_ref,                                          # VMEM output
                  ffw_v, ff2w_v, nw_v, lmw_v, dma_sem):             # scratch
    # --- kick off all later-stage weight prefetches immediately (overlap with Q/KV) ---
    ffw_cp = pltpu.make_async_copy(ffw_hbm, ffw_v, dma_sem.at[0]); ffw_cp.start()
    ff2w_cp = pltpu.make_async_copy(ff2w_hbm, ff2w_v, dma_sem.at[1]); ff2w_cp.start()
    nw_cp = pltpu.make_async_copy(nw_hbm, nw_v, dma_sem.at[2]); nw_cp.start()
    lmw_cp = pltpu.make_async_copy(lmw_hbm, lmw_v, dma_sem.at[3]); lmw_cp.start()

    enc = enc_ref[...]                       # (N_ENC, E)  f32
    dec = dec_ref[...]                       # (N_DEC, D)  f32
    enc_bf = enc.astype(jnp.bfloat16)
    dec_bf = dec.astype(jnp.bfloat16)

    # all-blocks Q / KV projections: two wide bf16 MXU matmuls, f32 accumulate,
    # kept resident in bf16 (q scale 1/sqrt(D) already folded into WQ on host).
    q_all = jnp.dot(dec_bf, wq_ref[...],
                    preferred_element_type=jnp.float32).astype(jnp.bfloat16)   # (8, 8*D)
    kv_all = jnp.dot(enc_bf, wkv_ref[...],
                     preferred_element_type=jnp.float32).astype(jnp.bfloat16)  # (8, 2*8*D)

    # hoist the packed per-block vectors once (8 f32 vregs), slice in-register below
    vec = vec_ref[...]                       # (8, 8*D) f32

    # FF / FF2 / narrow weights are needed inside the block loop; wait after the
    # projections have been issued so their DMA is (partially) hidden.
    ffw_cp.wait(); ff2w_cp.wait(); nw_cp.wait()

    acc = jnp.zeros((N_DEC, D_DIM), jnp.float32)       # narrow-Linear accumulator
    for b in range(N_BLOCKS):                # unrolled; all slices static & lane-aligned
        lo = b * D_DIM
        hi = lo + D_DIM
        q = q_all[:, lo:hi]                                      # bf16
        k = kv_all[:, lo:hi]                                     # bf16
        v = kv_all[:, N_BLOCKS * D_DIM + lo:N_BLOCKS * D_DIM + hi]  # bf16

        # scores: k-transpose folded into the contraction (no XLU transpose)
        s = jax.lax.dot_general(q, k, (((1,), (1,)), ((), ())),
                                preferred_element_type=jnp.float32)
        # nn.Softmax(dim=1) on the 2-D (N_dec, N_enc) score matrix, f32 math
        m = jnp.max(s, axis=1, keepdims=True)
        p = jnp.exp(s - m)
        sm = p * pl.reciprocal(jnp.sum(p, axis=1, keepdims=True), approx=True)
        attention = jnp.dot(sm.astype(jnp.bfloat16), v,
                            preferred_element_type=jnp.float32)

        ln1_w = vec[ROW_LN1_W:ROW_LN1_W + 1, lo:hi]
        ln1_b = vec[ROW_LN1_B:ROW_LN1_B + 1, lo:hi]
        ff_b = vec[ROW_FF_B:ROW_FF_B + 1, lo:hi]
        ff2_b = vec[ROW_FF2_B:ROW_FF2_B + 1, lo:hi]
        ln2_w = vec[ROW_LN2_W:ROW_LN2_W + 1, lo:hi]
        ln2_b = vec[ROW_LN2_B:ROW_LN2_B + 1, lo:hi]

        # residual + LN1
        h1 = _layer_norm(attention + dec, ln1_w, ln1_b)
        # FF -> ReLU -> FF2 (bf16 MXU operands, f32 accumulate + bias)
        ff = jnp.dot(h1.astype(jnp.bfloat16), ffw_v[b],
                     preferred_element_type=jnp.float32) + ff_b
        ff = jnp.maximum(ff, 0.0)
        ff2 = jnp.dot(ff.astype(jnp.bfloat16), ff2w_v[b],
                      preferred_element_type=jnp.float32) + ff2_b
        # residual + LN2 + final decoder skip (wider-model wrapper semantics)
        blk = (_layer_norm(ff2 + h1, ln2_w, ln2_b) + dec).astype(jnp.bfloat16)

        # narrow Linear folded into the loop: acc += blk @ W_narrow[bth 128-row slab]
        acc = acc + jnp.dot(blk, nw_v[lo:hi, :], preferred_element_type=jnp.float32)

    narrow_b = vec[ROW_NARROW_B:ROW_NARROW_B + 1, 0:D_DIM]
    h = acc + narrow_b                                   # (N_DEC, D) f32

    # lm_head weight only needed now
    lmw_cp.wait()
    out_ref[...] = jnp.dot(h.astype(jnp.bfloat16), lmw_v[...],
                           preferred_element_type=jnp.float32).astype(out_ref.dtype)


# ---------------------------------------------------------------------------
# Wrapper: one pallas_call. Small/early tensors auto-DMA'd to VMEM, later-stage
# weights left in HBM (pl.ANY) and prefetched manually inside the kernel.
# ---------------------------------------------------------------------------
@jax.jit
def wider_block_8(encoder_x, decoder_x, wq_all, wkv_all, vec_pack,
                  ff_w, ff2_w, narrow_w, lm_w):
    vmem = pl.BlockSpec(memory_space=pltpu.MemorySpace.VMEM)
    hbm = pl.BlockSpec(memory_space=pl.ANY)
    return pl.pallas_call(
        _fused_kernel,
        out_shape=jax.ShapeDtypeStruct((N_DEC, VOCAB), jnp.float32),
        in_specs=[vmem, vmem, vmem, vmem, vmem, hbm, hbm, hbm, hbm],
        out_specs=vmem,
        scratch_shapes=[
            pltpu.VMEM((N_BLOCKS, D_DIM, D_DIM), jnp.bfloat16),      # FF weights
            pltpu.VMEM((N_BLOCKS, D_DIM, D_DIM), jnp.bfloat16),      # FF2 weights
            pltpu.VMEM((N_BLOCKS * D_DIM, D_DIM), jnp.bfloat16),     # narrow Linear
            pltpu.VMEM((D_DIM, VOCAB), jnp.bfloat16),                # lm_head
            pltpu.SemaphoreType.DMA((4,)),
        ],
    )(encoder_x, decoder_x, wq_all, wkv_all, vec_pack, ff_w, ff2_w, narrow_w, lm_w)


# ---------------------------------------------------------------------------
# Parameter construction (deterministic, synthetic) + packing for the kernel.
# ---------------------------------------------------------------------------
def make_params(key):
    ks = jax.random.split(key, 10)
    nrm = lambda k, shape, scale=0.05: scale * jax.random.normal(k, shape, dtype=jnp.float32)

    # per-block "module" parameters; 1/sqrt(d_dim) attention scale folded into WQ here
    wq = nrm(ks[0], (N_BLOCKS, D_DIM, D_DIM)) * (1.0 / math.sqrt(D_DIM))
    wk = nrm(ks[1], (N_BLOCKS, E_DIM, D_DIM))
    wv = nrm(ks[2], (N_BLOCKS, E_DIM, D_DIM))
    ff_w = nrm(ks[3], (N_BLOCKS, D_DIM, D_DIM))   # stored (in, out) == torch W.T
    ff_b = nrm(ks[4], (N_BLOCKS, D_DIM))
    ff2_w = nrm(ks[5], (N_BLOCKS, D_DIM, D_DIM))
    ff2_b = nrm(ks[6], (N_BLOCKS, D_DIM))
    ln1_w = jnp.ones((N_BLOCKS, D_DIM), jnp.float32)
    ln1_b = jnp.zeros((N_BLOCKS, D_DIM), jnp.float32)
    ln2_w = jnp.ones((N_BLOCKS, D_DIM), jnp.float32)
    ln2_b = jnp.zeros((N_BLOCKS, D_DIM), jnp.float32)
    narrow_w = nrm(ks[7], (N_BLOCKS * D_DIM, D_DIM))
    narrow_b = nrm(ks[8], (D_DIM,))
    lm_w = nrm(ks[9], (D_DIM, VOCAB))             # bias-free, like GPT2 lm_head

    # ---- pack for the fused kernel ----
    # stack per-block output columns: all_w[in, b*D + out] = w[b, in, out]
    stack_out = lambda w: jnp.transpose(w, (1, 0, 2)).reshape(w.shape[1], N_BLOCKS * D_DIM)
    wq_all = stack_out(wq).astype(jnp.bfloat16)                              # (D, 8*D)
    wkv_all = jnp.concatenate([stack_out(wk), stack_out(wv)],
                              axis=1).astype(jnp.bfloat16)                   # (E, 2*8*D)

    pad = jnp.zeros((N_BLOCKS * D_DIM - D_DIM,), jnp.float32)
    vec_pack = jnp.stack([
        ln1_w.reshape(-1), ln1_b.reshape(-1),
        ff_b.reshape(-1), ff2_b.reshape(-1),
        ln2_w.reshape(-1), ln2_b.reshape(-1),
        jnp.concatenate([narrow_b, pad]),
        jnp.zeros((N_BLOCKS * D_DIM,), jnp.float32),
    ], axis=0)                                                               # (8, 8*D) f32

    return (wq_all, wkv_all, vec_pack,
            ff_w.astype(jnp.bfloat16), ff2_w.astype(jnp.bfloat16),
            narrow_w.astype(jnp.bfloat16), lm_w.astype(jnp.bfloat16))


# ---------------------------------------------------------------------------
# Pure-JAX f32 reference (same packed params, exact softmax/divide) for a
# tolerance check before benchmarking (perf-review correctness concern).
# ---------------------------------------------------------------------------
def reference_forward(encoder_x, decoder_x, params):
    wq_all, wkv_all, vec, ff_w, ff2_w, narrow_w, lm_w = params
    f32 = lambda a: a.astype(jnp.float32)
    q_all = decoder_x @ f32(wq_all)
    kv_all = encoder_x @ f32(wkv_all)
    outs = []
    for b in range(N_BLOCKS):
        lo, hi = b * D_DIM, (b + 1) * D_DIM
        q = q_all[:, lo:hi]
        k = kv_all[:, lo:hi]
        v = kv_all[:, N_BLOCKS * D_DIM + lo:N_BLOCKS * D_DIM + hi]
        sm = jax.nn.softmax(q @ k.T, axis=1)
        attention = sm @ v
        h1 = _layer_norm(attention + decoder_x, vec[ROW_LN1_W, lo:hi], vec[ROW_LN1_B, lo:hi])
        ff = jnp.maximum(h1 @ f32(ff_w[b]) + vec[ROW_FF_B, lo:hi], 0.0)
        ff2 = ff @ f32(ff2_w[b]) + vec[ROW_FF2_B, lo:hi]
        h2 = _layer_norm(ff2 + h1, vec[ROW_LN2_W, lo:hi], vec[ROW_LN2_B, lo:hi])
        outs.append(h2 + decoder_x)
    combined = jnp.concatenate(outs, axis=1)
    h = combined @ f32(narrow_w) + vec[ROW_NARROW_B, 0:D_DIM]
    return h @ f32(lm_w)


if __name__ == "__main__":
    key = jax.random.PRNGKey(0)
    k_enc, k_dec, k_par = jax.random.split(key, 3)
    encoder_x = (0.1 * jax.random.normal(k_enc, (N_ENC, E_DIM))).astype(jnp.float32)
    decoder_x = (0.1 * jax.random.normal(k_dec, (N_DEC, D_DIM))).astype(jnp.float32)
    params = make_params(k_par)

    out = wider_block_8(encoder_x, decoder_x, *params)
    jax.block_until_ready(out)

    assert out.shape == (N_DEC, VOCAB)
    assert bool(jnp.all(jnp.isfinite(out)))

    # loose tolerance: kernel uses bf16 MXU operands + approx reciprocal, reference is f32
    ref = reference_forward(encoder_x, decoder_x, params)
    max_err = float(jnp.max(jnp.abs(out - ref)))
    assert max_err < 0.25, f"max |kernel - f32 reference| = {max_err}"

    print("KERNEL_OK")
</pallas_src>

<mosaic_0001>
module attributes {stable_mosaic.version = 11 : i64} {
  func.func @_fused_kernel(%arg0: memref<8x128xf32, #tpu.memory_space<vmem>>, %arg1: memref<8x128xf32, #tpu.memory_space<vmem>>, %arg2: memref<128x1024xbf16, #tpu.memory_space<vmem>>, %arg3: memref<128x2048xbf16, #tpu.memory_space<vmem>>, %arg4: memref<8x1024xf32, #tpu.memory_space<vmem>>, %arg5: memref<8x128x128xbf16, #tpu.memory_space<any>>, %arg6: memref<8x128x128xbf16, #tpu.memory_space<any>>, %arg7: memref<1024x128xbf16, #tpu.memory_space<any>>, %arg8: memref<128x256xbf16, #tpu.memory_space<any>>, %arg9: memref<8x256xf32, #tpu.memory_space<vmem>>, %arg10: memref<8x128x128xbf16, #tpu.memory_space<vmem>>, %arg11: memref<8x128x128xbf16, #tpu.memory_space<vmem>>, %arg12: memref<1024x128xbf16, #tpu.memory_space<vmem>>, %arg13: memref<128x256xbf16, #tpu.memory_space<vmem>>, %arg14: memref<4x!tpu.dma_semaphore, #tpu.memory_space<semaphore_mem>>) attributes {dimension_semantics = [], scalar_prefetch = 0 : i64, scratch_operands = 5 : i64, tpu.core_type = #tpu.core_type<tc>} {
    %c0_i32 = arith.constant 0 : i32
    %0 = tpu.memref_slice %arg14[%c0_i32] : memref<4x!tpu.dma_semaphore, #tpu.memory_space<semaphore_mem>> -> memref<1x!tpu.dma_semaphore, #tpu.memory_space<semaphore_mem>>
    %1 = tpu.memref_squeeze %0 : memref<1x!tpu.dma_semaphore, #tpu.memory_space<semaphore_mem>> -> memref<!tpu.dma_semaphore, #tpu.memory_space<semaphore_mem>>
    tpu.enqueue_dma source(%arg5 : memref<8x128x128xbf16, #tpu.memory_space<any>>) target(%arg10 : memref<8x128x128xbf16, #tpu.memory_space<vmem>>) target_semaphore(%1 : memref<!tpu.dma_semaphore, #tpu.memory_space<semaphore_mem>>)
    %c1_i32 = arith.constant 1 : i32
    %2 = tpu.memref_slice %arg14[%c1_i32] : memref<4x!tpu.dma_semaphore, #tpu.memory_space<semaphore_mem>> -> memref<1x!tpu.dma_semaphore, #tpu.memory_space<semaphore_mem>>
    %3 = tpu.memref_squeeze %2 : memref<1x!tpu.dma_semaphore, #tpu.memory_space<semaphore_mem>> -> memref<!tpu.dma_semaphore, #tpu.memory_space<semaphore_mem>>
    tpu.enqueue_dma source(%arg6 : memref<8x128x128xbf16, #tpu.memory_space<any>>) target(%arg11 : memref<8x128x128xbf16, #tpu.memory_space<vmem>>) target_semaphore(%3 : memref<!tpu.dma_semaphore, #tpu.memory_space<semaphore_mem>>)
    %c2_i32 = arith.constant 2 : i32
    %4 = tpu.memref_slice %arg14[%c2_i32] : memref<4x!tpu.dma_semaphore, #tpu.memory_space<semaphore_mem>> -> memref<1x!tpu.dma_semaphore, #tpu.memory_space<semaphore_mem>>
    %5 = tpu.memref_squeeze %4 : memref<1x!tpu.dma_semaphore, #tpu.memory_space<semaphore_mem>> -> memref<!tpu.dma_semaphore, #tpu.memory_space<semaphore_mem>>
    tpu.enqueue_dma source(%arg7 : memref<1024x128xbf16, #tpu.memory_space<any>>) target(%arg12 : memref<1024x128xbf16, #tpu.memory_space<vmem>>) target_semaphore(%5 : memref<!tpu.dma_semaphore, #tpu.memory_space<semaphore_mem>>)
    %c3_i32 = arith.constant 3 : i32
    %6 = tpu.memref_slice %arg14[%c3_i32] : memref<4x!tpu.dma_semaphore, #tpu.memory_space<semaphore_mem>> -> memref<1x!tpu.dma_semaphore, #tpu.memory_space<semaphore_mem>>
    %7 = tpu.memref_squeeze %6 : memref<1x!tpu.dma_semaphore, #tpu.memory_space<semaphore_mem>> -> memref<!tpu.dma_semaphore, #tpu.memory_space<semaphore_mem>>
    tpu.enqueue_dma source(%arg8 : memref<128x256xbf16, #tpu.memory_space<any>>) target(%arg13 : memref<128x256xbf16, #tpu.memory_space<vmem>>) target_semaphore(%7 : memref<!tpu.dma_semaphore, #tpu.memory_space<semaphore_mem>>)
    %c0 = arith.constant 0 : index
    %c0_0 = arith.constant 0 : index
    %8 = vector.load %arg0[%c0, %c0_0] : memref<8x128xf32, #tpu.memory_space<vmem>>, vector<8x128xf32>
    %c0_1 = arith.constant 0 : index
    %c0_2 = arith.constant 0 : index
    %9 = vector.load %arg1[%c0_1, %c0_2] : memref<8x128xf32, #tpu.memory_space<vmem>>, vector<8x128xf32>
    %10 = arith.truncf %8 : vector<8x128xf32> to vector<8x128xbf16>
    %11 = arith.truncf %9 : vector<8x128xf32> to vector<8x128xbf16>
    %c0_3 = arith.constant 0 : index
    %c0_4 = arith.constant 0 : index
    %12 = vector.load %arg2[%c0_3, %c0_4] : memref<128x1024xbf16, #tpu.memory_space<vmem>>, vector<128x1024xbf16>
    %cst = arith.constant dense<0.000000e+00> : vector<8x1024xf32>
    %13 = tpu.matmul %11, %12, %cst {dimension_numbers = #tpu.dot_dimension_numbers<[1], [0], [0], [1], [0, 0, 1, 1], [], []>} : vector<8x128xbf16>, vector<128x1024xbf16>, vector<8x1024xf32> -> vector<8x1024xf32>
    %14 = arith.truncf %13 : vector<8x1024xf32> to vector<8x1024xbf16>
    %c0_5 = arith.constant 0 : index
    %c0_6 = arith.constant 0 : index
    %15 = vector.load %arg3[%c0_5, %c0_6] : memref<128x2048xbf16, #tpu.memory_space<vmem>>, vector<128x2048xbf16>
    %cst_7 = arith.constant dense<0.000000e+00> : vector<8x2048xf32>
    %16 = tpu.matmul %10, %15, %cst_7 {dimension_numbers = #tpu.dot_dimension_numbers<[1], [0], [0], [1], [0, 0, 1, 1], [], []>} : vector<8x128xbf16>, vector<128x2048xbf16>, vector<8x2048xf32> -> vector<8x2048xf32>
    %17 = arith.truncf %16 : vector<8x2048xf32> to vector<8x2048xbf16>
    %c0_8 = arith.constant 0 : index
    %c0_9 = arith.constant 0 : index
    %18 = vector.load %arg4[%c0_8, %c0_9] : memref<8x1024xf32, #tpu.memory_space<vmem>>, vector<8x1024xf32>
    %c0_i32_10 = arith.constant 0 : i32
    %19 = tpu.memref_slice %arg14[%c0_i32_10] : memref<4x!tpu.dma_semaphore, #tpu.memory_space<semaphore_mem>> -> memref<1x!tpu.dma_semaphore, #tpu.memory_space<semaphore_mem>>
    %20 = tpu.memref_squeeze %19 : memref<1x!tpu.dma_semaphore, #tpu.memory_space<semaphore_mem>> -> memref<!tpu.dma_semaphore, #tpu.memory_space<semaphore_mem>>
    tpu.wait_dma2 semaphore(%20 : memref<!tpu.dma_semaphore, #tpu.memory_space<semaphore_mem>>) src(%arg5 : memref<8x128x128xbf16, #tpu.memory_space<any>>) dst(%arg10 : memref<8x128x128xbf16, #tpu.memory_space<vmem>>)
    %c1_i32_11 = arith.constant 1 : i32
    %21 = tpu.memref_slice %arg14[%c1_i32_11] : memref<4x!tpu.dma_semaphore, #tpu.memory_space<semaphore_mem>> -> memref<1x!tpu.dma_semaphore, #tpu.memory_space<semaphore_mem>>
    %22 = tpu.memref_squeeze %21 : memref<1x!tpu.dma_semaphore, #tpu.memory_space<semaphore_mem>> -> memref<!tpu.dma_semaphore, #tpu.memory_space<semaphore_mem>>
    tpu.wait_dma2 semaphore(%22 : memref<!tpu.dma_semaphore, #tpu.memory_space<semaphore_mem>>) src(%arg6 : memref<8x128x128xbf16, #tpu.memory_space<any>>) dst(%arg11 : memref<8x128x128xbf16, #tpu.memory_space<vmem>>)
    %c2_i32_12 = arith.constant 2 : i32
    %23 = tpu.memref_slice %arg14[%c2_i32_12] : memref<4x!tpu.dma_semaphore, #tpu.memory_space<semaphore_mem>> -> memref<1x!tpu.dma_semaphore, #tpu.memory_space<semaphore_mem>>
    %24 = tpu.memref_squeeze %23 : memref<1x!tpu.dma_semaphore, #tpu.memory_space<semaphore_mem>> -> memref<!tpu.dma_semaphore, #tpu.memory_space<semaphore_mem>>
    tpu.wait_dma2 semaphore(%24 : memref<!tpu.dma_semaphore, #tpu.memory_space<semaphore_mem>>) src(%arg7 : memref<1024x128xbf16, #tpu.memory_space<any>>) dst(%arg12 : memref<1024x128xbf16, #tpu.memory_space<vmem>>)
    %cst_13 = arith.constant 0.000000e+00 : f32
    %25 = vector.broadcast %cst_13 : f32 to vector<8x128xf32>
    %26 = vector.extract_strided_slice %14 {offsets = [0, 0], sizes = [8, 128], strides = [1, 1]} : vector<8x1024xbf16> to vector<8x128xbf16>
    %27 = vector.extract_strided_slice %17 {offsets = [0, 0], sizes = [8, 128], strides = [1, 1]} : vector<8x2048xbf16> to vector<8x128xbf16>
    %28 = vector.extract_strided_slice %17 {offsets = [0, 1024], sizes = [8, 128], strides = [1, 1]} : vector<8x2048xbf16> to vector<8x128xbf16>
    %cst_14 = arith.constant dense<0.000000e+00> : vector<8x8xf32>
    %29 = tpu.matmul %26, %27, %cst_14 {dimension_numbers = #tpu.dot_dimension_numbers<[1], [1], [0], [0], [0, 0, 1, 0], [], []>} : vector<8x128xbf16>, vector<8x128xbf16>, vector<8x8xf32> -> vector<8x8xf32>
    %cst_15 = arith.constant dense<0xFF800000> : vector<8xf32>
    %30 = vector.multi_reduction <maximumf>, %29, %cst_15 [1] : vector<8x8xf32> to vector<8xf32>
    %31 = vector.shape_cast %30 : vector<8xf32> to vector<8x1xf32>
    %32 = vector.broadcast %31 : vector<8x1xf32> to vector<8x8xf32>
    %33 = arith.subf %29, %32 : vector<8x8xf32>
    %34 = math.exp %33 : vector<8x8xf32>
    %cst_16 = arith.constant dense<0.000000e+00> : vector<8xf32>
    %35 = vector.multi_reduction <add>, %34, %cst_16 [1] : vector<8x8xf32> to vector<8xf32>
    %36 = vector.shape_cast %35 : vector<8xf32> to vector<8x1xf32>
    %37 = tpu.reciprocal %36 {approx = true} : vector<8x1xf32> -> vector<8x1xf32>
    %38 = vector.broadcast %37 : vector<8x1xf32> to vector<8x8xf32>
    %39 = arith.mulf %34, %38 : vector<8x8xf32>
    %40 = arith.truncf %39 : vector<8x8xf32> to vector<8x8xbf16>
    %cst_17 = arith.constant dense<0.000000e+00> : vector<8x128xf32>
    %41 = tpu.matmul %40, %28, %cst_17 {dimension_numbers = #tpu.dot_dimension_numbers<[1], [0], [0], [1], [0, 0, 1, 1], [], []>} : vector<8x8xbf16>, vector<8x128xbf16>, vector<8x128xf32> -> vector<8x128xf32>
    %42 = vector.extract_strided_slice %18 {offsets = [0, 0], sizes = [1, 128], strides = [1, 1]} : vector<8x1024xf32> to vector<1x128xf32>
    %43 = vector.extract_strided_slice %18 {offsets = [1, 0], sizes = [1, 128], strides = [1, 1]} : vector<8x1024xf32> to vector<1x128xf32>
    %44 = vector.extract_strided_slice %18 {offsets = [2, 0], sizes = [1, 128], strides = [1, 1]} : vector<8x1024xf32> to vector<1x128xf32>
    %45 = vector.extract_strided_slice %18 {offsets = [3, 0], sizes = [1, 128], strides = [1, 1]} : vector<8x1024xf32> to vector<1x128xf32>
    %46 = vector.extract_strided_slice %18 {offsets = [4, 0], sizes = [1, 128], strides = [1, 1]} : vector<8x1024xf32> to vector<1x128xf32>
    %47 = vector.extract_strided_slice %18 {offsets = [5, 0], sizes = [1, 128], strides = [1, 1]} : vector<8x1024xf32> to vector<1x128xf32>
    %48 = arith.addf %41, %9 : vector<8x128xf32>
    %cst_18 = arith.constant dense<0.000000e+00> : vector<8xf32>
    %49 = vector.multi_reduction <add>, %48, %cst_18 [1] : vector<8x128xf32> to vector<8xf32>
    %50 = vector.shape_cast %49 : vector<8xf32> to vector<8x1xf32>
    %cst_19 = arith.constant 1.280000e+02 : f32
    %51 = vector.broadcast %cst_19 : f32 to vector<8x1xf32>
    %52 = arith.divf %50, %51 : vector<8x1xf32>
    %53 = vector.broadcast %52 : vector<8x1xf32> to vector<8x128xf32>
    %54 = arith.subf %48, %53 : vector<8x128xf32>
    %55 = arith.mulf %54, %54 : vector<8x128xf32>
    %cst_20 = arith.constant dense<0.000000e+00> : vector<8xf32>
    %56 = vector.multi_reduction <add>, %55, %cst_20 [1] : vector<8x128xf32> to vector<8xf32>
    %57 = vector.shape_cast %56 : vector<8xf32> to vector<8x1xf32>
    %cst_21 = arith.constant 1.280000e+02 : f32
    %58 = vector.broadcast %cst_21 : f32 to vector<8x1xf32>
    %59 = arith.divf %57, %58 : vector<8x1xf32>
    %60 = vector.broadcast %52 : vector<8x1xf32> to vector<8x128xf32>
    %61 = arith.subf %48, %60 : vector<8x128xf32>
    %cst_22 = arith.constant 9.99999974E-6 : f32
    %62 = vector.broadcast %cst_22 : f32 to vector<8x1xf32>
    %63 = arith.addf %59, %62 : vector<8x1xf32>
    %64 = math.rsqrt %63 : vector<8x1xf32>
    %65 = vector.broadcast %64 : vector<8x1xf32> to vector<8x128xf32>
    %66 = arith.mulf %61, %65 : vector<8x128xf32>
    %67 = vector.broadcast %42 : vector<1x128xf32> to vector<8x128xf32>
    %68 = arith.mulf %66, %67 : vector<8x128xf32>
    %69 = vector.broadcast %43 : vector<1x128xf32> to vector<8x128xf32>
    %70 = arith.addf %68, %69 : vector<8x128xf32>
    %71 = arith.truncf %70 : vector<8x128xf32> to vector<8x128xbf16>
    %c0_23 = arith.constant 0 : index
    %c0_24 = arith.constant 0 : index
    %c0_25 = arith.constant 0 : index
    %72 = vector.load %arg10[%c0_23, %c0_24, %c0_25] : memref<8x128x128xbf16, #tpu.memory_space<vmem>>, vector<1x128x128xbf16>
    %73 = vector.shape_cast %72 : vector<1x128x128xbf16> to vector<128x128xbf16>
    %cst_26 = arith.constant dense<0.000000e+00> : vector<8x128xf32>
    %74 = tpu.matmul %71, %73, %cst_26 {dimension_numbers = #tpu.dot_dimension_numbers<[1], [0], [0], [1], [0, 0, 1, 1], [], []>} : vector<8x128xbf16>, vector<128x128xbf16>, vector<8x128xf32> -> vector<8x128xf32>
    %75 = vector.broadcast %44 : vector<1x128xf32> to vector<8x128xf32>
    %76 = arith.addf %74, %75 : vector<8x128xf32>
    %cst_27 = arith.constant 0.000000e+00 : f32
    %77 = vector.broadcast %cst_27 : f32 to vector<8x128xf32>
    %78 = arith.maximumf %76, %77 : vector<8x128xf32>
    %79 = arith.truncf %78 : vector<8x128xf32> to vector<8x128xbf16>
    %c0_28 = arith.constant 0 : index
    %c0_29 = arith.constant 0 : index
    %c0_30 = arith.constant 0 : index
    %80 = vector.load %arg11[%c0_28, %c0_29, %c0_30] : memref<8x128x128xbf16, #tpu.memory_space<vmem>>, vector<1x128x128xbf16>
    %81 = vector.shape_cast %80 : vector<1x128x128xbf16> to vector<128x128xbf16>
    %cst_31 = arith.constant dense<0.000000e+00> : vector<8x128xf32>
    %82 = tpu.matmul %79, %81, %cst_31 {dimension_numbers = #tpu.dot_dimension_numbers<[1], [0], [0], [1], [0, 0, 1, 1], [], []>} : vector<8x128xbf16>, vector<128x128xbf16>, vector<8x128xf32> -> vector<8x128xf32>
    %83 = vector.broadcast %45 : vector<1x128xf32> to vector<8x128xf32>
    %84 = arith.addf %82, %83 : vector<8x128xf32>
    %85 = arith.addf %84, %70 : vector<8x128xf32>
    %cst_32 = arith.constant dense<0.000000e+00> : vector<8xf32>
    %86 = vector.multi_reduction <add>, %85, %cst_32 [1] : vector<8x128xf32> to vector<8xf32>
    %87 = vector.shape_cast %86 : vector<8xf32> to vector<8x1xf32>
    %cst_33 = arith.constant 1.280000e+02 : f32
    %88 = vector.broadcast %cst_33 : f32 to vector<8x1xf32>
    %89 = arith.divf %87, %88 : vector<8x1xf32>
    %90 = vector.broadcast %89 : vector<8x1xf32> to vector<8x128xf32>
    %91 = arith.subf %85, %90 : vector<8x128xf32>
    %92 = arith.mulf %91, %91 : vector<8x128xf32>
    %cst_34 = arith.constant dense<0.000000e+00> : vector<8xf32>
    %93 = vector.multi_reduction <add>, %92, %cst_34 [1] : vector<8x128xf32> to vector<8xf32>
    %94 = vector.shape_cast %93 : vector<8xf32> to vector<8x1xf32>
    %cst_35 = arith.constant 1.280000e+02 : f32
    %95 = vector.broadcast %cst_35 : f32 to vector<8x1xf32>
    %96 = arith.divf %94, %95 : vector<8x1xf32>
    %97 = vector.broadcast %89 : vector<8x1xf32> to vector<8x128xf32>
    %98 = arith.subf %85, %97 : vector<8x128xf32>
    %cst_36 = arith.constant 9.99999974E-6 : f32
    %99 = vector.broadcast %cst_36 : f32 to vector<8x1xf32>
    %100 = arith.addf %96, %99 : vector<8x1xf32>
    %101 = math.rsqrt %100 : vector<8x1xf32>
    %102 = vector.broadcast %101 : vector<8x1xf32> to vector<8x128xf32>
    %103 = arith.mulf %98, %102 : vector<8x128xf32>
    %104 = vector.broadcast %46 : vector<1x128xf32> to vector<8x128xf32>
    %105 = arith.mulf %103, %104 : vector<8x128xf32>
    %106 = vector.broadcast %47 : vector<1x128xf32> to vector<8x128xf32>
    %107 = arith.addf %105, %106 : vector<8x128xf32>
    %108 = arith.addf %107, %9 : vector<8x128xf32>
    %109 = arith.truncf %108 : vector<8x128xf32> to vector<8x128xbf16>
    %c0_37 = arith.constant 0 : index
    %c0_38 = arith.constant 0 : index
    %110 = vector.load %arg12[%c0_37, %c0_38] : memref<1024x128xbf16, #tpu.memory_space<vmem>>, vector<128x128xbf16>
    %cst_39 = arith.constant dense<0.000000e+00> : vector<8x128xf32>
    %111 = tpu.matmul %109, %110, %cst_39 {dimension_numbers = #tpu.dot_dimension_numbers<[1], [0], [0], [1], [0, 0, 1, 1], [], []>} : vector<8x128xbf16>, vector<128x128xbf16>, vector<8x128xf32> -> vector<8x128xf32>
    %112 = arith.addf %25, %111 : vector<8x128xf32>
    %113 = vector.extract_strided_slice %14 {offsets = [0, 128], sizes = [8, 128], strides = [1, 1]} : vector<8x1024xbf16> to vector<8x128xbf16>
    %114 = vector.extract_strided_slice %17 {offsets = [0, 128], sizes = [8, 128], strides = [1, 1]} : vector<8x2048xbf16> to vector<8x128xbf16>
    %115 = vector.extract_strided_slice %17 {offsets = [0, 1152], sizes = [8, 128], strides = [1, 1]} : vector<8x2048xbf16> to vector<8x128xbf16>
    %cst_40 = arith.constant dense<0.000000e+00> : vector<8x8xf32>
    %116 = tpu.matmul %113, %114, %cst_40 {dimension_numbers = #tpu.dot_dimension_numbers<[1], [1], [0], [0], [0, 0, 1, 0], [], []>} : vector<8x128xbf16>, vector<8x128xbf16>, vector<8x8xf32> -> vector<8x8xf32>
    %cst_41 = arith.constant dense<0xFF800000> : vector<8xf32>
    %117 = vector.multi_reduction <maximumf>, %116, %cst_41 [1] : vector<8x8xf32> to vector<8xf32>
    %118 = vector.shape_cast %117 : vector<8xf32> to vector<8x1xf32>
    %119 = vector.broadcast %118 : vector<8x1xf32> to vector<8x8xf32>
    %120 = arith.subf %116, %119 : vector<8x8xf32>
    %121 = math.exp %120 : vector<8x8xf32>
    %cst_42 = arith.constant dense<0.000000e+00> : vector<8xf32>
    %122 = vector.multi_reduction <add>, %121, %cst_42 [1] : vector<8x8xf32> to vector<8xf32>
    %123 = vector.shape_cast %122 : vector<8xf32> to vector<8x1xf32>
    %124 = tpu.reciprocal %123 {approx = true} : vector<8x1xf32> -> vector<8x1xf32>
    %125 = vector.broadcast %124 : vector<8x1xf32> to vector<8x8xf32>
    %126 = arith.mulf %121, %125 : vector<8x8xf32>
    %127 = arith.truncf %126 : vector<8x8xf32> to vector<8x8xbf16>
    %cst_43 = arith.constant dense<0.000000e+00> : vector<8x128xf32>
    %128 = tpu.matmul %127, %115, %cst_43 {dimension_numbers = #tpu.dot_dimension_numbers<[1], [0], [0], [1], [0, 0, 1, 1], [], []>} : vector<8x8xbf16>, vector<8x128xbf16>, vector<8x128xf32> -> vector<8x128xf32>
    %129 = vector.extract_strided_slice %18 {offsets = [0, 128], sizes = [1, 128], strides = [1, 1]} : vector<8x1024xf32> to vector<1x128xf32>
    %130 = vector.extract_strided_slice %18 {offsets = [1, 128], sizes = [1, 128], strides = [1, 1]} : vector<8x1024xf32> to vector<1x128xf32>
    %131 = vector.extract_strided_slice %18 {offsets = [2, 128], sizes = [1, 128], strides = [1, 1]} : vector<8x1024xf32> to vector<1x128xf32>
    %132 = vector.extract_strided_slice %18 {offsets = [3, 128], sizes = [1, 128], strides = [1, 1]} : vector<8x1024xf32> to vector<1x128xf32>
    %133 = vector.extract_strided_slice %18 {offsets = [4, 128], sizes = [1, 128], strides = [1, 1]} : vector<8x1024xf32> to vector<1x128xf32>
    %134 = vector.extract_strided_slice %18 {offsets = [5, 128], sizes = [1, 128], strides = [1, 1]} : vector<8x1024xf32> to vector<1x128xf32>
    %135 = arith.addf %128, %9 : vector<8x128xf32>
    %cst_44 = arith.constant dense<0.000000e+00> : vector<8xf32>
    %136 = vector.multi_reduction <add>, %135, %cst_44 [1] : vector<8x128xf32> to vector<8xf32>
    %137 = vector.shape_cast %136 : vector<8xf32> to vector<8x1xf32>
    %cst_45 = arith.constant 1.280000e+02 : f32
    %138 = vector.broadcast %cst_45 : f32 to vector<8x1xf32>
    %139 = arith.divf %137, %138 : vector<8x1xf32>
    %140 = vector.broadcast %139 : vector<8x1xf32> to vector<8x128xf32>
    %141 = arith.subf %135, %140 : vector<8x128xf32>
    %142 = arith.mulf %141, %141 : vector<8x128xf32>
    %cst_46 = arith.constant dense<0.000000e+00> : vector<8xf32>
    %143 = vector.multi_reduction <add>, %142, %cst_46 [1] : vector<8x128xf32> to vector<8xf32>
    %144 = vector.shape_cast %143 : vector<8xf32> to vector<8x1xf32>
    %cst_47 = arith.constant 1.280000e+02 : f32
    %145 = vector.broadcast %cst_47 : f32 to vector<8x1xf32>
    %146 = arith.divf %144, %145 : vector<8x1xf32>
    %147 = vector.broadcast %139 : vector<8x1xf32> to vector<8x128xf32>
    %148 = arith.subf %135, %147 : vector<8x128xf32>
    %cst_48 = arith.constant 9.99999974E-6 : f32
    %149 = vector.broadcast %cst_48 : f32 to vector<8x1xf32>
    %150 = arith.addf %146, %149 : vector<8x1xf32>
    %151 = math.rsqrt %150 : vector<8x1xf32>
    %152 = vector.broadcast %151 : vector<8x1xf32> to vector<8x128xf32>
    %153 = arith.mulf %148, %152 : vector<8x128xf32>
    %154 = vector.broadcast %129 : vector<1x128xf32> to vector<8x128xf32>
    %155 = arith.mulf %153, %154 : vector<8x128xf32>
    %156 = vector.broadcast %130 : vector<1x128xf32> to vector<8x128xf32>
    %157 = arith.addf %155, %156 : vector<8x128xf32>
    %158 = arith.truncf %157 : vector<8x128xf32> to vector<8x128xbf16>
    %c1 = arith.constant 1 : index
    %c0_49 = arith.constant 0 : index
    %c0_50 = arith.constant 0 : index
    %159 = vector.load %arg10[%c1, %c0_49, %c0_50] : memref<8x128x128xbf16, #tpu.memory_space<vmem>>, vector<1x128x128xbf16>
    %160 = vector.shape_cast %159 : vector<1x128x128xbf16> to vector<128x128xbf16>
    %cst_51 = arith.constant dense<0.000000e+00> : vector<8x128xf32>
    %161 = tpu.matmul %158, %160, %cst_51 {dimension_numbers = #tpu.dot_dimension_numbers<[1], [0], [0], [1], [0, 0, 1, 1], [], []>} : vector<8x128xbf16>, vector<128x128xbf16>, vector<8x128xf32> -> vector<8x128xf32>
    %162 = vector.broadcast %131 : vector<1x128xf32> to vector<8x128xf32>
    %163 = arith.addf %161, %162 : vector<8x128xf32>
    %cst_52 = arith.constant 0.000000e+00 : f32
    %164 = vector.broadcast %cst_52 : f32 to vector<8x128xf32>
    %165 = arith.maximumf %163, %164 : vector<8x128xf32>
    %166 = arith.truncf %165 : vector<8x128xf32> to vector<8x128xbf16>
    %c1_53 = arith.constant 1 : index
    %c0_54 = arith.constant 0 : index
    %c0_55 = arith.constant 0 : index
    %167 = vector.load %arg11[%c1_53, %c0_54, %c0_55] : memref<8x128x128xbf16, #tpu.memory_space<vmem>>, vector<1x128x128xbf16>
    %168 = vector.shape_cast %167 : vector<1x128x128xbf16> to vector<128x128xbf16>
    %cst_56 = arith.constant dense<0.000000e+00> : vector<8x128xf32>
    %169 = tpu.matmul %166, %168, %cst_56 {dimension_numbers = #tpu.dot_dimension_numbers<[1], [0], [0], [1], [0, 0, 1, 1], [], []>} : vector<8x128xbf16>, vector<128x128xbf16>, vector<8x128xf32> -> vector<8x128xf32>
    %170 = vector.broadcast %132 : vector<1x128xf32> to vector<8x128xf32>
    %171 = arith.addf %169, %170 : vector<8x128xf32>
    %172 = arith.addf %171, %157 : vector<8x128xf32>
    %cst_57 = arith.constant dense<0.000000e+00> : vector<8xf32>
    %173 = vector.multi_reduction <add>, %172, %cst_57 [1] : vector<8x128xf32> to vector<8xf32>
    %174 = vector.shape_cast %173 : vector<8xf32> to vector<8x1xf32>
    %cst_58 = arith.constant 1.280000e+02 : f32
    %175 = vector.broadcast %cst_58 : f32 to vector<8x1xf32>
    %176 = arith.divf %174, %175 : vector<8x1xf32>
    %177 = vector.broadcast %176 : vector<8x1xf32> to vector<8x128xf32>
    %178 = arith.subf %172, %177 : vector<8x128xf32>
    %179 = arith.mulf %178, %178 : vector<8x128xf32>
    %cst_59 = arith.constant dense<0.000000e+00> : vector<8xf32>
    %180 = vector.multi_reduction <add>, %179, %cst_59 [1] : vector<8x128xf32> to vector<8xf32>
    %181 = vector.shape_cast %180 : vector<8xf32> to vector<8x1xf32>
    %cst_60 = arith.constant 1.280000e+02 : f32
    %182 = vector.broadcast %cst_60 : f32 to vector<8x1xf32>
    %183 = arith.divf %181, %182 : vector<8x1xf32>
    %184 = vector.broadcast %176 : vector<8x1xf32> to vector<8x128xf32>
    %185 = arith.subf %172, %184 : vector<8x128xf32>
    %cst_61 = arith.constant 9.99999974E-6 : f32
    %186 = vector.broadcast %cst_61 : f32 to vector<8x1xf32>
    %187 = arith.addf %183, %186 : vector<8x1xf32>
    %188 = math.rsqrt %187 : vector<8x1xf32>
    %189 = vector.broadcast %188 : vector<8x1xf32> to vector<8x128xf32>
    %190 = arith.mulf %185, %189 : vector<8x128xf32>
    %191 = vector.broadcast %133 : vector<1x128xf32> to vector<8x128xf32>
    %192 = arith.mulf %190, %191 : vector<8x128xf32>
    %193 = vector.broadcast %134 : vector<1x128xf32> to vector<8x128xf32>
    %194 = arith.addf %192, %193 : vector<8x128xf32>
    %195 = arith.addf %194, %9 : vector<8x128xf32>
    %196 = arith.truncf %195 : vector<8x128xf32> to vector<8x128xbf16>
    %c128 = arith.constant 128 : index
    %c0_62 = arith.constant 0 : index
    %197 = vector.load %arg12[%c128, %c0_62] : memref<1024x128xbf16, #tpu.memory_space<vmem>>, vector<128x128xbf16>
    %cst_63 = arith.constant dense<0.000000e+00> : vector<8x128xf32>
    %198 = tpu.matmul %196, %197, %cst_63 {dimension_numbers = #tpu.dot_dimension_numbers<[1], [0], [0], [1], [0, 0, 1, 1], [], []>} : vector<8x128xbf16>, vector<128x128xbf16>, vector<8x128xf32> -> vector<8x128xf32>
    %199 = arith.addf %112, %198 : vector<8x128xf32>
    %200 = vector.extract_strided_slice %14 {offsets = [0, 256], sizes = [8, 128], strides = [1, 1]} : vector<8x1024xbf16> to vector<8x128xbf16>
    %201 = vector.extract_strided_slice %17 {offsets = [0, 256], sizes = [8, 128], strides = [1, 1]} : vector<8x2048xbf16> to vector<8x128xbf16>
    %202 = vector.extract_strided_slice %17 {offsets = [0, 1280], sizes = [8, 128], strides = [1, 1]} : vector<8x2048xbf16> to vector<8x128xbf16>
    %cst_64 = arith.constant dense<0.000000e+00> : vector<8x8xf32>
    %203 = tpu.matmul %200, %201, %cst_64 {dimension_numbers = #tpu.dot_dimension_numbers<[1], [1], [0], [0], [0, 0, 1, 0], [], []>} : vector<8x128xbf16>, vector<8x128xbf16>, vector<8x8xf32> -> vector<8x8xf32>
    %cst_65 = arith.constant dense<0xFF800000> : vector<8xf32>
    %204 = vector.multi_reduction <maximumf>, %203, %cst_65 [1] : vector<8x8xf32> to vector<8xf32>
    %205 = vector.shape_cast %204 : vector<8xf32> to vector<8x1xf32>
    %206 = vector.broadcast %205 : vector<8x1xf32> to vector<8x8xf32>
    %207 = arith.subf %203, %206 : vector<8x8xf32>
    %208 = math.exp %207 : vector<8x8xf32>
    %cst_66 = arith.constant dense<0.000000e+00> : vector<8xf32>
    %209 = vector.multi_reduction <add>, %208, %cst_66 [1] : vector<8x8xf32> to vector<8xf32>
    %210 = vector.shape_cast %209 : vector<8xf32> to vector<8x1xf32>
    %211 = tpu.reciprocal %210 {approx = true} : vector<8x1xf32> -> vector<8x1xf32>
    %212 = vector.broadcast %211 : vector<8x1xf32> to vector<8x8xf32>
    %213 = arith.mulf %208, %212 : vector<8x8xf32>
    %214 = arith.truncf %213 : vector<8x8xf32> to vector<8x8xbf16>
    %cst_67 = arith.constant dense<0.000000e+00> : vector<8x128xf32>
    %215 = tpu.matmul %214, %202, %cst_67 {dimension_numbers = #tpu.dot_dimension_numbers<[1], [0], [0], [1], [0, 0, 1, 1], [], []>} : vector<8x8xbf16>, vector<8x128xbf16>, vector<8x128xf32> -> vector<8x128xf32>
    %216 = vector.extract_strided_slice %18 {offsets = [0, 256], sizes = [1, 128], strides = [1, 1]} : vector<8x1024xf32> to vector<1x128xf32>
    %217 = vector.extract_strided_slice %18 {offsets = [1, 256], sizes = [1, 128], strides = [1, 1]} : vector<8x1024xf32> to vector<1x128xf32>
    %218 = vector.extract_strided_slice %18 {offsets = [2, 256], sizes = [1, 128], strides = [1, 1]} : vector<8x1024xf32> to vector<1x128xf32>
    %219 = vector.extract_strided_slice %18 {offsets = [3, 256], sizes = [1, 128], strides = [1, 1]} : vector<8x1024xf32> to vector<1x128xf32>
    %220 = vector.extract_strided_slice %18 {offsets = [4, 256], sizes = [1, 128], strides = [1, 1]} : vector<8x1024xf32> to vector<1x128xf32>
    %221 = vector.extract_strided_slice %18 {offsets = [5, 256], sizes = [1, 128], strides = [1, 1]} : vector<8x1024xf32> to vector<1x128xf32>
    %222 = arith.addf %215, %9 : vector<8x128xf32>
    %cst_68 = arith.constant dense<0.000000e+00> : vector<8xf32>
    %223 = vector.multi_reduction <add>, %222, %cst_68 [1] : vector<8x128xf32> to vector<8xf32>
    %224 = vector.shape_cast %223 : vector<8xf32> to vector<8x1xf32>
    %cst_69 = arith.constant 1.280000e+02 : f32
    %225 = vector.broadcast %cst_69 : f32 to vector<8x1xf32>
    %226 = arith.divf %224, %225 : vector<8x1xf32>
    %227 = vector.broadcast %226 : vector<8x1xf32> to vector<8x128xf32>
    %228 = arith.subf %222, %227 : vector<8x128xf32>
    %229 = arith.mulf %228, %228 : vector<8x128xf32>
    %cst_70 = arith.constant dense<0.000000e+00> : vector<8xf32>
    %230 = vector.multi_reduction <add>, %229, %cst_70 [1] : vector<8x128xf32> to vector<8xf32>
    %231 = vector.shape_cast %230 : vector<8xf32> to vector<8x1xf32>
    %cst_71 = arith.constant 1.280000e+02 : f32
    %232 = vector.broadcast %cst_71 : f32 to vector<8x1xf32>
    %233 = arith.divf %231, %232 : vector<8x1xf32>
    %234 = vector.broadcast %226 : vector<8x1xf32> to vector<8x128xf32>
    %235 = arith.subf %222, %234 : vector<8x128xf32>
    %cst_72 = arith.constant 9.99999974E-6 : f32
    %236 = vector.broadcast %cst_72 : f32 to vector<8x1xf32>
    %237 = arith.addf %233, %236 : vector<8x1xf32>
    %238 = math.rsqrt %237 : vector<8x1xf32>
    %239 = vector.broadcast %238 : vector<8x1xf32> to vector<8x128xf32>
    %240 = arith.mulf %235, %239 : vector<8x128xf32>
    %241 = vector.broadcast %216 : vector<1x128xf32> to vector<8x128xf32>
    %242 = arith.mulf %240, %241 : vector<8x128xf32>
    %243 = vector.broadcast %217 : vector<1x128xf32> to vector<8x128xf32>
    %244 = arith.addf %242, %243 : vector<8x128xf32>
    %245 = arith.truncf %244 : vector<8x128xf32> to vector<8x128xbf16>
    %c2 = arith.constant 2 : index
    %c0_73 = arith.constant 0 : index
    %c0_74 = arith.constant 0 : index
    %246 = vector.load %arg10[%c2, %c0_73, %c0_74] : memref<8x128x128xbf16, #tpu.memory_space<vmem>>, vector<1x128x128xbf16>
    %247 = vector.shape_cast %246 : vector<1x128x128xbf16> to vector<128x128xbf16>
    %cst_75 = arith.constant dense<0.000000e+00> : vector<8x128xf32>
    %248 = tpu.matmul %245, %247, %cst_75 {dimension_numbers = #tpu.dot_dimension_numbers<[1], [0], [0], [1], [0, 0, 1, 1], [], []>} : vector<8x128xbf16>, vector<128x128xbf16>, vector<8x128xf32> -> vector<8x128xf32>
    %249 = vector.broadcast %218 : vector<1x128xf32> to vector<8x128xf32>
    %250 = arith.addf %248, %249 : vector<8x128xf32>
    %cst_76 = arith.constant 0.000000e+00 : f32
    %251 = vector.broadcast %cst_76 : f32 to vector<8x128xf32>
    %252 = arith.maximumf %250, %251 : vector<8x128xf32>
    %253 = arith.truncf %252 : vector<8x128xf32> to vector<8x128xbf16>
    %c2_77 = arith.constant 2 : index
    %c0_78 = arith.constant 0 : index
    %c0_79 = arith.constant 0 : index
    %254 = vector.load %arg11[%c2_77, %c0_78, %c0_79] : memref<8x128x128xbf16, #tpu.memory_space<vmem>>, vector<1x128x128xbf16>
    %255 = vector.shape_cast %254 : vector<1x128x128xbf16> to vector<128x128xbf16>
    %cst_80 = arith.constant dense<0.000000e+00> : vector<8x128xf32>
    %256 = tpu.matmul %253, %255, %cst_80 {dimension_numbers = #tpu.dot_dimension_numbers<[1], [0], [0], [1], [0, 0, 1, 1], [], []>} : vector<8x128xbf16>, vector<128x128xbf16>, vector<8x128xf32> -> vector<8x128xf32>
    %257 = vector.broadcast %219 : vector<1x128xf32> to vector<8x128xf32>
    %258 = arith.addf %256, %257 : vector<8x128xf32>
    %259 = arith.addf %258, %244 : vector<8x128xf32>
    %cst_81 = arith.constant dense<0.000000e+00> : vector<8xf32>
    %260 = vector.multi_reduction <add>, %259, %cst_81 [1] : vector<8x128xf32> to vector<8xf32>
    %261 = vector.shape_cast %260 : vector<8xf32> to vector<8x1xf32>
    %cst_82 = arith.constant 1.280000e+02 : f32
    %262 = vector.broadcast %cst_82 : f32 to vector<8x1xf32>
    %263 = arith.divf %261, %262 : vector<8x1xf32>
    %264 = vector.broadcast %263 : vector<8x1xf32> to vector<8x128xf32>
    %265 = arith.subf %259, %264 : vector<8x128xf32>
    %266 = arith.mulf %265, %265 : vector<8x128xf32>
    %cst_83 = arith.constant dense<0.000000e+00> : vector<8xf32>
    %267 = vector.multi_reduction <add>, %266, %cst_83 [1] : vector<8x128xf32> to vector<8xf32>
    %268 = vector.shape_cast %267 : vector<8xf32> to vector<8x1xf32>
    %cst_84 = arith.constant 1.280000e+02 : f32
    %269 = vector.broadcast %cst_84 : f32 to vector<8x1xf32>
    %270 = arith.divf %268, %269 : vector<8x1xf32>
    %271 = vector.broadcast %263 : vector<8x1xf32> to vector<8x128xf32>
    %272 = arith.subf %259, %271 : vector<8x128xf32>
    %cst_85 = arith.constant 9.99999974E-6 : f32
    %273 = vector.broadcast %cst_85 : f32 to vector<8x1xf32>
    %274 = arith.addf %270, %273 : vector<8x1xf32>
    %275 = math.rsqrt %274 : vector<8x1xf32>
    %276 = vector.broadcast %275 : vector<8x1xf32> to vector<8x128xf32>
    %277 = arith.mulf %272, %276 : vector<8x128xf32>
    %278 = vector.broadcast %220 : vector<1x128xf32> to vector<8x128xf32>
    %279 = arith.mulf %277, %278 : vector<8x128xf32>
    %280 = vector.broadcast %221 : vector<1x128xf32> to vector<8x128xf32>
    %281 = arith.addf %279, %280 : vector<8x128xf32>
    %282 = arith.addf %281, %9 : vector<8x128xf32>
    %283 = arith.truncf %282 : vector<8x128xf32> to vector<8x128xbf16>
    %c256 = arith.constant 256 : index
    %c0_86 = arith.constant 0 : index
    %284 = vector.load %arg12[%c256, %c0_86] : memref<1024x128xbf16, #tpu.memory_space<vmem>>, vector<128x128xbf16>
    %cst_87 = arith.constant dense<0.000000e+00> : vector<8x128xf32>
    %285 = tpu.matmul %283, %284, %cst_87 {dimension_numbers = #tpu.dot_dimension_numbers<[1], [0], [0], [1], [0, 0, 1, 1], [], []>} : vector<8x128xbf16>, vector<128x128xbf16>, vector<8x128xf32> -> vector<8x128xf32>
    %286 = arith.addf %199, %285 : vector<8x128xf32>
    %287 = vector.extract_strided_slice %14 {offsets = [0, 384], sizes = [8, 128], strides = [1, 1]} : vector<8x1024xbf16> to vector<8x128xbf16>
    %288 = vector.extract_strided_slice %17 {offsets = [0, 384], sizes = [8, 128], strides = [1, 1]} : vector<8x2048xbf16> to vector<8x128xbf16>
    %289 = vector.extract_strided_slice %17 {offsets = [0, 1408], sizes = [8, 128], strides = [1, 1]} : vector<8x2048xbf16> to vector<8x128xbf16>
    %cst_88 = arith.constant dense<0.000000e+00> : vector<8x8xf32>
    %290 = tpu.matmul %287, %288, %cst_88 {dimension_numbers = #tpu.dot_dimension_numbers<[1], [1], [0], [0], [0, 0, 1, 0], [], []>} : vector<8x128xbf16>, vector<8x128xbf16>, vector<8x8xf32> -> vector<8x8xf32>
    %cst_89 = arith.constant dense<0xFF800000> : vector<8xf32>
    %291 = vector.multi_reduction <maximumf>, %290, %cst_89 [1] : vector<8x8xf32> to vector<8xf32>
    %292 = vector.shape_cast %291 : vector<8xf32> to vector<8x1xf32>
    %293 = vector.broadcast %292 : vector<8x1xf32> to vector<8x8xf32>
    %294 = arith.subf %290, %293 : vector<8x8xf32>
    %295 = math.exp %294 : vector<8x8xf32>
    %cst_90 = arith.constant dense<0.000000e+00> : vector<8xf32>
    %296 = vector.multi_reduction <add>, %295, %cst_90 [1] : vector<8x8xf32> to vector<8xf32>
    %297 = vector.shape_cast %296 : vector<8xf32> to vector<8x1xf32>
    %298 = tpu.reciprocal %297 {approx = true} : vector<8x1xf32> -> vector<8x1xf32>
    %299 = vector.broadcast %298 : vector<8x1xf32> to vector<8x8xf32>
    %300 = arith.mulf %295, %299 : vector<8x8xf32>
    %301 = arith.truncf %300 : vector<8x8xf32> to vector<8x8xbf16>
    %cst_91 = arith.constant dense<0.000000e+00> : vector<8x128xf32>
    %302 = tpu.matmul %301, %289, %cst_91 {dimension_numbers = #tpu.dot_dimension_numbers<[1], [0], [0], [1], [0, 0, 1, 1], [], []>} : vector<8x8xbf16>, vector<8x128xbf16>, vector<8x128xf32> -> vector<8x128xf32>
    %303 = vector.extract_strided_slice %18 {offsets = [0, 384], sizes = [1, 128], strides = [1, 1]} : vector<8x1024xf32> to vector<1x128xf32>
    %304 = vector.extract_strided_slice %18 {offsets = [1, 384], sizes = [1, 128], strides = [1, 1]} : vector<8x1024xf32> to vector<1x128xf32>
    %305 = vector.extract_strided_slice %18 {offsets = [2, 384], sizes = [1, 128], strides = [1, 1]} : vector<8x1024xf32> to vector<1x128xf32>
    %306 = vector.extract_strided_slice %18 {offsets = [3, 384], sizes = [1, 128], strides = [1, 1]} : vector<8x1024xf32> to vector<1x128xf32>
    %307 = vector.extract_strided_slice %18 {offsets = [4, 384], sizes = [1, 128], strides = [1, 1]} : vector<8x1024xf32> to vector<1x128xf32>
    %308 = vector.extract_strided_slice %18 {offsets = [5, 384], sizes = [1, 128], strides = [1, 1]} : vector<8x1024xf32> to vector<1x128xf32>
    %309 = arith.addf %302, %9 : vector<8x128xf32>
    %cst_92 = arith.constant dense<0.000000e+00> : vector<8xf32>
    %310 = vector.multi_reduction <add>, %309, %cst_92 [1] : vector<8x128xf32> to vector<8xf32>
    %311 = vector.shape_cast %310 : vector<8xf32> to vector<8x1xf32>
    %cst_93 = arith.constant 1.280000e+02 : f32
    %312 = vector.broadcast %cst_93 : f32 to vector<8x1xf32>
    %313 = arith.divf %311, %312 : vector<8x1xf32>
    %314 = vector.broadcast %313 : vector<8x1xf32> to vector<8x128xf32>
    %315 = arith.subf %309, %314 : vector<8x128xf32>
    %316 = arith.mulf %315, %315 : vector<8x128xf32>
    %cst_94 = arith.constant dense<0.000000e+00> : vector<8xf32>
    %317 = vector.multi_reduction <add>, %316, %cst_94 [1] : vector<8x128xf32> to vector<8xf32>
    %318 = vector.shape_cast %317 : vector<8xf32> to vector<8x1xf32>
    %cst_95 = arith.constant 1.280000e+02 : f32
    %319 = vector.broadcast %cst_95 : f32 to vector<8x1xf32>
    %320 = arith.divf %318, %319 : vector<8x1xf32>
    %321 = vector.broadcast %313 : vector<8x1xf32> to vector<8x128xf32>
    %322 = arith.subf %309, %321 : vector<8x128xf32>
    %cst_96 = arith.constant 9.99999974E-6 : f32
    %323 = vector.broadcast %cst_96 : f32 to vector<8x1xf32>
    %324 = arith.addf %320, %323 : vector<8x1xf32>
    %325 = math.rsqrt %324 : vector<8x1xf32>
    %326 = vector.broadcast %325 : vector<8x1xf32> to vector<8x128xf32>
    %327 = arith.mulf %322, %326 : vector<8x128xf32>
    %328 = vector.broadcast %303 : vector<1x128xf32> to vector<8x128xf32>
    %329 = arith.mulf %327, %328 : vector<8x128xf32>
    %330 = vector.broadcast %304 : vector<1x128xf32> to vector<8x128xf32>
    %331 = arith.addf %329, %330 : vector<8x128xf32>
    %332 = arith.truncf %331 : vector<8x128xf32> to vector<8x128xbf16>
    %c3 = arith.constant 3 : index
    %c0_97 = arith.constant 0 : index
    %c0_98 = arith.constant 0 : index
    %333 = vector.load %arg10[%c3, %c0_97, %c0_98] : memref<8x128x128xbf16, #tpu.memory_space<vmem>>, vector<1x128x128xbf16>
    %334 = vector.shape_cast %333 : vector<1x128x128xbf16> to vector<128x128xbf16>
    %cst_99 = arith.constant dense<0.000000e+00> : vector<8x128xf32>
    %335 = tpu.matmul %332, %334, %cst_99 {dimension_numbers = #tpu.dot_dimension_numbers<[1], [0], [0], [1], [0, 0, 1, 1], [], []>} : vector<8x128xbf16>, vector<128x128xbf16>, vector<8x128xf32> -> vector<8x128xf32>
    %336 = vector.broadcast %305 : vector<1x128xf32> to vector<8x128xf32>
    %337 = arith.addf %335, %336 : vector<8x128xf32>
    %cst_100 = arith.constant 0.000000e+00 : f32
    %338 = vector.broadcast %cst_100 : f32 to vector<8x128xf32>
    %339 = arith.maximumf %337, %338 : vector<8x128xf32>
    %340 = arith.truncf %339 : vector<8x128xf32> to vector<8x128xbf16>
    %c3_101 = arith.constant 3 : index
    %c0_102 = arith.constant 0 : index
    %c0_103 = arith.constant 0 : index
    %341 = vector.load %arg11[%c3_101, %c0_102, %c0_103] : memref<8x128x128xbf16, #tpu.memory_space<vmem>>, vector<1x128x128xbf16>
    %342 = vector.shape_cast %341 : vector<1x128x128xbf16> to vector<128x128xbf16>
    %cst_104 = arith.constant dense<0.000000e+00> : vector<8x128xf32>
    %343 = tpu.matmul %340, %342, %cst_104 {dimension_numbers = #tpu.dot_dimension_numbers<[1], [0], [0], [1], [0, 0, 1, 1], [], []>} : vector<8x128xbf16>, vector<128x128xbf16>, vector<8x128xf32> -> vector<8x128xf32>
    %344 = vector.broadcast %306 : vector<1x128xf32> to vector<8x128xf32>
    %345 = arith.addf %343, %344 : vector<8x128xf32>
    %346 = arith.addf %345, %331 : vector<8x128xf32>
    %cst_105 = arith.constant dense<0.000000e+00> : vector<8xf32>
    %347 = vector.multi_reduction <add>, %346, %cst_105 [1] : vector<8x128xf32> to vector<8xf32>
    %348 = vector.shape_cast %347 : vector<8xf32> to vector<8x1xf32>
    %cst_106 = arith.constant 1.280000e+02 : f32
    %349 = vector.broadcast %cst_106 : f32 to vector<8x1xf32>
    %350 = arith.divf %348, %349 : vector<8x1xf32>
    %351 = vector.broadcast %350 : vector<8x1xf32> to vector<8x128xf32>
    %352 = arith.subf %346, %351 : vector<8x128xf32>
    %353 = arith.mulf %352, %352 : vector<8x128xf32>
    %cst_107 = arith.constant dense<0.000000e+00> : vector<8xf32>
    %354 = vector.multi_reduction <add>, %353, %cst_107 [1] : vector<8x128xf32> to vector<8xf32>
    %355 = vector.shape_cast %354 : vector<8xf32> to vector<8x1xf32>
    %cst_108 = arith.constant 1.280000e+02 : f32
    %356 = vector.broadcast %cst_108 : f32 to vector<8x1xf32>
    %357 = arith.divf %355, %356 : vector<8x1xf32>
    %358 = vector.broadcast %350 : vector<8x1xf32> to vector<8x128xf32>
    %359 = arith.subf %346, %358 : vector<8x128xf32>
    %cst_109 = arith.constant 9.99999974E-6 : f32
    %360 = vector.broadcast %cst_109 : f32 to vector<8x1xf32>
    %361 = arith.addf %357, %360 : vector<8x1xf32>
    %362 = math.rsqrt %361 : vector<8x1xf32>
    %363 = vector.broadcast %362 : vector<8x1xf32> to vector<8x128xf32>
    %364 = arith.mulf %359, %363 : vector<8x128xf32>
    %365 = vector.broadcast %307 : vector<1x128xf32> to vector<8x128xf32>
    %366 = arith.mulf %364, %365 : vector<8x128xf32>
    %367 = vector.broadcast %308 : vector<1x128xf32> to vector<8x128xf32>
    %368 = arith.addf %366, %367 : vector<8x128xf32>
    %369 = arith.addf %368, %9 : vector<8x128xf32>
    %370 = arith.truncf %369 : vector<8x128xf32> to vector<8x128xbf16>
    %c384 = arith.constant 384 : index
    %c0_110 = arith.constant 0 : index
    %371 = vector.load %arg12[%c384, %c0_110] : memref<1024x128xbf16, #tpu.memory_space<vmem>>, vector<128x128xbf16>
    %cst_111 = arith.constant dense<0.000000e+00> : vector<8x128xf32>
    %372 = tpu.matmul %370, %371, %cst_111 {dimension_numbers = #tpu.dot_dimension_numbers<[1], [0], [0], [1], [0, 0, 1, 1], [], []>} : vector<8x128xbf16>, vector<128x128xbf16>, vector<8x128xf32> -> vector<8x128xf32>
    %373 = arith.addf %286, %372 : vector<8x128xf32>
    %374 = vector.extract_strided_slice %14 {offsets = [0, 512], sizes = [8, 128], strides = [1, 1]} : vector<8x1024xbf16> to vector<8x128xbf16>
    %375 = vector.extract_strided_slice %17 {offsets = [0, 512], sizes = [8, 128], strides = [1, 1]} : vector<8x2048xbf16> to vector<8x128xbf16>
    %376 = vector.extract_strided_slice %17 {offsets = [0, 1536], sizes = [8, 128], strides = [1, 1]} : vector<8x2048xbf16> to vector<8x128xbf16>
    %cst_112 = arith.constant dense<0.000000e+00> : vector<8x8xf32>
    %377 = tpu.matmul %374, %375, %cst_112 {dimension_numbers = #tpu.dot_dimension_numbers<[1], [1], [0], [0], [0, 0, 1, 0], [], []>} : vector<8x128xbf16>, vector<8x128xbf16>, vector<8x8xf32> -> vector<8x8xf32>
    %cst_113 = arith.constant dense<0xFF800000> : vector<8xf32>
    %378 = vector.multi_reduction <maximumf>, %377, %cst_113 [1] : vector<8x8xf32> to vector<8xf32>
    %379 = vector.shape_cast %378 : vector<8xf32> to vector<8x1xf32>
    %380 = vector.broadcast %379 : vector<8x1xf32> to vector<8x8xf32>
    %381 = arith.subf %377, %380 : vector<8x8xf32>
    %382 = math.exp %381 : vector<8x8xf32>
    %cst_114 = arith.constant dense<0.000000e+00> : vector<8xf32>
    %383 = vector.multi_reduction <add>, %382, %cst_114 [1] : vector<8x8xf32> to vector<8xf32>
    %384 = vector.shape_cast %383 : vector<8xf32> to vector<8x1xf32>
    %385 = tpu.reciprocal %384 {approx = true} : vector<8x1xf32> -> vector<8x1xf32>
    %386 = vector.broadcast %385 : vector<8x1xf32> to vector<8x8xf32>
    %387 = arith.mulf %382, %386 : vector<8x8xf32>
    %388 = arith.truncf %387 : vector<8x8xf32> to vector<8x8xbf16>
    %cst_115 = arith.constant dense<0.000000e+00> : vector<8x128xf32>
    %389 = tpu.matmul %388, %376, %cst_115 {dimension_numbers = #tpu.dot_dimension_numbers<[1], [0], [0], [1], [0, 0, 1, 1], [], []>} : vector<8x8xbf16>, vector<8x128xbf16>, vector<8x128xf32> -> vector<8x128xf32>
    %390 = vector.extract_strided_slice %18 {offsets = [0, 512], sizes = [1, 128], strides = [1, 1]} : vector<8x1024xf32> to vector<1x128xf32>
    %391 = vector.extract_strided_slice %18 {offsets = [1, 512], sizes = [1, 128], strides = [1, 1]} : vector<8x1024xf32> to vector<1x128xf32>
    %392 = vector.extract_strided_slice %18 {offsets = [2, 512], sizes = [1, 128], strides = [1, 1]} : vector<8x1024xf32> to vector<1x128xf32>
    %393 = vector.extract_strided_slice %18 {offsets = [3, 512], sizes = [1, 128], strides = [1, 1]} : vector<8x1024xf32> to vector<1x128xf32>
    %394 = vector.extract_strided_slice %18 {offsets = [4, 512], sizes = [1, 128], strides = [1, 1]} : vector<8x1024xf32> to vector<1x128xf32>
    %395 = vector.extract_strided_slice %18 {offsets = [5, 512], sizes = [1, 128], strides = [1, 1]} : vector<8x1024xf32> to vector<1x128xf32>
    %396 = arith.addf %389, %9 : vector<8x128xf32>
    %cst_116 = arith.constant dense<0.000000e+00> : vector<8xf32>
    %397 = vector.multi_reduction <add>, %396, %cst_116 [1] : vector<8x128xf32> to vector<8xf32>
    %398 = vector.shape_cast %397 : vector<8xf32> to vector<8x1xf32>
    %cst_117 = arith.constant 1.280000e+02 : f32
    %399 = vector.broadcast %cst_117 : f32 to vector<8x1xf32>
    %400 = arith.divf %398, %399 : vector<8x1xf32>
    %401 = vector.broadcast %400 : vector<8x1xf32> to vector<8x128xf32>
    %402 = arith.subf %396, %401 : vector<8x128xf32>
    %403 = arith.mulf %402, %402 : vector<8x128xf32>
    %cst_118 = arith.constant dense<0.000000e+00> : vector<8xf32>
    %404 = vector.multi_reduction <add>, %403, %cst_118 [1] : vector<8x128xf32> to vector<8xf32>
    %405 = vector.shape_cast %404 : vector<8xf32> to vector<8x1xf32>
    %cst_119 = arith.constant 1.280000e+02 : f32
    %406 = vector.broadcast %cst_119 : f32 to vector<8x1xf32>
    %407 = arith.divf %405, %406 : vector<8x1xf32>
    %408 = vector.broadcast %400 : vector<8x1xf32> to vector<8x128xf32>
    %409 = arith.subf %396, %408 : vector<8x128xf32>
    %cst_120 = arith.constant 9.99999974E-6 : f32
    %410 = vector.broadcast %cst_120 : f32 to vector<8x1xf32>
    %411 = arith.addf %407, %410 : vector<8x1xf32>
    %412 = math.rsqrt %411 : vector<8x1xf32>
    %413 = vector.broadcast %412 : vector<8x1xf32> to vector<8x128xf32>
    %414 = arith.mulf %409, %413 : vector<8x128xf32>
    %415 = vector.broadcast %390 : vector<1x128xf32> to vector<8x128xf32>
    %416 = arith.mulf %414, %415 : vector<8x128xf32>
    %417 = vector.broadcast %391 : vector<1x128xf32> to vector<8x128xf32>
    %418 = arith.addf %416, %417 : vector<8x128xf32>
    %419 = arith.truncf %418 : vector<8x128xf32> to vector<8x128xbf16>
    %c4 = arith.constant 4 : index
    %c0_121 = arith.constant 0 : index
    %c0_122 = arith.constant 0 : index
    %420 = vector.load %arg10[%c4, %c0_121, %c0_122] : memref<8x128x128xbf16, #tpu.memory_space<vmem>>, vector<1x128x128xbf16>
    %421 = vector.shape_cast %420 : vector<1x128x128xbf16> to vector<128x128xbf16>
    %cst_123 = arith.constant dense<0.000000e+00> : vector<8x128xf32>
    %422 = tpu.matmul %419, %421, %cst_123 {dimension_numbers = #tpu.dot_dimension_numbers<[1], [0], [0], [1], [0, 0, 1, 1], [], []>} : vector<8x128xbf16>, vector<128x128xbf16>, vector<8x128xf32> -> vector<8x128xf32>
    %423 = vector.broadcast %392 : vector<1x128xf32> to vector<8x128xf32>
    %424 = arith.addf %422, %423 : vector<8x128xf32>
    %cst_124 = arith.constant 0.000000e+00 : f32
    %425 = vector.broadcast %cst_124 : f32 to vector<8x128xf32>
    %426 = arith.maximumf %424, %425 : vector<8x128xf32>
    %427 = arith.truncf %426 : vector<8x128xf32> to vector<8x128xbf16>
    %c4_125 = arith.constant 4 : index
    %c0_126 = arith.constant 0 : index
    %c0_127 = arith.constant 0 : index
    %428 = vector.load %arg11[%c4_125, %c0_126, %c0_127] : memref<8x128x128xbf16, #tpu.memory_space<vmem>>, vector<1x128x128xbf16>
    %429 = vector.shape_cast %428 : vector<1x128x128xbf16> to vector<128x128xbf16>
    %cst_128 = arith.constant dense<0.000000e+00> : vector<8x128xf32>
    %430 = tpu.matmul %427, %429, %cst_128 {dimension_numbers = #tpu.dot_dimension_numbers<[1], [0], [0], [1], [0, 0, 1, 1], [], []>} : vector<8x128xbf16>, vector<128x128xbf16>, vector<8x128xf32> -> vector<8x128xf32>
    %431 = vector.broadcast %393 : vector<1x128xf32> to vector<8x128xf32>
    %432 = arith.addf %430, %431 : vector<8x128xf32>
    %433 = arith.addf %432, %418 : vector<8x128xf32>
    %cst_129 = arith.constant dense<0.000000e+00> : vector<8xf32>
    %434 = vector.multi_reduction <add>, %433, %cst_129 [1] : vector<8x128xf32> to vector<8xf32>
    %435 = vector.shape_cast %434 : vector<8xf32> to vector<8x1xf32>
    %cst_130 = arith.constant 1.280000e+02 : f32
    %436 = vector.broadcast %cst_130 : f32 to vector<8x1xf32>
    %437 = arith.divf %435, %436 : vector<8x1xf32>
    %438 = vector.broadcast %437 : vector<8x1xf32> to vector<8x128xf32>
    %439 = arith.subf %433, %438 : vector<8x128xf32>
    %440 = arith.mulf %439, %439 : vector<8x128xf32>
    %cst_131 = arith.constant dense<0.000000e+00> : vector<8xf32>
    %441 = vector.multi_reduction <add>, %440, %cst_131 [1] : vector<8x128xf32> to vector<8xf32>
    %442 = vector.shape_cast %441 : vector<8xf32> to vector<8x1xf32>
    %cst_132 = arith.constant 1.280000e+02 : f32
    %443 = vector.broadcast %cst_132 : f32 to vector<8x1xf32>
    %444 = arith.divf %442, %443 : vector<8x1xf32>
    %445 = vector.broadcast %437 : vector<8x1xf32> to vector<8x128xf32>
    %446 = arith.subf %433, %445 : vector<8x128xf32>
    %cst_133 = arith.constant 9.99999974E-6 : f32
    %447 = vector.broadcast %cst_133 : f32 to vector<8x1xf32>
    %448 = arith.addf %444, %447 : vector<8x1xf32>
    %449 = math.rsqrt %448 : vector<8x1xf32>
    %450 = vector.broadcast %449 : vector<8x1xf32> to vector<8x128xf32>
    %451 = arith.mulf %446, %450 : vector<8x128xf32>
    %452 = vector.broadcast %394 : vector<1x128xf32> to vector<8x128xf32>
    %453 = arith.mulf %451, %452 : vector<8x128xf32>
    %454 = vector.broadcast %395 : vector<1x128xf32> to vector<8x128xf32>
    %455 = arith.addf %453, %454 : vector<8x128xf32>
    %456 = arith.addf %455, %9 : vector<8x128xf32>
    %457 = arith.truncf %456 : vector<8x128xf32> to vector<8x128xbf16>
    %c512 = arith.constant 512 : index
    %c0_134 = arith.constant 0 : index
    %458 = vector.load %arg12[%c512, %c0_134] : memref<1024x128xbf16, #tpu.memory_space<vmem>>, vector<128x128xbf16>
    %cst_135 = arith.constant dense<0.000000e+00> : vector<8x128xf32>
    %459 = tpu.matmul %457, %458, %cst_135 {dimension_numbers = #tpu.dot_dimension_numbers<[1], [0], [0], [1], [0, 0, 1, 1], [], []>} : vector<8x128xbf16>, vector<128x128xbf16>, vector<8x128xf32> -> vector<8x128xf32>
    %460 = arith.addf %373, %459 : vector<8x128xf32>
    %461 = vector.extract_strided_slice %14 {offsets = [0, 640], sizes = [8, 128], strides = [1, 1]} : vector<8x1024xbf16> to vector<8x128xbf16>
    %462 = vector.extract_strided_slice %17 {offsets = [0, 640], sizes = [8, 128], strides = [1, 1]} : vector<8x2048xbf16> to vector<8x128xbf16>
    %463 = vector.extract_strided_slice %17 {offsets = [0, 1664], sizes = [8, 128], strides = [1, 1]} : vector<8x2048xbf16> to vector<8x128xbf16>
    %cst_136 = arith.constant dense<0.000000e+00> : vector<8x8xf32>
    %464 = tpu.matmul %461, %462, %cst_136 {dimension_numbers = #tpu.dot_dimension_numbers<[1], [1], [0], [0], [0, 0, 1, 0], [], []>} : vector<8x128xbf16>, vector<8x128xbf16>, vector<8x8xf32> -> vector<8x8xf32>
    %cst_137 = arith.constant dense<0xFF800000> : vector<8xf32>
    %465 = vector.multi_reduction <maximumf>, %464, %cst_137 [1] : vector<8x8xf32> to vector<8xf32>
    %466 = vector.shape_cast %465 : vector<8xf32> to vector<8x1xf32>
    %467 = vector.broadcast %466 : vector<8x1xf32> to vector<8x8xf32>
    %468 = arith.subf %464, %467 : vector<8x8xf32>
    %469 = math.exp %468 : vector<8x8xf32>
    %cst_138 = arith.constant dense<0.000000e+00> : vector<8xf32>
    %470 = vector.multi_reduction <add>, %469, %cst_138 [1] : vector<8x8xf32> to vector<8xf32>
    %471 = vector.shape_cast %470 : vector<8xf32> to vector<8x1xf32>
    %472 = tpu.reciprocal %471 {approx = true} : vector<8x1xf32> -> vector<8x1xf32>
    %473 = vector.broadcast %472 : vector<8x1xf32> to vector<8x8xf32>
    %474 = arith.mulf %469, %473 : vector<8x8xf32>
    %475 = arith.truncf %474 : vector<8x8xf32> to vector<8x8xbf16>
    %cst_139 = arith.constant dense<0.000000e+00> : vector<8x128xf32>
    %476 = tpu.matmul %475, %463, %cst_139 {dimension_numbers = #tpu.dot_dimension_numbers<[1], [0], [0], [1], [0, 0, 1, 1], [], []>} : vector<8x8xbf16>, vector<8x128xbf16>, vector<8x128xf32> -> vector<8x128xf32>
    %477 = vector.extract_strided_slice %18 {offsets = [0, 640], sizes = [1, 128], strides = [1, 1]} : vector<8x1024xf32> to vector<1x128xf32>
    %478 = vector.extract_strided_slice %18 {offsets = [1, 640], sizes = [1, 128], strides = [1, 1]} : vector<8x1024xf32> to vector<1x128xf32>
    %479 = vector.extract_strided_slice %18 {offsets = [2, 640], sizes = [1, 128], strides = [1, 1]} : vector<8x1024xf32> to vector<1x128xf32>
    %480 = vector.extract_strided_slice %18 {offsets = [3, 640], sizes = [1, 128], strides = [1, 1]} : vector<8x1024xf32> to vector<1x128xf32>
    %481 = vector.extract_strided_slice %18 {offsets = [4, 640], sizes = [1, 128], strides = [1, 1]} : vector<8x1024xf32> to vector<1x128xf32>
    %482 = vector.extract_strided_slice %18 {offsets = [5, 640], sizes = [1, 128], strides = [1, 1]} : vector<8x1024xf32> to vector<1x128xf32>
    %483 = arith.addf %476, %9 : vector<8x128xf32>
    %cst_140 = arith.constant dense<0.000000e+00> : vector<8xf32>
    %484 = vector.multi_reduction <add>, %483, %cst_140 [1] : vector<8x128xf32> to vector<8xf32>
    %485 = vector.shape_cast %484 : vector<8xf32> to vector<8x1xf32>
    %cst_141 = arith.constant 1.280000e+02 : f32
    %486 = vector.broadcast %cst_141 : f32 to vector<8x1xf32>
    %487 = arith.divf %485, %486 : vector<8x1xf32>
    %488 = vector.broadcast %487 : vector<8x1xf32> to vector<8x128xf32>
    %489 = arith.subf %483, %488 : vector<8x128xf32>
    %490 = arith.mulf %489, %489 : vector<8x128xf32>
    %cst_142 = arith.constant dense<0.000000e+00> : vector<8xf32>
    %491 = vector.multi_reduction <add>, %490, %cst_142 [1] : vector<8x128xf32> to vector<8xf32>
    %492 = vector.shape_cast %491 : vector<8xf32> to vector<8x1xf32>
    %cst_143 = arith.constant 1.280000e+02 : f32
    %493 = vector.broadcast %cst_143 : f32 to vector<8x1xf32>
    %494 = arith.divf %492, %493 : vector<8x1xf32>
    %495 = vector.broadcast %487 : vector<8x1xf32> to vector<8x128xf32>
    %496 = arith.subf %483, %495 : vector<8x128xf32>
    %cst_144 = arith.constant 9.99999974E-6 : f32
    %497 = vector.broadcast %cst_144 : f32 to vector<8x1xf32>
    %498 = arith.addf %494, %497 : vector<8x1xf32>
    %499 = math.rsqrt %498 : vector<8x1xf32>
    %500 = vector.broadcast %499 : vector<8x1xf32> to vector<8x128xf32>
    %501 = arith.mulf %496, %500 : vector<8x128xf32>
    %502 = vector.broadcast %477 : vector<1x128xf32> to vector<8x128xf32>
    %503 = arith.mulf %501, %502 : vector<8x128xf32>
    %504 = vector.broadcast %478 : vector<1x128xf32> to vector<8x128xf32>
    %505 = arith.addf %503, %504 : vector<8x128xf32>
    %506 = arith.truncf %505 : vector<8x128xf32> to vector<8x128xbf16>
    %c5 = arith.constant 5 : index
    %c0_145 = arith.constant 0 : index
    %c0_146 = arith.constant 0 : index
    %507 = vector.load %arg10[%c5, %c0_145, %c0_146] : memref<8x128x128xbf16, #tpu.memory_space<vmem>>, vector<1x128x128xbf16>
    %508 = vector.shape_cast %507 : vector<1x128x128xbf16> to vector<128x128xbf16>
    %cst_147 = arith.constant dense<0.000000e+00> : vector<8x128xf32>
    %509 = tpu.matmul %506, %508, %cst_147 {dimension_numbers = #tpu.dot_dimension_numbers<[1], [0], [0], [1], [0, 0, 1, 1], [], []>} : vector<8x128xbf16>, vector<128x128xbf16>, vector<8x128xf32> -> vector<8x128xf32>
    %510 = vector.broadcast %479 : vector<1x128xf32> to vector<8x128xf32>
    %511 = arith.addf %509, %510 : vector<8x128xf32>
    %cst_148 = arith.constant 0.000000e+00 : f32
    %512 = vector.broadcast %cst_148 : f32 to vector<8x128xf32>
    %513 = arith.maximumf %511, %512 : vector<8x128xf32>
    %514 = arith.truncf %513 : vector<8x128xf32> to vector<8x128xbf16>
    %c5_149 = arith.constant 5 : index
    %c0_150 = arith.constant 0 : index
    %c0_151 = arith.constant 0 : index
    %515 = vector.load %arg11[%c5_149, %c0_150, %c0_151] : memref<8x128x128xbf16, #tpu.memory_space<vmem>>, vector<1x128x128xbf16>
    %516 = vector.shape_cast %515 : vector<1x128x128xbf16> to vector<128x128xbf16>
    %cst_152 = arith.constant dense<0.000000e+00> : vector<8x128xf32>
    %517 = tpu.matmul %514, %516, %cst_152 {dimension_numbers = #tpu.dot_dimension_numbers<[1], [0], [0], [1], [0, 0, 1, 1], [], []>} : vector<8x128xbf16>, vector<128x128xbf16>, vector<8x128xf32> -> vector<8x128xf32>
    %518 = vector.broadcast %480 : vector<1x128xf32> to vector<8x128xf32>
    %519 = arith.addf %517, %518 : vector<8x128xf32>
    %520 = arith.addf %519, %505 : vector<8x128xf32>
    %cst_153 = arith.constant dense<0.000000e+00> : vector<8xf32>
    %521 = vector.multi_reduction <add>, %520, %cst_153 [1] : vector<8x128xf32> to vector<8xf32>
    %522 = vector.shape_cast %521 : vector<8xf32> to vector<8x1xf32>
    %cst_154 = arith.constant 1.280000e+02 : f32
    %523 = vector.broadcast %cst_154 : f32 to vector<8x1xf32>
    %524 = arith.divf %522, %523 : vector<8x1xf32>
    %525 = vector.broadcast %524 : vector<8x1xf32> to vector<8x128xf32>
    %526 = arith.subf %520, %525 : vector<8x128xf32>
    %527 = arith.mulf %526, %526 : vector<8x128xf32>
    %cst_155 = arith.constant dense<0.000000e+00> : vector<8xf32>
    %528 = vector.multi_reduction <add>, %527, %cst_155 [1] : vector<8x128xf32> to vector<8xf32>
    %529 = vector.shape_cast %528 : vector<8xf32> to vector<8x1xf32>
    %cst_156 = arith.constant 1.280000e+02 : f32
    %530 = vector.broadcast %cst_156 : f32 to vector<8x1xf32>
    %531 = arith.divf %529, %530 : vector<8x1xf32>
    %532 = vector.broadcast %524 : vector<8x1xf32> to vector<8x128xf32>
    %533 = arith.subf %520, %532 : vector<8x128xf32>
    %cst_157 = arith.constant 9.99999974E-6 : f32
    %534 = vector.broadcast %cst_157 : f32 to vector<8x1xf32>
    %535 = arith.addf %531, %534 : vector<8x1xf32>
    %536 = math.rsqrt %535 : vector<8x1xf32>
    %537 = vector.broadcast %536 : vector<8x1xf32> to vector<8x128xf32>
    %538 = arith.mulf %533, %537 : vector<8x128xf32>
    %539 = vector.broadcast %481 : vector<1x128xf32> to vector<8x128xf32>
    %540 = arith.mulf %538, %539 : vector<8x128xf32>
    %541 = vector.broadcast %482 : vector<1x128xf32> to vector<8x128xf32>
    %542 = arith.addf %540, %541 : vector<8x128xf32>
    %543 = arith.addf %542, %9 : vector<8x128xf32>
    %544 = arith.truncf %543 : vector<8x128xf32> to vector<8x128xbf16>
    %c640 = arith.constant 640 : index
    %c0_158 = arith.constant 0 : index
    %545 = vector.load %arg12[%c640, %c0_158] : memref<1024x128xbf16, #tpu.memory_space<vmem>>, vector<128x128xbf16>
    %cst_159 = arith.constant dense<0.000000e+00> : vector<8x128xf32>
    %546 = tpu.matmul %544, %545, %cst_159 {dimension_numbers = #tpu.dot_dimension_numbers<[1], [0], [0], [1], [0, 0, 1, 1], [], []>} : vector<8x128xbf16>, vector<128x128xbf16>, vector<8x128xf32> -> vector<8x128xf32>
    %547 = arith.addf %460, %546 : vector<8x128xf32>
    %548 = vector.extract_strided_slice %14 {offsets = [0, 768], sizes = [8, 128], strides = [1, 1]} : vector<8x1024xbf16> to vector<8x128xbf16>
    %549 = vector.extract_strided_slice %17 {offsets = [0, 768], sizes = [8, 128], strides = [1, 1]} : vector<8x2048xbf16> to vector<8x128xbf16>
    %550 = vector.extract_strided_slice %17 {offsets = [0, 1792], sizes = [8, 128], strides = [1, 1]} : vector<8x2048xbf16> to vector<8x128xbf16>
    %cst_160 = arith.constant dense<0.000000e+00> : vector<8x8xf32>
    %551 = tpu.matmul %548, %549, %cst_160 {dimension_numbers = #tpu.dot_dimension_numbers<[1], [1], [0], [0], [0, 0, 1, 0], [], []>} : vector<8x128xbf16>, vector<8x128xbf16>, vector<8x8xf32> -> vector<8x8xf32>
    %cst_161 = arith.constant dense<0xFF800000> : vector<8xf32>
    %552 = vector.multi_reduction <maximumf>, %551, %cst_161 [1] : vector<8x8xf32> to vector<8xf32>
    %553 = vector.shape_cast %552 : vector<8xf32> to vector<8x1xf32>
    %554 = vector.broadcast %553 : vector<8x1xf32> to vector<8x8xf32>
    %555 = arith.subf %551, %554 : vector<8x8xf32>
    %556 = math.exp %555 : vector<8x8xf32>
    %cst_162 = arith.constant dense<0.000000e+00> : vector<8xf32>
    %557 = vector.multi_reduction <add>, %556, %cst_162 [1] : vector<8x8xf32> to vector<8xf32>
    %558 = vector.shape_cast %557 : vector<8xf32> to vector<8x1xf32>
    %559 = tpu.reciprocal %558 {approx = true} : vector<8x1xf32> -> vector<8x1xf32>
    %560 = vector.broadcast %559 : vector<8x1xf32> to vector<8x8xf32>
    %561 = arith.mulf %556, %560 : vector<8x8xf32>
    %562 = arith.truncf %561 : vector<8x8xf32> to vector<8x8xbf16>
    %cst_163 = arith.constant dense<0.000000e+00> : vector<8x128xf32>
    %563 = tpu.matmul %562, %550, %cst_163 {dimension_numbers = #tpu.dot_dimension_numbers<[1], [0], [0], [1], [0, 0, 1, 1], [], []>} : vector<8x8xbf16>, vector<8x128xbf16>, vector<8x128xf32> -> vector<8x128xf32>
    %564 = vector.extract_strided_slice %18 {offsets = [0, 768], sizes = [1, 128], strides = [1, 1]} : vector<8x1024xf32> to vector<1x128xf32>
    %565 = vector.extract_strided_slice %18 {offsets = [1, 768], sizes = [1, 128], strides = [1, 1]} : vector<8x1024xf32> to vector<1x128xf32>
    %566 = vector.extract_strided_slice %18 {offsets = [2, 768], sizes = [1, 128], strides = [1, 1]} : vector<8x1024xf32> to vector<1x128xf32>
    %567 = vector.extract_strided_slice %18 {offsets = [3, 768], sizes = [1, 128], strides = [1, 1]} : vector<8x1024xf32> to vector<1x128xf32>
    %568 = vector.extract_strided_slice %18 {offsets = [4, 768], sizes = [1, 128], strides = [1, 1]} : vector<8x1024xf32> to vector<1x128xf32>
    %569 = vector.extract_strided_slice %18 {offsets = [5, 768], sizes = [1, 128], strides = [1, 1]} : vector<8x1024xf32> to vector<1x128xf32>
    %570 = arith.addf %563, %9 : vector<8x128xf32>
    %cst_164 = arith.constant dense<0.000000e+00> : vector<8xf32>
    %571 = vector.multi_reduction <add>, %570, %cst_164 [1] : vector<8x128xf32> to vector<8xf32>
    %572 = vector.shape_cast %571 : vector<8xf32> to vector<8x1xf32>
    %cst_165 = arith.constant 1.280000e+02 : f32
    %573 = vector.broadcast %cst_165 : f32 to vector<8x1xf32>
    %574 = arith.divf %572, %573 : vector<8x1xf32>
    %575 = vector.broadcast %574 : vector<8x1xf32> to vector<8x128xf32>
    %576 = arith.subf %570, %575 : vector<8x128xf32>
    %577 = arith.mulf %576, %576 : vector<8x128xf32>
    %cst_166 = arith.constant dense<0.000000e+00> : vector<8xf32>
    %578 = vector.multi_reduction <add>, %577, %cst_166 [1] : vector<8x128xf32> to vector<8xf32>
    %579 = vector.shape_cast %578 : vector<8xf32> to vector<8x1xf32>
    %cst_167 = arith.constant 1.280000e+02 : f32
    %580 = vector.broadcast %cst_167 : f32 to vector<8x1xf32>
    %581 = arith.divf %579, %580 : vector<8x1xf32>
    %582 = vector.broadcast %574 : vector<8x1xf32> to vector<8x128xf32>
    %583 = arith.subf %570, %582 : vector<8x128xf32>
    %cst_168 = arith.constant 9.99999974E-6 : f32
    %584 = vector.broadcast %cst_168 : f32 to vector<8x1xf32>
    %585 = arith.addf %581, %584 : vector<8x1xf32>
    %586 = math.rsqrt %585 : vector<8x1xf32>
    %587 = vector.broadcast %586 : vector<8x1xf32> to vector<8x128xf32>
    %588 = arith.mulf %583, %587 : vector<8x128xf32>
    %589 = vector.broadcast %564 : vector<1x128xf32> to vector<8x128xf32>
    %590 = arith.mulf %588, %589 : vector<8x128xf32>
    %591 = vector.broadcast %565 : vector<1x128xf32> to vector<8x128xf32>
    %592 = arith.addf %590, %591 : vector<8x128xf32>
    %593 = arith.truncf %592 : vector<8x128xf32> to vector<8x128xbf16>
    %c6 = arith.constant 6 : index
    %c0_169 = arith.constant 0 : index
    %c0_170 = arith.constant 0 : index
    %594 = vector.load %arg10[%c6, %c0_169, %c0_170] : memref<8x128x128xbf16, #tpu.memory_space<vmem>>, vector<1x128x128xbf16>
    %595 = vector.shape_cast %594 : vector<1x128x128xbf16> to vector<128x128xbf16>
    %cst_171 = arith.constant dense<0.000000e+00> : vector<8x128xf32>
    %596 = tpu.matmul %593, %595, %cst_171 {dimension_numbers = #tpu.dot_dimension_numbers<[1], [0], [0], [1], [0, 0, 1, 1], [], []>} : vector<8x128xbf16>, vector<128x128xbf16>, vector<8x128xf32> -> vector<8x128xf32>
    %597 = vector.broadcast %566 : vector<1x128xf32> to vector<8x128xf32>
    %598 = arith.addf %596, %597 : vector<8x128xf32>
    %cst_172 = arith.constant 0.000000e+00 : f32
    %599 = vector.broadcast %cst_172 : f32 to vector<8x128xf32>
    %600 = arith.maximumf %598, %599 : vector<8x128xf32>
    %601 = arith.truncf %600 : vector<8x128xf32> to vector<8x128xbf16>
    %c6_173 = arith.constant 6 : index
    %c0_174 = arith.constant 0 : index
    %c0_175 = arith.constant 0 : index
    %602 = vector.load %arg11[%c6_173, %c0_174, %c0_175] : memref<8x128x128xbf16, #tpu.memory_space<vmem>>, vector<1x128x128xbf16>
    %603 = vector.shape_cast %602 : vector<1x128x128xbf16> to vector<128x128xbf16>
    %cst_176 = arith.constant dense<0.000000e+00> : vector<8x128xf32>
    %604 = tpu.matmul %601, %603, %cst_176 {dimension_numbers = #tpu.dot_dimension_numbers<[1], [0], [0], [1], [0, 0, 1, 1], [], []>} : vector<8x128xbf16>, vector<128x128xbf16>, vector<8x128xf32> -> vector<8x128xf32>
    %605 = vector.broadcast %567 : vector<1x128xf32> to vector<8x128xf32>
    %606 = arith.addf %604, %605 : vector<8x128xf32>
    %607 = arith.addf %606, %592 : vector<8x128xf32>
    %cst_177 = arith.constant dense<0.000000e+00> : vector<8xf32>
    %608 = vector.multi_reduction <add>, %607, %cst_177 [1] : vector<8x128xf32> to vector<8xf32>
    %609 = vector.shape_cast %608 : vector<8xf32> to vector<8x1xf32>
    %cst_178 = arith.constant 1.280000e+02 : f32
    %610 = vector.broadcast %cst_178 : f32 to vector<8x1xf32>
    %611 = arith.divf %609, %610 : vector<8x1xf32>
    %612 = vector.broadcast %611 : vector<8x1xf32> to vector<8x128xf32>
    %613 = arith.subf %607, %612 : vector<8x128xf32>
    %614 = arith.mulf %613, %613 : vector<8x128xf32>
    %cst_179 = arith.constant dense<0.000000e+00> : vector<8xf32>
    %615 = vector.multi_reduction <add>, %614, %cst_179 [1] : vector<8x128xf32> to vector<8xf32>
    %616 = vector.shape_cast %615 : vector<8xf32> to vector<8x1xf32>
    %cst_180 = arith.constant 1.280000e+02 : f32
    %617 = vector.broadcast %cst_180 : f32 to vector<8x1xf32>
    %618 = arith.divf %616, %617 : vector<8x1xf32>
    %619 = vector.broadcast %611 : vector<8x1xf32> to vector<8x128xf32>
    %620 = arith.subf %607, %619 : vector<8x128xf32>
    %cst_181 = arith.constant 9.99999974E-6 : f32
    %621 = vector.broadcast %cst_181 : f32 to vector<8x1xf32>
    %622 = arith.addf %618, %621 : vector<8x1xf32>
    %623 = math.rsqrt %622 : vector<8x1xf32>
    %624 = vector.broadcast %623 : vector<8x1xf32> to vector<8x128xf32>
    %625 = arith.mulf %620, %624 : vector<8x128xf32>
    %626 = vector.broadcast %568 : vector<1x128xf32> to vector<8x128xf32>
    %627 = arith.mulf %625, %626 : vector<8x128xf32>
    %628 = vector.broadcast %569 : vector<1x128xf32> to vector<8x128xf32>
    %629 = arith.addf %627, %628 : vector<8x128xf32>
    %630 = arith.addf %629, %9 : vector<8x128xf32>
    %631 = arith.truncf %630 : vector<8x128xf32> to vector<8x128xbf16>
    %c768 = arith.constant 768 : index
    %c0_182 = arith.constant 0 : index
    %632 = vector.load %arg12[%c768, %c0_182] : memref<1024x128xbf16, #tpu.memory_space<vmem>>, vector<128x128xbf16>
    %cst_183 = arith.constant dense<0.000000e+00> : vector<8x128xf32>
    %633 = tpu.matmul %631, %632, %cst_183 {dimension_numbers = #tpu.dot_dimension_numbers<[1], [0], [0], [1], [0, 0, 1, 1], [], []>} : vector<8x128xbf16>, vector<128x128xbf16>, vector<8x128xf32> -> vector<8x128xf32>
    %634 = arith.addf %547, %633 : vector<8x128xf32>
    %635 = vector.extract_strided_slice %14 {offsets = [0, 896], sizes = [8, 128], strides = [1, 1]} : vector<8x1024xbf16> to vector<8x128xbf16>
    %636 = vector.extract_strided_slice %17 {offsets = [0, 896], sizes = [8, 128], strides = [1, 1]} : vector<8x2048xbf16> to vector<8x128xbf16>
    %637 = vector.extract_strided_slice %17 {offsets = [0, 1920], sizes = [8, 128], strides = [1, 1]} : vector<8x2048xbf16> to vector<8x128xbf16>
    %cst_184 = arith.constant dense<0.000000e+00> : vector<8x8xf32>
    %638 = tpu.matmul %635, %636, %cst_184 {dimension_numbers = #tpu.dot_dimension_numbers<[1], [1], [0], [0], [0, 0, 1, 0], [], []>} : vector<8x128xbf16>, vector<8x128xbf16>, vector<8x8xf32> -> vector<8x8xf32>
    %cst_185 = arith.constant dense<0xFF800000> : vector<8xf32>
    %639 = vector.multi_reduction <maximumf>, %638, %cst_185 [1] : vector<8x8xf32> to vector<8xf32>
    %640 = vector.shape_cast %639 : vector<8xf32> to vector<8x1xf32>
    %641 = vector.broadcast %640 : vector<8x1xf32> to vector<8x8xf32>
    %642 = arith.subf %638, %641 : vector<8x8xf32>
    %643 = math.exp %642 : vector<8x8xf32>
    %cst_186 = arith.constant dense<0.000000e+00> : vector<8xf32>
    %644 = vector.multi_reduction <add>, %643, %cst_186 [1] : vector<8x8xf32> to vector<8xf32>
    %645 = vector.shape_cast %644 : vector<8xf32> to vector<8x1xf32>
    %646 = tpu.reciprocal %645 {approx = true} : vector<8x1xf32> -> vector<8x1xf32>
    %647 = vector.broadcast %646 : vector<8x1xf32> to vector<8x8xf32>
    %648 = arith.mulf %643, %647 : vector<8x8xf32>
    %649 = arith.truncf %648 : vector<8x8xf32> to vector<8x8xbf16>
    %cst_187 = arith.constant dense<0.000000e+00> : vector<8x128xf32>
    %650 = tpu.matmul %649, %637, %cst_187 {dimension_numbers = #tpu.dot_dimension_numbers<[1], [0], [0], [1], [0, 0, 1, 1], [], []>} : vector<8x8xbf16>, vector<8x128xbf16>, vector<8x128xf32> -> vector<8x128xf32>
    %651 = vector.extract_strided_slice %18 {offsets = [0, 896], sizes = [1, 128], strides = [1, 1]} : vector<8x1024xf32> to vector<1x128xf32>
    %652 = vector.extract_strided_slice %18 {offsets = [1, 896], sizes = [1, 128], strides = [1, 1]} : vector<8x1024xf32> to vector<1x128xf32>
    %653 = vector.extract_strided_slice %18 {offsets = [2, 896], sizes = [1, 128], strides = [1, 1]} : vector<8x1024xf32> to vector<1x128xf32>
    %654 = vector.extract_strided_slice %18 {offsets = [3, 896], sizes = [1, 128], strides = [1, 1]} : vector<8x1024xf32> to vector<1x128xf32>
    %655 = vector.extract_strided_slice %18 {offsets = [4, 896], sizes = [1, 128], strides = [1, 1]} : vector<8x1024xf32> to vector<1x128xf32>
    %656 = vector.extract_strided_slice %18 {offsets = [5, 896], sizes = [1, 128], strides = [1, 1]} : vector<8x1024xf32> to vector<1x128xf32>
    %657 = arith.addf %650, %9 : vector<8x128xf32>
    %cst_188 = arith.constant dense<0.000000e+00> : vector<8xf32>
    %658 = vector.multi_reduction <add>, %657, %cst_188 [1] : vector<8x128xf32> to vector<8xf32>
    %659 = vector.shape_cast %658 : vector<8xf32> to vector<8x1xf32>
    %cst_189 = arith.constant 1.280000e+02 : f32
    %660 = vector.broadcast %cst_189 : f32 to vector<8x1xf32>
    %661 = arith.divf %659, %660 : vector<8x1xf32>
    %662 = vector.broadcast %661 : vector<8x1xf32> to vector<8x128xf32>
    %663 = arith.subf %657, %662 : vector<8x128xf32>
    %664 = arith.mulf %663, %663 : vector<8x128xf32>
    %cst_190 = arith.constant dense<0.000000e+00> : vector<8xf32>
    %665 = vector.multi_reduction <add>, %664, %cst_190 [1] : vector<8x128xf32> to vector<8xf32>
    %666 = vector.shape_cast %665 : vector<8xf32> to vector<8x1xf32>
    %cst_191 = arith.constant 1.280000e+02 : f32
    %667 = vector.broadcast %cst_191 : f32 to vector<8x1xf32>
    %668 = arith.divf %666, %667 : vector<8x1xf32>
    %669 = vector.broadcast %661 : vector<8x1xf32> to vector<8x128xf32>
    %670 = arith.subf %657, %669 : vector<8x128xf32>
    %cst_192 = arith.constant 9.99999974E-6 : f32
    %671 = vector.broadcast %cst_192 : f32 to vector<8x1xf32>
    %672 = arith.addf %668, %671 : vector<8x1xf32>
    %673 = math.rsqrt %672 : vector<8x1xf32>
    %674 = vector.broadcast %673 : vector<8x1xf32> to vector<8x128xf32>
    %675 = arith.mulf %670, %674 : vector<8x128xf32>
    %676 = vector.broadcast %651 : vector<1x128xf32> to vector<8x128xf32>
    %677 = arith.mulf %675, %676 : vector<8x128xf32>
    %678 = vector.broadcast %652 : vector<1x128xf32> to vector<8x128xf32>
    %679 = arith.addf %677, %678 : vector<8x128xf32>
    %680 = arith.truncf %679 : vector<8x128xf32> to vector<8x128xbf16>
    %c7 = arith.constant 7 : index
    %c0_193 = arith.constant 0 : index
    %c0_194 = arith.constant 0 : index
    %681 = vector.load %arg10[%c7, %c0_193, %c0_194] : memref<8x128x128xbf16, #tpu.memory_space<vmem>>, vector<1x128x128xbf16>
    %682 = vector.shape_cast %681 : vector<1x128x128xbf16> to vector<128x128xbf16>
    %cst_195 = arith.constant dense<0.000000e+00> : vector<8x128xf32>
    %683 = tpu.matmul %680, %682, %cst_195 {dimension_numbers = #tpu.dot_dimension_numbers<[1], [0], [0], [1], [0, 0, 1, 1], [], []>} : vector<8x128xbf16>, vector<128x128xbf16>, vector<8x128xf32> -> vector<8x128xf32>
    %684 = vector.broadcast %653 : vector<1x128xf32> to vector<8x128xf32>
    %685 = arith.addf %683, %684 : vector<8x128xf32>
    %cst_196 = arith.constant 0.000000e+00 : f32
    %686 = vector.broadcast %cst_196 : f32 to vector<8x128xf32>
    %687 = arith.maximumf %685, %686 : vector<8x128xf32>
    %688 = arith.truncf %687 : vector<8x128xf32> to vector<8x128xbf16>
    %c7_197 = arith.constant 7 : index
    %c0_198 = arith.constant 0 : index
    %c0_199 = arith.constant 0 : index
    %689 = vector.load %arg11[%c7_197, %c0_198, %c0_199] : memref<8x128x128xbf16, #tpu.memory_space<vmem>>, vector<1x128x128xbf16>
    %690 = vector.shape_cast %689 : vector<1x128x128xbf16> to vector<128x128xbf16>
    %cst_200 = arith.constant dense<0.000000e+00> : vector<8x128xf32>
    %691 = tpu.matmul %688, %690, %cst_200 {dimension_numbers = #tpu.dot_dimension_numbers<[1], [0], [0], [1], [0, 0, 1, 1], [], []>} : vector<8x128xbf16>, vector<128x128xbf16>, vector<8x128xf32> -> vector<8x128xf32>
    %692 = vector.broadcast %654 : vector<1x128xf32> to vector<8x128xf32>
    %693 = arith.addf %691, %692 : vector<8x128xf32>
    %694 = arith.addf %693, %679 : vector<8x128xf32>
    %cst_201 = arith.constant dense<0.000000e+00> : vector<8xf32>
    %695 = vector.multi_reduction <add>, %694, %cst_201 [1] : vector<8x128xf32> to vector<8xf32>
    %696 = vector.shape_cast %695 : vector<8xf32> to vector<8x1xf32>
    %cst_202 = arith.constant 1.280000e+02 : f32
    %697 = vector.broadcast %cst_202 : f32 to vector<8x1xf32>
    %698 = arith.divf %696, %697 : vector<8x1xf32>
    %699 = vector.broadcast %698 : vector<8x1xf32> to vector<8x128xf32>
    %700 = arith.subf %694, %699 : vector<8x128xf32>
    %701 = arith.mulf %700, %700 : vector<8x128xf32>
    %cst_203 = arith.constant dense<0.000000e+00> : vector<8xf32>
    %702 = vector.multi_reduction <add>, %701, %cst_203 [1] : vector<8x128xf32> to vector<8xf32>
    %703 = vector.shape_cast %702 : vector<8xf32> to vector<8x1xf32>
    %cst_204 = arith.constant 1.280000e+02 : f32
    %704 = vector.broadcast %cst_204 : f32 to vector<8x1xf32>
    %705 = arith.divf %703, %704 : vector<8x1xf32>
    %706 = vector.broadcast %698 : vector<8x1xf32> to vector<8x128xf32>
    %707 = arith.subf %694, %706 : vector<8x128xf32>
    %cst_205 = arith.constant 9.99999974E-6 : f32
    %708 = vector.broadcast %cst_205 : f32 to vector<8x1xf32>
    %709 = arith.addf %705, %708 : vector<8x1xf32>
    %710 = math.rsqrt %709 : vector<8x1xf32>
    %711 = vector.broadcast %710 : vector<8x1xf32> to vector<8x128xf32>
    %712 = arith.mulf %707, %711 : vector<8x128xf32>
    %713 = vector.broadcast %655 : vector<1x128xf32> to vector<8x128xf32>
    %714 = arith.mulf %712, %713 : vector<8x128xf32>
    %715 = vector.broadcast %656 : vector<1x128xf32> to vector<8x128xf32>
    %716 = arith.addf %714, %715 : vector<8x128xf32>
    %717 = arith.addf %716, %9 : vector<8x128xf32>
    %718 = arith.truncf %717 : vector<8x128xf32> to vector<8x128xbf16>
    %c896 = arith.constant 896 : index
    %c0_206 = arith.constant 0 : index
    %719 = vector.load %arg12[%c896, %c0_206] : memref<1024x128xbf16, #tpu.memory_space<vmem>>, vector<128x128xbf16>
    %cst_207 = arith.constant dense<0.000000e+00> : vector<8x128xf32>
    %720 = tpu.matmul %718, %719, %cst_207 {dimension_numbers = #tpu.dot_dimension_numbers<[1], [0], [0], [1], [0, 0, 1, 1], [], []>} : vector<8x128xbf16>, vector<128x128xbf16>, vector<8x128xf32> -> vector<8x128xf32>
    %721 = arith.addf %634, %720 : vector<8x128xf32>
    %722 = vector.extract_strided_slice %18 {offsets = [6, 0], sizes = [1, 128], strides = [1, 1]} : vector<8x1024xf32> to vector<1x128xf32>
    %723 = vector.broadcast %722 : vector<1x128xf32> to vector<8x128xf32>
    %724 = arith.addf %721, %723 : vector<8x128xf32>
    %c3_i32_208 = arith.constant 3 : i32
    %725 = tpu.memref_slice %arg14[%c3_i32_208] : memref<4x!tpu.dma_semaphore, #tpu.memory_space<semaphore_mem>> -> memref<1x!tpu.dma_semaphore, #tpu.memory_space<semaphore_mem>>
    %726 = tpu.memref_squeeze %725 : memref<1x!tpu.dma_semaphore, #tpu.memory_space<semaphore_mem>> -> memref<!tpu.dma_semaphore, #tpu.memory_space<semaphore_mem>>
    tpu.wait_dma2 semaphore(%726 : memref<!tpu.dma_semaphore, #tpu.memory_space<semaphore_mem>>) src(%arg8 : memref<128x256xbf16, #tpu.memory_space<any>>) dst(%arg13 : memref<128x256xbf16, #tpu.memory_space<vmem>>)
    %727 = arith.truncf %724 : vector<8x128xf32> to vector<8x128xbf16>
    %c0_209 = arith.constant 0 : index
    %c0_210 = arith.constant 0 : index
    %728 = vector.load %arg13[%c0_209, %c0_210] : memref<128x256xbf16, #tpu.memory_space<vmem>>, vector<128x256xbf16>
    %cst_211 = arith.constant dense<0.000000e+00> : vector<8x256xf32>
    %729 = tpu.matmul %727, %728, %cst_211 {dimension_numbers = #tpu.dot_dimension_numbers<[1], [0], [0], [1], [0, 0, 1, 1], [], []>} : vector<8x128xbf16>, vector<128x256xbf16>, vector<8x256xf32> -> vector<8x256xf32>
    %c0_212 = arith.constant 0 : index
    %c0_213 = arith.constant 0 : index
    %730 = vector.load %arg9[%c0_212, %c0_213] : memref<8x256xf32, #tpu.memory_space<vmem>>, vector<8x256xf32>
    tpu.vector_store %arg9[%c0_212, %c0_213], %729 {strides = array<i32>} : memref<8x256xf32, #tpu.memory_space<vmem>>, vector<8x256xf32>,
    return
  }
}

</mosaic_0001>

<llo_original>
// kernel: wider_block_8.1
$region0: #{wider_block_8.1}
  #allocation0 [shape = 'u32[]', space=smem, size = 0x4, offset = 0x4, fixed_abs, tag = 'smem constant byte address 0x4 - core index']
  #allocation1 [shape = 'u32[144,128]{1,0:T(1,128)}', space=vmem, size = 0x12000, scoped, tag = 'internal scratch']
  #allocation2 [shape = 'bf16[8,128,128]{2,1,0:T(8,128)(2,1)}', space=vmem, size = 0x40000, scoped, tag = 'scratch operand']
  #allocation3 [shape = 'bf16[8,128,128]{2,1,0:T(8,128)(2,1)}', space=vmem, size = 0x40000, scoped, tag = 'scratch operand']
  #allocation4 [shape = 'bf16[1024,128]{1,0:T(8,128)(2,1)}', space=vmem, size = 0x40000, scoped, tag = 'scratch operand']
  #allocation5 [shape = 'bf16[128,256]{1,0:T(8,128)(2,1)}', space=vmem, size = 0x10000, scoped, tag = 'scratch operand']
  #allocation6 [shape = 's32[4]{0}', space=sflag, size = 0x10, scoped, tag = 'scratch operand']
  #allocation17 [shape = 's32[]', space=sflag, size = 0x4, offset = 0, fixed_abs, tag = 'sflag constant byte address 0x0 - dummy sync flag']
  #allocation18 [shape = 's32[]', space=sflag, size = 0x4, offset = 0, fixed_abs, tag = 'sflag constant byte address 0x0 - dummy sync flag']
  #allocation19 [shape = 'u32[]', space=smem, size = 0x4, offset = 0x44, fixed_abs, tag = 'smem constant byte address 0x44 - assertion arg 0']
  #allocation20 [shape = 'u32[]', space=smem, size = 0x4, offset = 0x48, fixed_abs, tag = 'smem constant byte address 0x48 - assertion arg 1']
  #allocation21 [shape = 's32[]', space=sflag, size = 0x4, offset = 0, fixed_abs, tag = 'sflag constant byte address 0x0 - dummy sync flag']
  #allocation22 [shape = 's32[]', space=sflag, size = 0x4, offset = 0, fixed_abs, tag = 'sflag constant byte address 0x0 - dummy sync flag']
  #allocation23 [shape = 's32[]', space=sflag, size = 0x4, offset = 0, fixed_abs, tag = 'sflag constant byte address 0x0 - dummy sync flag']
  #allocation24 [shape = 's32[]', space=sflag, size = 0x4, offset = 0, fixed_abs, tag = 'sflag constant byte address 0x0 - dummy sync flag']
  #allocation25 [shape = 's32[]', space=sflag, size = 0x4, offset = 0, fixed_abs, tag = 'sflag constant byte address 0x0 - dummy sync flag']
  #allocation26 [shape = 's32[]', space=sflag, size = 0x4, offset = 0, fixed_abs, tag = 'sflag constant byte address 0x0 - dummy sync flag']
  %s0 = inlined_call_operand.hbm [shape: f32[8,128], index: 0, kind: input, shape index: {}]
  %s1 = inlined_call_operand.hbm [shape: f32[8,128], index: 1, kind: input, shape index: {}]
  %s2 = inlined_call_operand.hbm [shape: bf16[128,1024], index: 2, kind: input, shape index: {}]
  %s3 = inlined_call_operand.hbm [shape: bf16[128,2048], index: 3, kind: input, shape index: {}]
  %s4 = inlined_call_operand.hbm [shape: f32[8,1024], index: 4, kind: input, shape index: {}]
  %s5 = inlined_call_operand.hbm [shape: bf16[8,128,128], index: 5, kind: input, shape index: {}]
  %s6 = inlined_call_operand.hbm [shape: bf16[8,128,128], index: 6, kind: input, shape index: {}]
  %s7 = inlined_call_operand.hbm [shape: bf16[1024,128], index: 7, kind: input, shape index: {}]
  %s8 = inlined_call_operand.hbm [shape: bf16[128,256], index: 8, kind: input, shape index: {}]
  %s9 = inlined_call_operand.hbm [shape: f32[8,256], index: 9, kind: output, shape index: {}]
  %s10 = sld [smem:[#allocation0]]
  $region66: #{wider_block_8.1} parent=0
    _
  %s12 = ssub.s32 1, %s10
  %s13 = scalar_select 0, %s12, %s10
  $region1: #{wider_block_8.1} parent=0
    #allocation7 [shape = 'u8[4096]{0}', space=vmem, size = 0x1000, scoped, tag = 'input window, operand 0, single buffered']
    #allocation8 [shape = 's32[1]{0}', space=sflag, size = 0x4, scoped, tag = 'scoped memory for wider_block_8.1']
    #allocation9 [shape = 's32[1]{0}', space=sflag, size = 0x4, scoped, tag = 'scoped memory for wider_block_8.1']
    #allocation10 [shape = 'u8[4096]{0}', space=vmem, size = 0x1000, scoped, tag = 'input window, operand 1, single buffered']
    #allocation11 [shape = 's32[1]{0}', space=sflag, size = 0x4, scoped, tag = 'scoped memory for wider_block_8.1']
    #allocation12 [shape = 'u8[262144]{0}', space=vmem, size = 0x40000, scoped, tag = 'input window, operand 2, single buffered']
    #allocation13 [shape = 'u8[524288]{0}', space=vmem, size = 0x80000, scoped, tag = 'input window, operand 3, single buffered']
    #allocation14 [shape = 's32[1]{0}', space=sflag, size = 0x4, scoped, tag = 'scoped memory for wider_block_8.1']
    #allocation15 [shape = 'u8[32768]{0}', space=vmem, size = 0x8000, scoped, tag = 'input window, operand 4, single buffered']
    #allocation16 [shape = 'u8[8192]{0}', space=vmem, size = 0x2000, scoped, tag = 'output window, operand 0, single buffered']
    %14 = vsyncpa [#allocation8], 0
    %15 = vsyncpa [#allocation11], 0
    %16 = vsyncpa [#allocation14], 0
    %17 = vsyncpa [#allocation9], 0
    // Predicated region
    $region2: #{wider_block_8.1} parent=1 // pred_check
      _
    $region3: #{wider_block_8.1} parent=1 // pred_check_branch
      %19 = sbr.rel (0) target = $region5
    $region4: #{wider_block_8.1} parent=1 // pred_region
      %s21 = ssub.s32 128, 128
      %22 = vsyncadd [#allocation8], %s21
      %s24 = sshll.u32 [#allocation7], 4
      %s25 = int_to_ptr.vmem [resolvable:$true] %s24
      %27 = dma.hbm_to_vmem [thread:$0]  %s0, 128, %s25, [#allocation8]
    $region5: #{wider_block_8.1} parent=1 // pred_fallthru
      _
    // Predicated region
    $region6: #{wider_block_8.1} parent=1 // pred_check
      _
    $region7: #{wider_block_8.1} parent=1 // pred_check_branch
      %29 = sbr.rel (0) target = $region9
    $region8: #{wider_block_8.1} parent=1 // pred_region
      %s31 = ssub.s32 128, 128
      %32 = vsyncadd [#allocation11], %s31
      %s34 = sshll.u32 [#allocation10], 4
      %s35 = int_to_ptr.vmem [resolvable:$true] %s34
      %37 = dma.hbm_to_vmem [thread:$0]  %s1, 128, %s35, [#allocation11]
    $region9: #{wider_block_8.1} parent=1 // pred_fallthru
      _
    // Predicated region
    $region10: #{wider_block_8.1} parent=1 // pred_check
      _
    $region11: #{wider_block_8.1} parent=1 // pred_check_branch
      %39 = sbr.rel (0) target = $region13
    $region12: #{wider_block_8.1} parent=1 // pred_region
      %s41 = ssub.s32 8192, 8192
      %42 = vsyncadd [#allocation11], %s41
      %s43 = sshll.u32 [#allocation12], 4
      %s44 = int_to_ptr.vmem [resolvable:$true] %s43
      %49 = dma.hbm_to_vmem [thread:$0]  %s2, 8192, %s44, [#allocation11], 512, 512, 32
    $region13: #{wider_block_8.1} parent=1 // pred_fallthru
      _
    // Predicated region
    $region14: #{wider_block_8.1} parent=1 // pred_check
      _
    $region15: #{wider_block_8.1} parent=1 // pred_check_branch
      %51 = sbr.rel (0) target = $region17
    $region16: #{wider_block_8.1} parent=1 // pred_region
      %s53 = ssub.s32 16384, 16384
      %54 = vsyncadd [#allocation14], %s53
      %s55 = sshll.u32 [#allocation13], 4
      %s56 = int_to_ptr.vmem [resolvable:$true] %s55
      %61 = dma.hbm_to_vmem [thread:$0]  %s3, 16384, %s56, [#allocation14], 1024, 1024, 64
    $region17: #{wider_block_8.1} parent=1 // pred_fallthru
      _
    // Predicated region
    $region18: #{wider_block_8.1} parent=1 // pred_check
      _
    $region19: #{wider_block_8.1} parent=1 // pred_check_branch
      %63 = sbr.rel (0) target = $region21
    $region20: #{wider_block_8.1} parent=1 // pred_region
      %s65 = ssub.s32 1024, 1024
      %66 = vsyncadd [#allocation14], %s65
      %s68 = sshll.u32 [#allocation15], 4
      %s69 = int_to_ptr.vmem [resolvable:$true] %s68
      %71 = dma.hbm_to_vmem [thread:$0]  %s4, 1024, %s69, [#allocation14]
    $region21: #{wider_block_8.1} parent=1 // pred_fallthru
      _
    // Predicated region
    $region22: #{wider_block_8.1} parent=1 // pred_check
      _
    $region23: #{wider_block_8.1} parent=1 // pred_check_branch
      %73 = sbr.rel (0) target = $region25
    $region24: #{wider_block_8.1} parent=1 // pred_region
      %74 = dma.done [#allocation8], 128
    $region25: #{wider_block_8.1} parent=1 // pred_fallthru
      _
    // Predicated region
    $region26: #{wider_block_8.1} parent=1 // pred_check
      _
    $region27: #{wider_block_8.1} parent=1 // pred_check_branch
      %76 = sbr.rel (0) target = $region29
    $region28: #{wider_block_8.1} parent=1 // pred_region
      %77 = dma.done [#allocation11], 128
    $region29: #{wider_block_8.1} parent=1 // pred_fallthru
      _
    // Predicated region
    $region30: #{wider_block_8.1} parent=1 // pred_check
      _
    $region31: #{wider_block_8.1} parent=1 // pred_check_branch
      %79 = sbr.rel (0) target = $region33
    $region32: #{wider_block_8.1} parent=1 // pred_region
      %80 = dma.done [#allocation11], 8192
    $region33: #{wider_block_8.1} parent=1 // pred_fallthru
      _
    // Predicated region
    $region34: #{wider_block_8.1} parent=1 // pred_check
      _
    $region35: #{wider_block_8.1} parent=1 // pred_check_branch
      %82 = sbr.rel (0) target = $region37
    $region36: #{wider_block_8.1} parent=1 // pred_region
      %83 = dma.done [#allocation14], 16384
    $region37: #{wider_block_8.1} parent=1 // pred_fallthru
      _
    // Predicated region
    $region38: #{wider_block_8.1} parent=1 // pred_check
      _
    $region39: #{wider_block_8.1} parent=1 // pred_check_branch
      %85 = sbr.rel (0) target = $region41
    $region40: #{wider_block_8.1} parent=1 // pred_region
      %86 = dma.done [#allocation14], 1024
    $region41: #{wider_block_8.1} parent=1 // pred_fallthru
      _
    // Predicated region
    $region42: #{wider_block_8.1} parent=1 // pred_check
      _
    $region43: #{wider_block_8.1} parent=1 // pred_check_branch
      %89 = sbr.rel target = $region45
    $region44: #{wider_block_8.1} parent=1 // pred_region
      %90 = sst [smem:[#allocation19]] [#allocation18]
      %91 = sst [smem:[#allocation20]] [#allocation17]
    $region45: #{wider_block_8.1} parent=1 // pred_fallthru
      _
    %93 = shalt.err (0)
    %s95 = sshll.u32 [#allocation2], 4
    %s96 = int_to_ptr.vmem [resolvable:$true] %s95
    %98 = dma.hbm_to_vmem [thread:$0]  %s5, 8192, %s96, [#allocation6]
    %s99 = scalar_lea.sflag [#allocation6], 1
    // Predicated region
    $region46: #{wider_block_8.1} parent=1 // pred_check
      _
    $region47: #{wider_block_8.1} parent=1 // pred_check_branch
      %101 = sbr.rel target = $region49
    $region48: #{wider_block_8.1} parent=1 // pred_region
      %102 = sst [smem:[#allocation19]] [#allocation22]
      %103 = sst [smem:[#allocation20]] [#allocation21]
    $region49: #{wider_block_8.1} parent=1 // pred_fallthru
      _
    %105 = shalt.err (0)
    %s107 = sshll.u32 [#allocation3], 4
    %s108 = int_to_ptr.vmem [resolvable:$true] %s107
    %110 = dma.hbm_to_vmem [thread:$0]  %s6, 8192, %s108, %s99
    %s111 = scalar_lea.sflag [#allocation6], 2
    // Predicated region
    $region50: #{wider_block_8.1} parent=1 // pred_check
      _
    $region51: #{wider_block_8.1} parent=1 // pred_check_branch
      %113 = sbr.rel target = $region53
    $region52: #{wider_block_8.1} parent=1 // pred_region
      %114 = sst [smem:[#allocation19]] [#allocation24]
      %115 = sst [smem:[#allocation20]] [#allocation23]
    $region53: #{wider_block_8.1} parent=1 // pred_fallthru
      _
    %117 = shalt.err (0)
    %s119 = sshll.u32 [#allocation4], 4
    %s120 = int_to_ptr.vmem [resolvable:$true] %s119
    %122 = dma.hbm_to_vmem [thread:$0]  %s7, 8192, %s120, %s111
    %s123 = scalar_lea.sflag [#allocation6], 3
    // Predicated region
    $region54: #{wider_block_8.1} parent=1 // pred_check
      _
    $region55: #{wider_block_8.1} parent=1 // pred_check_branch
      %125 = sbr.rel target = $region57
    $region56: #{wider_block_8.1} parent=1 // pred_region
      %126 = sst [smem:[#allocation19]] [#allocation26]
      %127 = sst [smem:[#allocation20]] [#allocation25]
    $region57: #{wider_block_8.1} parent=1 // pred_fallthru
      _
    %129 = shalt.err (0)
    %s131 = sshll.u32 [#allocation5], 4
    %s132 = int_to_ptr.vmem [resolvable:$true] %s131
    %134 = dma.hbm_to_vmem [thread:$0]  %s8, 2048, %s132, %s123
    %v135 = vld [vmem:[#allocation7] sm:$0xff]
    %v136 = vld [vmem:[#allocation10] sm:$0xff]
    %v137 = vpack.c.bf16 %v135, %v135
    %v138 = vpack.c.bf16 %v136, %v136
    %v139 = vld [vmem:[#allocation12] sm:$0xff]
    %v140 = vld [vmem:[#allocation12 + $0x8] sm:$0xff]
    %v141 = vld [vmem:[#allocation12 + $0x10] sm:$0xff]
    %v142 = vld [vmem:[#allocation12 + $0x18] sm:$0xff]
    %v143 = vld [vmem:[#allocation12 + $0x20] sm:$0xff]
    %v144 = vld [vmem:[#allocation12 + $0x28] sm:$0xff]
    %v145 = vld [vmem:[#allocation12 + $0x30] sm:$0xff]
    %v146 = vld [vmem:[#allocation12 + $0x38] sm:$0xff]
    %v147 = vld [vmem:[#allocation12 + $0x40] sm:$0xff]
    %v148 = vld [vmem:[#allocation12 + $0x48] sm:$0xff]
    %v149 = vld [vmem:[#allocation12 + $0x50] sm:$0xff]
    %v150 = vld [vmem:[#allocation12 + $0x58] sm:$0xff]
    %v151 = vld [vmem:[#allocation12 + $0x60] sm:$0xff]
    %v152 = vld [vmem:[#allocation12 + $0x68] sm:$0xff]
    %v153 = vld [vmem:[#allocation12 + $0x70] sm:$0xff]
    %v154 = vld [vmem:[#allocation12 + $0x78] sm:$0xff]
    %v155 = vld [vmem:[#allocation12 + $0x80] sm:$0xff]
    %v156 = vld [vmem:[#allocation12 + $0x88] sm:$0xff]
    %v157 = vld [vmem:[#allocation12 + $0x90] sm:$0xff]
    %v158 = vld [vmem:[#allocation12 + $0x98] sm:$0xff]
    %v159 = vld [vmem:[#allocation12 + $0xa0] sm:$0xff]
    %v160 = vld [vmem:[#allocation12 + $0xa8] sm:$0xff]
    %v161 = vld [vmem:[#allocation12 + $0xb0] sm:$0xff]
    %v162 = vld [vmem:[#allocation12 + $0xb8] sm:$0xff]
    %v163 = vld [vmem:[#allocation12 + $0xc0] sm:$0xff]
    %v164 = vld [vmem:[#allocation12 + $0xc8] sm:$0xff]
    %v165 = vld [vmem:[#allocation12 + $0xd0] sm:$0xff]
    %v166 = vld [vmem:[#allocation12 + $0xd8] sm:$0xff]
    %v167 = vld [vmem:[#allocation12 + $0xe0] sm:$0xff]
    %v168 = vld [vmem:[#allocation12 + $0xe8] sm:$0xff]
    %v169 = vld [vmem:[#allocation12 + $0xf0] sm:$0xff]
    %v170 = vld [vmem:[#allocation12 + $0xf8] sm:$0xff]
    %v171 = vld [vmem:[#allocation12 + $0x100] sm:$0xff]
    %v172 = vld [vmem:[#allocation12 + $0x108] sm:$0xff]
    %v173 = vld [vmem:[#allocation12 + $0x110] sm:$0xff]
    %v174 = vld [vmem:[#allocation12 + $0x118] sm:$0xff]
    %v175 = vld [vmem:[#allocation12 + $0x120] sm:$0xff]
    %v176 = vld [vmem:[#allocation12 + $0x128] sm:$0xff]
    %v177 = vld [vmem:[#allocation12 + $0x130] sm:$0xff]
    %v178 = vld [vmem:[#allocation12 + $0x138] sm:$0xff]
    %v179 = vld [vmem:[#allocation12 + $0x140] sm:$0xff]
    %v180 = vld [vmem:[#allocation12 + $0x148] sm:$0xff]
    %v181 = vld [vmem:[#allocation12 + $0x150] sm:$0xff]
    %v182 = vld [vmem:[#allocation12 + $0x158] sm:$0xff]
    %v183 = vld [vmem:[#allocation12 + $0x160] sm:$0xff]
    %v184 = vld [vmem:[#allocation12 + $0x168] sm:$0xff]
    %v185 = vld [vmem:[#allocation12 + $0x170] sm:$0xff]
    %v186 = vld [vmem:[#allocation12 + $0x178] sm:$0xff]
    %v187 = vld [vmem:[#allocation12 + $0x180] sm:$0xff]
    %v188 = vld [vmem:[#allocation12 + $0x188] sm:$0xff]
    %v189 = vld [vmem:[#allocation12 + $0x190] sm:$0xff]
    %v190 = vld [vmem:[#allocation12 + $0x198] sm:$0xff]
    %v191 = vld [vmem:[#allocation12 + $0x1a0] sm:$0xff]
    %v192 = vld [vmem:[#allocation12 + $0x1a8] sm:$0xff]
    %v193 = vld [vmem:[#allocation12 + $0x1b0] sm:$0xff]
    %v194 = vld [vmem:[#allocation12 + $0x1b8] sm:$0xff]
    %v195 = vld [vmem:[#allocation12 + $0x1c0] sm:$0xff]
    %v196 = vld [vmem:[#allocation12 + $0x1c8] sm:$0xff]
    %v197 = vld [vmem:[#allocation12 + $0x1d0] sm:$0xff]
    %v198 = vld [vmem:[#allocation12 + $0x1d8] sm:$0xff]
    %v199 = vld [vmem:[#allocation12 + $0x1e0] sm:$0xff]
    %v200 = vld [vmem:[#allocation12 + $0x1e8] sm:$0xff]
    %v201 = vld [vmem:[#allocation12 + $0x1f0] sm:$0xff]
    %v202 = vld [vmem:[#allocation12 + $0x1f8] sm:$0xff]
    %v267 = vunpack.c.l.b16 %v139
    %v268 = vunpack.c.h.b16 %v139
    %v269 = vunpack.c.l.b16 %v140
    %v270 = vunpack.c.h.b16 %v140
    %v271 = vunpack.c.l.b16 %v141
    %v272 = vunpack.c.h.b16 %v141
    %v273 = vunpack.c.l.b16 %v142
    %v274 = vunpack.c.h.b16 %v142
    %v275 = vunpack.c.l.b16 %v143
    %v276 = vunpack.c.h.b16 %v143
    %v277 = vunpack.c.l.b16 %v144
    %v278 = vunpack.c.h.b16 %v144
    %v279 = vunpack.c.l.b16 %v145
    %v280 = vunpack.c.h.b16 %v145
    %v281 = vunpack.c.l.b16 %v146
    %v282 = vunpack.c.h.b16 %v146
    %v283 = vunpack.c.l.b16 %v147
    %v284 = vunpack.c.h.b16 %v147
    %v285 = vunpack.c.l.b16 %v148
    %v286 = vunpack.c.h.b16 %v148
    %v287 = vunpack.c.l.b16 %v149
    %v288 = vunpack.c.h.b16 %v149
    %v289 = vunpack.c.l.b16 %v150
    %v290 = vunpack.c.h.b16 %v150
    %v291 = vunpack.c.l.b16 %v151
    %v292 = vunpack.c.h.b16 %v151
    %v293 = vunpack.c.l.b16 %v152
    %v294 = vunpack.c.h.b16 %v152
    %v295 = vunpack.c.l.b16 %v153
    %v296 = vunpack.c.h.b16 %v153
    %v297 = vunpack.c.l.b16 %v154
    %v298 = vunpack.c.h.b16 %v154
    %v299 = vunpack.c.l.b16 %v155
    %v300 = vunpack.c.h.b16 %v155
    %v301 = vunpack.c.l.b16 %v156
    %v302 = vunpack.c.h.b16 %v156
    %v303 = vunpack.c.l.b16 %v157
    %v304 = vunpack.c.h.b16 %v157
    %v305 = vunpack.c.l.b16 %v158
    %v306 = vunpack.c.h.b16 %v158
    %v307 = vunpack.c.l.b16 %v159
    %v308 = vunpack.c.h.b16 %v159
    %v309 = vunpack.c.l.b16 %v160
    %v310 = vunpack.c.h.b16 %v160
    %v311 = vunpack.c.l.b16 %v161
    %v312 = vunpack.c.h.b16 %v161
    %v313 = vunpack.c.l.b16 %v162
    %v314 = vunpack.c.h.b16 %v162
    %v315 = vunpack.c.l.b16 %v163
    %v316 = vunpack.c.h.b16 %v163
    %v317 = vunpack.c.l.b16 %v164
    %v318 = vunpack.c.h.b16 %v164
    %v319 = vunpack.c.l.b16 %v165
    %v320 = vunpack.c.h.b16 %v165
    %v321 = vunpack.c.l.b16 %v166
    %v322 = vunpack.c.h.b16 %v166
    %v323 = vunpack.c.l.b16 %v167
    %v324 = vunpack.c.h.b16 %v167
    %v325 = vunpack.c.l.b16 %v168
    %v326 = vunpack.c.h.b16 %v168
    %v327 = vunpack.c.l.b16 %v169
    %v328 = vunpack.c.h.b16 %v169
    %v329 = vunpack.c.l.b16 %v170
    %v330 = vunpack.c.h.b16 %v170
    %v331 = vunpack.c.l.b16 %v171
    %v332 = vunpack.c.h.b16 %v171
    %v333 = vunpack.c.l.b16 %v172
    %v334 = vunpack.c.h.b16 %v172
    %v335 = vunpack.c.l.b16 %v173
    %v336 = vunpack.c.h.b16 %v173
    %v337 = vunpack.c.l.b16 %v174
    %v338 = vunpack.c.h.b16 %v174
    %v339 = vunpack.c.l.b16 %v175
    %v340 = vunpack.c.h.b16 %v175
    %v341 = vunpack.c.l.b16 %v176
    %v342 = vunpack.c.h.b16 %v176
    %v343 = vunpack.c.l.b16 %v177
    %v344 = vunpack.c.h.b16 %v177
    %v345 = vunpack.c.l.b16 %v178
    %v346 = vunpack.c.h.b16 %v178
    %v347 = vunpack.c.l.b16 %v179
    %v348 = vunpack.c.h.b16 %v179
    %v349 = vunpack.c.l.b16 %v180
    %v350 = vunpack.c.h.b16 %v180
    %v351 = vunpack.c.l.b16 %v181
    %v352 = vunpack.c.h.b16 %v181
    %v353 = vunpack.c.l.b16 %v182
    %v354 = vunpack.c.h.b16 %v182
    %v355 = vunpack.c.l.b16 %v183
    %v356 = vunpack.c.h.b16 %v183
    %v357 = vunpack.c.l.b16 %v184
    %v358 = vunpack.c.h.b16 %v184
    %v359 = vunpack.c.l.b16 %v185
    %v360 = vunpack.c.h.b16 %v185
    %v361 = vunpack.c.l.b16 %v186
    %v362 = vunpack.c.h.b16 %v186
    %v363 = vunpack.c.l.b16 %v187
    %v364 = vunpack.c.h.b16 %v187
    %v365 = vunpack.c.l.b16 %v188
    %v366 = vunpack.c.h.b16 %v188
    %v367 = vunpack.c.l.b16 %v189
    %v368 = vunpack.c.h.b16 %v189
    %v369 = vunpack.c.l.b16 %v190
    %v370 = vunpack.c.h.b16 %v190
    %v371 = vunpack.c.l.b16 %v191
    %v372 = vunpack.c.h.b16 %v191
    %v373 = vunpack.c.l.b16 %v192
    %v374 = vunpack.c.h.b16 %v192
    %v375 = vunpack.c.l.b16 %v193
    %v376 = vunpack.c.h.b16 %v193
    %v377 = vunpack.c.l.b16 %v194
    %v378 = vunpack.c.h.b16 %v194
    %v379 = vunpack.c.l.b16 %v195
    %v380 = vunpack.c.h.b16 %v195
    %v381 = vunpack.c.l.b16 %v196
    %v382 = vunpack.c.h.b16 %v196
    %v383 = vunpack.c.l.b16 %v197
    %v384 = vunpack.c.h.b16 %v197
    %v385 = vunpack.c.l.b16 %v198
    %v386 = vunpack.c.h.b16 %v198
    %v387 = vunpack.c.l.b16 %v199
    %v388 = vunpack.c.h.b16 %v199
    %v389 = vunpack.c.l.b16 %v200
    %v390 = vunpack.c.h.b16 %v200
    %v391 = vunpack.c.l.b16 %v201
    %v392 = vunpack.c.h.b16 %v201
    %v393 = vunpack.c.l.b16 %v202
    %v394 = vunpack.c.h.b16 %v202
    %v395 = vpack.c.b16 %v275, %v267
    %v396 = vpack.c.b16 %v276, %v268
    %v397 = vpack.c.b16 %v277, %v269
    %v398 = vpack.c.b16 %v278, %v270
    %v399 = vpack.c.b16 %v279, %v271
    %v400 = vpack.c.b16 %v280, %v272
    %v401 = vpack.c.b16 %v281, %v273
    %v402 = vpack.c.b16 %v282, %v274
    %v403 = vpack.c.b16 %v291, %v283
    %v404 = vpack.c.b16 %v292, %v284
    %v405 = vpack.c.b16 %v293, %v285
    %v406 = vpack.c.b16 %v294, %v286
    %v407 = vpack.c.b16 %v295, %v287
    %v408 = vpack.c.b16 %v296, %v288
    %v409 = vpack.c.b16 %v297, %v289
    %v410 = vpack.c.b16 %v298, %v290
    %v411 = vpack.c.b16 %v307, %v299
    %v412 = vpack.c.b16 %v308, %v300
    %v413 = vpack.c.b16 %v309, %v301
    %v414 = vpack.c.b16 %v310, %v302
    %v415 = vpack.c.b16 %v311, %v303
    %v416 = vpack.c.b16 %v312, %v304
    %v417 = vpack.c.b16 %v313, %v305
    %v418 = vpack.c.b16 %v314, %v306
    %v419 = vpack.c.b16 %v323, %v315
    %v420 = vpack.c.b16 %v324, %v316
    %v421 = vpack.c.b16 %v325, %v317
    %v422 = vpack.c.b16 %v326, %v318
    %v423 = vpack.c.b16 %v327, %v319
    %v424 = vpack.c.b16 %v328, %v320
    %v425 = vpack.c.b16 %v329, %v321
    %v426 = vpack.c.b16 %v330, %v322
    %v427 = vpack.c.b16 %v339, %v331
    %v428 = vpack.c.b16 %v340, %v332
    %v429 = vpack.c.b16 %v341, %v333
    %v430 = vpack.c.b16 %v342, %v334
    %v431 = vpack.c.b16 %v343, %v335
    %v432 = vpack.c.b16 %v344, %v336
    %v433 = vpack.c.b16 %v345, %v337
    %v434 = vpack.c.b16 %v346, %v338
    %v435 = vpack.c.b16 %v355, %v347
    %v436 = vpack.c.b16 %v356, %v348
    %v437 = vpack.c.b16 %v357, %v349
    %v438 = vpack.c.b16 %v358, %v350
    %v439 = vpack.c.b16 %v359, %v351
    %v440 = vpack.c.b16 %v360, %v352
    %v441 = vpack.c.b16 %v361, %v353
    %v442 = vpack.c.b16 %v362, %v354
    %v443 = vpack.c.b16 %v371, %v363
    %v444 = vpack.c.b16 %v372, %v364
    %v445 = vpack.c.b16 %v373, %v365
    %v446 = vpack.c.b16 %v374, %v366
    %v447 = vpack.c.b16 %v375, %v367
    %v448 = vpack.c.b16 %v376, %v368
    %v449 = vpack.c.b16 %v377, %v369
    %v450 = vpack.c.b16 %v378, %v370
    %v451 = vpack.c.b16 %v387, %v379
    %v452 = vpack.c.b16 %v388, %v380
    %v453 = vpack.c.b16 %v389, %v381
    %v454 = vpack.c.b16 %v390, %v382
    %v455 = vpack.c.b16 %v391, %v383
    %v456 = vpack.c.b16 %v392, %v384
    %v457 = vpack.c.b16 %v393, %v385
    %v458 = vpack.c.b16 %v394, %v386
    %523 = vmatprep.subr.bf16.mxu0 %v452
    %524 = vmatpush1.bf16.msra.mxu0 %v451
    %525 = vmatprep.subr.bf16.mxu0 %v444
    %526 = vmatpush1.bf16.msra.mxu0 %v443
    %527 = vmatprep.subr.bf16.mxu0 %v436
    %528 = vmatpush1.bf16.msra.mxu0 %v435
    %529 = vmatprep.subr.bf16.mxu0 %v428
    %530 = vmatpush1.bf16.msra.mxu0 %v427
    %531 = vmatprep.subr.bf16.mxu0 %v420
    %532 = vmatpush1.bf16.msra.mxu0 %v419
    %533 = vmatprep.subr.bf16.mxu0 %v412
    %534 = vmatpush1.bf16.msra.mxu0 %v411
    %535 = vmatprep.subr.bf16.mxu0 %v404
    %536 = vmatpush1.bf16.msra.mxu0 %v403
    %537 = vmatprep.subr.bf16.mxu0 %v396
    %538 = vmatpush1.bf16.msra.mxu0 %v395
    %539 = vmatprep.subr.bf16.mxu0 0
    %540 = vmatpush2.bf16.msra.mxu0 0
    %541 = vmatprep.subr.bf16.mxu0 0
    %542 = vmatpush2.bf16.msra.mxu0 0
    %543 = vmatprep.subr.bf16.mxu0 0
    %544 = vmatpush2.bf16.msra.mxu0 0
    %545 = vmatprep.subr.bf16.mxu0 0
    %546 = vmatpush2.bf16.msra.mxu0 0
    %547 = vmatprep.subr.bf16.mxu0 0
    %548 = vmatpush2.bf16.msra.mxu0 0
    %549 = vmatprep.subr.bf16.mxu0 0
    %550 = vmatpush2.bf16.msra.mxu0 0
    %551 = vmatprep.subr.bf16.mxu0 0
    %552 = vmatpush2.bf16.msra.mxu0 0
    %553 = vmatprep.subr.bf16.mxu0 0
    %554 = vmatpush2.bf16.msra.mxu0 0
    %555 = vmatprep.mubr.bf16.mxu0 0
    %556 = vmatmul.mubr.bf16.gmra.mxu0 %v138
    %v557 = vpop.f32.mrf.mxu0
    %v558 = vadd.f32 0.0, %v557
    %v559 = vpop.f32.mrf.mxu0
    %v560 = vadd.f32 0.0, %v559
    %v561 = vpop.f32.mrf.mxu0
    %v562 = vpop.f32.mrf.mxu0
    %563 = vdwg.mxu0
    %564 = vmatprep.subr.bf16.mxu0 %v454
    %565 = vmatpush1.bf16.msra.mxu0 %v453
    %566 = vmatprep.subr.bf16.mxu0 %v446
    %567 = vmatpush1.bf16.msra.mxu0 %v445
    %568 = vmatprep.subr.bf16.mxu0 %v438
    %569 = vmatpush1.bf16.msra.mxu0 %v437
    %570 = vmatprep.subr.bf16.mxu0 %v430
    %571 = vmatpush1.bf16.msra.mxu0 %v429
    %572 = vmatprep.subr.bf16.mxu0 %v422
    %573 = vmatpush1.bf16.msra.mxu0 %v421
    %574 = vmatprep.subr.bf16.mxu0 %v414
    %575 = vmatpush1.bf16.msra.mxu0 %v413
    %576 = vmatprep.subr.bf16.mxu0 %v406
    %577 = vmatpush1.bf16.msra.mxu0 %v405
    %578 = vmatprep.subr.bf16.mxu0 %v398
    %579 = vmatpush1.bf16.msra.mxu0 %v397
    %580 = vmatprep.subr.bf16.mxu0 0
    %581 = vmatpush2.bf16.msra.mxu0 0
    %582 = vmatprep.subr.bf16.mxu0 0
    %583 = vmatpush2.bf16.msra.mxu0 0
    %584 = vmatprep.subr.bf16.mxu0 0
    %585 = vmatpush2.bf16.msra.mxu0 0
    %586 = vmatprep.subr.bf16.mxu0 0
    %587 = vmatpush2.bf16.msra.mxu0 0
    %588 = vmatprep.subr.bf16.mxu0 0
    %589 = vmatpush2.bf16.msra.mxu0 0
    %590 = vmatprep.subr.bf16.mxu0 0
    %591 = vmatpush2.bf16.msra.mxu0 0
    %592 = vmatprep.subr.bf16.mxu0 0
    %593 = vmatpush2.bf16.msra.mxu0 0
    %594 = vmatprep.subr.bf16.mxu0 0
    %595 = vmatpush2.bf16.msra.mxu0 0
    %596 = vmatprep.mubr.bf16.mxu0 0
    %597 = vmatmul.mubr.bf16.gmra.mxu0 %v138
    %v598 = vpop.f32.mrf.mxu0
    %v599 = vadd.f32 0.0, %v598
    %v600 = vpop.f32.mrf.mxu0
    %v601 = vadd.f32 0.0, %v600
    %v602 = vpop.f32.mrf.mxu0
    %v603 = vpop.f32.mrf.mxu0
    %604 = vdwg.mxu0
    %605 = vmatprep.subr.bf16.mxu0 %v456
    %606 = vmatpush1.bf16.msra.mxu0 %v455
    %607 = vmatprep.subr.bf16.mxu0 %v448
    %608 = vmatpush1.bf16.msra.mxu0 %v447
    %609 = vmatprep.subr.bf16.mxu0 %v440
    %610 = vmatpush1.bf16.msra.mxu0 %v439
    %611 = vmatprep.subr.bf16.mxu0 %v432
    %612 = vmatpush1.bf16.msra.mxu0 %v431
    %613 = vmatprep.subr.bf16.mxu0 %v424
    %614 = vmatpush1.bf16.msra.mxu0 %v423
    %615 = vmatprep.subr.bf16.mxu0 %v416
    %616 = vmatpush1.bf16.msra.mxu0 %v415
    %617 = vmatprep.subr.bf16.mxu0 %v408
    %618 = vmatpush1.bf16.msra.mxu0 %v407
    %619 = vmatprep.subr.bf16.mxu0 %v400
    %620 = vmatpush1.bf16.msra.mxu0 %v399
    %621 = vmatprep.subr.bf16.mxu0 0
    %622 = vmatpush2.bf16.msra.mxu0 0
    %623 = vmatprep.subr.bf16.mxu0 0
    %624 = vmatpush2.bf16.msra.mxu0 0
    %625 = vmatprep.subr.bf16.mxu0 0
    %626 = vmatpush2.bf16.msra.mxu0 0
    %627 = vmatprep.subr.bf16.mxu0 0
    %628 = vmatpush2.bf16.msra.mxu0 0
    %629 = vmatprep.subr.bf16.mxu0 0
    %630 = vmatpush2.bf16.msra.mxu0 0
    %631 = vmatprep.subr.bf16.mxu0 0
    %632 = vmatpush2.bf16.msra.mxu0 0
    %633 = vmatprep.subr.bf16.mxu0 0
    %634 = vmatpush2.bf16.msra.mxu0 0
    %635 = vmatprep.subr.bf16.mxu0 0
    %636 = vmatpush2.bf16.msra.mxu0 0
    %637 = vmatprep.mubr.bf16.mxu0 0
    %638 = vmatmul.mubr.bf16.gmra.mxu0 %v138
    %v639 = vpop.f32.mrf.mxu0
    %v640 = vadd.f32 0.0, %v639
    %v641 = vpop.f32.mrf.mxu0
    %v642 = vadd.f32 0.0, %v641
    %v643 = vpop.f32.mrf.mxu0
    %v644 = vpop.f32.mrf.mxu0
    %645 = vdwg.mxu0
    %646 = vmatprep.subr.bf16.mxu0 %v458
    %647 = vmatpush1.bf16.msra.mxu0 %v457
    %648 = vmatprep.subr.bf16.mxu0 %v450
    %649 = vmatpush1.bf16.msra.mxu0 %v449
    %650 = vmatprep.subr.bf16.mxu0 %v442
    %651 = vmatpush1.bf16.msra.mxu0 %v441
    %652 = vmatprep.subr.bf16.mxu0 %v434
    %653 = vmatpush1.bf16.msra.mxu0 %v433
    %654 = vmatprep.subr.bf16.mxu0 %v426
    %655 = vmatpush1.bf16.msra.mxu0 %v425
    %656 = vmatprep.subr.bf16.mxu0 %v418
    %657 = vmatpush1.bf16.msra.mxu0 %v417
    %658 = vmatprep.subr.bf16.mxu0 %v410
    %659 = vmatpush1.bf16.msra.mxu0 %v409
    %660 = vmatprep.subr.bf16.mxu0 %v402
    %661 = vmatpush1.bf16.msra.mxu0 %v401
    %662 = vmatprep.subr.bf16.mxu0 0
    %663 = vmatpush2.bf16.msra.mxu0 0
    %664 = vmatprep.subr.bf16.mxu0 0
    %665 = vmatpush2.bf16.msra.mxu0 0
    %666 = vmatprep.subr.bf16.mxu0 0
    %667 = vmatpush2.bf16.msra.mxu0 0
    %668 = vmatprep.subr.bf16.mxu0 0
    %669 = vmatpush2.bf16.msra.mxu0 0
    %670 = vmatprep.subr.bf16.mxu0 0
    %671 = vmatpush2.bf16.msra.mxu0 0
    %672 = vmatprep.subr.bf16.mxu0 0
    %673 = vmatpush2.bf16.msra.mxu0 0
    %674 = vmatprep.subr.bf16.mxu0 0
    %675 = vmatpush2.bf16.msra.mxu0 0
    %676 = vmatprep.subr.bf16.mxu0 0
    %677 = vmatpush2.bf16.msra.mxu0 0
    %678 = vmatprep.mubr.bf16.mxu0 0
    %679 = vmatmul.mubr.bf16.gmra.mxu0 %v138
    %v680 = vpop.f32.mrf.mxu0
    %v681 = vadd.f32 0.0, %v680
    %v682 = vpop.f32.mrf.mxu0
    %v683 = vadd.f32 0.0, %v682
    %v684 = vpop.f32.mrf.mxu0
    %v685 = vpop.f32.mrf.mxu0
    %686 = vdwg.mxu0
    %v687 = vpack.c.bf16 %v558, %v558
    %v688 = vpack.c.bf16 %v560, %v560
    %v689 = vpack.c.bf16 %v599, %v599
    %v690 = vpack.c.bf16 %v601, %v601
    %v691 = vpack.c.bf16 %v640, %v640
    %v692 = vpack.c.bf16 %v642, %v642
    %v693 = vpack.c.bf16 %v681, %v681
    %v694 = vpack.c.bf16 %v683, %v683
    %v695 = vld [vmem:[#allocation13] sm:$0xff]
    %v696 = vld [vmem:[#allocation13 + $0x8] sm:$0xff]
    %v697 = vld [vmem:[#allocation13 + $0x10] sm:$0xff]
    %v698 = vld [vmem:[#allocation13 + $0x18] sm:$0xff]
    %v699 = vld [vmem:[#allocation13 + $0x20] sm:$0xff]
    %v700 = vld [vmem:[#allocation13 + $0x28] sm:$0xff]
    %v701 = vld [vmem:[#allocation13 + $0x30] sm:$0xff]
    %v702 = vld [vmem:[#allocation13 + $0x38] sm:$0xff]
    %v703 = vld [vmem:[#allocation13 + $0x40] sm:$0xff]
    %v704 = vld [vmem:[#allocation13 + $0x48] sm:$0xff]
    %v705 = vld [vmem:[#allocation13 + $0x50] sm:$0xff]
    %v706 = vld [vmem:[#allocation13 + $0x58] sm:$0xff]
    %v707 = vld [vmem:[#allocation13 + $0x60] sm:$0xff]
    %v708 = vld [vmem:[#allocation13 + $0x68] sm:$0xff]
    %v709 = vld [vmem:[#allocation13 + $0x70] sm:$0xff]
    %v710 = vld [vmem:[#allocation13 + $0x78] sm:$0xff]
    %v711 = vld [vmem:[#allocation13 + $0x80] sm:$0xff]
    %v712 = vld [vmem:[#allocation13 + $0x88] sm:$0xff]
    %v713 = vld [vmem:[#allocation13 + $0x90] sm:$0xff]
    %v714 = vld [vmem:[#allocation13 + $0x98] sm:$0xff]
    %v715 = vld [vmem:[#allocation13 + $0xa0] sm:$0xff]
    %v716 = vld [vmem:[#allocation13 + $0xa8] sm:$0xff]
    %v717 = vld [vmem:[#allocation13 + $0xb0] sm:$0xff]
    %v718 = vld [vmem:[#allocation13 + $0xb8] sm:$0xff]
    %v719 = vld [vmem:[#allocation13 + $0xc0] sm:$0xff]
    %v720 = vld [vmem:[#allocation13 + $0xc8] sm:$0xff]
    %v721 = vld [vmem:[#allocation13 + $0xd0] sm:$0xff]
    %v722 = vld [vmem:[#allocation13 + $0xd8] sm:$0xff]
    %v723 = vld [vmem:[#allocation13 + $0xe0] sm:$0xff]
    %v724 = vld [vmem:[#allocation13 + $0xe8] sm:$0xff]
    %v725 = vld [vmem:[#allocation13 + $0xf0] sm:$0xff]
    %v726 = vld [vmem:[#allocation13 + $0xf8] sm:$0xff]
    %v727 = vld [vmem:[#allocation13 + $0x100] sm:$0xff]
    %v728 = vld [vmem:[#allocation13 + $0x108] sm:$0xff]
    %v729 = vld [vmem:[#allocation13 + $0x110] sm:$0xff]
    %v730 = vld [vmem:[#allocation13 + $0x118] sm:$0xff]
    %v731 = vld [vmem:[#allocation13 + $0x120] sm:$0xff]
    %v732 = vld [vmem:[#allocation13 + $0x128] sm:$0xff]
    %v733 = vld [vmem:[#allocation13 + $0x130] sm:$0xff]
    %v734 = vld [vmem:[#allocation13 + $0x138] sm:$0xff]
    %v735 = vld [vmem:[#allocation13 + $0x140] sm:$0xff]
    %v736 = vld [vmem:[#allocation13 + $0x148] sm:$0xff]
    %v737 = vld [vmem:[#allocation13 + $0x150] sm:$0xff]
    %v738 = vld [vmem:[#allocation13 + $0x158] sm:$0xff]
    %v739 = vld [vmem:[#allocation13 + $0x160] sm:$0xff]
    %v740 = vld [vmem:[#allocation13 + $0x168] sm:$0xff]
    %v741 = vld [vmem:[#allocation13 + $0x170] sm:$0xff]
    %v742 = vld [vmem:[#allocation13 + $0x178] sm:$0xff]
    %v743 = vld [vmem:[#allocation13 + $0x180] sm:$0xff]
    %v744 = vld [vmem:[#allocation13 + $0x188] sm:$0xff]
    %v745 = vld [vmem:[#allocation13 + $0x190] sm:$0xff]
    %v746 = vld [vmem:[#allocation13 + $0x198] sm:$0xff]
    %v747 = vld [vmem:[#allocation13 + $0x1a0] sm:$0xff]
    %v748 = vld [vmem:[#allocation13 + $0x1a8] sm:$0xff]
    %v749 = vld [vmem:[#allocation13 + $0x1b0] sm:$0xff]
    %v750 = vld [vmem:[#allocation13 + $0x1b8] sm:$0xff]
    %v751 = vld [vmem:[#allocation13 + $0x1c0] sm:$0xff]
    %v752 = vld [vmem:[#allocation13 + $0x1c8] sm:$0xff]
    %v753 = vld [vmem:[#allocation13 + $0x1d0] sm:$0xff]
    %v754 = vld [vmem:[#allocation13 + $0x1d8] sm:$0xff]
    %v755 = vld [vmem:[#allocation13 + $0x1e0] sm:$0xff]
    %v756 = vld [vmem:[#allocation13 + $0x1e8] sm:$0xff]
    %v757 = vld [vmem:[#allocation13 + $0x1f0] sm:$0xff]
    %v758 = vld [vmem:[#allocation13 + $0x1f8] sm:$0xff]
    %v759 = vld [vmem:[#allocation13 + $0x200] sm:$0xff]
    %v760 = vld [vmem:[#allocation13 + $0x208] sm:$0xff]
    %v761 = vld [vmem:[#allocation13 + $0x210] sm:$0xff]
    %v762 = vld [vmem:[#allocation13 + $0x218] sm:$0xff]
    %v763 = vld [vmem:[#allocation13 + $0x220] sm:$0xff]
    %v764 = vld [vmem:[#allocation13 + $0x228] sm:$0xff]
    %v765 = vld [vmem:[#allocation13 + $0x230] sm:$0xff]
    %v766 = vld [vmem:[#allocation13 + $0x238] sm:$0xff]
    %v767 = vld [vmem:[#allocation13 + $0x240] sm:$0xff]
    %v768 = vld [vmem:[#allocation13 + $0x248] sm:$0xff]
    %v769 = vld [vmem:[#allocation13 + $0x250] sm:$0xff]
    %v770 = vld [vmem:[#allocation13 + $0x258] sm:$0xff]
    %v771 = vld [vmem:[#allocation13 + $0x260] sm:$0xff]
    %v772 = vld [vmem:[#allocation13 + $0x268] sm:$0xff]
    %v773 = vld [vmem:[#allocation13 + $0x270] sm:$0xff]
    %v774 = vld [vmem:[#allocation13 + $0x278] sm:$0xff]
    %v775 = vld [vmem:[#allocation13 + $0x280] sm:$0xff]
    %v776 = vld [vmem:[#allocation13 + $0x288] sm:$0xff]
    %v777 = vld [vmem:[#allocation13 + $0x290] sm:$0xff]
    %v778 = vld [vmem:[#allocation13 + $0x298] sm:$0xff]
    %v779 = vld [vmem:[#allocation13 + $0x2a0] sm:$0xff]
    %v780 = vld [vmem:[#allocation13 + $0x2a8] sm:$0xff]
    %v781 = vld [vmem:[#allocation13 + $0x2b0] sm:$0xff]
    %v782 = vld [vmem:[#allocation13 + $0x2b8] sm:$0xff]
    %v783 = vld [vmem:[#allocation13 + $0x2c0] sm:$0xff]
    %v784 = vld [vmem:[#allocation13 + $0x2c8] sm:$0xff]
    %v785 = vld [vmem:[#allocation13 + $0x2d0] sm:$0xff]
    %v786 = vld [vmem:[#allocation13 + $0x2d8] sm:$0xff]
    %v787 = vld [vmem:[#allocation13 + $0x2e0] sm:$0xff]
    %v788 = vld [vmem:[#allocation13 + $0x2e8] sm:$0xff]
    %v789 = vld [vmem:[#allocation13 + $0x2f0] sm:$0xff]
    %v790 = vld [vmem:[#allocation13 + $0x2f8] sm:$0xff]
    %v791 = vld [vmem:[#allocation13 + $0x300] sm:$0xff]
    %v792 = vld [vmem:[#allocation13 + $0x308] sm:$0xff]
    %v793 = vld [vmem:[#allocation13 + $0x310] sm:$0xff]
    %v794 = vld [vmem:[#allocation13 + $0x318] sm:$0xff]
    %v795 = vld [vmem:[#allocation13 + $0x320] sm:$0xff]
    %v796 = vld [vmem:[#allocation13 + $0x328] sm:$0xff]
    %v797 = vld [vmem:[#allocation13 + $0x330] sm:$0xff]
    %v798 = vld [vmem:[#allocation13 + $0x338] sm:$0xff]
    %v799 = vld [vmem:[#allocation13 + $0x340] sm:$0xff]
    %v800 = vld [vmem:[#allocation13 + $0x348] sm:$0xff]
    %v801 = vld [vmem:[#allocation13 + $0x350] sm:$0xff]
    %v802 = vld [vmem:[#allocation13 + $0x358] sm:$0xff]
    %v803 = vld [vmem:[#allocation13 + $0x360] sm:$0xff]
    %v804 = vld [vmem:[#allocation13 + $0x368] sm:$0xff]
    %v805 = vld [vmem:[#allocation13 + $0x370] sm:$0xff]
    %v806 = vld [vmem:[#allocation13 + $0x378] sm:$0xff]
    %v807 = vld [vmem:[#allocation13 + $0x380] sm:$0xff]
    %v808 = vld [vmem:[#allocation13 + $0x388] sm:$0xff]
    %v809 = vld [vmem:[#allocation13 + $0x390] sm:$0xff]
    %v810 = vld [vmem:[#allocation13 + $0x398] sm:$0xff]
    %v811 = vld [vmem:[#allocation13 + $0x3a0] sm:$0xff]
    %v812 = vld [vmem:[#allocation13 + $0x3a8] sm:$0xff]
    %v813 = vld [vmem:[#allocation13 + $0x3b0] sm:$0xff]
    %v814 = vld [vmem:[#allocation13 + $0x3b8] sm:$0xff]
    %v815 = vld [vmem:[#allocation13 + $0x3c0] sm:$0xff]
    %v816 = vld [vmem:[#allocation13 + $0x3c8] sm:$0xff]
    %v817 = vld [vmem:[#allocation13 + $0x3d0] sm:$0xff]
    %v818 = vld [vmem:[#allocation13 + $0x3d8] sm:$0xff]
    %v819 = vld [vmem:[#allocation13 + $0x3e0] sm:$0xff]
    %v820 = vld [vmem:[#allocation13 + $0x3e8] sm:$0xff]
    %v821 = vld [vmem:[#allocation13 + $0x3f0] sm:$0xff]
    %v822 = vld [vmem:[#allocation13 + $0x3f8] sm:$0xff]
    %v951 = vunpack.c.l.b16 %v695
    %v952 = vunpack.c.h.b16 %v695
    %v953 = vunpack.c.l.b16 %v696
    %v954 = vunpack.c.h.b16 %v696
    %v955 = vunpack.c.l.b16 %v697
    %v956 = vunpack.c.h.b16 %v697
    %v957 = vunpack.c.l.b16 %v698
    %v958 = vunpack.c.h.b16 %v698
    %v959 = vunpack.c.l.b16 %v699
    %v960 = vunpack.c.h.b16 %v699
    %v961 = vunpack.c.l.b16 %v700
    %v962 = vunpack.c.h.b16 %v700
    %v963 = vunpack.c.l.b16 %v701
    %v964 = vunpack.c.h.b16 %v701
    %v965 = vunpack.c.l.b16 %v702
    %v966 = vunpack.c.h.b16 %v702
    %v967 = vunpack.c.l.b16 %v703
    %v968 = vunpack.c.h.b16 %v703
    %v969 = vunpack.c.l.b16 %v704
    %v970 = vunpack.c.h.b16 %v704
    %v971 = vunpack.c.l.b16 %v705
    %v972 = vunpack.c.h.b16 %v705
    %v973 = vunpack.c.l.b16 %v706
    %v974 = vunpack.c.h.b16 %v706
    %v975 = vunpack.c.l.b16 %v707
    %v976 = vunpack.c.h.b16 %v707
    %v977 = vunpack.c.l.b16 %v708
    %v978 = vunpack.c.h.b16 %v708
    %v979 = vunpack.c.l.b16 %v709
    %v980 = vunpack.c.h.b16 %v709
    %v981 = vunpack.c.l.b16 %v710
    %v982 = vunpack.c.h.b16 %v710
    %v983 = vunpack.c.l.b16 %v711
    %v984 = vunpack.c.h.b16 %v711
    %v985 = vunpack.c.l.b16 %v712
    %v986 = vunpack.c.h.b16 %v712
    %v987 = vunpack.c.l.b16 %v713
    %v988 = vunpack.c.h.b16 %v713
    %v989 = vunpack.c.l.b16 %v714
    %v990 = vunpack.c.h.b16 %v714
    %v991 = vunpack.c.l.b16 %v715
    %v992 = vunpack.c.h.b16 %v715
    %v993 = vunpack.c.l.b16 %v716
    %v994 = vunpack.c.h.b16 %v716
    %v995 = vunpack.c.l.b16 %v717
    %v996 = vunpack.c.h.b16 %v717
    %v997 = vunpack.c.l.b16 %v718
    %v998 = vunpack.c.h.b16 %v718
    %v999 = vunpack.c.l.b16 %v719
    %v1000 = vunpack.c.h.b16 %v719
    %v1001 = vunpack.c.l.b16 %v720
    %v1002 = vunpack.c.h.b16 %v720
    %v1003 = vunpack.c.l.b16 %v721
    %v1004 = vunpack.c.h.b16 %v721
    %v1005 = vunpack.c.l.b16 %v722
    %v1006 = vunpack.c.h.b16 %v722
    %v1007 = vunpack.c.l.b16 %v723
    %v1008 = vunpack.c.h.b16 %v723
    %v1009 = vunpack.c.l.b16 %v724
    %v1010 = vunpack.c.h.b16 %v724
    %v1011 = vunpack.c.l.b16 %v725
    %v1012 = vunpack.c.h.b16 %v725
    %v1013 = vunpack.c.l.b16 %v726
    %v1014 = vunpack.c.h.b16 %v726
    %v1015 = vunpack.c.l.b16 %v727
    %v1016 = vunpack.c.h.b16 %v727
    %v1017 = vunpack.c.l.b16 %v728
    %v1018 = vunpack.c.h.b16 %v728
    %v1019 = vunpack.c.l.b16 %v729
    %v1020 = vunpack.c.h.b16 %v729
    %v1021 = vunpack.c.l.b16 %v730
    %v1022 = vunpack.c.h.b16 %v730
    %v1023 = vunpack.c.l.b16 %v731
    %v1024 = vunpack.c.h.b16 %v731
    %v1025 = vunpack.c.l.b16 %v732
    %v1026 = vunpack.c.h.b16 %v732
    %v1027 = vunpack.c.l.b16 %v733
    %v1028 = vunpack.c.h.b16 %v733
    %v1029 = vunpack.c.l.b16 %v734
    %v1030 = vunpack.c.h.b16 %v734
    %v1031 = vunpack.c.l.b16 %v735
    %v1032 = vunpack.c.h.b16 %v735
    %v1033 = vunpack.c.l.b16 %v736
    %v1034 = vunpack.c.h.b16 %v736
    %v1035 = vunpack.c.l.b16 %v737
    %v1036 = vunpack.c.h.b16 %v737
    %v1037 = vunpack.c.l.b16 %v738
    %v1038 = vunpack.c.h.b16 %v738
    %v1039 = vunpack.c.l.b16 %v739
    %v1040 = vunpack.c.h.b16 %v739
    %v1041 = vunpack.c.l.b16 %v740
    %v1042 = vunpack.c.h.b16 %v740
    %v1043 = vunpack.c.l.b16 %v741
    %v1044 = vunpack.c.h.b16 %v741
    %v1045 = vunpack.c.l.b16 %v742
    %v1046 = vunpack.c.h.b16 %v742
    %v1047 = vunpack.c.l.b16 %v743
    %v1048 = vunpack.c.h.b16 %v743
    %v1049 = vunpack.c.l.b16 %v744
    %v1050 = vunpack.c.h.b16 %v744
    %v1051 = vunpack.c.l.b16 %v745
    %v1052 = vunpack.c.h.b16 %v745
    %v1053 = vunpack.c.l.b16 %v746
    %v1054 = vunpack.c.h.b16 %v746
    %v1055 = vunpack.c.l.b16 %v747
    %v1056 = vunpack.c.h.b16 %v747
    %v1057 = vunpack.c.l.b16 %v748
    %v1058 = vunpack.c.h.b16 %v748
    %v1059 = vunpack.c.l.b16 %v749
    %v1060 = vunpack.c.h.b16 %v749
    %v1061 = vunpack.c.l.b16 %v750
    %v1062 = vunpack.c.h.b16 %v750
    %v1063 = vunpack.c.l.b16 %v751
    %v1064 = vunpack.c.h.b16 %v751
    %v1065 = vunpack.c.l.b16 %v752
    %v1066 = vunpack.c.h.b16 %v752
    %v1067 = vunpack.c.l.b16 %v753
    %v1068 = vunpack.c.h.b16 %v753
    %v1069 = vunpack.c.l.b16 %v754
    %v1070 = vunpack.c.h.b16 %v754
    %v1071 = vunpack.c.l.b16 %v755
    %v1072 = vunpack.c.h.b16 %v755
    %v1073 = vunpack.c.l.b16 %v756
    %v1074 = vunpack.c.h.b16 %v756
    %v1075 = vunpack.c.l.b16 %v757
    %v1076 = vunpack.c.h.b16 %v757
    %v1077 = vunpack.c.l.b16 %v758
    %v1078 = vunpack.c.h.b16 %v758
    %v1079 = vunpack.c.l.b16 %v759
    %v1080 = vunpack.c.h.b16 %v759
    %v1081 = vunpack.c.l.b16 %v760
    %v1082 = vunpack.c.h.b16 %v760
    %v1083 = vunpack.c.l.b16 %v761
    %v1084 = vunpack.c.h.b16 %v761
    %v1085 = vunpack.c.l.b16 %v762
    %v1086 = vunpack.c.h.b16 %v762
    %v1087 = vunpack.c.l.b16 %v763
    %v1088 = vunpack.c.h.b16 %v763
    %v1089 = vunpack.c.l.b16 %v764
    %v1090 = vunpack.c.h.b16 %v764
    %v1091 = vunpack.c.l.b16 %v765
    %v1092 = vunpack.c.h.b16 %v765
    %v1093 = vunpack.c.l.b16 %v766
    %v1094 = vunpack.c.h.b16 %v766
    %v1095 = vunpack.c.l.b16 %v767
    %v1096 = vunpack.c.h.b16 %v767
    %v1097 = vunpack.c.l.b16 %v768
    %v1098 = vunpack.c.h.b16 %v768
    %v1099 = vunpack.c.l.b16 %v769
    %v1100 = vunpack.c.h.b16 %v769
    %v1101 = vunpack.c.l.b16 %v770
    %v1102 = vunpack.c.h.b16 %v770
    %v1103 = vunpack.c.l.b16 %v771
    %v1104 = vunpack.c.h.b16 %v771
    %v1105 = vunpack.c.l.b16 %v772
    %v1106 = vunpack.c.h.b16 %v772
    %v1107 = vunpack.c.l.b16 %v773
    %v1108 = vunpack.c.h.b16 %v773
    %v1109 = vunpack.c.l.b16 %v774
    %v1110 = vunpack.c.h.b16 %v774
    %v1111 = vunpack.c.l.b16 %v775
    %v1112 = vunpack.c.h.b16 %v775
    %v1113 = vunpack.c.l.b16 %v776
    %v1114 = vunpack.c.h.b16 %v776
    %v1115 = vunpack.c.l.b16 %v777
    %v1116 = vunpack.c.h.b16 %v777
    %v1117 = vunpack.c.l.b16 %v778
    %v1118 = vunpack.c.h.b16 %v778
    %v1119 = vunpack.c.l.b16 %v779
    %v1120 = vunpack.c.h.b16 %v779
    %v1121 = vunpack.c.l.b16 %v780
    %v1122 = vunpack.c.h.b16 %v780
    %v1123 = vunpack.c.l.b16 %v781
    %v1124 = vunpack.c.h.b16 %v781
    %v1125 = vunpack.c.l.b16 %v782
    %v1126 = vunpack.c.h.b16 %v782
    %v1127 = vunpack.c.l.b16 %v783
    %v1128 = vunpack.c.h.b16 %v783
    %v1129 = vunpack.c.l.b16 %v784
    %v1130 = vunpack.c.h.b16 %v784
    %v1131 = vunpack.c.l.b16 %v785
    %v1132 = vunpack.c.h.b16 %v785
    %v1133 = vunpack.c.l.b16 %v786
    %v1134 = vunpack.c.h.b16 %v786
    %v1135 = vunpack.c.l.b16 %v787
    %v1136 = vunpack.c.h.b16 %v787
    %v1137 = vunpack.c.l.b16 %v788
    %v1138 = vunpack.c.h.b16 %v788
    %v1139 = vunpack.c.l.b16 %v789
    %v1140 = vunpack.c.h.b16 %v789
    %v1141 = vunpack.c.l.b16 %v790
    %v1142 = vunpack.c.h.b16 %v790
    %v1143 = vunpack.c.l.b16 %v791
    %v1144 = vunpack.c.h.b16 %v791
    %v1145 = vunpack.c.l.b16 %v792
    %v1146 = vunpack.c.h.b16 %v792
    %v1147 = vunpack.c.l.b16 %v793
    %v1148 = vunpack.c.h.b16 %v793
    %v1149 = vunpack.c.l.b16 %v794
    %v1150 = vunpack.c.h.b16 %v794
    %v1151 = vunpack.c.l.b16 %v795
    %v1152 = vunpack.c.h.b16 %v795
    %v1153 = vunpack.c.l.b16 %v796
    %v1154 = vunpack.c.h.b16 %v796
    %v1155 = vunpack.c.l.b16 %v797
    %v1156 = vunpack.c.h.b16 %v797
    %v1157 = vunpack.c.l.b16 %v798
    %v1158 = vunpack.c.h.b16 %v798
    %v1159 = vunpack.c.l.b16 %v799
    %v1160 = vunpack.c.h.b16 %v799
    %v1161 = vunpack.c.l.b16 %v800
    %v1162 = vunpack.c.h.b16 %v800
    %v1163 = vunpack.c.l.b16 %v801
    %v1164 = vunpack.c.h.b16 %v801
    %v1165 = vunpack.c.l.b16 %v802
    %v1166 = vunpack.c.h.b16 %v802
    %v1167 = vunpack.c.l.b16 %v803
    %v1168 = vunpack.c.h.b16 %v803
    %v1169 = vunpack.c.l.b16 %v804
    %v1170 = vunpack.c.h.b16 %v804
    %v1171 = vunpack.c.l.b16 %v805
    %v1172 = vunpack.c.h.b16 %v805
    %v1173 = vunpack.c.l.b16 %v806
    %v1174 = vunpack.c.h.b16 %v806
    %v1175 = vunpack.c.l.b16 %v807
    %v1176 = vunpack.c.h.b16 %v807
    %v1177 = vunpack.c.l.b16 %v808
    %v1178 = vunpack.c.h.b16 %v808
    %v1179 = vunpack.c.l.b16 %v809
    %v1180 = vunpack.c.h.b16 %v809
    %v1181 = vunpack.c.l.b16 %v810
    %v1182 = vunpack.c.h.b16 %v810
    %v1183 = vunpack.c.l.b16 %v811
    %v1184 = vunpack.c.h.b16 %v811
    %v1185 = vunpack.c.l.b16 %v812
    %v1186 = vunpack.c.h.b16 %v812
    %v1187 = vunpack.c.l.b16 %v813
    %v1188 = vunpack.c.h.b16 %v813
    %v1189 = vunpack.c.l.b16 %v814
    %v1190 = vunpack.c.h.b16 %v814
    %v1191 = vunpack.c.l.b16 %v815
    %v1192 = vunpack.c.h.b16 %v815
    %v1193 = vunpack.c.l.b16 %v816
    %v1194 = vunpack.c.h.b16 %v816
    %v1195 = vunpack.c.l.b16 %v817
    %v1196 = vunpack.c.h.b16 %v817
    %v1197 = vunpack.c.l.b16 %v818
    %v1198 = vunpack.c.h.b16 %v818
    %v1199 = vunpack.c.l.b16 %v819
    %v1200 = vunpack.c.h.b16 %v819
    %v1201 = vunpack.c.l.b16 %v820
    %v1202 = vunpack.c.h.b16 %v820
    %v1203 = vunpack.c.l.b16 %v821
    %v1204 = vunpack.c.h.b16 %v821
    %v1205 = vunpack.c.l.b16 %v822
    %v1206 = vunpack.c.h.b16 %v822
    %v1207 = vpack.c.b16 %v967, %v951
    %v1208 = vpack.c.b16 %v968, %v952
    %v1209 = vpack.c.b16 %v969, %v953
    %v1210 = vpack.c.b16 %v970, %v954
    %v1211 = vpack.c.b16 %v971, %v955
    %v1212 = vpack.c.b16 %v972, %v956
    %v1213 = vpack.c.b16 %v973, %v957
    %v1214 = vpack.c.b16 %v974, %v958
    %v1215 = vpack.c.b16 %v975, %v959
    %v1216 = vpack.c.b16 %v976, %v960
    %v1217 = vpack.c.b16 %v977, %v961
    %v1218 = vpack.c.b16 %v978, %v962
    %v1219 = vpack.c.b16 %v979, %v963
    %v1220 = vpack.c.b16 %v980, %v964
    %v1221 = vpack.c.b16 %v981, %v965
    %v1222 = vpack.c.b16 %v982, %v966
    %v1223 = vpack.c.b16 %v999, %v983
    %v1224 = vpack.c.b16 %v1000, %v984
    %v1225 = vpack.c.b16 %v1001, %v985
    %v1226 = vpack.c.b16 %v1002, %v986
    %v1227 = vpack.c.b16 %v1003, %v987
    %v1228 = vpack.c.b16 %v1004, %v988
    %v1229 = vpack.c.b16 %v1005, %v989
    %v1230 = vpack.c.b16 %v1006, %v990
    %v1231 = vpack.c.b16 %v1007, %v991
    %v1232 = vpack.c.b16 %v1008, %v992
    %v1233 = vpack.c.b16 %v1009, %v993
    %v1234 = vpack.c.b16 %v1010, %v994
    %v1235 = vpack.c.b16 %v1011, %v995
    %v1236 = vpack.c.b16 %v1012, %v996
    %v1237 = vpack.c.b16 %v1013, %v997
    %v1238 = vpack.c.b16 %v1014, %v998
    %v1239 = vpack.c.b16 %v1031, %v1015
    %v1240 = vpack.c.b16 %v1032, %v1016
    %v1241 = vpack.c.b16 %v1033, %v1017
    %v1242 = vpack.c.b16 %v1034, %v1018
    %v1243 = vpack.c.b16 %v1035, %v1019
    %v1244 = vpack.c.b16 %v1036, %v1020
    %v1245 = vpack.c.b16 %v1037, %v1021
    %v1246 = vpack.c.b16 %v1038, %v1022
    %v1247 = vpack.c.b16 %v1039, %v1023
    %v1248 = vpack.c.b16 %v1040, %v1024
    %v1249 = vpack.c.b16 %v1041, %v1025
    %v1250 = vpack.c.b16 %v1042, %v1026
    %v1251 = vpack.c.b16 %v1043, %v1027
    %v1252 = vpack.c.b16 %v1044, %v1028
    %v1253 = vpack.c.b16 %v1045, %v1029
    %v1254 = vpack.c.b16 %v1046, %v1030
    %v1255 = vpack.c.b16 %v1063, %v1047
    %v1256 = vpack.c.b16 %v1064, %v1048
    %v1257 = vpack.c.b16 %v1065, %v1049
    %v1258 = vpack.c.b16 %v1066, %v1050
    %v1259 = vpack.c.b16 %v1067, %v1051
    %v1260 = vpack.c.b16 %v1068, %v1052
    %v1261 = vpack.c.b16 %v1069, %v1053
    %v1262 = vpack.c.b16 %v1070, %v1054
    %v1263 = vpack.c.b16 %v1071, %v1055
    %v1264 = vpack.c.b16 %v1072, %v1056
    %v1265 = vpack.c.b16 %v1073, %v1057
    %v1266 = vpack.c.b16 %v1074, %v1058
    %v1267 = vpack.c.b16 %v1075, %v1059
    %v1268 = vpack.c.b16 %v1076, %v1060
    %v1269 = vpack.c.b16 %v1077, %v1061
    %v1270 = vpack.c.b16 %v1078, %v1062
    %v1271 = vpack.c.b16 %v1095, %v1079
    %v1272 = vpack.c.b16 %v1096, %v1080
    %v1273 = vpack.c.b16 %v1097, %v1081
    %v1274 = vpack.c.b16 %v1098, %v1082
    %v1275 = vpack.c.b16 %v1099, %v1083
    %v1276 = vpack.c.b16 %v1100, %v1084
    %v1277 = vpack.c.b16 %v1101, %v1085
    %v1278 = vpack.c.b16 %v1102, %v1086
    %v1279 = vpack.c.b16 %v1103, %v1087
    %v1280 = vpack.c.b16 %v1104, %v1088
    %v1281 = vpack.c.b16 %v1105, %v1089
    %v1282 = vpack.c.b16 %v1106, %v1090
    %v1283 = vpack.c.b16 %v1107, %v1091
    %v1284 = vpack.c.b16 %v1108, %v1092
    %v1285 = vpack.c.b16 %v1109, %v1093
    %v1286 = vpack.c.b16 %v1110, %v1094
    %v1287 = vpack.c.b16 %v1127, %v1111
    %v1288 = vpack.c.b16 %v1128, %v1112
    %v1289 = vpack.c.b16 %v1129, %v1113
    %v1290 = vpack.c.b16 %v1130, %v1114
    %v1291 = vpack.c.b16 %v1131, %v1115
    %v1292 = vpack.c.b16 %v1132, %v1116
    %v1293 = vpack.c.b16 %v1133, %v1117
    %v1294 = vpack.c.b16 %v1134, %v1118
    %v1295 = vpack.c.b16 %v1135, %v1119
    %v1296 = vpack.c.b16 %v1136, %v1120
    %v1297 = vpack.c.b16 %v1137, %v1121
    %v1298 = vpack.c.b16 %v1138, %v1122
    %v1299 = vpack.c.b16 %v1139, %v1123
    %v1300 = vpack.c.b16 %v1140, %v1124
    %v1301 = vpack.c.b16 %v1141, %v1125
    %v1302 = vpack.c.b16 %v1142, %v1126
    %v1303 = vpack.c.b16 %v1159, %v1143
    %v1304 = vpack.c.b16 %v1160, %v1144
    %v1305 = vpack.c.b16 %v1161, %v1145
    %v1306 = vpack.c.b16 %v1162, %v1146
    %v1307 = vpack.c.b16 %v1163, %v1147
    %v1308 = vpack.c.b16 %v1164, %v1148
    %v1309 = vpack.c.b16 %v1165, %v1149
    %v1310 = vpack.c.b16 %v1166, %v1150
    %v1311 = vpack.c.b16 %v1167, %v1151
    %v1312 = vpack.c.b16 %v1168, %v1152
    %v1313 = vpack.c.b16 %v1169, %v1153
    %v1314 = vpack.c.b16 %v1170, %v1154
    %v1315 = vpack.c.b16 %v1171, %v1155
    %v1316 = vpack.c.b16 %v1172, %v1156
    %v1317 = vpack.c.b16 %v1173, %v1157
    %v1318 = vpack.c.b16 %v1174, %v1158
    %v1319 = vpack.c.b16 %v1191, %v1175
    %v1320 = vpack.c.b16 %v1192, %v1176
    %v1321 = vpack.c.b16 %v1193, %v1177
    %v1322 = vpack.c.b16 %v1194, %v1178
    %v1323 = vpack.c.b16 %v1195, %v1179
    %v1324 = vpack.c.b16 %v1196, %v1180
    %v1325 = vpack.c.b16 %v1197, %v1181
    %v1326 = vpack.c.b16 %v1198, %v1182
    %v1327 = vpack.c.b16 %v1199, %v1183
    %v1328 = vpack.c.b16 %v1200, %v1184
    %v1329 = vpack.c.b16 %v1201, %v1185
    %v1330 = vpack.c.b16 %v1202, %v1186
    %v1331 = vpack.c.b16 %v1203, %v1187
    %v1332 = vpack.c.b16 %v1204, %v1188
    %v1333 = vpack.c.b16 %v1205, %v1189
    %v1334 = vpack.c.b16 %v1206, %v1190
    %1463 = vmatprep.subr.bf16.mxu0 %v1320
    %1464 = vmatpush1.bf16.msra.mxu0 %v1319
    %1465 = vmatprep.subr.bf16.mxu0 %v1304
    %1466 = vmatpush1.bf16.msra.mxu0 %v1303
    %1467 = vmatprep.subr.bf16.mxu0 %v1288
    %1468 = vmatpush1.bf16.msra.mxu0 %v1287
    %1469 = vmatprep.subr.bf16.mxu0 %v1272
    %1470 = vmatpush1.bf16.msra.mxu0 %v1271
    %1471 = vmatprep.subr.bf16.mxu0 %v1256
    %1472 = vmatpush1.bf16.msra.mxu0 %v1255
    %1473 = vmatprep.subr.bf16.mxu0 %v1240
    %1474 = vmatpush1.bf16.msra.mxu0 %v1239
    %1475 = vmatprep.subr.bf16.mxu0 %v1224
    %1476 = vmatpush1.bf16.msra.mxu0 %v1223
    %1477 = vmatprep.subr.bf16.mxu0 %v1208
    %1478 = vmatpush1.bf16.msra.mxu0 %v1207
    %1479 = vmatprep.subr.bf16.mxu0 0
    %1480 = vmatpush2.bf16.msra.mxu0 0
    %1481 = vmatprep.subr.bf16.mxu0 0
    %1482 = vmatpush2.bf16.msra.mxu0 0
    %1483 = vmatprep.subr.bf16.mxu0 0
    %1484 = vmatpush2.bf16.msra.mxu0 0
    %1485 = vmatprep.subr.bf16.mxu0 0
    %1486 = vmatpush2.bf16.msra.mxu0 0
    %1487 = vmatprep.subr.bf16.mxu0 0
    %1488 = vmatpush2.bf16.msra.mxu0 0
    %1489 = vmatprep.subr.bf16.mxu0 0
    %1490 = vmatpush2.bf16.msra.mxu0 0
    %1491 = vmatprep.subr.bf16.mxu0 0
    %1492 = vmatpush2.bf16.msra.mxu0 0
    %1493 = vmatprep.subr.bf16.mxu0 0
    %1494 = vmatpush2.bf16.msra.mxu0 0
    %1495 = vmatprep.mubr.bf16.mxu0 0
    %1496 = vmatmul.mubr.bf16.gmra.mxu0 %v137
    %v1497 = vpop.f32.mrf.mxu0
    %v1498 = vadd.f32 0.0, %v1497
    %v1499 = vpop.f32.mrf.mxu0
    %v1500 = vadd.f32 0.0, %v1499
    %v1501 = vpop.f32.mrf.mxu0
    %v1502 = vpop.f32.mrf.mxu0
    %1503 = vdwg.mxu0
    %1504 = vmatprep.subr.bf16.mxu0 %v1322
    %1505 = vmatpush1.bf16.msra.mxu0 %v1321
    %1506 = vmatprep.subr.bf16.mxu0 %v1306
    %1507 = vmatpush1.bf16.msra.mxu0 %v1305
    %1508 = vmatprep.subr.bf16.mxu0 %v1290
    %1509 = vmatpush1.bf16.msra.mxu0 %v1289
    %1510 = vmatprep.subr.bf16.mxu0 %v1274
    %1511 = vmatpush1.bf16.msra.mxu0 %v1273
    %1512 = vmatprep.subr.bf16.mxu0 %v1258
    %1513 = vmatpush1.bf16.msra.mxu0 %v1257
    %1514 = vmatprep.subr.bf16.mxu0 %v1242
    %1515 = vmatpush1.bf16.msra.mxu0 %v1241
    %1516 = vmatprep.subr.bf16.mxu0 %v1226
    %1517 = vmatpush1.bf16.msra.mxu0 %v1225
    %1518 = vmatprep.subr.bf16.mxu0 %v1210
    %1519 = vmatpush1.bf16.msra.mxu0 %v1209
    %1520 = vmatprep.subr.bf16.mxu0 0
    %1521 = vmatpush2.bf16.msra.mxu0 0
    %1522 = vmatprep.subr.bf16.mxu0 0
    %1523 = vmatpush2.bf16.msra.mxu0 0
    %1524 = vmatprep.subr.bf16.mxu0 0
    %1525 = vmatpush2.bf16.msra.mxu0 0
    %1526 = vmatprep.subr.bf16.mxu0 0
    %1527 = vmatpush2.bf16.msra.mxu0 0
    %1528 = vmatprep.subr.bf16.mxu0 0
    %1529 = vmatpush2.bf16.msra.mxu0 0
    %1530 = vmatprep.subr.bf16.mxu0 0
    %1531 = vmatpush2.bf16.msra.mxu0 0
    %1532 = vmatprep.subr.bf16.mxu0 0
    %1533 = vmatpush2.bf16.msra.mxu0 0
    %1534 = vmatprep.subr.bf16.mxu0 0
    %1535 = vmatpush2.bf16.msra.mxu0 0
    %1536 = vmatprep.mubr.bf16.mxu0 0
    %1537 = vmatmul.mubr.bf16.gmra.mxu0 %v137
    %v1538 = vpop.f32.mrf.mxu0
    %v1539 = vadd.f32 0.0, %v1538
    %v1540 = vpop.f32.mrf.mxu0
    %v1541 = vadd.f32 0.0, %v1540
    %v1542 = vpop.f32.mrf.mxu0
    %v1543 = vpop.f32.mrf.mxu0
    %1544 = vdwg.mxu0
    %1545 = vmatprep.subr.bf16.mxu0 %v1324
    %1546 = vmatpush1.bf16.msra.mxu0 %v1323
    %1547 = vmatprep.subr.bf16.mxu0 %v1308
    %1548 = vmatpush1.bf16.msra.mxu0 %v1307
    %1549 = vmatprep.subr.bf16.mxu0 %v1292
    %1550 = vmatpush1.bf16.msra.mxu0 %v1291
    %1551 = vmatprep.subr.bf16.mxu0 %v1276
    %1552 = vmatpush1.bf16.msra.mxu0 %v1275
    %1553 = vmatprep.subr.bf16.mxu0 %v1260
    %1554 = vmatpush1.bf16.msra.mxu0 %v1259
    %1555 = vmatprep.subr.bf16.mxu0 %v1244
    %1556 = vmatpush1.bf16.msra.mxu0 %v1243
    %1557 = vmatprep.subr.bf16.mxu0 %v1228
    %1558 = vmatpush1.bf16.msra.mxu0 %v1227
    %1559 = vmatprep.subr.bf16.mxu0 %v1212
    %1560 = vmatpush1.bf16.msra.mxu0 %v1211
    %1561 = vmatprep.subr.bf16.mxu0 0
    %1562 = vmatpush2.bf16.msra.mxu0 0
    %1563 = vmatprep.subr.bf16.mxu0 0
    %1564 = vmatpush2.bf16.msra.mxu0 0
    %1565 = vmatprep.subr.bf16.mxu0 0
    %1566 = vmatpush2.bf16.msra.mxu0 0
    %1567 = vmatprep.subr.bf16.mxu0 0
    %1568 = vmatpush2.bf16.msra.mxu0 0
    %1569 = vmatprep.subr.bf16.mxu0 0
    %1570 = vmatpush2.bf16.msra.mxu0 0
    %1571 = vmatprep.subr.bf16.mxu0 0
    %1572 = vmatpush2.bf16.msra.mxu0 0
    %1573 = vmatprep.subr.bf16.mxu0 0
    %1574 = vmatpush2.bf16.msra.mxu0 0
    %1575 = vmatprep.subr.bf16.mxu0 0
    %1576 = vmatpush2.bf16.msra.mxu0 0
    %1577 = vmatprep.mubr.bf16.mxu0 0
    %1578 = vmatmul.mubr.bf16.gmra.mxu0 %v137
    %v1579 = vpop.f32.mrf.mxu0
    %v1580 = vadd.f32 0.0, %v1579
    %v1581 = vpop.f32.mrf.mxu0
    %v1582 = vadd.f32 0.0, %v1581
    %v1583 = vpop.f32.mrf.mxu0
    %v1584 = vpop.f32.mrf.mxu0
    %1585 = vdwg.mxu0
    %1586 = vmatprep.subr.bf16.mxu0 %v1326
    %1587 = vmatpush1.bf16.msra.mxu0 %v1325
    %1588 = vmatprep.subr.bf16.mxu0 %v1310
    %1589 = vmatpush1.bf16.msra.mxu0 %v1309
    %1590 = vmatprep.subr.bf16.mxu0 %v1294
    %1591 = vmatpush1.bf16.msra.mxu0 %v1293
    %1592 = vmatprep.subr.bf16.mxu0 %v1278
    %1593 = vmatpush1.bf16.msra.mxu0 %v1277
    %1594 = vmatprep.subr.bf16.mxu0 %v1262
    %1595 = vmatpush1.bf16.msra.mxu0 %v1261
    %1596 = vmatprep.subr.bf16.mxu0 %v1246
    %1597 = vmatpush1.bf16.msra.mxu0 %v1245
    %1598 = vmatprep.subr.bf16.mxu0 %v1230
    %1599 = vmatpush1.bf16.msra.mxu0 %v1229
    %1600 = vmatprep.subr.bf16.mxu0 %v1214
    %1601 = vmatpush1.bf16.msra.mxu0 %v1213
    %1602 = vmatprep.subr.bf16.mxu0 0
    %1603 = vmatpush2.bf16.msra.mxu0 0
    %1604 = vmatprep.subr.bf16.mxu0 0
    %1605 = vmatpush2.bf16.msra.mxu0 0
    %1606 = vmatprep.subr.bf16.mxu0 0
    %1607 = vmatpush2.bf16.msra.mxu0 0
    %1608 = vmatprep.subr.bf16.mxu0 0
    %1609 = vmatpush2.bf16.msra.mxu0 0
    %1610 = vmatprep.subr.bf16.mxu0 0
    %1611 = vmatpush2.bf16.msra.mxu0 0
    %1612 = vmatprep.subr.bf16.mxu0 0
    %1613 = vmatpush2.bf16.msra.mxu0 0
    %1614 = vmatprep.subr.bf16.mxu0 0
    %1615 = vmatpush2.bf16.msra.mxu0 0
    %1616 = vmatprep.subr.bf16.mxu0 0
    %1617 = vmatpush2.bf16.msra.mxu0 0
    %1618 = vmatprep.mubr.bf16.mxu0 0
    %1619 = vmatmul.mubr.bf16.gmra.mxu0 %v137
    %v1620 = vpop.f32.mrf.mxu0
    %v1621 = vadd.f32 0.0, %v1620
    %v1622 = vpop.f32.mrf.mxu0
    %v1623 = vadd.f32 0.0, %v1622
    %v1624 = vpop.f32.mrf.mxu0
    %v1625 = vpop.f32.mrf.mxu0
    %1626 = vdwg.mxu0
    %1627 = vmatprep.subr.bf16.mxu0 %v1328
    %1628 = vmatpush1.bf16.msra.mxu0 %v1327
    %1629 = vmatprep.subr.bf16.mxu0 %v1312
    %1630 = vmatpush1.bf16.msra.mxu0 %v1311
    %1631 = vmatprep.subr.bf16.mxu0 %v1296
    %1632 = vmatpush1.bf16.msra.mxu0 %v1295
    %1633 = vmatprep.subr.bf16.mxu0 %v1280
    %1634 = vmatpush1.bf16.msra.mxu0 %v1279
    %1635 = vmatprep.subr.bf16.mxu0 %v1264
    %1636 = vmatpush1.bf16.msra.mxu0 %v1263
    %1637 = vmatprep.subr.bf16.mxu0 %v1248
    %1638 = vmatpush1.bf16.msra.mxu0 %v1247
    %1639 = vmatprep.subr.bf16.mxu0 %v1232
    %1640 = vmatpush1.bf16.msra.mxu0 %v1231
    %1641 = vmatprep.subr.bf16.mxu0 %v1216
    %1642 = vmatpush1.bf16.msra.mxu0 %v1215
    %1643 = vmatprep.subr.bf16.mxu0 0
    %1644 = vmatpush2.bf16.msra.mxu0 0
    %1645 = vmatprep.subr.bf16.mxu0 0
    %1646 = vmatpush2.bf16.msra.mxu0 0
    %1647 = vmatprep.subr.bf16.mxu0 0
    %1648 = vmatpush2.bf16.msra.mxu0 0
    %1649 = vmatprep.subr.bf16.mxu0 0
    %1650 = vmatpush2.bf16.msra.mxu0 0
    %1651 = vmatprep.subr.bf16.mxu0 0
    %1652 = vmatpush2.bf16.msra.mxu0 0
    %1653 = vmatprep.subr.bf16.mxu0 0
    %1654 = vmatpush2.bf16.msra.mxu0 0
    %1655 = vmatprep.subr.bf16.mxu0 0
    %1656 = vmatpush2.bf16.msra.mxu0 0
    %1657 = vmatprep.subr.bf16.mxu0 0
    %1658 = vmatpush2.bf16.msra.mxu0 0
    %1659 = vmatprep.mubr.bf16.mxu0 0
    %1660 = vmatmul.mubr.bf16.gmra.mxu0 %v137
    %v1661 = vpop.f32.mrf.mxu0
    %v1662 = vadd.f32 0.0, %v1661
    %v1663 = vpop.f32.mrf.mxu0
    %v1664 = vadd.f32 0.0, %v1663
    %v1665 = vpop.f32.mrf.mxu0
    %v1666 = vpop.f32.mrf.mxu0
    %1667 = vdwg.mxu0
    %1668 = vmatprep.subr.bf16.mxu0 %v1330
    %1669 = vmatpush1.bf16.msra.mxu0 %v1329
    %1670 = vmatprep.subr.bf16.mxu0 %v1314
    %1671 = vmatpush1.bf16.msra.mxu0 %v1313
    %1672 = vmatprep.subr.bf16.mxu0 %v1298
    %1673 = vmatpush1.bf16.msra.mxu0 %v1297
    %1674 = vmatprep.subr.bf16.mxu0 %v1282
    %1675 = vmatpush1.bf16.msra.mxu0 %v1281
    %1676 = vmatprep.subr.bf16.mxu0 %v1266
    %1677 = vmatpush1.bf16.msra.mxu0 %v1265
    %1678 = vmatprep.subr.bf16.mxu0 %v1250
    %1679 = vmatpush1.bf16.msra.mxu0 %v1249
    %1680 = vmatprep.subr.bf16.mxu0 %v1234
    %1681 = vmatpush1.bf16.msra.mxu0 %v1233
    %1682 = vmatprep.subr.bf16.mxu0 %v1218
    %1683 = vmatpush1.bf16.msra.mxu0 %v1217
    %1684 = vmatprep.subr.bf16.mxu0 0
    %1685 = vmatpush2.bf16.msra.mxu0 0
    %1686 = vmatprep.subr.bf16.mxu0 0
    %1687 = vmatpush2.bf16.msra.mxu0 0
    %1688 = vmatprep.subr.bf16.mxu0 0
    %1689 = vmatpush2.bf16.msra.mxu0 0
    %1690 = vmatprep.subr.bf16.mxu0 0
    %1691 = vmatpush2.bf16.msra.mxu0 0
    %1692 = vmatprep.subr.bf16.mxu0 0
    %1693 = vmatpush2.bf16.msra.mxu0 0
    %1694 = vmatprep.subr.bf16.mxu0 0
    %1695 = vmatpush2.bf16.msra.mxu0 0
    %1696 = vmatprep.subr.bf16.mxu0 0
    %1697 = vmatpush2.bf16.msra.mxu0 0
    %1698 = vmatprep.subr.bf16.mxu0 0
    %1699 = vmatpush2.bf16.msra.mxu0 0
    %1700 = vmatprep.mubr.bf16.mxu0 0
    %1701 = vmatmul.mubr.bf16.gmra.mxu0 %v137
    %v1702 = vpop.f32.mrf.mxu0
    %v1703 = vadd.f32 0.0, %v1702
    %v1704 = vpop.f32.mrf.mxu0
    %v1705 = vadd.f32 0.0, %v1704
    %v1706 = vpop.f32.mrf.mxu0
    %v1707 = vpop.f32.mrf.mxu0
    %1708 = vdwg.mxu0
    %1709 = vmatprep.subr.bf16.mxu0 %v1332
    %1710 = vmatpush1.bf16.msra.mxu0 %v1331
    %1711 = vmatprep.subr.bf16.mxu0 %v1316
    %1712 = vmatpush1.bf16.msra.mxu0 %v1315
    %1713 = vmatprep.subr.bf16.mxu0 %v1300
    %1714 = vmatpush1.bf16.msra.mxu0 %v1299
    %1715 = vmatprep.subr.bf16.mxu0 %v1284
    %1716 = vmatpush1.bf16.msra.mxu0 %v1283
    %1717 = vmatprep.subr.bf16.mxu0 %v1268
    %1718 = vmatpush1.bf16.msra.mxu0 %v1267
    %1719 = vmatprep.subr.bf16.mxu0 %v1252
    %1720 = vmatpush1.bf16.msra.mxu0 %v1251
    %1721 = vmatprep.subr.bf16.mxu0 %v1236
    %1722 = vmatpush1.bf16.msra.mxu0 %v1235
    %1723 = vmatprep.subr.bf16.mxu0 %v1220
    %1724 = vmatpush1.bf16.msra.mxu0 %v1219
    %1725 = vmatprep.subr.bf16.mxu0 0
    %1726 = vmatpush2.bf16.msra.mxu0 0
    %1727 = vmatprep.subr.bf16.mxu0 0
    %1728 = vmatpush2.bf16.msra.mxu0 0
    %1729 = vmatprep.subr.bf16.mxu0 0
    %1730 = vmatpush2.bf16.msra.mxu0 0
    %1731 = vmatprep.subr.bf16.mxu0 0
    %1732 = vmatpush2.bf16.msra.mxu0 0
    %1733 = vmatprep.subr.bf16.mxu0 0
    %1734 = vmatpush2.bf16.msra.mxu0 0
    %1735 = vmatprep.subr.bf16.mxu0 0
    %1736 = vmatpush2.bf16.msra.mxu0 0
    %1737 = vmatprep.subr.bf16.mxu0 0
    %1738 = vmatpush2.bf16.msra.mxu0 0
    %1739 = vmatprep.subr.bf16.mxu0 0
    %1740 = vmatpush2.bf16.msra.mxu0 0
    %1741 = vmatprep.mubr.bf16.mxu0 0
    %1742 = vmatmul.mubr.bf16.gmra.mxu0 %v137
    %v1743 = vpop.f32.mrf.mxu0
    %v1744 = vadd.f32 0.0, %v1743
    %v1745 = vpop.f32.mrf.mxu0
    %v1746 = vadd.f32 0.0, %v1745
    %v1747 = vpop.f32.mrf.mxu0
    %v1748 = vpop.f32.mrf.mxu0
    %1749 = vdwg.mxu0
    %1750 = vmatprep.subr.bf16.mxu0 %v1334
    %1751 = vmatpush1.bf16.msra.mxu0 %v1333
    %1752 = vmatprep.subr.bf16.mxu0 %v1318
    %1753 = vmatpush1.bf16.msra.mxu0 %v1317
    %1754 = vmatprep.subr.bf16.mxu0 %v1302
    %1755 = vmatpush1.bf16.msra.mxu0 %v1301
    %1756 = vmatprep.subr.bf16.mxu0 %v1286
    %1757 = vmatpush1.bf16.msra.mxu0 %v1285
    %1758 = vmatprep.subr.bf16.mxu0 %v1270
    %1759 = vmatpush1.bf16.msra.mxu0 %v1269
    %1760 = vmatprep.subr.bf16.mxu0 %v1254
    %1761 = vmatpush1.bf16.msra.mxu0 %v1253
    %1762 = vmatprep.subr.bf16.mxu0 %v1238
    %1763 = vmatpush1.bf16.msra.mxu0 %v1237
    %1764 = vmatprep.subr.bf16.mxu0 %v1222
    %1765 = vmatpush1.bf16.msra.mxu0 %v1221
    %1766 = vmatprep.subr.bf16.mxu0 0
    %1767 = vmatpush2.bf16.msra.mxu0 0
    %1768 = vmatprep.subr.bf16.mxu0 0
    %1769 = vmatpush2.bf16.msra.mxu0 0
    %1770 = vmatprep.subr.bf16.mxu0 0
    %1771 = vmatpush2.bf16.msra.mxu0 0
    %1772 = vmatprep.subr.bf16.mxu0 0
    %1773 = vmatpush2.bf16.msra.mxu0 0
    %1774 = vmatprep.subr.bf16.mxu0 0
    %1775 = vmatpush2.bf16.msra.mxu0 0
    %1776 = vmatprep.subr.bf16.mxu0 0
    %1777 = vmatpush2.bf16.msra.mxu0 0
    %1778 = vmatprep.subr.bf16.mxu0 0
    %1779 = vmatpush2.bf16.msra.mxu0 0
    %1780 = vmatprep.subr.bf16.mxu0 0
    %1781 = vmatpush2.bf16.msra.mxu0 0
    %1782 = vmatprep.mubr.bf16.mxu0 0
    %1783 = vmatmul.mubr.bf16.gmra.mxu0 %v137
    %v1784 = vpop.f32.mrf.mxu0
    %v1785 = vadd.f32 0.0, %v1784
    %v1786 = vpop.f32.mrf.mxu0
    %v1787 = vadd.f32 0.0, %v1786
    %v1788 = vpop.f32.mrf.mxu0
    %v1789 = vpop.f32.mrf.mxu0
    %1790 = vdwg.mxu0
    %v1791 = vpack.c.bf16 %v1498, %v1498
    %v1792 = vpack.c.bf16 %v1500, %v1500
    %v1793 = vpack.c.bf16 %v1539, %v1539
    %v1794 = vpack.c.bf16 %v1541, %v1541
    %v1795 = vpack.c.bf16 %v1580, %v1580
    %v1796 = vpack.c.bf16 %v1582, %v1582
    %v1797 = vpack.c.bf16 %v1621, %v1621
    %v1798 = vpack.c.bf16 %v1623, %v1623
    %v1799 = vpack.c.bf16 %v1662, %v1662
    %v1800 = vpack.c.bf16 %v1664, %v1664
    %v1801 = vpack.c.bf16 %v1703, %v1703
    %v1802 = vpack.c.bf16 %v1705, %v1705
    %v1803 = vpack.c.bf16 %v1744, %v1744
    %v1804 = vpack.c.bf16 %v1746, %v1746
    %v1805 = vpack.c.bf16 %v1785, %v1785
    %v1806 = vpack.c.bf16 %v1787, %v1787
    %v1807 = vld [vmem:[#allocation15] sm:$0xff]
    %v1808 = vld [vmem:[#allocation15 + $0x8] sm:$0xff]
    %v1809 = vld [vmem:[#allocation15 + $0x10] sm:$0xff]
    %v1810 = vld [vmem:[#allocation15 + $0x18] sm:$0xff]
    %v1811 = vld [vmem:[#allocation15 + $0x20] sm:$0xff]
    %v1812 = vld [vmem:[#allocation15 + $0x28] sm:$0xff]
    %v1813 = vld [vmem:[#allocation15 + $0x30] sm:$0xff]
    %v1814 = vld [vmem:[#allocation15 + $0x38] sm:$0xff]
    %s1815 = smul.u32 4, 8
    %s1816 = smul.u32 %s1815, 16
    %s1817 = smul.u32 %s1816, 1
    %s1818 = sshll.u32 %s1817, 4
    %1819 = dma.done [#allocation6], %s1818
    %s1820 = sshll.u32 %s1817, 4
    %1821 = dma.done %s99, %s1820
    %s1822 = smul.u32 4, 128
    %s1823 = smul.u32 %s1822, 1
    %s1824 = sshll.u32 %s1823, 4
    %1825 = dma.done %s111, %s1824
    %1826 = vmatprep.subr.bf16.mxu0 0
    %1827 = vmatpush1.bf16.xpose.msra.mxu0 0
    %1828 = vmatprep.subr.bf16.mxu0 0
    %1829 = vmatpush1.bf16.xpose.msra.mxu0 0
    %1830 = vmatprep.subr.bf16.mxu0 0
    %1831 = vmatpush1.bf16.xpose.msra.mxu0 0
    %1832 = vmatprep.subr.bf16.mxu0 0
    %1833 = vmatpush1.bf16.xpose.msra.mxu0 0
    %1834 = vmatprep.subr.bf16.mxu0 0
    %1835 = vmatpush1.bf16.xpose.msra.mxu0 0
    %1836 = vmatprep.subr.bf16.mxu0 0
    %1837 = vmatpush1.bf16.xpose.msra.mxu0 0
    %1838 = vmatprep.subr.bf16.mxu0 0
    %1839 = vmatpush1.bf16.xpose.msra.mxu0 0
    %1840 = vmatprep.subr.bf16.mxu0 0
    %1841 = vmatpush1.bf16.xpose.msra.mxu0 %v1791
    %1842 = vmatprep.subr.bf16.mxu0 0
    %1843 = vmatpush2.bf16.xpose.msra.mxu0 0
    %1844 = vmatprep.subr.bf16.mxu0 0
    %1845 = vmatpush2.bf16.xpose.msra.mxu0 0
    %1846 = vmatprep.subr.bf16.mxu0 0
    %1847 = vmatpush2.bf16.xpose.msra.mxu0 0
    %1848 = vmatprep.subr.bf16.mxu0 0
    %1849 = vmatpush2.bf16.xpose.msra.mxu0 0
    %1850 = vmatprep.subr.bf16.mxu0 0
    %1851 = vmatpush2.bf16.xpose.msra.mxu0 0
    %1852 = vmatprep.subr.bf16.mxu0 0
    %1853 = vmatpush2.bf16.xpose.msra.mxu0 0
    %1854 = vmatprep.subr.bf16.mxu0 0
    %1855 = vmatpush2.bf16.xpose.msra.mxu0 0
    %1856 = vmatprep.subr.bf16.mxu0 0
    %1857 = vmatpush2.bf16.xpose.msra.mxu0 0
    %1858 = vmatprep.mubr.bf16.mxu0 0
    %1859 = vmatmul.mubr.bf16.gmra.mxu0 %v687
    %v1860 = vpop.f32.mrf.mxu0
    %v1861 = vadd.f32 0.0, %v1860
    %v1862 = vpop.f32.mrf.mxu0
    %v1863 = vpop.f32.mrf.mxu0
    %v1864 = vpop.f32.mrf.mxu0
    %1865 = vdwg.mxu0
    %vm1866 = vcmask 64512
    %v1867 = vsel %vm1866, %v1861, -inf
    %1868 = vmax.xlane.f32.xlu0 %v1867
    %v1869 = vpop.xlane.xlu0 %1868
    %v1870 = vsub.f32 %v1861, %v1869
    %v1871 = vmul.f32 %v1870, 1.442695
    %v1872 = vpow.pop %v1871
    %v1873 = vsel %vm1866, %v1872, 0.0
    %1874 = vadd.xlane.f32.xlu0 %v1873
    %v1875 = vpop.xlane.xlu0 %1874
    %v1876 = vrcp.pop %v1875
    %v1877 = vmul.f32 %v1872, %v1876
    %v1878 = vpack.c.bf16 %v1877, %v1877
    %v1880 = vsel %vm1866, %v1878, 0
    %vm1882 = vcmask 1043456
    %v1884 = vsel %vm1882, %v1799, 0
    %1886 = vmatprep.subr.bf16.mxu0 0
    %1887 = vmatpush1.bf16.msra.mxu0 0
    %1888 = vmatprep.subr.bf16.mxu0 0
    %1889 = vmatpush1.bf16.msra.mxu0 0
    %1890 = vmatprep.subr.bf16.mxu0 0
    %1891 = vmatpush1.bf16.msra.mxu0 0
    %1892 = vmatprep.subr.bf16.mxu0 0
    %1893 = vmatpush1.bf16.msra.mxu0 0
    %1894 = vmatprep.subr.bf16.mxu0 0
    %1895 = vmatpush1.bf16.msra.mxu0 0
    %1896 = vmatprep.subr.bf16.mxu0 0
    %1897 = vmatpush1.bf16.msra.mxu0 0
    %1898 = vmatprep.subr.bf16.mxu0 0
    %1899 = vmatpush1.bf16.msra.mxu0 0
    %1900 = vmatprep.subr.bf16.mxu0 0
    %1901 = vmatpush1.bf16.msra.mxu0 %v1884
    %1902 = vmatprep.subr.bf16.mxu0 0
    %1903 = vmatpush2.bf16.msra.mxu0 0
    %1904 = vmatprep.subr.bf16.mxu0 0
    %1905 = vmatpush2.bf16.msra.mxu0 0
    %1906 = vmatprep.subr.bf16.mxu0 0
    %1907 = vmatpush2.bf16.msra.mxu0 0
    %1908 = vmatprep.subr.bf16.mxu0 0
    %1909 = vmatpush2.bf16.msra.mxu0 0
    %1910 = vmatprep.subr.bf16.mxu0 0
    %1911 = vmatpush2.bf16.msra.mxu0 0
    %1912 = vmatprep.subr.bf16.mxu0 0
    %1913 = vmatpush2.bf16.msra.mxu0 0
    %1914 = vmatprep.subr.bf16.mxu0 0
    %1915 = vmatpush2.bf16.msra.mxu0 0
    %1916 = vmatprep.subr.bf16.mxu0 0
    %1917 = vmatpush2.bf16.msra.mxu0 0
    %1918 = vmatprep.mubr.bf16.mxu0 0
    %1919 = vmatmul.mubr.bf16.gmra.mxu0 %v1880
    %v1920 = vpop.f32.mrf.mxu0
    %v1921 = vadd.f32 %v136, %v1920
    %v1922 = vpop.f32.mrf.mxu0
    %v1923 = vpop.f32.mrf.mxu0
    %v1924 = vpop.f32.mrf.mxu0
    %1925 = vdwg.mxu0
    %1926 = vadd.xlane.f32.xlu0 %v1921
    %v1927 = vpop.xlane.xlu0 %1926
    %v1928 = vrcp.pop 128.0
    %v1929 = vmul.f32 %v1927, %v1928
    %v1930 = vsub.f32 %v1921, %v1929
    %v1931 = vmul.f32 %v1930, %v1930
    %1932 = vadd.xlane.f32.xlu0 %v1931
    %v1933 = vpop.xlane.xlu0 %1932
    %v1934 = vmul.f32 %v1933, %v1928
    %v1935 = vadd.f32 %v1934, 1e-05
    %v1936 = vrsqrt.pop %v1935
    %v1937 = vmul.f32 %v1930, %v1936
    %v1938 = vlaneseq
    %v1939 = vshrl.u32 %v1938, 7
    %v1940 = vsub.s32 0, %v1939
    %v1941 = vrot.slane %v1807, %v1940
    %v1942 = vmul.f32 %v1937, %v1941
    %v1943 = vlaneseq
    %v1944 = vshrl.u32 %v1943, 7
    %v1945 = vsub.s32 1, %v1944
    %v1946 = vrot.slane %v1807, %v1945
    %v1947 = vadd.f32 %v1942, %v1946
    %v1948 = vpack.c.bf16 %v1947, %v1947
    %v1949 = vld [vmem:[#allocation2] sm:$0xf]
    %v1950 = vld [vmem:[#allocation2 + $0x4] sm:$0xf]
    %v1951 = vld [vmem:[#allocation2 + $0x8] sm:$0xf]
    %v1952 = vld [vmem:[#allocation2 + $0xc] sm:$0xf]
    %v1953 = vld [vmem:[#allocation2 + $0x10] sm:$0xf]
    %v1954 = vld [vmem:[#allocation2 + $0x14] sm:$0xf]
    %v1955 = vld [vmem:[#allocation2 + $0x18] sm:$0xf]
    %v1956 = vld [vmem:[#allocation2 + $0x1c] sm:$0xf]
    %v1957 = vld [vmem:[#allocation2 + $0x20] sm:$0xf]
    %v1958 = vld [vmem:[#allocation2 + $0x24] sm:$0xf]
    %v1959 = vld [vmem:[#allocation2 + $0x28] sm:$0xf]
    %v1960 = vld [vmem:[#allocation2 + $0x2c] sm:$0xf]
    %v1961 = vld [vmem:[#allocation2 + $0x30] sm:$0xf]
    %v1962 = vld [vmem:[#allocation2 + $0x34] sm:$0xf]
    %v1963 = vld [vmem:[#allocation2 + $0x38] sm:$0xf]
    %v1964 = vld [vmem:[#allocation2 + $0x3c] sm:$0xf]
    %v1965 = vlaneseq
    %v1966 = vshrl.u32 %v1965, 7
    %v1967 = vsub.s32 2, %v1966
    %v1968 = vrot.slane %v1807, %v1967
    %v1985 = vunpack.c.l.b16 %v1949
    %v1986 = vunpack.c.l.b16 %v1950
    %v1987 = vunpack.c.l.b16 %v1951
    %v1988 = vunpack.c.l.b16 %v1952
    %v1989 = vunpack.c.l.b16 %v1953
    %v1990 = vunpack.c.l.b16 %v1954
    %v1991 = vunpack.c.l.b16 %v1955
    %v1992 = vunpack.c.l.b16 %v1956
    %v1993 = vunpack.c.l.b16 %v1957
    %v1994 = vunpack.c.l.b16 %v1958
    %v1995 = vunpack.c.l.b16 %v1959
    %v1996 = vunpack.c.l.b16 %v1960
    %v1997 = vunpack.c.l.b16 %v1961
    %v1998 = vunpack.c.l.b16 %v1962
    %v1999 = vunpack.c.l.b16 %v1963
    %v2000 = vunpack.c.l.b16 %v1964
    %v2001 = vpack.c.b16 %v1986, %v1985
    %v2002 = vpack.c.b16 %v1988, %v1987
    %v2003 = vpack.c.b16 %v1990, %v1989
    %v2004 = vpack.c.b16 %v1992, %v1991
    %v2005 = vpack.c.b16 %v1994, %v1993
    %v2006 = vpack.c.b16 %v1996, %v1995
    %v2007 = vpack.c.b16 %v1998, %v1997
    %v2008 = vpack.c.b16 %v2000, %v1999
    %2017 = vmatprep.subr.bf16.mxu0 0
    %2018 = vmatpush1.bf16.msra.mxu0 %v2008
    %2019 = vmatprep.subr.bf16.mxu0 0
    %2020 = vmatpush1.bf16.msra.mxu0 %v2007
    %2021 = vmatprep.subr.bf16.mxu0 0
    %2022 = vmatpush1.bf16.msra.mxu0 %v2006
    %2023 = vmatprep.subr.bf16.mxu0 0
    %2024 = vmatpush1.bf16.msra.mxu0 %v2005
    %2025 = vmatprep.subr.bf16.mxu0 0
    %2026 = vmatpush1.bf16.msra.mxu0 %v2004
    %2027 = vmatprep.subr.bf16.mxu0 0
    %2028 = vmatpush1.bf16.msra.mxu0 %v2003
    %2029 = vmatprep.subr.bf16.mxu0 0
    %2030 = vmatpush1.bf16.msra.mxu0 %v2002
    %2031 = vmatprep.subr.bf16.mxu0 0
    %2032 = vmatpush1.bf16.msra.mxu0 %v2001
    %2033 = vmatprep.subr.bf16.mxu0 0
    %2034 = vmatpush2.bf16.msra.mxu0 0
    %2035 = vmatprep.subr.bf16.mxu0 0
    %2036 = vmatpush2.bf16.msra.mxu0 0
    %2037 = vmatprep.subr.bf16.mxu0 0
    %2038 = vmatpush2.bf16.msra.mxu0 0
    %2039 = vmatprep.subr.bf16.mxu0 0
    %2040 = vmatpush2.bf16.msra.mxu0 0
    %2041 = vmatprep.subr.bf16.mxu0 0
    %2042 = vmatpush2.bf16.msra.mxu0 0
    %2043 = vmatprep.subr.bf16.mxu0 0
    %2044 = vmatpush2.bf16.msra.mxu0 0
    %2045 = vmatprep.subr.bf16.mxu0 0
    %2046 = vmatpush2.bf16.msra.mxu0 0
    %2047 = vmatprep.subr.bf16.mxu0 0
    %2048 = vmatpush2.bf16.msra.mxu0 0
    %2049 = vmatprep.mubr.bf16.mxu0 0
    %2050 = vmatmul.mubr.bf16.gmra.mxu0 %v1948
    %v2051 = vpop.f32.mrf.mxu0
    %v2052 = vadd.f32 %v1968, %v2051
    %v2053 = vpop.f32.mrf.mxu0
    %v2054 = vpop.f32.mrf.mxu0
    %v2055 = vpop.f32.mrf.mxu0
    %2056 = vdwg.mxu0
    %v2057 = vmax.f32 %v2052, 0.0
    %v2058 = vpack.c.bf16 %v2057, %v2057
    %v2059 = vld [vmem:[#allocation3] sm:$0xf]
    %v2060 = vld [vmem:[#allocation3 + $0x4] sm:$0xf]
    %v2061 = vld [vmem:[#allocation3 + $0x8] sm:$0xf]
    %v2062 = vld [vmem:[#allocation3 + $0xc] sm:$0xf]
    %v2063 = vld [vmem:[#allocation3 + $0x10] sm:$0xf]
    %v2064 = vld [vmem:[#allocation3 + $0x14] sm:$0xf]
    %v2065 = vld [vmem:[#allocation3 + $0x18] sm:$0xf]
    %v2066 = vld [vmem:[#allocation3 + $0x1c] sm:$0xf]
    %v2067 = vld [vmem:[#allocation3 + $0x20] sm:$0xf]
    %v2068 = vld [vmem:[#allocation3 + $0x24] sm:$0xf]
    %v2069 = vld [vmem:[#allocation3 + $0x28] sm:$0xf]
    %v2070 = vld [vmem:[#allocation3 + $0x2c] sm:$0xf]
    %v2071 = vld [vmem:[#allocation3 + $0x30] sm:$0xf]
    %v2072 = vld [vmem:[#allocation3 + $0x34] sm:$0xf]
    %v2073 = vld [vmem:[#allocation3 + $0x38] sm:$0xf]
    %v2074 = vld [vmem:[#allocation3 + $0x3c] sm:$0xf]
    %v2075 = vlaneseq
    %v2076 = vshrl.u32 %v2075, 7
    %v2077 = vsub.s32 3, %v2076
    %v2078 = vrot.slane %v1807, %v2077
    %v2095 = vunpack.c.l.b16 %v2059
    %v2096 = vunpack.c.l.b16 %v2060
    %v2097 = vunpack.c.l.b16 %v2061
    %v2098 = vunpack.c.l.b16 %v2062
    %v2099 = vunpack.c.l.b16 %v2063
    %v2100 = vunpack.c.l.b16 %v2064
    %v2101 = vunpack.c.l.b16 %v2065
    %v2102 = vunpack.c.l.b16 %v2066
    %v2103 = vunpack.c.l.b16 %v2067
    %v2104 = vunpack.c.l.b16 %v2068
    %v2105 = vunpack.c.l.b16 %v2069
    %v2106 = vunpack.c.l.b16 %v2070
    %v2107 = vunpack.c.l.b16 %v2071
    %v2108 = vunpack.c.l.b16 %v2072
    %v2109 = vunpack.c.l.b16 %v2073
    %v2110 = vunpack.c.l.b16 %v2074
    %v2111 = vpack.c.b16 %v2096, %v2095
    %v2112 = vpack.c.b16 %v2098, %v2097
    %v2113 = vpack.c.b16 %v2100, %v2099
    %v2114 = vpack.c.b16 %v2102, %v2101
    %v2115 = vpack.c.b16 %v2104, %v2103
    %v2116 = vpack.c.b16 %v2106, %v2105
    %v2117 = vpack.c.b16 %v2108, %v2107
    %v2118 = vpack.c.b16 %v2110, %v2109
    %2127 = vmatprep.subr.bf16.mxu0 0
    %2128 = vmatpush1.bf16.msra.mxu0 %v2118
    %2129 = vmatprep.subr.bf16.mxu0 0
    %2130 = vmatpush1.bf16.msra.mxu0 %v2117
    %2131 = vmatprep.subr.bf16.mxu0 0
    %2132 = vmatpush1.bf16.msra.mxu0 %v2116
    %2133 = vmatprep.subr.bf16.mxu0 0
    %2134 = vmatpush1.bf16.msra.mxu0 %v2115
    %2135 = vmatprep.subr.bf16.mxu0 0
    %2136 = vmatpush1.bf16.msra.mxu0 %v2114
    %2137 = vmatprep.subr.bf16.mxu0 0
    %2138 = vmatpush1.bf16.msra.mxu0 %v2113
    %2139 = vmatprep.subr.bf16.mxu0 0
    %2140 = vmatpush1.bf16.msra.mxu0 %v2112
    %2141 = vmatprep.subr.bf16.mxu0 0
    %2142 = vmatpush1.bf16.msra.mxu0 %v2111
    %2143 = vmatprep.subr.bf16.mxu0 0
    %2144 = vmatpush2.bf16.msra.mxu0 0
    %2145 = vmatprep.subr.bf16.mxu0 0
    %2146 = vmatpush2.bf16.msra.mxu0 0
    %2147 = vmatprep.subr.bf16.mxu0 0
    %2148 = vmatpush2.bf16.msra.mxu0 0
    %2149 = vmatprep.subr.bf16.mxu0 0
    %2150 = vmatpush2.bf16.msra.mxu0 0
    %2151 = vmatprep.subr.bf16.mxu0 0
    %2152 = vmatpush2.bf16.msra.mxu0 0
    %2153 = vmatprep.subr.bf16.mxu0 0
    %2154 = vmatpush2.bf16.msra.mxu0 0
    %2155 = vmatprep.subr.bf16.mxu0 0
    %2156 = vmatpush2.bf16.msra.mxu0 0
    %2157 = vmatprep.subr.bf16.mxu0 0
    %2158 = vmatpush2.bf16.msra.mxu0 0
    %2159 = vmatprep.mubr.bf16.mxu0 0
    %2160 = vmatmul.mubr.bf16.gmra.mxu0 %v2058
    %v2161 = vpop.f32.mrf.mxu0
    %v2162 = vadd.f32 %v2078, %v2161
    %v2163 = vpop.f32.mrf.mxu0
    %v2164 = vpop.f32.mrf.mxu0
    %v2165 = vpop.f32.mrf.mxu0
    %2166 = vdwg.mxu0
    %v2167 = vadd.f32 %v2162, %v1947
    %2168 = vadd.xlane.f32.xlu0 %v2167
    %v2169 = vpop.xlane.xlu0 %2168
    %v2170 = vmul.f32 %v2169, %v1928
    %v2171 = vsub.f32 %v2167, %v2170
    %v2172 = vmul.f32 %v2171, %v2171
    %2173 = vadd.xlane.f32.xlu0 %v2172
    %v2174 = vpop.xlane.xlu0 %2173
    %v2175 = vmul.f32 %v2174, %v1928
    %v2176 = vadd.f32 %v2175, 1e-05
    %v2177 = vrsqrt.pop %v2176
    %v2178 = vmul.f32 %v2171, %v2177
    %v2179 = vlaneseq
    %v2180 = vshrl.u32 %v2179, 7
    %v2181 = vsub.s32 4, %v2180
    %v2182 = vrot.slane %v1807, %v2181
    %v2183 = vmul.f32 %v2178, %v2182
    %v2184 = vlaneseq
    %v2185 = vshrl.u32 %v2184, 7
    %v2186 = vsub.s32 5, %v2185
    %v2187 = vrot.slane %v1807, %v2186
    %v2188 = vadd.f32 %v2183, %v2187
    %v2189 = vadd.f32 %v2188, %v136
    %v2190 = vpack.c.bf16 %v2189, %v2189
    %v2191 = vld [vmem:[#allocation4] sm:$0xf]
    %v2192 = vld [vmem:[#allocation4 + $0x4] sm:$0xf]
    %v2193 = vld [vmem:[#allocation4 + $0x8] sm:$0xf]
    %v2194 = vld [vmem:[#allocation4 + $0xc] sm:$0xf]
    %v2195 = vld [vmem:[#allocation4 + $0x10] sm:$0xf]
    %v2196 = vld [vmem:[#allocation4 + $0x14] sm:$0xf]
    %v2197 = vld [vmem:[#allocation4 + $0x18] sm:$0xf]
    %v2198 = vld [vmem:[#allocation4 + $0x1c] sm:$0xf]
    %v2199 = vld [vmem:[#allocation4 + $0x20] sm:$0xf]
    %v2200 = vld [vmem:[#allocation4 + $0x24] sm:$0xf]
    %v2201 = vld [vmem:[#allocation4 + $0x28] sm:$0xf]
    %v2202 = vld [vmem:[#allocation4 + $0x2c] sm:$0xf]
    %v2203 = vld [vmem:[#allocation4 + $0x30] sm:$0xf]
    %v2204 = vld [vmem:[#allocation4 + $0x34] sm:$0xf]
    %v2205 = vld [vmem:[#allocation4 + $0x38] sm:$0xf]
    %v2206 = vld [vmem:[#allocation4 + $0x3c] sm:$0xf]
    %2207 = vmatprep.subr.bf16.mxu0 0
    %2208 = vmatpush1.bf16.xpose.msra.mxu0 0
    %2209 = vmatprep.subr.bf16.mxu0 0
    %2210 = vmatpush1.bf16.xpose.msra.mxu0 0
    %2211 = vmatprep.subr.bf16.mxu0 0
    %2212 = vmatpush1.bf16.xpose.msra.mxu0 0
    %2213 = vmatprep.subr.bf16.mxu0 0
    %2214 = vmatpush1.bf16.xpose.msra.mxu0 0
    %2215 = vmatprep.subr.bf16.mxu0 0
    %2216 = vmatpush1.bf16.xpose.msra.mxu0 0
    %2217 = vmatprep.subr.bf16.mxu0 0
    %2218 = vmatpush1.bf16.xpose.msra.mxu0 0
    %2219 = vmatprep.subr.bf16.mxu0 0
    %2220 = vmatpush1.bf16.xpose.msra.mxu0 0
    %2221 = vmatprep.subr.bf16.mxu0 0
    %2222 = vmatpush1.bf16.xpose.msra.mxu0 %v1792
    %2223 = vmatprep.subr.bf16.mxu0 0
    %2224 = vmatpush2.bf16.xpose.msra.mxu0 0
    %2225 = vmatprep.subr.bf16.mxu0 0
    %2226 = vmatpush2.bf16.xpose.msra.mxu0 0
    %2227 = vmatprep.subr.bf16.mxu0 0
    %2228 = vmatpush2.bf16.xpose.msra.mxu0 0
    %2229 = vmatprep.subr.bf16.mxu0 0
    %2230 = vmatpush2.bf16.xpose.msra.mxu0 0
    %2231 = vmatprep.subr.bf16.mxu0 0
    %2232 = vmatpush2.bf16.xpose.msra.mxu0 0
    %2233 = vmatprep.subr.bf16.mxu0 0
    %2234 = vmatpush2.bf16.xpose.msra.mxu0 0
    %2235 = vmatprep.subr.bf16.mxu0 0
    %2236 = vmatpush2.bf16.xpose.msra.mxu0 0
    %2237 = vmatprep.subr.bf16.mxu0 0
    %2238 = vmatpush2.bf16.xpose.msra.mxu0 0
    %2239 = vmatprep.mubr.bf16.mxu0 0
    %2240 = vmatmul.mubr.bf16.gmra.mxu0 %v688
    %v2241 = vpop.f32.mrf.mxu0
    %v2242 = vadd.f32 0.0, %v2241
    %v2243 = vpop.f32.mrf.mxu0
    %v2244 = vpop.f32.mrf.mxu0
    %v2245 = vpop.f32.mrf.mxu0
    %2246 = vdwg.mxu0
    %v2247 = vsel %vm1866, %v2242, -inf
    %2248 = vmax.xlane.f32.xlu0 %v2247
    %v2249 = vpop.xlane.xlu0 %2248
    %v2250 = vsub.f32 %v2242, %v2249
    %v2251 = vmul.f32 %v2250, 1.442695
    %v2252 = vpow.pop %v2251
    %v2253 = vsel %vm1866, %v2252, 0.0
    %2254 = vadd.xlane.f32.xlu0 %v2253
    %v2255 = vpop.xlane.xlu0 %2254
    %v2256 = vrcp.pop %v2255
    %v2257 = vmul.f32 %v2252, %v2256
    %v2258 = vpack.c.bf16 %v2257, %v2257
    %v2260 = vsel %vm1866, %v2258, 0
    %v2263 = vsel %vm1882, %v1800, 0
    %2265 = vmatprep.subr.bf16.mxu0 0
    %2266 = vmatpush1.bf16.msra.mxu0 0
    %2267 = vmatprep.subr.bf16.mxu0 0
    %2268 = vmatpush1.bf16.msra.mxu0 0
    %2269 = vmatprep.subr.bf16.mxu0 0
    %2270 = vmatpush1.bf16.msra.mxu0 0
    %2271 = vmatprep.subr.bf16.mxu0 0
    %2272 = vmatpush1.bf16.msra.mxu0 0
    %2273 = vmatprep.subr.bf16.mxu0 0
    %2274 = vmatpush1.bf16.msra.mxu0 0
    %2275 = vmatprep.subr.bf16.mxu0 0
    %2276 = vmatpush1.bf16.msra.mxu0 0
    %2277 = vmatprep.subr.bf16.mxu0 0
    %2278 = vmatpush1.bf16.msra.mxu0 0
    %2279 = vmatprep.subr.bf16.mxu0 0
    %2280 = vmatpush1.bf16.msra.mxu0 %v2263
    %2281 = vmatprep.subr.bf16.mxu0 0
    %2282 = vmatpush2.bf16.msra.mxu0 0
    %2283 = vmatprep.subr.bf16.mxu0 0
    %2284 = vmatpush2.bf16.msra.mxu0 0
    %2285 = vmatprep.subr.bf16.mxu0 0
    %2286 = vmatpush2.bf16.msra.mxu0 0
    %2287 = vmatprep.subr.bf16.mxu0 0
    %2288 = vmatpush2.bf16.msra.mxu0 0
    %2289 = vmatprep.subr.bf16.mxu0 0
    %2290 = vmatpush2.bf16.msra.mxu0 0
    %2291 = vmatprep.subr.bf16.mxu0 0
    %2292 = vmatpush2.bf16.msra.mxu0 0
    %2293 = vmatprep.subr.bf16.mxu0 0
    %2294 = vmatpush2.bf16.msra.mxu0 0
    %2295 = vmatprep.subr.bf16.mxu0 0
    %2296 = vmatpush2.bf16.msra.mxu0 0
    %2297 = vmatprep.mubr.bf16.mxu0 0
    %2298 = vmatmul.mubr.bf16.gmra.mxu0 %v2260
    %v2299 = vpop.f32.mrf.mxu0
    %v2300 = vadd.f32 %v136, %v2299
    %v2301 = vpop.f32.mrf.mxu0
    %v2302 = vpop.f32.mrf.mxu0
    %v2303 = vpop.f32.mrf.mxu0
    %2304 = vdwg.mxu0
    %2305 = vadd.xlane.f32.xlu0 %v2300
    %v2306 = vpop.xlane.xlu0 %2305
    %v2307 = vmul.f32 %v2306, %v1928
    %v2308 = vsub.f32 %v2300, %v2307
    %v2309 = vmul.f32 %v2308, %v2308
    %2310 = vadd.xlane.f32.xlu0 %v2309
    %v2311 = vpop.xlane.xlu0 %2310
    %v2312 = vmul.f32 %v2311, %v1928
    %v2313 = vadd.f32 %v2312, 1e-05
    %v2314 = vrsqrt.pop %v2313
    %v2315 = vmul.f32 %v2308, %v2314
    %v2316 = vlaneseq
    %v2317 = vshrl.u32 %v2316, 7
    %v2318 = vsub.s32 0, %v2317
    %v2319 = vrot.slane %v1808, %v2318
    %v2320 = vmul.f32 %v2315, %v2319
    %v2321 = vlaneseq
    %v2322 = vshrl.u32 %v2321, 7
    %v2323 = vsub.s32 1, %v2322
    %v2324 = vrot.slane %v1808, %v2323
    %v2325 = vadd.f32 %v2320, %v2324
    %v2326 = vpack.c.bf16 %v2325, %v2325
    %s2327 = scalar_lea.vmem [#allocation2], 64
    %v2328 = vld [vmem:[%s2327] sm:$0xf]
    %v2329 = vld [vmem:[%s2327 + $0x4] sm:$0xf]
    %v2330 = vld [vmem:[%s2327 + $0x8] sm:$0xf]
    %v2331 = vld [vmem:[%s2327 + $0xc] sm:$0xf]
    %v2332 = vld [vmem:[%s2327 + $0x10] sm:$0xf]
    %v2333 = vld [vmem:[%s2327 + $0x14] sm:$0xf]
    %v2334 = vld [vmem:[%s2327 + $0x18] sm:$0xf]
    %v2335 = vld [vmem:[%s2327 + $0x1c] sm:$0xf]
    %v2336 = vld [vmem:[%s2327 + $0x20] sm:$0xf]
    %v2337 = vld [vmem:[%s2327 + $0x24] sm:$0xf]
    %v2338 = vld [vmem:[%s2327 + $0x28] sm:$0xf]
    %v2339 = vld [vmem:[%s2327 + $0x2c] sm:$0xf]
    %v2340 = vld [vmem:[%s2327 + $0x30] sm:$0xf]
    %v2341 = vld [vmem:[%s2327 + $0x34] sm:$0xf]
    %v2342 = vld [vmem:[%s2327 + $0x38] sm:$0xf]
    %v2343 = vld [vmem:[%s2327 + $0x3c] sm:$0xf]
    %v2344 = vlaneseq
    %v2345 = vshrl.u32 %v2344, 7
    %v2346 = vsub.s32 2, %v2345
    %v2347 = vrot.slane %v1808, %v2346
    %v2364 = vunpack.c.l.b16 %v2328
    %v2365 = vunpack.c.l.b16 %v2329
    %v2366 = vunpack.c.l.b16 %v2330
    %v2367 = vunpack.c.l.b16 %v2331
    %v2368 = vunpack.c.l.b16 %v2332
    %v2369 = vunpack.c.l.b16 %v2333
    %v2370 = vunpack.c.l.b16 %v2334
    %v2371 = vunpack.c.l.b16 %v2335
    %v2372 = vunpack.c.l.b16 %v2336
    %v2373 = vunpack.c.l.b16 %v2337
    %v2374 = vunpack.c.l.b16 %v2338
    %v2375 = vunpack.c.l.b16 %v2339
    %v2376 = vunpack.c.l.b16 %v2340
    %v2377 = vunpack.c.l.b16 %v2341
    %v2378 = vunpack.c.l.b16 %v2342
    %v2379 = vunpack.c.l.b16 %v2343
    %v2380 = vpack.c.b16 %v2365, %v2364
    %v2381 = vpack.c.b16 %v2367, %v2366
    %v2382 = vpack.c.b16 %v2369, %v2368
    %v2383 = vpack.c.b16 %v2371, %v2370
    %v2384 = vpack.c.b16 %v2373, %v2372
    %v2385 = vpack.c.b16 %v2375, %v2374
    %v2386 = vpack.c.b16 %v2377, %v2376
    %v2387 = vpack.c.b16 %v2379, %v2378
    %2396 = vmatprep.subr.bf16.mxu0 0
    %2397 = vmatpush1.bf16.msra.mxu0 %v2387
    %2398 = vmatprep.subr.bf16.mxu0 0
    %2399 = vmatpush1.bf16.msra.mxu0 %v2386
    %2400 = vmatprep.subr.bf16.mxu0 0
    %2401 = vmatpush1.bf16.msra.mxu0 %v2385
    %2402 = vmatprep.subr.bf16.mxu0 0
    %2403 = vmatpush1.bf16.msra.mxu0 %v2384
    %2404 = vmatprep.subr.bf16.mxu0 0
    %2405 = vmatpush1.bf16.msra.mxu0 %v2383
    %2406 = vmatprep.subr.bf16.mxu0 0
    %2407 = vmatpush1.bf16.msra.mxu0 %v2382
    %2408 = vmatprep.subr.bf16.mxu0 0
    %2409 = vmatpush1.bf16.msra.mxu0 %v2381
    %2410 = vmatprep.subr.bf16.mxu0 0
    %2411 = vmatpush1.bf16.msra.mxu0 %v2380
    %2412 = vmatprep.subr.bf16.mxu0 0
    %2413 = vmatpush2.bf16.msra.mxu0 0
    %2414 = vmatprep.subr.bf16.mxu0 0
    %2415 = vmatpush2.bf16.msra.mxu0 0
    %2416 = vmatprep.subr.bf16.mxu0 0
    %2417 = vmatpush2.bf16.msra.mxu0 0
    %2418 = vmatprep.subr.bf16.mxu0 0
    %2419 = vmatpush2.bf16.msra.mxu0 0
    %2420 = vmatprep.subr.bf16.mxu0 0
    %2421 = vmatpush2.bf16.msra.mxu0 0
    %2422 = vmatprep.subr.bf16.mxu0 0
    %2423 = vmatpush2.bf16.msra.mxu0 0
    %2424 = vmatprep.subr.bf16.mxu0 0
    %2425 = vmatpush2.bf16.msra.mxu0 0
    %2426 = vmatprep.subr.bf16.mxu0 0
    %2427 = vmatpush2.bf16.msra.mxu0 0
    %2428 = vmatprep.mubr.bf16.mxu0 0
    %2429 = vmatmul.mubr.bf16.gmra.mxu0 %v2326
    %v2430 = vpop.f32.mrf.mxu0
    %v2431 = vadd.f32 %v2347, %v2430
    %v2432 = vpop.f32.mrf.mxu0
    %v2433 = vpop.f32.mrf.mxu0
    %v2434 = vpop.f32.mrf.mxu0
    %2435 = vdwg.mxu0
    %v2436 = vmax.f32 %v2431, 0.0
    %v2437 = vpack.c.bf16 %v2436, %v2436
    %s2438 = scalar_lea.vmem [#allocation3], 64
    %v2439 = vld [vmem:[%s2438] sm:$0xf]
    %v2440 = vld [vmem:[%s2438 + $0x4] sm:$0xf]
    %v2441 = vld [vmem:[%s2438 + $0x8] sm:$0xf]
    %v2442 = vld [vmem:[%s2438 + $0xc] sm:$0xf]
    %v2443 = vld [vmem:[%s2438 + $0x10] sm:$0xf]
    %v2444 = vld [vmem:[%s2438 + $0x14] sm:$0xf]
    %v2445 = vld [vmem:[%s2438 + $0x18] sm:$0xf]
    %v2446 = vld [vmem:[%s2438 + $0x1c] sm:$0xf]
    %v2447 = vld [vmem:[%s2438 + $0x20] sm:$0xf]
    %v2448 = vld [vmem:[%s2438 + $0x24] sm:$0xf]
    %v2449 = vld [vmem:[%s2438 + $0x28] sm:$0xf]
    %v2450 = vld [vmem:[%s2438 + $0x2c] sm:$0xf]
    %v2451 = vld [vmem:[%s2438 + $0x30] sm:$0xf]
    %v2452 = vld [vmem:[%s2438 + $0x34] sm:$0xf]
    %v2453 = vld [vmem:[%s2438 + $0x38] sm:$0xf]
    %v2454 = vld [vmem:[%s2438 + $0x3c] sm:$0xf]
    %v2455 = vlaneseq
    %v2456 = vshrl.u32 %v2455, 7
    %v2457 = vsub.s32 3, %v2456
    %v2458 = vrot.slane %v1808, %v2457
    %v2475 = vunpack.c.l.b16 %v2439
    %v2476 = vunpack.c.l.b16 %v2440
    %v2477 = vunpack.c.l.b16 %v2441
    %v2478 = vunpack.c.l.b16 %v2442
    %v2479 = vunpack.c.l.b16 %v2443
    %v2480 = vunpack.c.l.b16 %v2444
    %v2481 = vunpack.c.l.b16 %v2445
    %v2482 = vunpack.c.l.b16 %v2446
    %v2483 = vunpack.c.l.b16 %v2447
    %v2484 = vunpack.c.l.b16 %v2448
    %v2485 = vunpack.c.l.b16 %v2449
    %v2486 = vunpack.c.l.b16 %v2450
    %v2487 = vunpack.c.l.b16 %v2451
    %v2488 = vunpack.c.l.b16 %v2452
    %v2489 = vunpack.c.l.b16 %v2453
    %v2490 = vunpack.c.l.b16 %v2454
    %v2491 = vpack.c.b16 %v2476, %v2475
    %v2492 = vpack.c.b16 %v2478, %v2477
    %v2493 = vpack.c.b16 %v2480, %v2479
    %v2494 = vpack.c.b16 %v2482, %v2481
    %v2495 = vpack.c.b16 %v2484, %v2483
    %v2496 = vpack.c.b16 %v2486, %v2485
    %v2497 = vpack.c.b16 %v2488, %v2487
    %v2498 = vpack.c.b16 %v2490, %v2489
    %2507 = vmatprep.subr.bf16.mxu0 0
    %2508 = vmatpush1.bf16.msra.mxu0 %v2498
    %2509 = vmatprep.subr.bf16.mxu0 0
    %2510 = vmatpush1.bf16.msra.mxu0 %v2497
    %2511 = vmatprep.subr.bf16.mxu0 0
    %2512 = vmatpush1.bf16.msra.mxu0 %v2496
    %2513 = vmatprep.subr.bf16.mxu0 0
    %2514 = vmatpush1.bf16.msra.mxu0 %v2495
    %2515 = vmatprep.subr.bf16.mxu0 0
    %2516 = vmatpush1.bf16.msra.mxu0 %v2494
    %2517 = vmatprep.subr.bf16.mxu0 0
    %2518 = vmatpush1.bf16.msra.mxu0 %v2493
    %2519 = vmatprep.subr.bf16.mxu0 0
    %2520 = vmatpush1.bf16.msra.mxu0 %v2492
    %2521 = vmatprep.subr.bf16.mxu0 0
    %2522 = vmatpush1.bf16.msra.mxu0 %v2491
    %2523 = vmatprep.subr.bf16.mxu0 0
    %2524 = vmatpush2.bf16.msra.mxu0 0
    %2525 = vmatprep.subr.bf16.mxu0 0
    %2526 = vmatpush2.bf16.msra.mxu0 0
    %2527 = vmatprep.subr.bf16.mxu0 0
    %2528 = vmatpush2.bf16.msra.mxu0 0
    %2529 = vmatprep.subr.bf16.mxu0 0
    %2530 = vmatpush2.bf16.msra.mxu0 0
    %2531 = vmatprep.subr.bf16.mxu0 0
    %2532 = vmatpush2.bf16.msra.mxu0 0
    %2533 = vmatprep.subr.bf16.mxu0 0
    %2534 = vmatpush2.bf16.msra.mxu0 0
    %2535 = vmatprep.subr.bf16.mxu0 0
    %2536 = vmatpush2.bf16.msra.mxu0 0
    %2537 = vmatprep.subr.bf16.mxu0 0
    %2538 = vmatpush2.bf16.msra.mxu0 0
    %2539 = vmatprep.mubr.bf16.mxu0 0
    %2540 = vmatmul.mubr.bf16.gmra.mxu0 %v2437
    %v2541 = vpop.f32.mrf.mxu0
    %v2542 = vadd.f32 %v2458, %v2541
    %v2543 = vpop.f32.mrf.mxu0
    %v2544 = vpop.f32.mrf.mxu0
    %v2545 = vpop.f32.mrf.mxu0
    %2546 = vdwg.mxu0
    %v2547 = vadd.f32 %v2542, %v2325
    %2548 = vadd.xlane.f32.xlu0 %v2547
    %v2549 = vpop.xlane.xlu0 %2548
    %v2550 = vmul.f32 %v2549, %v1928
    %v2551 = vsub.f32 %v2547, %v2550
    %v2552 = vmul.f32 %v2551, %v2551
    %2553 = vadd.xlane.f32.xlu0 %v2552
    %v2554 = vpop.xlane.xlu0 %2553
    %v2555 = vmul.f32 %v2554, %v1928
    %v2556 = vadd.f32 %v2555, 1e-05
    %v2557 = vrsqrt.pop %v2556
    %v2558 = vmul.f32 %v2551, %v2557
    %v2559 = vlaneseq
    %v2560 = vshrl.u32 %v2559, 7
    %v2561 = vsub.s32 4, %v2560
    %v2562 = vrot.slane %v1808, %v2561
    %v2563 = vmul.f32 %v2558, %v2562
    %v2564 = vlaneseq
    %v2565 = vshrl.u32 %v2564, 7
    %v2566 = vsub.s32 5, %v2565
    %v2567 = vrot.slane %v1808, %v2566
    %v2568 = vadd.f32 %v2563, %v2567
    %v2569 = vadd.f32 %v2568, %v136
    %v2570 = vpack.c.bf16 %v2569, %v2569
    %v2571 = vld [vmem:[#allocation4 + $0x40] sm:$0xf]
    %v2572 = vld [vmem:[#allocation4 + $0x44] sm:$0xf]
    %v2573 = vld [vmem:[#allocation4 + $0x48] sm:$0xf]
    %v2574 = vld [vmem:[#allocation4 + $0x4c] sm:$0xf]
    %v2575 = vld [vmem:[#allocation4 + $0x50] sm:$0xf]
    %v2576 = vld [vmem:[#allocation4 + $0x54] sm:$0xf]
    %v2577 = vld [vmem:[#allocation4 + $0x58] sm:$0xf]
    %v2578 = vld [vmem:[#allocation4 + $0x5c] sm:$0xf]
    %v2579 = vld [vmem:[#allocation4 + $0x60] sm:$0xf]
    %v2580 = vld [vmem:[#allocation4 + $0x64] sm:$0xf]
    %v2581 = vld [vmem:[#allocation4 + $0x68] sm:$0xf]
    %v2582 = vld [vmem:[#allocation4 + $0x6c] sm:$0xf]
    %v2583 = vld [vmem:[#allocation4 + $0x70] sm:$0xf]
    %v2584 = vld [vmem:[#allocation4 + $0x74] sm:$0xf]
    %v2585 = vld [vmem:[#allocation4 + $0x78] sm:$0xf]
    %v2586 = vld [vmem:[#allocation4 + $0x7c] sm:$0xf]
    %v2603 = vunpack.c.l.b16 %v2571
    %v2604 = vunpack.c.l.b16 %v2572
    %v2605 = vunpack.c.l.b16 %v2573
    %v2606 = vunpack.c.l.b16 %v2574
    %v2607 = vunpack.c.l.b16 %v2575
    %v2608 = vunpack.c.l.b16 %v2576
    %v2609 = vunpack.c.l.b16 %v2577
    %v2610 = vunpack.c.l.b16 %v2578
    %v2611 = vunpack.c.l.b16 %v2579
    %v2612 = vunpack.c.l.b16 %v2580
    %v2613 = vunpack.c.l.b16 %v2581
    %v2614 = vunpack.c.l.b16 %v2582
    %v2615 = vunpack.c.l.b16 %v2583
    %v2616 = vunpack.c.l.b16 %v2584
    %v2617 = vunpack.c.l.b16 %v2585
    %v2618 = vunpack.c.l.b16 %v2586
    %v2619 = vpack.c.b16 %v2604, %v2603
    %v2620 = vpack.c.b16 %v2606, %v2605
    %v2621 = vpack.c.b16 %v2608, %v2607
    %v2622 = vpack.c.b16 %v2610, %v2609
    %v2623 = vpack.c.b16 %v2612, %v2611
    %v2624 = vpack.c.b16 %v2614, %v2613
    %v2625 = vpack.c.b16 %v2616, %v2615
    %v2626 = vpack.c.b16 %v2618, %v2617
    %2635 = vmatprep.subr.bf16.mxu0 0
    %2636 = vmatpush1.bf16.msra.mxu0 %v2626
    %2637 = vmatprep.subr.bf16.mxu0 0
    %2638 = vmatpush1.bf16.msra.mxu0 %v2625
    %2639 = vmatprep.subr.bf16.mxu0 0
    %2640 = vmatpush1.bf16.msra.mxu0 %v2624
    %2641 = vmatprep.subr.bf16.mxu0 0
    %2642 = vmatpush1.bf16.msra.mxu0 %v2623
    %2643 = vmatprep.subr.bf16.mxu0 0
    %2644 = vmatpush1.bf16.msra.mxu0 %v2622
    %2645 = vmatprep.subr.bf16.mxu0 0
    %2646 = vmatpush1.bf16.msra.mxu0 %v2621
    %2647 = vmatprep.subr.bf16.mxu0 0
    %2648 = vmatpush1.bf16.msra.mxu0 %v2620
    %2649 = vmatprep.subr.bf16.mxu0 0
    %2650 = vmatpush1.bf16.msra.mxu0 %v2619
    %2651 = vmatprep.subr.bf16.mxu0 0
    %2652 = vmatpush2.bf16.msra.mxu0 0
    %2653 = vmatprep.subr.bf16.mxu0 0
    %2654 = vmatpush2.bf16.msra.mxu0 0
    %2655 = vmatprep.subr.bf16.mxu0 0
    %2656 = vmatpush2.bf16.msra.mxu0 0
    %2657 = vmatprep.subr.bf16.mxu0 0
    %2658 = vmatpush2.bf16.msra.mxu0 0
    %2659 = vmatprep.subr.bf16.mxu0 0
    %2660 = vmatpush2.bf16.msra.mxu0 0
    %2661 = vmatprep.subr.bf16.mxu0 0
    %2662 = vmatpush2.bf16.msra.mxu0 0
    %2663 = vmatprep.subr.bf16.mxu0 0
    %2664 = vmatpush2.bf16.msra.mxu0 0
    %2665 = vmatprep.subr.bf16.mxu0 0
    %2666 = vmatpush2.bf16.msra.mxu0 0
    %2667 = vmatprep.mubr.bf16.mxu0 0
    %2668 = vmatmul.mubr.bf16.gmra.mxu0 %v2570
    %v2669 = vpop.f32.mrf.mxu0
    %v2670 = vadd.f32 0.0, %v2669
    %v2671 = vpop.f32.mrf.mxu0
    %v2672 = vpop.f32.mrf.mxu0
    %v2673 = vpop.f32.mrf.mxu0
    %2674 = vdwg.mxu0
    %v2691 = vunpack.c.l.b16 %v2191
    %v2692 = vunpack.c.l.b16 %v2192
    %v2693 = vunpack.c.l.b16 %v2193
    %v2694 = vunpack.c.l.b16 %v2194
    %v2695 = vunpack.c.l.b16 %v2195
    %v2696 = vunpack.c.l.b16 %v2196
    %v2697 = vunpack.c.l.b16 %v2197
    %v2698 = vunpack.c.l.b16 %v2198
    %v2699 = vunpack.c.l.b16 %v2199
    %v2700 = vunpack.c.l.b16 %v2200
    %v2701 = vunpack.c.l.b16 %v2201
    %v2702 = vunpack.c.l.b16 %v2202
    %v2703 = vunpack.c.l.b16 %v2203
    %v2704 = vunpack.c.l.b16 %v2204
    %v2705 = vunpack.c.l.b16 %v2205
    %v2706 = vunpack.c.l.b16 %v2206
    %v2707 = vpack.c.b16 %v2692, %v2691
    %v2708 = vpack.c.b16 %v2694, %v2693
    %v2709 = vpack.c.b16 %v2696, %v2695
    %v2710 = vpack.c.b16 %v2698, %v2697
    %v2711 = vpack.c.b16 %v2700, %v2699
    %v2712 = vpack.c.b16 %v2702, %v2701
    %v2713 = vpack.c.b16 %v2704, %v2703
    %v2714 = vpack.c.b16 %v2706, %v2705
    %2723 = vmatprep.subr.bf16.mxu0 0
    %2724 = vmatpush1.bf16.msra.mxu0 %v2714
    %2725 = vmatprep.subr.bf16.mxu0 0
    %2726 = vmatpush1.bf16.msra.mxu0 %v2713
    %2727 = vmatprep.subr.bf16.mxu0 0
    %2728 = vmatpush1.bf16.msra.mxu0 %v2712
    %2729 = vmatprep.subr.bf16.mxu0 0
    %2730 = vmatpush1.bf16.msra.mxu0 %v2711
    %2731 = vmatprep.subr.bf16.mxu0 0
    %2732 = vmatpush1.bf16.msra.mxu0 %v2710
    %2733 = vmatprep.subr.bf16.mxu0 0
    %2734 = vmatpush1.bf16.msra.mxu0 %v2709
    %2735 = vmatprep.subr.bf16.mxu0 0
    %2736 = vmatpush1.bf16.msra.mxu0 %v2708
    %2737 = vmatprep.subr.bf16.mxu0 0
    %2738 = vmatpush1.bf16.msra.mxu0 %v2707
    %2739 = vmatprep.subr.bf16.mxu0 0
    %2740 = vmatpush2.bf16.msra.mxu0 0
    %2741 = vmatprep.subr.bf16.mxu0 0
    %2742 = vmatpush2.bf16.msra.mxu0 0
    %2743 = vmatprep.subr.bf16.mxu0 0
    %2744 = vmatpush2.bf16.msra.mxu0 0
    %2745 = vmatprep.subr.bf16.mxu0 0
    %2746 = vmatpush2.bf16.msra.mxu0 0
    %2747 = vmatprep.subr.bf16.mxu0 0
    %2748 = vmatpush2.bf16.msra.mxu0 0
    %2749 = vmatprep.subr.bf16.mxu0 0
    %2750 = vmatpush2.bf16.msra.mxu0 0
    %2751 = vmatprep.subr.bf16.mxu0 0
    %2752 = vmatpush2.bf16.msra.mxu0 0
    %2753 = vmatprep.subr.bf16.mxu0 0
    %2754 = vmatpush2.bf16.msra.mxu0 0
    %2755 = vmatprep.mubr.bf16.mxu0 0
    %2756 = vmatmul.mubr.bf16.gmra.mxu0 %v2190
    %v2757 = vpop.f32.mrf.mxu0
    %v2758 = vadd.f32 %v2670, %v2757
    %v2759 = vpop.f32.mrf.mxu0
    %v2760 = vpop.f32.mrf.mxu0
    %v2761 = vpop.f32.mrf.mxu0
    %2762 = vdwg.mxu0
    %2763 = vmatprep.subr.bf16.mxu0 0
    %2764 = vmatpush1.bf16.xpose.msra.mxu0 0
    %2765 = vmatprep.subr.bf16.mxu0 0
    %2766 = vmatpush1.bf16.xpose.msra.mxu0 0
    %2767 = vmatprep.subr.bf16.mxu0 0
    %2768 = vmatpush1.bf16.xpose.msra.mxu0 0
    %2769 = vmatprep.subr.bf16.mxu0 0
    %2770 = vmatpush1.bf16.xpose.msra.mxu0 0
    %2771 = vmatprep.subr.bf16.mxu0 0
    %2772 = vmatpush1.bf16.xpose.msra.mxu0 0
    %2773 = vmatprep.subr.bf16.mxu0 0
    %2774 = vmatpush1.bf16.xpose.msra.mxu0 0
    %2775 = vmatprep.subr.bf16.mxu0 0
    %2776 = vmatpush1.bf16.xpose.msra.mxu0 0
    %2777 = vmatprep.subr.bf16.mxu0 0
    %2778 = vmatpush1.bf16.xpose.msra.mxu0 %v1793
    %2779 = vmatprep.subr.bf16.mxu0 0
    %2780 = vmatpush2.bf16.xpose.msra.mxu0 0
    %2781 = vmatprep.subr.bf16.mxu0 0
    %2782 = vmatpush2.bf16.xpose.msra.mxu0 0
    %2783 = vmatprep.subr.bf16.mxu0 0
    %2784 = vmatpush2.bf16.xpose.msra.mxu0 0
    %2785 = vmatprep.subr.bf16.mxu0 0
    %2786 = vmatpush2.bf16.xpose.msra.mxu0 0
    %2787 = vmatprep.subr.bf16.mxu0 0
    %2788 = vmatpush2.bf16.xpose.msra.mxu0 0
    %2789 = vmatprep.subr.bf16.mxu0 0
    %2790 = vmatpush2.bf16.xpose.msra.mxu0 0
    %2791 = vmatprep.subr.bf16.mxu0 0
    %2792 = vmatpush2.bf16.xpose.msra.mxu0 0
    %2793 = vmatprep.subr.bf16.mxu0 0
    %2794 = vmatpush2.bf16.xpose.msra.mxu0 0
    %2795 = vmatprep.mubr.bf16.mxu0 0
    %2796 = vmatmul.mubr.bf16.gmra.mxu0 %v689
    %v2797 = vpop.f32.mrf.mxu0
    %v2798 = vadd.f32 0.0, %v2797
    %v2799 = vpop.f32.mrf.mxu0
    %v2800 = vpop.f32.mrf.mxu0
    %v2801 = vpop.f32.mrf.mxu0
    %2802 = vdwg.mxu0
    %v2803 = vsel %vm1866, %v2798, -inf
    %2804 = vmax.xlane.f32.xlu0 %v2803
    %v2805 = vpop.xlane.xlu0 %2804
    %v2806 = vsub.f32 %v2798, %v2805
    %v2807 = vmul.f32 %v2806, 1.442695
    %v2808 = vpow.pop %v2807
    %v2809 = vsel %vm1866, %v2808, 0.0
    %2810 = vadd.xlane.f32.xlu0 %v2809
    %v2811 = vpop.xlane.xlu0 %2810
    %v2812 = vrcp.pop %v2811
    %v2813 = vmul.f32 %v2808, %v2812
    %v2814 = vpack.c.bf16 %v2813, %v2813
    %v2816 = vsel %vm1866, %v2814, 0
    %v2819 = vsel %vm1882, %v1801, 0
    %2821 = vmatprep.subr.bf16.mxu0 0
    %2822 = vmatpush1.bf16.msra.mxu0 0
    %2823 = vmatprep.subr.bf16.mxu0 0
    %2824 = vmatpush1.bf16.msra.mxu0 0
    %2825 = vmatprep.subr.bf16.mxu0 0
    %2826 = vmatpush1.bf16.msra.mxu0 0
    %2827 = vmatprep.subr.bf16.mxu0 0
    %2828 = vmatpush1.bf16.msra.mxu0 0
    %2829 = vmatprep.subr.bf16.mxu0 0
    %2830 = vmatpush1.bf16.msra.mxu0 0
    %2831 = vmatprep.subr.bf16.mxu0 0
    %2832 = vmatpush1.bf16.msra.mxu0 0
    %2833 = vmatprep.subr.bf16.mxu0 0
    %2834 = vmatpush1.bf16.msra.mxu0 0
    %2835 = vmatprep.subr.bf16.mxu0 0
    %2836 = vmatpush1.bf16.msra.mxu0 %v2819
    %2837 = vmatprep.subr.bf16.mxu0 0
    %2838 = vmatpush2.bf16.msra.mxu0 0
    %2839 = vmatprep.subr.bf16.mxu0 0
    %2840 = vmatpush2.bf16.msra.mxu0 0
    %2841 = vmatprep.subr.bf16.mxu0 0
    %2842 = vmatpush2.bf16.msra.mxu0 0
    %2843 = vmatprep.subr.bf16.mxu0 0
    %2844 = vmatpush2.bf16.msra.mxu0 0
    %2845 = vmatprep.subr.bf16.mxu0 0
    %2846 = vmatpush2.bf16.msra.mxu0 0
    %2847 = vmatprep.subr.bf16.mxu0 0
    %2848 = vmatpush2.bf16.msra.mxu0 0
    %2849 = vmatprep.subr.bf16.mxu0 0
    %2850 = vmatpush2.bf16.msra.mxu0 0
    %2851 = vmatprep.subr.bf16.mxu0 0
    %2852 = vmatpush2.bf16.msra.mxu0 0
    %2853 = vmatprep.mubr.bf16.mxu0 0
    %2854 = vmatmul.mubr.bf16.gmra.mxu0 %v2816
    %v2855 = vpop.f32.mrf.mxu0
    %v2856 = vadd.f32 %v136, %v2855
    %v2857 = vpop.f32.mrf.mxu0
    %v2858 = vpop.f32.mrf.mxu0
    %v2859 = vpop.f32.mrf.mxu0
    %2860 = vdwg.mxu0
    %2861 = vadd.xlane.f32.xlu0 %v2856
    %v2862 = vpop.xlane.xlu0 %2861
    %v2863 = vmul.f32 %v2862, %v1928
    %v2864 = vsub.f32 %v2856, %v2863
    %v2865 = vmul.f32 %v2864, %v2864
    %2866 = vadd.xlane.f32.xlu0 %v2865
    %v2867 = vpop.xlane.xlu0 %2866
    %v2868 = vmul.f32 %v2867, %v1928
    %v2869 = vadd.f32 %v2868, 1e-05
    %v2870 = vrsqrt.pop %v2869
    %v2871 = vmul.f32 %v2864, %v2870
    %v2872 = vlaneseq
    %v2873 = vshrl.u32 %v2872, 7
    %v2874 = vsub.s32 0, %v2873
    %v2875 = vrot.slane %v1809, %v2874
    %v2876 = vmul.f32 %v2871, %v2875
    %v2877 = vlaneseq
    %v2878 = vshrl.u32 %v2877, 7
    %v2879 = vsub.s32 1, %v2878
    %v2880 = vrot.slane %v1809, %v2879
    %v2881 = vadd.f32 %v2876, %v2880
    %v2882 = vpack.c.bf16 %v2881, %v2881
    %s2883 = scalar_lea.vmem [#allocation2], 128
    %v2884 = vld [vmem:[%s2883] sm:$0xf]
    %v2885 = vld [vmem:[%s2883 + $0x4] sm:$0xf]
    %v2886 = vld [vmem:[%s2883 + $0x8] sm:$0xf]
    %v2887 = vld [vmem:[%s2883 + $0xc] sm:$0xf]
    %v2888 = vld [vmem:[%s2883 + $0x10] sm:$0xf]
    %v2889 = vld [vmem:[%s2883 + $0x14] sm:$0xf]
    %v2890 = vld [vmem:[%s2883 + $0x18] sm:$0xf]
    %v2891 = vld [vmem:[%s2883 + $0x1c] sm:$0xf]
    %v2892 = vld [vmem:[%s2883 + $0x20] sm:$0xf]
    %v2893 = vld [vmem:[%s2883 + $0x24] sm:$0xf]
    %v2894 = vld [vmem:[%s2883 + $0x28] sm:$0xf]
    %v2895 = vld [vmem:[%s2883 + $0x2c] sm:$0xf]
    %v2896 = vld [vmem:[%s2883 + $0x30] sm:$0xf]
    %v2897 = vld [vmem:[%s2883 + $0x34] sm:$0xf]
    %v2898 = vld [vmem:[%s2883 + $0x38] sm:$0xf]
    %v2899 = vld [vmem:[%s2883 + $0x3c] sm:$0xf]
    %v2900 = vlaneseq
    %v2901 = vshrl.u32 %v2900, 7
    %v2902 = vsub.s32 2, %v2901
    %v2903 = vrot.slane %v1809, %v2902
    %v2920 = vunpack.c.l.b16 %v2884
    %v2921 = vunpack.c.l.b16 %v2885
    %v2922 = vunpack.c.l.b16 %v2886
    %v2923 = vunpack.c.l.b16 %v2887
    %v2924 = vunpack.c.l.b16 %v2888
    %v2925 = vunpack.c.l.b16 %v2889
    %v2926 = vunpack.c.l.b16 %v2890
    %v2927 = vunpack.c.l.b16 %v2891
    %v2928 = vunpack.c.l.b16 %v2892
    %v2929 = vunpack.c.l.b16 %v2893
    %v2930 = vunpack.c.l.b16 %v2894
    %v2931 = vunpack.c.l.b16 %v2895
    %v2932 = vunpack.c.l.b16 %v2896
    %v2933 = vunpack.c.l.b16 %v2897
    %v2934 = vunpack.c.l.b16 %v2898
    %v2935 = vunpack.c.l.b16 %v2899
    %v2936 = vpack.c.b16 %v2921, %v2920
    %v2937 = vpack.c.b16 %v2923, %v2922
    %v2938 = vpack.c.b16 %v2925, %v2924
    %v2939 = vpack.c.b16 %v2927, %v2926
    %v2940 = vpack.c.b16 %v2929, %v2928
    %v2941 = vpack.c.b16 %v2931, %v2930
    %v2942 = vpack.c.b16 %v2933, %v2932
    %v2943 = vpack.c.b16 %v2935, %v2934
    %2952 = vmatprep.subr.bf16.mxu0 0
    %2953 = vmatpush1.bf16.msra.mxu0 %v2943
    %2954 = vmatprep.subr.bf16.mxu0 0
    %2955 = vmatpush1.bf16.msra.mxu0 %v2942
    %2956 = vmatprep.subr.bf16.mxu0 0
    %2957 = vmatpush1.bf16.msra.mxu0 %v2941
    %2958 = vmatprep.subr.bf16.mxu0 0
    %2959 = vmatpush1.bf16.msra.mxu0 %v2940
    %2960 = vmatprep.subr.bf16.mxu0 0
    %2961 = vmatpush1.bf16.msra.mxu0 %v2939
    %2962 = vmatprep.subr.bf16.mxu0 0
    %2963 = vmatpush1.bf16.msra.mxu0 %v2938
    %2964 = vmatprep.subr.bf16.mxu0 0
    %2965 = vmatpush1.bf16.msra.mxu0 %v2937
    %2966 = vmatprep.subr.bf16.mxu0 0
    %2967 = vmatpush1.bf16.msra.mxu0 %v2936
    %2968 = vmatprep.subr.bf16.mxu0 0
    %2969 = vmatpush2.bf16.msra.mxu0 0
    %2970 = vmatprep.subr.bf16.mxu0 0
    %2971 = vmatpush2.bf16.msra.mxu0 0
    %2972 = vmatprep.subr.bf16.mxu0 0
    %2973 = vmatpush2.bf16.msra.mxu0 0
    %2974 = vmatprep.subr.bf16.mxu0 0
    %2975 = vmatpush2.bf16.msra.mxu0 0
    %2976 = vmatprep.subr.bf16.mxu0 0
    %2977 = vmatpush2.bf16.msra.mxu0 0
    %2978 = vmatprep.subr.bf16.mxu0 0
    %2979 = vmatpush2.bf16.msra.mxu0 0
    %2980 = vmatprep.subr.bf16.mxu0 0
    %2981 = vmatpush2.bf16.msra.mxu0 0
    %2982 = vmatprep.subr.bf16.mxu0 0
    %2983 = vmatpush2.bf16.msra.mxu0 0
    %2984 = vmatprep.mubr.bf16.mxu0 0
    %2985 = vmatmul.mubr.bf16.gmra.mxu0 %v2882
    %v2986 = vpop.f32.mrf.mxu0
    %v2987 = vadd.f32 %v2903, %v2986
    %v2988 = vpop.f32.mrf.mxu0
    %v2989 = vpop.f32.mrf.mxu0
    %v2990 = vpop.f32.mrf.mxu0
    %2991 = vdwg.mxu0
    %v2992 = vmax.f32 %v2987, 0.0
    %v2993 = vpack.c.bf16 %v2992, %v2992
    %s2994 = scalar_lea.vmem [#allocation3], 128
    %v2995 = vld [vmem:[%s2994] sm:$0xf]
    %v2996 = vld [vmem:[%s2994 + $0x4] sm:$0xf]
    %v2997 = vld [vmem:[%s2994 + $0x8] sm:$0xf]
    %v2998 = vld [vmem:[%s2994 + $0xc] sm:$0xf]
    %v2999 = vld [vmem:[%s2994 + $0x10] sm:$0xf]
    %v3000 = vld [vmem:[%s2994 + $0x14] sm:$0xf]
    %v3001 = vld [vmem:[%s2994 + $0x18] sm:$0xf]
    %v3002 = vld [vmem:[%s2994 + $0x1c] sm:$0xf]
    %v3003 = vld [vmem:[%s2994 + $0x20] sm:$0xf]
    %v3004 = vld [vmem:[%s2994 + $0x24] sm:$0xf]
    %v3005 = vld [vmem:[%s2994 + $0x28] sm:$0xf]
    %v3006 = vld [vmem:[%s2994 + $0x2c] sm:$0xf]
    %v3007 = vld [vmem:[%s2994 + $0x30] sm:$0xf]
    %v3008 = vld [vmem:[%s2994 + $0x34] sm:$0xf]
    %v3009 = vld [vmem:[%s2994 + $0x38] sm:$0xf]
    %v3010 = vld [vmem:[%s2994 + $0x3c] sm:$0xf]
    %v3011 = vlaneseq
    %v3012 = vshrl.u32 %v3011, 7
    %v3013 = vsub.s32 3, %v3012
    %v3014 = vrot.slane %v1809, %v3013
    %v3031 = vunpack.c.l.b16 %v2995
    %v3032 = vunpack.c.l.b16 %v2996
    %v3033 = vunpack.c.l.b16 %v2997
    %v3034 = vunpack.c.l.b16 %v2998
    %v3035 = vunpack.c.l.b16 %v2999
    %v3036 = vunpack.c.l.b16 %v3000
    %v3037 = vunpack.c.l.b16 %v3001
    %v3038 = vunpack.c.l.b16 %v3002
    %v3039 = vunpack.c.l.b16 %v3003
    %v3040 = vunpack.c.l.b16 %v3004
    %v3041 = vunpack.c.l.b16 %v3005
    %v3042 = vunpack.c.l.b16 %v3006
    %v3043 = vunpack.c.l.b16 %v3007
    %v3044 = vunpack.c.l.b16 %v3008
    %v3045 = vunpack.c.l.b16 %v3009
    %v3046 = vunpack.c.l.b16 %v3010
    %v3047 = vpack.c.b16 %v3032, %v3031
    %v3048 = vpack.c.b16 %v3034, %v3033
    %v3049 = vpack.c.b16 %v3036, %v3035
    %v3050 = vpack.c.b16 %v3038, %v3037
    %v3051 = vpack.c.b16 %v3040, %v3039
    %v3052 = vpack.c.b16 %v3042, %v3041
    %v3053 = vpack.c.b16 %v3044, %v3043
    %v3054 = vpack.c.b16 %v3046, %v3045
    %3063 = vmatprep.subr.bf16.mxu0 0
    %3064 = vmatpush1.bf16.msra.mxu0 %v3054
    %3065 = vmatprep.subr.bf16.mxu0 0
    %3066 = vmatpush1.bf16.msra.mxu0 %v3053
    %3067 = vmatprep.subr.bf16.mxu0 0
    %3068 = vmatpush1.bf16.msra.mxu0 %v3052
    %3069 = vmatprep.subr.bf16.mxu0 0
    %3070 = vmatpush1.bf16.msra.mxu0 %v3051
    %3071 = vmatprep.subr.bf16.mxu0 0
    %3072 = vmatpush1.bf16.msra.mxu0 %v3050
    %3073 = vmatprep.subr.bf16.mxu0 0
    %3074 = vmatpush1.bf16.msra.mxu0 %v3049
    %3075 = vmatprep.subr.bf16.mxu0 0
    %3076 = vmatpush1.bf16.msra.mxu0 %v3048
    %3077 = vmatprep.subr.bf16.mxu0 0
    %3078 = vmatpush1.bf16.msra.mxu0 %v3047
    %3079 = vmatprep.subr.bf16.mxu0 0
    %3080 = vmatpush2.bf16.msra.mxu0 0
    %3081 = vmatprep.subr.bf16.mxu0 0
    %3082 = vmatpush2.bf16.msra.mxu0 0
    %3083 = vmatprep.subr.bf16.mxu0 0
    %3084 = vmatpush2.bf16.msra.mxu0 0
    %3085 = vmatprep.subr.bf16.mxu0 0
    %3086 = vmatpush2.bf16.msra.mxu0 0
    %3087 = vmatprep.subr.bf16.mxu0 0
    %3088 = vmatpush2.bf16.msra.mxu0 0
    %3089 = vmatprep.subr.bf16.mxu0 0
    %3090 = vmatpush2.bf16.msra.mxu0 0
    %3091 = vmatprep.subr.bf16.mxu0 0
    %3092 = vmatpush2.bf16.msra.mxu0 0
    %3093 = vmatprep.subr.bf16.mxu0 0
    %3094 = vmatpush2.bf16.msra.mxu0 0
    %3095 = vmatprep.mubr.bf16.mxu0 0
    %3096 = vmatmul.mubr.bf16.gmra.mxu0 %v2993
    %v3097 = vpop.f32.mrf.mxu0
    %v3098 = vadd.f32 %v3014, %v3097
    %v3099 = vpop.f32.mrf.mxu0
    %v3100 = vpop.f32.mrf.mxu0
    %v3101 = vpop.f32.mrf.mxu0
    %3102 = vdwg.mxu0
    %v3103 = vadd.f32 %v3098, %v2881
    %3104 = vadd.xlane.f32.xlu0 %v3103
    %v3105 = vpop.xlane.xlu0 %3104
    %v3106 = vmul.f32 %v3105, %v1928
    %v3107 = vsub.f32 %v3103, %v3106
    %v3108 = vmul.f32 %v3107, %v3107
    %3109 = vadd.xlane.f32.xlu0 %v3108
    %v3110 = vpop.xlane.xlu0 %3109
    %v3111 = vmul.f32 %v3110, %v1928
    %v3112 = vadd.f32 %v3111, 1e-05
    %v3113 = vrsqrt.pop %v3112
    %v3114 = vmul.f32 %v3107, %v3113
    %v3115 = vlaneseq
    %v3116 = vshrl.u32 %v3115, 7
    %v3117 = vsub.s32 4, %v3116
    %v3118 = vrot.slane %v1809, %v3117
    %v3119 = vmul.f32 %v3114, %v3118
    %v3120 = vlaneseq
    %v3121 = vshrl.u32 %v3120, 7
    %v3122 = vsub.s32 5, %v3121
    %v3123 = vrot.slane %v1809, %v3122
    %v3124 = vadd.f32 %v3119, %v3123
    %v3125 = vadd.f32 %v3124, %v136
    %v3126 = vpack.c.bf16 %v3125, %v3125
    %v3127 = vld [vmem:[#allocation4 + $0x80] sm:$0xf]
    %v3128 = vld [vmem:[#allocation4 + $0x84] sm:$0xf]
    %v3129 = vld [vmem:[#allocation4 + $0x88] sm:$0xf]
    %v3130 = vld [vmem:[#allocation4 + $0x8c] sm:$0xf]
    %v3131 = vld [vmem:[#allocation4 + $0x90] sm:$0xf]
    %v3132 = vld [vmem:[#allocation4 + $0x94] sm:$0xf]
    %v3133 = vld [vmem:[#allocation4 + $0x98] sm:$0xf]
    %v3134 = vld [vmem:[#allocation4 + $0x9c] sm:$0xf]
    %v3135 = vld [vmem:[#allocation4 + $0xa0] sm:$0xf]
    %v3136 = vld [vmem:[#allocation4 + $0xa4] sm:$0xf]
    %v3137 = vld [vmem:[#allocation4 + $0xa8] sm:$0xf]
    %v3138 = vld [vmem:[#allocation4 + $0xac] sm:$0xf]
    %v3139 = vld [vmem:[#allocation4 + $0xb0] sm:$0xf]
    %v3140 = vld [vmem:[#allocation4 + $0xb4] sm:$0xf]
    %v3141 = vld [vmem:[#allocation4 + $0xb8] sm:$0xf]
    %v3142 = vld [vmem:[#allocation4 + $0xbc] sm:$0xf]
    %v3159 = vunpack.c.l.b16 %v3127
    %v3160 = vunpack.c.l.b16 %v3128
    %v3161 = vunpack.c.l.b16 %v3129
    %v3162 = vunpack.c.l.b16 %v3130
    %v3163 = vunpack.c.l.b16 %v3131
    %v3164 = vunpack.c.l.b16 %v3132
    %v3165 = vunpack.c.l.b16 %v3133
    %v3166 = vunpack.c.l.b16 %v3134
    %v3167 = vunpack.c.l.b16 %v3135
    %v3168 = vunpack.c.l.b16 %v3136
    %v3169 = vunpack.c.l.b16 %v3137
    %v3170 = vunpack.c.l.b16 %v3138
    %v3171 = vunpack.c.l.b16 %v3139
    %v3172 = vunpack.c.l.b16 %v3140
    %v3173 = vunpack.c.l.b16 %v3141
    %v3174 = vunpack.c.l.b16 %v3142
    %v3175 = vpack.c.b16 %v3160, %v3159
    %v3176 = vpack.c.b16 %v3162, %v3161
    %v3177 = vpack.c.b16 %v3164, %v3163
    %v3178 = vpack.c.b16 %v3166, %v3165
    %v3179 = vpack.c.b16 %v3168, %v3167
    %v3180 = vpack.c.b16 %v3170, %v3169
    %v3181 = vpack.c.b16 %v3172, %v3171
    %v3182 = vpack.c.b16 %v3174, %v3173
    %3191 = vmatprep.subr.bf16.mxu0 0
    %3192 = vmatpush1.bf16.msra.mxu0 %v3182
    %3193 = vmatprep.subr.bf16.mxu0 0
    %3194 = vmatpush1.bf16.msra.mxu0 %v3181
    %3195 = vmatprep.subr.bf16.mxu0 0
    %3196 = vmatpush1.bf16.msra.mxu0 %v3180
    %3197 = vmatprep.subr.bf16.mxu0 0
    %3198 = vmatpush1.bf16.msra.mxu0 %v3179
    %3199 = vmatprep.subr.bf16.mxu0 0
    %3200 = vmatpush1.bf16.msra.mxu0 %v3178
    %3201 = vmatprep.subr.bf16.mxu0 0
    %3202 = vmatpush1.bf16.msra.mxu0 %v3177
    %3203 = vmatprep.subr.bf16.mxu0 0
    %3204 = vmatpush1.bf16.msra.mxu0 %v3176
    %3205 = vmatprep.subr.bf16.mxu0 0
    %3206 = vmatpush1.bf16.msra.mxu0 %v3175
    %3207 = vmatprep.subr.bf16.mxu0 0
    %3208 = vmatpush2.bf16.msra.mxu0 0
    %3209 = vmatprep.subr.bf16.mxu0 0
    %3210 = vmatpush2.bf16.msra.mxu0 0
    %3211 = vmatprep.subr.bf16.mxu0 0
    %3212 = vmatpush2.bf16.msra.mxu0 0
    %3213 = vmatprep.subr.bf16.mxu0 0
    %3214 = vmatpush2.bf16.msra.mxu0 0
    %3215 = vmatprep.subr.bf16.mxu0 0
    %3216 = vmatpush2.bf16.msra.mxu0 0
    %3217 = vmatprep.subr.bf16.mxu0 0
    %3218 = vmatpush2.bf16.msra.mxu0 0
    %3219 = vmatprep.subr.bf16.mxu0 0
    %3220 = vmatpush2.bf16.msra.mxu0 0
    %3221 = vmatprep.subr.bf16.mxu0 0
    %3222 = vmatpush2.bf16.msra.mxu0 0
    %3223 = vmatprep.mubr.bf16.mxu0 0
    %3224 = vmatmul.mubr.bf16.gmra.mxu0 %v3126
    %v3225 = vpop.f32.mrf.mxu0
    %v3226 = vadd.f32 0.0, %v3225
    %v3227 = vpop.f32.mrf.mxu0
    %v3228 = vpop.f32.mrf.mxu0
    %v3229 = vpop.f32.mrf.mxu0
    %3230 = vdwg.mxu0
    %v3231 = vadd.f32 %v2758, %v3226
    %3232 = vmatprep.subr.bf16.mxu0 0
    %3233 = vmatpush1.bf16.xpose.msra.mxu0 0
    %3234 = vmatprep.subr.bf16.mxu0 0
    %3235 = vmatpush1.bf16.xpose.msra.mxu0 0
    %3236 = vmatprep.subr.bf16.mxu0 0
    %3237 = vmatpush1.bf16.xpose.msra.mxu0 0
    %3238 = vmatprep.subr.bf16.mxu0 0
    %3239 = vmatpush1.bf16.xpose.msra.mxu0 0
    %3240 = vmatprep.subr.bf16.mxu0 0
    %3241 = vmatpush1.bf16.xpose.msra.mxu0 0
    %3242 = vmatprep.subr.bf16.mxu0 0
    %3243 = vmatpush1.bf16.xpose.msra.mxu0 0
    %3244 = vmatprep.subr.bf16.mxu0 0
    %3245 = vmatpush1.bf16.xpose.msra.mxu0 0
    %3246 = vmatprep.subr.bf16.mxu0 0
    %3247 = vmatpush1.bf16.xpose.msra.mxu0 %v1794
    %3248 = vmatprep.subr.bf16.mxu0 0
    %3249 = vmatpush2.bf16.xpose.msra.mxu0 0
    %3250 = vmatprep.subr.bf16.mxu0 0
    %3251 = vmatpush2.bf16.xpose.msra.mxu0 0
    %3252 = vmatprep.subr.bf16.mxu0 0
    %3253 = vmatpush2.bf16.xpose.msra.mxu0 0
    %3254 = vmatprep.subr.bf16.mxu0 0
    %3255 = vmatpush2.bf16.xpose.msra.mxu0 0
    %3256 = vmatprep.subr.bf16.mxu0 0
    %3257 = vmatpush2.bf16.xpose.msra.mxu0 0
    %3258 = vmatprep.subr.bf16.mxu0 0
    %3259 = vmatpush2.bf16.xpose.msra.mxu0 0
    %3260 = vmatprep.subr.bf16.mxu0 0
    %3261 = vmatpush2.bf16.xpose.msra.mxu0 0
    %3262 = vmatprep.subr.bf16.mxu0 0
    %3263 = vmatpush2.bf16.xpose.msra.mxu0 0
    %3264 = vmatprep.mubr.bf16.mxu0 0
    %3265 = vmatmul.mubr.bf16.gmra.mxu0 %v690
    %v3266 = vpop.f32.mrf.mxu0
    %v3267 = vadd.f32 0.0, %v3266
    %v3268 = vpop.f32.mrf.mxu0
    %v3269 = vpop.f32.mrf.mxu0
    %v3270 = vpop.f32.mrf.mxu0
    %3271 = vdwg.mxu0
    %v3272 = vsel %vm1866, %v3267, -inf
    %3273 = vmax.xlane.f32.xlu0 %v3272
    %v3274 = vpop.xlane.xlu0 %3273
    %v3275 = vsub.f32 %v3267, %v3274
    %v3276 = vmul.f32 %v3275, 1.442695
    %v3277 = vpow.pop %v3276
    %v3278 = vsel %vm1866, %v3277, 0.0
    %3279 = vadd.xlane.f32.xlu0 %v3278
    %v3280 = vpop.xlane.xlu0 %3279
    %v3281 = vrcp.pop %v3280
    %v3282 = vmul.f32 %v3277, %v3281
    %v3283 = vpack.c.bf16 %v3282, %v3282
    %v3285 = vsel %vm1866, %v3283, 0
    %v3288 = vsel %vm1882, %v1802, 0
    %3290 = vmatprep.subr.bf16.mxu0 0
    %3291 = vmatpush1.bf16.msra.mxu0 0
    %3292 = vmatprep.subr.bf16.mxu0 0
    %3293 = vmatpush1.bf16.msra.mxu0 0
    %3294 = vmatprep.subr.bf16.mxu0 0
    %3295 = vmatpush1.bf16.msra.mxu0 0
    %3296 = vmatprep.subr.bf16.mxu0 0
    %3297 = vmatpush1.bf16.msra.mxu0 0
    %3298 = vmatprep.subr.bf16.mxu0 0
    %3299 = vmatpush1.bf16.msra.mxu0 0
    %3300 = vmatprep.subr.bf16.mxu0 0
    %3301 = vmatpush1.bf16.msra.mxu0 0
    %3302 = vmatprep.subr.bf16.mxu0 0
    %3303 = vmatpush1.bf16.msra.mxu0 0
    %3304 = vmatprep.subr.bf16.mxu0 0
    %3305 = vmatpush1.bf16.msra.mxu0 %v3288
    %3306 = vmatprep.subr.bf16.mxu0 0
    %3307 = vmatpush2.bf16.msra.mxu0 0
    %3308 = vmatprep.subr.bf16.mxu0 0
    %3309 = vmatpush2.bf16.msra.mxu0 0
    %3310 = vmatprep.subr.bf16.mxu0 0
    %3311 = vmatpush2.bf16.msra.mxu0 0
    %3312 = vmatprep.subr.bf16.mxu0 0
    %3313 = vmatpush2.bf16.msra.mxu0 0
    %3314 = vmatprep.subr.bf16.mxu0 0
    %3315 = vmatpush2.bf16.msra.mxu0 0
    %3316 = vmatprep.subr.bf16.mxu0 0
    %3317 = vmatpush2.bf16.msra.mxu0 0
    %3318 = vmatprep.subr.bf16.mxu0 0
    %3319 = vmatpush2.bf16.msra.mxu0 0
    %3320 = vmatprep.subr.bf16.mxu0 0
    %3321 = vmatpush2.bf16.msra.mxu0 0
    %3322 = vmatprep.mubr.bf16.mxu0 0
    %3323 = vmatmul.mubr.bf16.gmra.mxu0 %v3285
    %v3324 = vpop.f32.mrf.mxu0
    %v3325 = vadd.f32 %v136, %v3324
    %v3326 = vpop.f32.mrf.mxu0
    %v3327 = vpop.f32.mrf.mxu0
    %v3328 = vpop.f32.mrf.mxu0
    %3329 = vdwg.mxu0
    %3330 = vadd.xlane.f32.xlu0 %v3325
    %v3331 = vpop.xlane.xlu0 %3330
    %v3332 = vmul.f32 %v3331, %v1928
    %v3333 = vsub.f32 %v3325, %v3332
    %v3334 = vmul.f32 %v3333, %v3333
    %3335 = vadd.xlane.f32.xlu0 %v3334
    %v3336 = vpop.xlane.xlu0 %3335
    %v3337 = vmul.f32 %v3336, %v1928
    %v3338 = vadd.f32 %v3337, 1e-05
    %v3339 = vrsqrt.pop %v3338
    %v3340 = vmul.f32 %v3333, %v3339
    %v3341 = vlaneseq
    %v3342 = vshrl.u32 %v3341, 7
    %v3343 = vsub.s32 0, %v3342
    %v3344 = vrot.slane %v1810, %v3343
    %v3345 = vmul.f32 %v3340, %v3344
    %v3346 = vlaneseq
    %v3347 = vshrl.u32 %v3346, 7
    %v3348 = vsub.s32 1, %v3347
    %v3349 = vrot.slane %v1810, %v3348
    %v3350 = vadd.f32 %v3345, %v3349
    %v3351 = vpack.c.bf16 %v3350, %v3350
    %s3352 = scalar_lea.vmem [#allocation2], 192
    %v3353 = vld [vmem:[%s3352] sm:$0xf]
    %v3354 = vld [vmem:[%s3352 + $0x4] sm:$0xf]
    %v3355 = vld [vmem:[%s3352 + $0x8] sm:$0xf]
    %v3356 = vld [vmem:[%s3352 + $0xc] sm:$0xf]
    %v3357 = vld [vmem:[%s3352 + $0x10] sm:$0xf]
    %v3358 = vld [vmem:[%s3352 + $0x14] sm:$0xf]
    %v3359 = vld [vmem:[%s3352 + $0x18] sm:$0xf]
    %v3360 = vld [vmem:[%s3352 + $0x1c] sm:$0xf]
    %v3361 = vld [vmem:[%s3352 + $0x20] sm:$0xf]
    %v3362 = vld [vmem:[%s3352 + $0x24] sm:$0xf]
    %v3363 = vld [vmem:[%s3352 + $0x28] sm:$0xf]
    %v3364 = vld [vmem:[%s3352 + $0x2c] sm:$0xf]
    %v3365 = vld [vmem:[%s3352 + $0x30] sm:$0xf]
    %v3366 = vld [vmem:[%s3352 + $0x34] sm:$0xf]
    %v3367 = vld [vmem:[%s3352 + $0x38] sm:$0xf]
    %v3368 = vld [vmem:[%s3352 + $0x3c] sm:$0xf]
    %v3369 = vlaneseq
    %v3370 = vshrl.u32 %v3369, 7
    %v3371 = vsub.s32 2, %v3370
    %v3372 = vrot.slane %v1810, %v3371
    %v3389 = vunpack.c.l.b16 %v3353
    %v3390 = vunpack.c.l.b16 %v3354
    %v3391 = vunpack.c.l.b16 %v3355
    %v3392 = vunpack.c.l.b16 %v3356
    %v3393 = vunpack.c.l.b16 %v3357
    %v3394 = vunpack.c.l.b16 %v3358
    %v3395 = vunpack.c.l.b16 %v3359
    %v3396 = vunpack.c.l.b16 %v3360
    %v3397 = vunpack.c.l.b16 %v3361
    %v3398 = vunpack.c.l.b16 %v3362
    %v3399 = vunpack.c.l.b16 %v3363
    %v3400 = vunpack.c.l.b16 %v3364
    %v3401 = vunpack.c.l.b16 %v3365
    %v3402 = vunpack.c.l.b16 %v3366
    %v3403 = vunpack.c.l.b16 %v3367
    %v3404 = vunpack.c.l.b16 %v3368
    %v3405 = vpack.c.b16 %v3390, %v3389
    %v3406 = vpack.c.b16 %v3392, %v3391
    %v3407 = vpack.c.b16 %v3394, %v3393
    %v3408 = vpack.c.b16 %v3396, %v3395
    %v3409 = vpack.c.b16 %v3398, %v3397
    %v3410 = vpack.c.b16 %v3400, %v3399
    %v3411 = vpack.c.b16 %v3402, %v3401
    %v3412 = vpack.c.b16 %v3404, %v3403
    %3421 = vmatprep.subr.bf16.mxu0 0
    %3422 = vmatpush1.bf16.msra.mxu0 %v3412
    %3423 = vmatprep.subr.bf16.mxu0 0
    %3424 = vmatpush1.bf16.msra.mxu0 %v3411
    %3425 = vmatprep.subr.bf16.mxu0 0
    %3426 = vmatpush1.bf16.msra.mxu0 %v3410
    %3427 = vmatprep.subr.bf16.mxu0 0
    %3428 = vmatpush1.bf16.msra.mxu0 %v3409
    %3429 = vmatprep.subr.bf16.mxu0 0
    %3430 = vmatpush1.bf16.msra.mxu0 %v3408
    %3431 = vmatprep.subr.bf16.mxu0 0
    %3432 = vmatpush1.bf16.msra.mxu0 %v3407
    %3433 = vmatprep.subr.bf16.mxu0 0
    %3434 = vmatpush1.bf16.msra.mxu0 %v3406
    %3435 = vmatprep.subr.bf16.mxu0 0
    %3436 = vmatpush1.bf16.msra.mxu0 %v3405
    %3437 = vmatprep.subr.bf16.mxu0 0
    %3438 = vmatpush2.bf16.msra.mxu0 0
    %3439 = vmatprep.subr.bf16.mxu0 0
    %3440 = vmatpush2.bf16.msra.mxu0 0
    %3441 = vmatprep.subr.bf16.mxu0 0
    %3442 = vmatpush2.bf16.msra.mxu0 0
    %3443 = vmatprep.subr.bf16.mxu0 0
    %3444 = vmatpush2.bf16.msra.mxu0 0
    %3445 = vmatprep.subr.bf16.mxu0 0
    %3446 = vmatpush2.bf16.msra.mxu0 0
    %3447 = vmatprep.subr.bf16.mxu0 0
    %3448 = vmatpush2.bf16.msra.mxu0 0
    %3449 = vmatprep.subr.bf16.mxu0 0
    %3450 = vmatpush2.bf16.msra.mxu0 0
    %3451 = vmatprep.subr.bf16.mxu0 0
    %3452 = vmatpush2.bf16.msra.mxu0 0
    %3453 = vmatprep.mubr.bf16.mxu0 0
    %3454 = vmatmul.mubr.bf16.gmra.mxu0 %v3351
    %v3455 = vpop.f32.mrf.mxu0
    %v3456 = vadd.f32 %v3372, %v3455
    %v3457 = vpop.f32.mrf.mxu0
    %v3458 = vpop.f32.mrf.mxu0
    %v3459 = vpop.f32.mrf.mxu0
    %3460 = vdwg.mxu0
    %v3461 = vmax.f32 %v3456, 0.0
    %v3462 = vpack.c.bf16 %v3461, %v3461
    %s3463 = scalar_lea.vmem [#allocation3], 192
    %v3464 = vld [vmem:[%s3463] sm:$0xf]
    %v3465 = vld [vmem:[%s3463 + $0x4] sm:$0xf]
    %v3466 = vld [vmem:[%s3463 + $0x8] sm:$0xf]
    %v3467 = vld [vmem:[%s3463 + $0xc] sm:$0xf]
    %v3468 = vld [vmem:[%s3463 + $0x10] sm:$0xf]
    %v3469 = vld [vmem:[%s3463 + $0x14] sm:$0xf]
    %v3470 = vld [vmem:[%s3463 + $0x18] sm:$0xf]
    %v3471 = vld [vmem:[%s3463 + $0x1c] sm:$0xf]
    %v3472 = vld [vmem:[%s3463 + $0x20] sm:$0xf]
    %v3473 = vld [vmem:[%s3463 + $0x24] sm:$0xf]
    %v3474 = vld [vmem:[%s3463 + $0x28] sm:$0xf]
    %v3475 = vld [vmem:[%s3463 + $0x2c] sm:$0xf]
    %v3476 = vld [vmem:[%s3463 + $0x30] sm:$0xf]
    %v3477 = vld [vmem:[%s3463 + $0x34] sm:$0xf]
    %v3478 = vld [vmem:[%s3463 + $0x38] sm:$0xf]
    %v3479 = vld [vmem:[%s3463 + $0x3c] sm:$0xf]
    %v3480 = vlaneseq
    %v3481 = vshrl.u32 %v3480, 7
    %v3482 = vsub.s32 3, %v3481
    %v3483 = vrot.slane %v1810, %v3482
    %v3500 = vunpack.c.l.b16 %v3464
    %v3501 = vunpack.c.l.b16 %v3465
    %v3502 = vunpack.c.l.b16 %v3466
    %v3503 = vunpack.c.l.b16 %v3467
    %v3504 = vunpack.c.l.b16 %v3468
    %v3505 = vunpack.c.l.b16 %v3469
    %v3506 = vunpack.c.l.b16 %v3470
    %v3507 = vunpack.c.l.b16 %v3471
    %v3508 = vunpack.c.l.b16 %v3472
    %v3509 = vunpack.c.l.b16 %v3473
    %v3510 = vunpack.c.l.b16 %v3474
    %v3511 = vunpack.c.l.b16 %v3475
    %v3512 = vunpack.c.l.b16 %v3476
    %v3513 = vunpack.c.l.b16 %v3477
    %v3514 = vunpack.c.l.b16 %v3478
    %v3515 = vunpack.c.l.b16 %v3479
    %v3516 = vpack.c.b16 %v3501, %v3500
    %v3517 = vpack.c.b16 %v3503, %v3502
    %v3518 = vpack.c.b16 %v3505, %v3504
    %v3519 = vpack.c.b16 %v3507, %v3506
    %v3520 = vpack.c.b16 %v3509, %v3508
    %v3521 = vpack.c.b16 %v3511, %v3510
    %v3522 = vpack.c.b16 %v3513, %v3512
    %v3523 = vpack.c.b16 %v3515, %v3514
    %3532 = vmatprep.subr.bf16.mxu0 0
    %3533 = vmatpush1.bf16.msra.mxu0 %v3523
    %3534 = vmatprep.subr.bf16.mxu0 0
    %3535 = vmatpush1.bf16.msra.mxu0 %v3522
    %3536 = vmatprep.subr.bf16.mxu0 0
    %3537 = vmatpush1.bf16.msra.mxu0 %v3521
    %3538 = vmatprep.subr.bf16.mxu0 0
    %3539 = vmatpush1.bf16.msra.mxu0 %v3520
    %3540 = vmatprep.subr.bf16.mxu0 0
    %3541 = vmatpush1.bf16.msra.mxu0 %v3519
    %3542 = vmatprep.subr.bf16.mxu0 0
    %3543 = vmatpush1.bf16.msra.mxu0 %v3518
    %3544 = vmatprep.subr.bf16.mxu0 0
    %3545 = vmatpush1.bf16.msra.mxu0 %v3517
    %3546 = vmatprep.subr.bf16.mxu0 0
    %3547 = vmatpush1.bf16.msra.mxu0 %v3516
    %3548 = vmatprep.subr.bf16.mxu0 0
    %3549 = vmatpush2.bf16.msra.mxu0 0
    %3550 = vmatprep.subr.bf16.mxu0 0
    %3551 = vmatpush2.bf16.msra.mxu0 0
    %3552 = vmatprep.subr.bf16.mxu0 0
    %3553 = vmatpush2.bf16.msra.mxu0 0
    %3554 = vmatprep.subr.bf16.mxu0 0
    %3555 = vmatpush2.bf16.msra.mxu0 0
    %3556 = vmatprep.subr.bf16.mxu0 0
    %3557 = vmatpush2.bf16.msra.mxu0 0
    %3558 = vmatprep.subr.bf16.mxu0 0
    %3559 = vmatpush2.bf16.msra.mxu0 0
    %3560 = vmatprep.subr.bf16.mxu0 0
    %3561 = vmatpush2.bf16.msra.mxu0 0
    %3562 = vmatprep.subr.bf16.mxu0 0
    %3563 = vmatpush2.bf16.msra.mxu0 0
    %3564 = vmatprep.mubr.bf16.mxu0 0
    %3565 = vmatmul.mubr.bf16.gmra.mxu0 %v3462
    %v3566 = vpop.f32.mrf.mxu0
    %v3567 = vadd.f32 %v3483, %v3566
    %v3568 = vpop.f32.mrf.mxu0
    %v3569 = vpop.f32.mrf.mxu0
    %v3570 = vpop.f32.mrf.mxu0
    %3571 = vdwg.mxu0
    %v3572 = vadd.f32 %v3567, %v3350
    %3573 = vadd.xlane.f32.xlu0 %v3572
    %v3574 = vpop.xlane.xlu0 %3573
    %v3575 = vmul.f32 %v3574, %v1928
    %v3576 = vsub.f32 %v3572, %v3575
    %v3577 = vmul.f32 %v3576, %v3576
    %3578 = vadd.xlane.f32.xlu0 %v3577
    %v3579 = vpop.xlane.xlu0 %3578
    %v3580 = vmul.f32 %v3579, %v1928
    %v3581 = vadd.f32 %v3580, 1e-05
    %v3582 = vrsqrt.pop %v3581
    %v3583 = vmul.f32 %v3576, %v3582
    %v3584 = vlaneseq
    %v3585 = vshrl.u32 %v3584, 7
    %v3586 = vsub.s32 4, %v3585
    %v3587 = vrot.slane %v1810, %v3586
    %v3588 = vmul.f32 %v3583, %v3587
    %v3589 = vlaneseq
    %v3590 = vshrl.u32 %v3589, 7
    %v3591 = vsub.s32 5, %v3590
    %v3592 = vrot.slane %v1810, %v3591
    %v3593 = vadd.f32 %v3588, %v3592
    %v3594 = vadd.f32 %v3593, %v136
    %v3595 = vpack.c.bf16 %v3594, %v3594
    %v3596 = vld [vmem:[#allocation4 + $0xc0] sm:$0xf]
    %v3597 = vld [vmem:[#allocation4 + $0xc4] sm:$0xf]
    %v3598 = vld [vmem:[#allocation4 + $0xc8] sm:$0xf]
    %v3599 = vld [vmem:[#allocation4 + $0xcc] sm:$0xf]
    %v3600 = vld [vmem:[#allocation4 + $0xd0] sm:$0xf]
    %v3601 = vld [vmem:[#allocation4 + $0xd4] sm:$0xf]
    %v3602 = vld [vmem:[#allocation4 + $0xd8] sm:$0xf]
    %v3603 = vld [vmem:[#allocation4 + $0xdc] sm:$0xf]
    %v3604 = vld [vmem:[#allocation4 + $0xe0] sm:$0xf]
    %v3605 = vld [vmem:[#allocation4 + $0xe4] sm:$0xf]
    %v3606 = vld [vmem:[#allocation4 + $0xe8] sm:$0xf]
    %v3607 = vld [vmem:[#allocation4 + $0xec] sm:$0xf]
    %v3608 = vld [vmem:[#allocation4 + $0xf0] sm:$0xf]
    %v3609 = vld [vmem:[#allocation4 + $0xf4] sm:$0xf]
    %v3610 = vld [vmem:[#allocation4 + $0xf8] sm:$0xf]
    %v3611 = vld [vmem:[#allocation4 + $0xfc] sm:$0xf]
    %v3628 = vunpack.c.l.b16 %v3596
    %v3629 = vunpack.c.l.b16 %v3597
    %v3630 = vunpack.c.l.b16 %v3598
    %v3631 = vunpack.c.l.b16 %v3599
    %v3632 = vunpack.c.l.b16 %v3600
    %v3633 = vunpack.c.l.b16 %v3601
    %v3634 = vunpack.c.l.b16 %v3602
    %v3635 = vunpack.c.l.b16 %v3603
    %v3636 = vunpack.c.l.b16 %v3604
    %v3637 = vunpack.c.l.b16 %v3605
    %v3638 = vunpack.c.l.b16 %v3606
    %v3639 = vunpack.c.l.b16 %v3607
    %v3640 = vunpack.c.l.b16 %v3608
    %v3641 = vunpack.c.l.b16 %v3609
    %v3642 = vunpack.c.l.b16 %v3610
    %v3643 = vunpack.c.l.b16 %v3611
    %v3644 = vpack.c.b16 %v3629, %v3628
    %v3645 = vpack.c.b16 %v3631, %v3630
    %v3646 = vpack.c.b16 %v3633, %v3632
    %v3647 = vpack.c.b16 %v3635, %v3634
    %v3648 = vpack.c.b16 %v3637, %v3636
    %v3649 = vpack.c.b16 %v3639, %v3638
    %v3650 = vpack.c.b16 %v3641, %v3640
    %v3651 = vpack.c.b16 %v3643, %v3642
    %3660 = vmatprep.subr.bf16.mxu0 0
    %3661 = vmatpush1.bf16.msra.mxu0 %v3651
    %3662 = vmatprep.subr.bf16.mxu0 0
    %3663 = vmatpush1.bf16.msra.mxu0 %v3650
    %3664 = vmatprep.subr.bf16.mxu0 0
    %3665 = vmatpush1.bf16.msra.mxu0 %v3649
    %3666 = vmatprep.subr.bf16.mxu0 0
    %3667 = vmatpush1.bf16.msra.mxu0 %v3648
    %3668 = vmatprep.subr.bf16.mxu0 0
    %3669 = vmatpush1.bf16.msra.mxu0 %v3647
    %3670 = vmatprep.subr.bf16.mxu0 0
    %3671 = vmatpush1.bf16.msra.mxu0 %v3646
    %3672 = vmatprep.subr.bf16.mxu0 0
    %3673 = vmatpush1.bf16.msra.mxu0 %v3645
    %3674 = vmatprep.subr.bf16.mxu0 0
    %3675 = vmatpush1.bf16.msra.mxu0 %v3644
    %3676 = vmatprep.subr.bf16.mxu0 0
    %3677 = vmatpush2.bf16.msra.mxu0 0
    %3678 = vmatprep.subr.bf16.mxu0 0
    %3679 = vmatpush2.bf16.msra.mxu0 0
    %3680 = vmatprep.subr.bf16.mxu0 0
    %3681 = vmatpush2.bf16.msra.mxu0 0
    %3682 = vmatprep.subr.bf16.mxu0 0
    %3683 = vmatpush2.bf16.msra.mxu0 0
    %3684 = vmatprep.subr.bf16.mxu0 0
    %3685 = vmatpush2.bf16.msra.mxu0 0
    %3686 = vmatprep.subr.bf16.mxu0 0
    %3687 = vmatpush2.bf16.msra.mxu0 0
    %3688 = vmatprep.subr.bf16.mxu0 0
    %3689 = vmatpush2.bf16.msra.mxu0 0
    %3690 = vmatprep.subr.bf16.mxu0 0
    %3691 = vmatpush2.bf16.msra.mxu0 0
    %3692 = vmatprep.mubr.bf16.mxu0 0
    %3693 = vmatmul.mubr.bf16.gmra.mxu0 %v3595
    %v3694 = vpop.f32.mrf.mxu0
    %v3695 = vadd.f32 0.0, %v3694
    %v3696 = vpop.f32.mrf.mxu0
    %v3697 = vpop.f32.mrf.mxu0
    %v3698 = vpop.f32.mrf.mxu0
    %3699 = vdwg.mxu0
    %v3700 = vadd.f32 %v3231, %v3695
    %3701 = vmatprep.subr.bf16.mxu0 0
    %3702 = vmatpush1.bf16.xpose.msra.mxu0 0
    %3703 = vmatprep.subr.bf16.mxu0 0
    %3704 = vmatpush1.bf16.xpose.msra.mxu0 0
    %3705 = vmatprep.subr.bf16.mxu0 0
    %3706 = vmatpush1.bf16.xpose.msra.mxu0 0
    %3707 = vmatprep.subr.bf16.mxu0 0
    %3708 = vmatpush1.bf16.xpose.msra.mxu0 0
    %3709 = vmatprep.subr.bf16.mxu0 0
    %3710 = vmatpush1.bf16.xpose.msra.mxu0 0
    %3711 = vmatprep.subr.bf16.mxu0 0
    %3712 = vmatpush1.bf16.xpose.msra.mxu0 0
    %3713 = vmatprep.subr.bf16.mxu0 0
    %3714 = vmatpush1.bf16.xpose.msra.mxu0 0
    %3715 = vmatprep.subr.bf16.mxu0 0
    %3716 = vmatpush1.bf16.xpose.msra.mxu0 %v1795
    %3717 = vmatprep.subr.bf16.mxu0 0
    %3718 = vmatpush2.bf16.xpose.msra.mxu0 0
    %3719 = vmatprep.subr.bf16.mxu0 0
    %3720 = vmatpush2.bf16.xpose.msra.mxu0 0
    %3721 = vmatprep.subr.bf16.mxu0 0
    %3722 = vmatpush2.bf16.xpose.msra.mxu0 0
    %3723 = vmatprep.subr.bf16.mxu0 0
    %3724 = vmatpush2.bf16.xpose.msra.mxu0 0
    %3725 = vmatprep.subr.bf16.mxu0 0
    %3726 = vmatpush2.bf16.xpose.msra.mxu0 0
    %3727 = vmatprep.subr.bf16.mxu0 0
    %3728 = vmatpush2.bf16.xpose.msra.mxu0 0
    %3729 = vmatprep.subr.bf16.mxu0 0
    %3730 = vmatpush2.bf16.xpose.msra.mxu0 0
    %3731 = vmatprep.subr.bf16.mxu0 0
    %3732 = vmatpush2.bf16.xpose.msra.mxu0 0
    %3733 = vmatprep.mubr.bf16.mxu0 0
    %3734 = vmatmul.mubr.bf16.gmra.mxu0 %v691
    %v3735 = vpop.f32.mrf.mxu0
    %v3736 = vadd.f32 0.0, %v3735
    %v3737 = vpop.f32.mrf.mxu0
    %v3738 = vpop.f32.mrf.mxu0
    %v3739 = vpop.f32.mrf.mxu0
    %3740 = vdwg.mxu0
    %v3741 = vsel %vm1866, %v3736, -inf
    %3742 = vmax.xlane.f32.xlu0 %v3741
    %v3743 = vpop.xlane.xlu0 %3742
    %v3744 = vsub.f32 %v3736, %v3743
    %v3745 = vmul.f32 %v3744, 1.442695
    %v3746 = vpow.pop %v3745
    %v3747 = vsel %vm1866, %v3746, 0.0
    %3748 = vadd.xlane.f32.xlu0 %v3747
    %v3749 = vpop.xlane.xlu0 %3748
    %v3750 = vrcp.pop %v3749
    %v3751 = vmul.f32 %v3746, %v3750
    %v3752 = vpack.c.bf16 %v3751, %v3751
    %v3754 = vsel %vm1866, %v3752, 0
    %v3757 = vsel %vm1882, %v1803, 0
    %3759 = vmatprep.subr.bf16.mxu0 0
    %3760 = vmatpush1.bf16.msra.mxu0 0
    %3761 = vmatprep.subr.bf16.mxu0 0
    %3762 = vmatpush1.bf16.msra.mxu0 0
    %3763 = vmatprep.subr.bf16.mxu0 0
    %3764 = vmatpush1.bf16.msra.mxu0 0
    %3765 = vmatprep.subr.bf16.mxu0 0
    %3766 = vmatpush1.bf16.msra.mxu0 0
    %3767 = vmatprep.subr.bf16.mxu0 0
    %3768 = vmatpush1.bf16.msra.mxu0 0
    %3769 = vmatprep.subr.bf16.mxu0 0
    %3770 = vmatpush1.bf16.msra.mxu0 0
    %3771 = vmatprep.subr.bf16.mxu0 0
    %3772 = vmatpush1.bf16.msra.mxu0 0
    %3773 = vmatprep.subr.bf16.mxu0 0
    %3774 = vmatpush1.bf16.msra.mxu0 %v3757
    %3775 = vmatprep.subr.bf16.mxu0 0
    %3776 = vmatpush2.bf16.msra.mxu0 0
    %3777 = vmatprep.subr.bf16.mxu0 0
    %3778 = vmatpush2.bf16.msra.mxu0 0
    %3779 = vmatprep.subr.bf16.mxu0 0
    %3780 = vmatpush2.bf16.msra.mxu0 0
    %3781 = vmatprep.subr.bf16.mxu0 0
    %3782 = vmatpush2.bf16.msra.mxu0 0
    %3783 = vmatprep.subr.bf16.mxu0 0
    %3784 = vmatpush2.bf16.msra.mxu0 0
    %3785 = vmatprep.subr.bf16.mxu0 0
    %3786 = vmatpush2.bf16.msra.mxu0 0
    %3787 = vmatprep.subr.bf16.mxu0 0
    %3788 = vmatpush2.bf16.msra.mxu0 0
    %3789 = vmatprep.subr.bf16.mxu0 0
    %3790 = vmatpush2.bf16.msra.mxu0 0
    %3791 = vmatprep.mubr.bf16.mxu0 0
    %3792 = vmatmul.mubr.bf16.gmra.mxu0 %v3754
    %v3793 = vpop.f32.mrf.mxu0
    %v3794 = vadd.f32 %v136, %v3793
    %v3795 = vpop.f32.mrf.mxu0
    %v3796 = vpop.f32.mrf.mxu0
    %v3797 = vpop.f32.mrf.mxu0
    %3798 = vdwg.mxu0
    %3799 = vadd.xlane.f32.xlu0 %v3794
    %v3800 = vpop.xlane.xlu0 %3799
    %v3801 = vmul.f32 %v3800, %v1928
    %v3802 = vsub.f32 %v3794, %v3801
    %v3803 = vmul.f32 %v3802, %v3802
    %3804 = vadd.xlane.f32.xlu0 %v3803
    %v3805 = vpop.xlane.xlu0 %3804
    %v3806 = vmul.f32 %v3805, %v1928
    %v3807 = vadd.f32 %v3806, 1e-05
    %v3808 = vrsqrt.pop %v3807
    %v3809 = vmul.f32 %v3802, %v3808
    %v3810 = vlaneseq
    %v3811 = vshrl.u32 %v3810, 7
    %v3812 = vsub.s32 0, %v3811
    %v3813 = vrot.slane %v1811, %v3812
    %v3814 = vmul.f32 %v3809, %v3813
    %v3815 = vlaneseq
    %v3816 = vshrl.u32 %v3815, 7
    %v3817 = vsub.s32 1, %v3816
    %v3818 = vrot.slane %v1811, %v3817
    %v3819 = vadd.f32 %v3814, %v3818
    %v3820 = vpack.c.bf16 %v3819, %v3819
    %s3821 = scalar_lea.vmem [#allocation2], 256
    %v3822 = vld [vmem:[%s3821] sm:$0xf]
    %v3823 = vld [vmem:[%s3821 + $0x4] sm:$0xf]
    %v3824 = vld [vmem:[%s3821 + $0x8] sm:$0xf]
    %v3825 = vld [vmem:[%s3821 + $0xc] sm:$0xf]
    %v3826 = vld [vmem:[%s3821 + $0x10] sm:$0xf]
    %v3827 = vld [vmem:[%s3821 + $0x14] sm:$0xf]
    %v3828 = vld [vmem:[%s3821 + $0x18] sm:$0xf]
    %v3829 = vld [vmem:[%s3821 + $0x1c] sm:$0xf]
    %v3830 = vld [vmem:[%s3821 + $0x20] sm:$0xf]
    %v3831 = vld [vmem:[%s3821 + $0x24] sm:$0xf]
    %v3832 = vld [vmem:[%s3821 + $0x28] sm:$0xf]
    %v3833 = vld [vmem:[%s3821 + $0x2c] sm:$0xf]
    %v3834 = vld [vmem:[%s3821 + $0x30] sm:$0xf]
    %v3835 = vld [vmem:[%s3821 + $0x34] sm:$0xf]
    %v3836 = vld [vmem:[%s3821 + $0x38] sm:$0xf]
    %v3837 = vld [vmem:[%s3821 + $0x3c] sm:$0xf]
    %v3838 = vlaneseq
    %v3839 = vshrl.u32 %v3838, 7
    %v3840 = vsub.s32 2, %v3839
    %v3841 = vrot.slane %v1811, %v3840
    %v3858 = vunpack.c.l.b16 %v3822
    %v3859 = vunpack.c.l.b16 %v3823
    %v3860 = vunpack.c.l.b16 %v3824
    %v3861 = vunpack.c.l.b16 %v3825
    %v3862 = vunpack.c.l.b16 %v3826
    %v3863 = vunpack.c.l.b16 %v3827
    %v3864 = vunpack.c.l.b16 %v3828
    %v3865 = vunpack.c.l.b16 %v3829
    %v3866 = vunpack.c.l.b16 %v3830
    %v3867 = vunpack.c.l.b16 %v3831
    %v3868 = vunpack.c.l.b16 %v3832
    %v3869 = vunpack.c.l.b16 %v3833
    %v3870 = vunpack.c.l.b16 %v3834
    %v3871 = vunpack.c.l.b16 %v3835
    %v3872 = vunpack.c.l.b16 %v3836
    %v3873 = vunpack.c.l.b16 %v3837
    %v3874 = vpack.c.b16 %v3859, %v3858
    %v3875 = vpack.c.b16 %v3861, %v3860
    %v3876 = vpack.c.b16 %v3863, %v3862
    %v3877 = vpack.c.b16 %v3865, %v3864
    %v3878 = vpack.c.b16 %v3867, %v3866
    %v3879 = vpack.c.b16 %v3869, %v3868
    %v3880 = vpack.c.b16 %v3871, %v3870
    %v3881 = vpack.c.b16 %v3873, %v3872
    %3890 = vmatprep.subr.bf16.mxu0 0
    %3891 = vmatpush1.bf16.msra.mxu0 %v3881
    %3892 = vmatprep.subr.bf16.mxu0 0
    %3893 = vmatpush1.bf16.msra.mxu0 %v3880
    %3894 = vmatprep.subr.bf16.mxu0 0
    %3895 = vmatpush1.bf16.msra.mxu0 %v3879
    %3896 = vmatprep.subr.bf16.mxu0 0
    %3897 = vmatpush1.bf16.msra.mxu0 %v3878
    %3898 = vmatprep.subr.bf16.mxu0 0
    %3899 = vmatpush1.bf16.msra.mxu0 %v3877
    %3900 = vmatprep.subr.bf16.mxu0 0
    %3901 = vmatpush1.bf16.msra.mxu0 %v3876
    %3902 = vmatprep.subr.bf16.mxu0 0
    %3903 = vmatpush1.bf16.msra.mxu0 %v3875
    %3904 = vmatprep.subr.bf16.mxu0 0
    %3905 = vmatpush1.bf16.msra.mxu0 %v3874
    %3906 = vmatprep.subr.bf16.mxu0 0
    %3907 = vmatpush2.bf16.msra.mxu0 0
    %3908 = vmatprep.subr.bf16.mxu0 0
    %3909 = vmatpush2.bf16.msra.mxu0 0
    %3910 = vmatprep.subr.bf16.mxu0 0
    %3911 = vmatpush2.bf16.msra.mxu0 0
    %3912 = vmatprep.subr.bf16.mxu0 0
    %3913 = vmatpush2.bf16.msra.mxu0 0
    %3914 = vmatprep.subr.bf16.mxu0 0
    %3915 = vmatpush2.bf16.msra.mxu0 0
    %3916 = vmatprep.subr.bf16.mxu0 0
    %3917 = vmatpush2.bf16.msra.mxu0 0
    %3918 = vmatprep.subr.bf16.mxu0 0
    %3919 = vmatpush2.bf16.msra.mxu0 0
    %3920 = vmatprep.subr.bf16.mxu0 0
    %3921 = vmatpush2.bf16.msra.mxu0 0
    %3922 = vmatprep.mubr.bf16.mxu0 0
    %3923 = vmatmul.mubr.bf16.gmra.mxu0 %v3820
    %v3924 = vpop.f32.mrf.mxu0
    %v3925 = vadd.f32 %v3841, %v3924
    %v3926 = vpop.f32.mrf.mxu0
    %v3927 = vpop.f32.mrf.mxu0
    %v3928 = vpop.f32.mrf.mxu0
    %3929 = vdwg.mxu0
    %v3930 = vmax.f32 %v3925, 0.0
    %v3931 = vpack.c.bf16 %v3930, %v3930
    %s3932 = scalar_lea.vmem [#allocation3], 256
    %v3933 = vld [vmem:[%s3932] sm:$0xf]
    %v3934 = vld [vmem:[%s3932 + $0x4] sm:$0xf]
    %v3935 = vld [vmem:[%s3932 + $0x8] sm:$0xf]
    %v3936 = vld [vmem:[%s3932 + $0xc] sm:$0xf]
    %v3937 = vld [vmem:[%s3932 + $0x10] sm:$0xf]
    %v3938 = vld [vmem:[%s3932 + $0x14] sm:$0xf]
    %v3939 = vld [vmem:[%s3932 + $0x18] sm:$0xf]
    %v3940 = vld [vmem:[%s3932 + $0x1c] sm:$0xf]
    %v3941 = vld [vmem:[%s3932 + $0x20] sm:$0xf]
    %v3942 = vld [vmem:[%s3932 + $0x24] sm:$0xf]
    %v3943 = vld [vmem:[%s3932 + $0x28] sm:$0xf]
    %v3944 = vld [vmem:[%s3932 + $0x2c] sm:$0xf]
    %v3945 = vld [vmem:[%s3932 + $0x30] sm:$0xf]
    %v3946 = vld [vmem:[%s3932 + $0x34] sm:$0xf]
    %v3947 = vld [vmem:[%s3932 + $0x38] sm:$0xf]
    %v3948 = vld [vmem:[%s3932 + $0x3c] sm:$0xf]
    %v3949 = vlaneseq
    %v3950 = vshrl.u32 %v3949, 7
    %v3951 = vsub.s32 3, %v3950
    %v3952 = vrot.slane %v1811, %v3951
    %v3969 = vunpack.c.l.b16 %v3933
    %v3970 = vunpack.c.l.b16 %v3934
    %v3971 = vunpack.c.l.b16 %v3935
    %v3972 = vunpack.c.l.b16 %v3936
    %v3973 = vunpack.c.l.b16 %v3937
    %v3974 = vunpack.c.l.b16 %v3938
    %v3975 = vunpack.c.l.b16 %v3939
    %v3976 = vunpack.c.l.b16 %v3940
    %v3977 = vunpack.c.l.b16 %v3941
    %v3978 = vunpack.c.l.b16 %v3942
    %v3979 = vunpack.c.l.b16 %v3943
    %v3980 = vunpack.c.l.b16 %v3944
    %v3981 = vunpack.c.l.b16 %v3945
    %v3982 = vunpack.c.l.b16 %v3946
    %v3983 = vunpack.c.l.b16 %v3947
    %v3984 = vunpack.c.l.b16 %v3948
    %v3985 = vpack.c.b16 %v3970, %v3969
    %v3986 = vpack.c.b16 %v3972, %v3971
    %v3987 = vpack.c.b16 %v3974, %v3973
    %v3988 = vpack.c.b16 %v3976, %v3975
    %v3989 = vpack.c.b16 %v3978, %v3977
    %v3990 = vpack.c.b16 %v3980, %v3979
    %v3991 = vpack.c.b16 %v3982, %v3981
    %v3992 = vpack.c.b16 %v3984, %v3983
    %4001 = vmatprep.subr.bf16.mxu0 0
    %4002 = vmatpush1.bf16.msra.mxu0 %v3992
    %4003 = vmatprep.subr.bf16.mxu0 0
    %4004 = vmatpush1.bf16.msra.mxu0 %v3991
    %4005 = vmatprep.subr.bf16.mxu0 0
    %4006 = vmatpush1.bf16.msra.mxu0 %v3990
    %4007 = vmatprep.subr.bf16.mxu0 0
    %4008 = vmatpush1.bf16.msra.mxu0 %v3989
    %4009 = vmatprep.subr.bf16.mxu0 0
    %4010 = vmatpush1.bf16.msra.mxu0 %v3988
    %4011 = vmatprep.subr.bf16.mxu0 0
    %4012 = vmatpush1.bf16.msra.mxu0 %v3987
    %4013 = vmatprep.subr.bf16.mxu0 0
    %4014 = vmatpush1.bf16.msra.mxu0 %v3986
    %4015 = vmatprep.subr.bf16.mxu0 0
    %4016 = vmatpush1.bf16.msra.mxu0 %v3985
    %4017 = vmatprep.subr.bf16.mxu0 0
    %4018 = vmatpush2.bf16.msra.mxu0 0
    %4019 = vmatprep.subr.bf16.mxu0 0
    %4020 = vmatpush2.bf16.msra.mxu0 0
    %4021 = vmatprep.subr.bf16.mxu0 0
    %4022 = vmatpush2.bf16.msra.mxu0 0
    %4023 = vmatprep.subr.bf16.mxu0 0
    %4024 = vmatpush2.bf16.msra.mxu0 0
    %4025 = vmatprep.subr.bf16.mxu0 0
    %4026 = vmatpush2.bf16.msra.mxu0 0
    %4027 = vmatprep.subr.bf16.mxu0 0
    %4028 = vmatpush2.bf16.msra.mxu0 0
    %4029 = vmatprep.subr.bf16.mxu0 0
    %4030 = vmatpush2.bf16.msra.mxu0 0
    %4031 = vmatprep.subr.bf16.mxu0 0
    %4032 = vmatpush2.bf16.msra.mxu0 0
    %4033 = vmatprep.mubr.bf16.mxu0 0
    %4034 = vmatmul.mubr.bf16.gmra.mxu0 %v3931
    %v4035 = vpop.f32.mrf.mxu0
    %v4036 = vadd.f32 %v3952, %v4035
    %v4037 = vpop.f32.mrf.mxu0
    %v4038 = vpop.f32.mrf.mxu0
    %v4039 = vpop.f32.mrf.mxu0
    %4040 = vdwg.mxu0
    %v4041 = vadd.f32 %v4036, %v3819
    %4042 = vadd.xlane.f32.xlu0 %v4041
    %v4043 = vpop.xlane.xlu0 %4042
    %v4044 = vmul.f32 %v4043, %v1928
    %v4045 = vsub.f32 %v4041, %v4044
    %v4046 = vmul.f32 %v4045, %v4045
    %4047 = vadd.xlane.f32.xlu0 %v4046
    %v4048 = vpop.xlane.xlu0 %4047
    %v4049 = vmul.f32 %v4048, %v1928
    %v4050 = vadd.f32 %v4049, 1e-05
    %v4051 = vrsqrt.pop %v4050
    %v4052 = vmul.f32 %v4045, %v4051
    %v4053 = vlaneseq
    %v4054 = vshrl.u32 %v4053, 7
    %v4055 = vsub.s32 4, %v4054
    %v4056 = vrot.slane %v1811, %v4055
    %v4057 = vmul.f32 %v4052, %v4056
    %v4058 = vlaneseq
    %v4059 = vshrl.u32 %v4058, 7
    %v4060 = vsub.s32 5, %v4059
    %v4061 = vrot.slane %v1811, %v4060
    %v4062 = vadd.f32 %v4057, %v4061
    %v4063 = vadd.f32 %v4062, %v136
    %v4064 = vpack.c.bf16 %v4063, %v4063
    %v4065 = vld [vmem:[#allocation4 + $0x100] sm:$0xf]
    %v4066 = vld [vmem:[#allocation4 + $0x104] sm:$0xf]
    %v4067 = vld [vmem:[#allocation4 + $0x108] sm:$0xf]
    %v4068 = vld [vmem:[#allocation4 + $0x10c] sm:$0xf]
    %v4069 = vld [vmem:[#allocation4 + $0x110] sm:$0xf]
    %v4070 = vld [vmem:[#allocation4 + $0x114] sm:$0xf]
    %v4071 = vld [vmem:[#allocation4 + $0x118] sm:$0xf]
    %v4072 = vld [vmem:[#allocation4 + $0x11c] sm:$0xf]
    %v4073 = vld [vmem:[#allocation4 + $0x120] sm:$0xf]
    %v4074 = vld [vmem:[#allocation4 + $0x124] sm:$0xf]
    %v4075 = vld [vmem:[#allocation4 + $0x128] sm:$0xf]
    %v4076 = vld [vmem:[#allocation4 + $0x12c] sm:$0xf]
    %v4077 = vld [vmem:[#allocation4 + $0x130] sm:$0xf]
    %v4078 = vld [vmem:[#allocation4 + $0x134] sm:$0xf]
    %v4079 = vld [vmem:[#allocation4 + $0x138] sm:$0xf]
    %v4080 = vld [vmem:[#allocation4 + $0x13c] sm:$0xf]
    %v4097 = vunpack.c.l.b16 %v4065
    %v4098 = vunpack.c.l.b16 %v4066
    %v4099 = vunpack.c.l.b16 %v4067
    %v4100 = vunpack.c.l.b16 %v4068
    %v4101 = vunpack.c.l.b16 %v4069
    %v4102 = vunpack.c.l.b16 %v4070
    %v4103 = vunpack.c.l.b16 %v4071
    %v4104 = vunpack.c.l.b16 %v4072
    %v4105 = vunpack.c.l.b16 %v4073
    %v4106 = vunpack.c.l.b16 %v4074
    %v4107 = vunpack.c.l.b16 %v4075
    %v4108 = vunpack.c.l.b16 %v4076
    %v4109 = vunpack.c.l.b16 %v4077
    %v4110 = vunpack.c.l.b16 %v4078
    %v4111 = vunpack.c.l.b16 %v4079
    %v4112 = vunpack.c.l.b16 %v4080
    %v4113 = vpack.c.b16 %v4098, %v4097
    %v4114 = vpack.c.b16 %v4100, %v4099
    %v4115 = vpack.c.b16 %v4102, %v4101
    %v4116 = vpack.c.b16 %v4104, %v4103
    %v4117 = vpack.c.b16 %v4106, %v4105
    %v4118 = vpack.c.b16 %v4108, %v4107
    %v4119 = vpack.c.b16 %v4110, %v4109
    %v4120 = vpack.c.b16 %v4112, %v4111
    %4129 = vmatprep.subr.bf16.mxu0 0
    %4130 = vmatpush1.bf16.msra.mxu0 %v4120
    %4131 = vmatprep.subr.bf16.mxu0 0
    %4132 = vmatpush1.bf16.msra.mxu0 %v4119
    %4133 = vmatprep.subr.bf16.mxu0 0
    %4134 = vmatpush1.bf16.msra.mxu0 %v4118
    %4135 = vmatprep.subr.bf16.mxu0 0
    %4136 = vmatpush1.bf16.msra.mxu0 %v4117
    %4137 = vmatprep.subr.bf16.mxu0 0
    %4138 = vmatpush1.bf16.msra.mxu0 %v4116
    %4139 = vmatprep.subr.bf16.mxu0 0
    %4140 = vmatpush1.bf16.msra.mxu0 %v4115
    %4141 = vmatprep.subr.bf16.mxu0 0
    %4142 = vmatpush1.bf16.msra.mxu0 %v4114
    %4143 = vmatprep.subr.bf16.mxu0 0
    %4144 = vmatpush1.bf16.msra.mxu0 %v4113
    %4145 = vmatprep.subr.bf16.mxu0 0
    %4146 = vmatpush2.bf16.msra.mxu0 0
    %4147 = vmatprep.subr.bf16.mxu0 0
    %4148 = vmatpush2.bf16.msra.mxu0 0
    %4149 = vmatprep.subr.bf16.mxu0 0
    %4150 = vmatpush2.bf16.msra.mxu0 0
    %4151 = vmatprep.subr.bf16.mxu0 0
    %4152 = vmatpush2.bf16.msra.mxu0 0
    %4153 = vmatprep.subr.bf16.mxu0 0
    %4154 = vmatpush2.bf16.msra.mxu0 0
    %4155 = vmatprep.subr.bf16.mxu0 0
    %4156 = vmatpush2.bf16.msra.mxu0 0
    %4157 = vmatprep.subr.bf16.mxu0 0
    %4158 = vmatpush2.bf16.msra.mxu0 0
    %4159 = vmatprep.subr.bf16.mxu0 0
    %4160 = vmatpush2.bf16.msra.mxu0 0
    %4161 = vmatprep.mubr.bf16.mxu0 0
    %4162 = vmatmul.mubr.bf16.gmra.mxu0 %v4064
    %v4163 = vpop.f32.mrf.mxu0
    %v4164 = vadd.f32 0.0, %v4163
    %v4165 = vpop.f32.mrf.mxu0
    %v4166 = vpop.f32.mrf.mxu0
    %v4167 = vpop.f32.mrf.mxu0
    %4168 = vdwg.mxu0
    %v4169 = vadd.f32 %v3700, %v4164
    %4170 = vmatprep.subr.bf16.mxu0 0
    %4171 = vmatpush1.bf16.xpose.msra.mxu0 0
    %4172 = vmatprep.subr.bf16.mxu0 0
    %4173 = vmatpush1.bf16.xpose.msra.mxu0 0
    %4174 = vmatprep.subr.bf16.mxu0 0
    %4175 = vmatpush1.bf16.xpose.msra.mxu0 0
    %4176 = vmatprep.subr.bf16.mxu0 0
    %4177 = vmatpush1.bf16.xpose.msra.mxu0 0
    %4178 = vmatprep.subr.bf16.mxu0 0
    %4179 = vmatpush1.bf16.xpose.msra.mxu0 0
    %4180 = vmatprep.subr.bf16.mxu0 0
    %4181 = vmatpush1.bf16.xpose.msra.mxu0 0
    %4182 = vmatprep.subr.bf16.mxu0 0
    %4183 = vmatpush1.bf16.xpose.msra.mxu0 0
    %4184 = vmatprep.subr.bf16.mxu0 0
    %4185 = vmatpush1.bf16.xpose.msra.mxu0 %v1796
    %4186 = vmatprep.subr.bf16.mxu0 0
    %4187 = vmatpush2.bf16.xpose.msra.mxu0 0
    %4188 = vmatprep.subr.bf16.mxu0 0
    %4189 = vmatpush2.bf16.xpose.msra.mxu0 0
    %4190 = vmatprep.subr.bf16.mxu0 0
    %4191 = vmatpush2.bf16.xpose.msra.mxu0 0
    %4192 = vmatprep.subr.bf16.mxu0 0
    %4193 = vmatpush2.bf16.xpose.msra.mxu0 0
    %4194 = vmatprep.subr.bf16.mxu0 0
    %4195 = vmatpush2.bf16.xpose.msra.mxu0 0
    %4196 = vmatprep.subr.bf16.mxu0 0
    %4197 = vmatpush2.bf16.xpose.msra.mxu0 0
    %4198 = vmatprep.subr.bf16.mxu0 0
    %4199 = vmatpush2.bf16.xpose.msra.mxu0 0
    %4200 = vmatprep.subr.bf16.mxu0 0
    %4201 = vmatpush2.bf16.xpose.msra.mxu0 0
    %4202 = vmatprep.mubr.bf16.mxu0 0
    %4203 = vmatmul.mubr.bf16.gmra.mxu0 %v692
    %v4204 = vpop.f32.mrf.mxu0
    %v4205 = vadd.f32 0.0, %v4204
    %v4206 = vpop.f32.mrf.mxu0
    %v4207 = vpop.f32.mrf.mxu0
    %v4208 = vpop.f32.mrf.mxu0
    %4209 = vdwg.mxu0
    %v4210 = vsel %vm1866, %v4205, -inf
    %4211 = vmax.xlane.f32.xlu0 %v4210
    %v4212 = vpop.xlane.xlu0 %4211
    %v4213 = vsub.f32 %v4205, %v4212
    %v4214 = vmul.f32 %v4213, 1.442695
    %v4215 = vpow.pop %v4214
    %v4216 = vsel %vm1866, %v4215, 0.0
    %4217 = vadd.xlane.f32.xlu0 %v4216
    %v4218 = vpop.xlane.xlu0 %4217
    %v4219 = vrcp.pop %v4218
    %v4220 = vmul.f32 %v4215, %v4219
    %v4221 = vpack.c.bf16 %v4220, %v4220
    %v4223 = vsel %vm1866, %v4221, 0
    %v4226 = vsel %vm1882, %v1804, 0
    %4228 = vmatprep.subr.bf16.mxu0 0
    %4229 = vmatpush1.bf16.msra.mxu0 0
    %4230 = vmatprep.subr.bf16.mxu0 0
    %4231 = vmatpush1.bf16.msra.mxu0 0
    %4232 = vmatprep.subr.bf16.mxu0 0
    %4233 = vmatpush1.bf16.msra.mxu0 0
    %4234 = vmatprep.subr.bf16.mxu0 0
    %4235 = vmatpush1.bf16.msra.mxu0 0
    %4236 = vmatprep.subr.bf16.mxu0 0
    %4237 = vmatpush1.bf16.msra.mxu0 0
    %4238 = vmatprep.subr.bf16.mxu0 0
    %4239 = vmatpush1.bf16.msra.mxu0 0
    %4240 = vmatprep.subr.bf16.mxu0 0
    %4241 = vmatpush1.bf16.msra.mxu0 0
    %4242 = vmatprep.subr.bf16.mxu0 0
    %4243 = vmatpush1.bf16.msra.mxu0 %v4226
    %4244 = vmatprep.subr.bf16.mxu0 0
    %4245 = vmatpush2.bf16.msra.mxu0 0
    %4246 = vmatprep.subr.bf16.mxu0 0
    %4247 = vmatpush2.bf16.msra.mxu0 0
    %4248 = vmatprep.subr.bf16.mxu0 0
    %4249 = vmatpush2.bf16.msra.mxu0 0
    %4250 = vmatprep.subr.bf16.mxu0 0
    %4251 = vmatpush2.bf16.msra.mxu0 0
    %4252 = vmatprep.subr.bf16.mxu0 0
    %4253 = vmatpush2.bf16.msra.mxu0 0
    %4254 = vmatprep.subr.bf16.mxu0 0
    %4255 = vmatpush2.bf16.msra.mxu0 0
    %4256 = vmatprep.subr.bf16.mxu0 0
    %4257 = vmatpush2.bf16.msra.mxu0 0
    %4258 = vmatprep.subr.bf16.mxu0 0
    %4259 = vmatpush2.bf16.msra.mxu0 0
    %4260 = vmatprep.mubr.bf16.mxu0 0
    %4261 = vmatmul.mubr.bf16.gmra.mxu0 %v4223
    %v4262 = vpop.f32.mrf.mxu0
    %v4263 = vadd.f32 %v136, %v4262
    %v4264 = vpop.f32.mrf.mxu0
    %v4265 = vpop.f32.mrf.mxu0
    %v4266 = vpop.f32.mrf.mxu0
    %4267 = vdwg.mxu0
    %4268 = vadd.xlane.f32.xlu0 %v4263
    %v4269 = vpop.xlane.xlu0 %4268
    %v4270 = vmul.f32 %v4269, %v1928
    %v4271 = vsub.f32 %v4263, %v4270
    %v4272 = vmul.f32 %v4271, %v4271
    %4273 = vadd.xlane.f32.xlu0 %v4272
    %v4274 = vpop.xlane.xlu0 %4273
    %v4275 = vmul.f32 %v4274, %v1928
    %v4276 = vadd.f32 %v4275, 1e-05
    %v4277 = vrsqrt.pop %v4276
    %v4278 = vmul.f32 %v4271, %v4277
    %v4279 = vlaneseq
    %v4280 = vshrl.u32 %v4279, 7
    %v4281 = vsub.s32 0, %v4280
    %v4282 = vrot.slane %v1812, %v4281
    %v4283 = vmul.f32 %v4278, %v4282
    %v4284 = vlaneseq
    %v4285 = vshrl.u32 %v4284, 7
    %v4286 = vsub.s32 1, %v4285
    %v4287 = vrot.slane %v1812, %v4286
    %v4288 = vadd.f32 %v4283, %v4287
    %v4289 = vpack.c.bf16 %v4288, %v4288
    %s4290 = scalar_lea.vmem [#allocation2], 320
    %v4291 = vld [vmem:[%s4290] sm:$0xf]
    %v4292 = vld [vmem:[%s4290 + $0x4] sm:$0xf]
    %v4293 = vld [vmem:[%s4290 + $0x8] sm:$0xf]
    %v4294 = vld [vmem:[%s4290 + $0xc] sm:$0xf]
    %v4295 = vld [vmem:[%s4290 + $0x10] sm:$0xf]
    %v4296 = vld [vmem:[%s4290 + $0x14] sm:$0xf]
    %v4297 = vld [vmem:[%s4290 + $0x18] sm:$0xf]
    %v4298 = vld [vmem:[%s4290 + $0x1c] sm:$0xf]
    %v4299 = vld [vmem:[%s4290 + $0x20] sm:$0xf]
    %v4300 = vld [vmem:[%s4290 + $0x24] sm:$0xf]
    %v4301 = vld [vmem:[%s4290 + $0x28] sm:$0xf]
    %v4302 = vld [vmem:[%s4290 + $0x2c] sm:$0xf]
    %v4303 = vld [vmem:[%s4290 + $0x30] sm:$0xf]
    %v4304 = vld [vmem:[%s4290 + $0x34] sm:$0xf]
    %v4305 = vld [vmem:[%s4290 + $0x38] sm:$0xf]
    %v4306 = vld [vmem:[%s4290 + $0x3c] sm:$0xf]
    %v4307 = vlaneseq
    %v4308 = vshrl.u32 %v4307, 7
    %v4309 = vsub.s32 2, %v4308
    %v4310 = vrot.slane %v1812, %v4309
    %v4327 = vunpack.c.l.b16 %v4291
    %v4328 = vunpack.c.l.b16 %v4292
    %v4329 = vunpack.c.l.b16 %v4293
    %v4330 = vunpack.c.l.b16 %v4294
    %v4331 = vunpack.c.l.b16 %v4295
    %v4332 = vunpack.c.l.b16 %v4296
    %v4333 = vunpack.c.l.b16 %v4297
    %v4334 = vunpack.c.l.b16 %v4298
    %v4335 = vunpack.c.l.b16 %v4299
    %v4336 = vunpack.c.l.b16 %v4300
    %v4337 = vunpack.c.l.b16 %v4301
    %v4338 = vunpack.c.l.b16 %v4302
    %v4339 = vunpack.c.l.b16 %v4303
    %v4340 = vunpack.c.l.b16 %v4304
    %v4341 = vunpack.c.l.b16 %v4305
    %v4342 = vunpack.c.l.b16 %v4306
    %v4343 = vpack.c.b16 %v4328, %v4327
    %v4344 = vpack.c.b16 %v4330, %v4329
    %v4345 = vpack.c.b16 %v4332, %v4331
    %v4346 = vpack.c.b16 %v4334, %v4333
    %v4347 = vpack.c.b16 %v4336, %v4335
    %v4348 = vpack.c.b16 %v4338, %v4337
    %v4349 = vpack.c.b16 %v4340, %v4339
    %v4350 = vpack.c.b16 %v4342, %v4341
    %4359 = vmatprep.subr.bf16.mxu0 0
    %4360 = vmatpush1.bf16.msra.mxu0 %v4350
    %4361 = vmatprep.subr.bf16.mxu0 0
    %4362 = vmatpush1.bf16.msra.mxu0 %v4349
    %4363 = vmatprep.subr.bf16.mxu0 0
    %4364 = vmatpush1.bf16.msra.mxu0 %v4348
    %4365 = vmatprep.subr.bf16.mxu0 0
    %4366 = vmatpush1.bf16.msra.mxu0 %v4347
    %4367 = vmatprep.subr.bf16.mxu0 0
    %4368 = vmatpush1.bf16.msra.mxu0 %v4346
    %4369 = vmatprep.subr.bf16.mxu0 0
    %4370 = vmatpush1.bf16.msra.mxu0 %v4345
    %4371 = vmatprep.subr.bf16.mxu0 0
    %4372 = vmatpush1.bf16.msra.mxu0 %v4344
    %4373 = vmatprep.subr.bf16.mxu0 0
    %4374 = vmatpush1.bf16.msra.mxu0 %v4343
    %4375 = vmatprep.subr.bf16.mxu0 0
    %4376 = vmatpush2.bf16.msra.mxu0 0
    %4377 = vmatprep.subr.bf16.mxu0 0
    %4378 = vmatpush2.bf16.msra.mxu0 0
    %4379 = vmatprep.subr.bf16.mxu0 0
    %4380 = vmatpush2.bf16.msra.mxu0 0
    %4381 = vmatprep.subr.bf16.mxu0 0
    %4382 = vmatpush2.bf16.msra.mxu0 0
    %4383 = vmatprep.subr.bf16.mxu0 0
    %4384 = vmatpush2.bf16.msra.mxu0 0
    %4385 = vmatprep.subr.bf16.mxu0 0
    %4386 = vmatpush2.bf16.msra.mxu0 0
    %4387 = vmatprep.subr.bf16.mxu0 0
    %4388 = vmatpush2.bf16.msra.mxu0 0
    %4389 = vmatprep.subr.bf16.mxu0 0
    %4390 = vmatpush2.bf16.msra.mxu0 0
    %4391 = vmatprep.mubr.bf16.mxu0 0
    %4392 = vmatmul.mubr.bf16.gmra.mxu0 %v4289
    %v4393 = vpop.f32.mrf.mxu0
    %v4394 = vadd.f32 %v4310, %v4393
    %v4395 = vpop.f32.mrf.mxu0
    %v4396 = vpop.f32.mrf.mxu0
    %v4397 = vpop.f32.mrf.mxu0
    %4398 = vdwg.mxu0
    %v4399 = vmax.f32 %v4394, 0.0
    %v4400 = vpack.c.bf16 %v4399, %v4399
    %s4401 = scalar_lea.vmem [#allocation3], 320
    %v4402 = vld [vmem:[%s4401] sm:$0xf]
    %v4403 = vld [vmem:[%s4401 + $0x4] sm:$0xf]
    %v4404 = vld [vmem:[%s4401 + $0x8] sm:$0xf]
    %v4405 = vld [vmem:[%s4401 + $0xc] sm:$0xf]
    %v4406 = vld [vmem:[%s4401 + $0x10] sm:$0xf]
    %v4407 = vld [vmem:[%s4401 + $0x14] sm:$0xf]
    %v4408 = vld [vmem:[%s4401 + $0x18] sm:$0xf]
    %v4409 = vld [vmem:[%s4401 + $0x1c] sm:$0xf]
    %v4410 = vld [vmem:[%s4401 + $0x20] sm:$0xf]
    %v4411 = vld [vmem:[%s4401 + $0x24] sm:$0xf]
    %v4412 = vld [vmem:[%s4401 + $0x28] sm:$0xf]
    %v4413 = vld [vmem:[%s4401 + $0x2c] sm:$0xf]
    %v4414 = vld [vmem:[%s4401 + $0x30] sm:$0xf]
    %v4415 = vld [vmem:[%s4401 + $0x34] sm:$0xf]
    %v4416 = vld [vmem:[%s4401 + $0x38] sm:$0xf]
    %v4417 = vld [vmem:[%s4401 + $0x3c] sm:$0xf]
    %v4418 = vlaneseq
    %v4419 = vshrl.u32 %v4418, 7
    %v4420 = vsub.s32 3, %v4419
    %v4421 = vrot.slane %v1812, %v4420
    %v4438 = vunpack.c.l.b16 %v4402
    %v4439 = vunpack.c.l.b16 %v4403
    %v4440 = vunpack.c.l.b16 %v4404
    %v4441 = vunpack.c.l.b16 %v4405
    %v4442 = vunpack.c.l.b16 %v4406
    %v4443 = vunpack.c.l.b16 %v4407
    %v4444 = vunpack.c.l.b16 %v4408
    %v4445 = vunpack.c.l.b16 %v4409
    %v4446 = vunpack.c.l.b16 %v4410
    %v4447 = vunpack.c.l.b16 %v4411
    %v4448 = vunpack.c.l.b16 %v4412
    %v4449 = vunpack.c.l.b16 %v4413
    %v4450 = vunpack.c.l.b16 %v4414
    %v4451 = vunpack.c.l.b16 %v4415
    %v4452 = vunpack.c.l.b16 %v4416
    %v4453 = vunpack.c.l.b16 %v4417
    %v4454 = vpack.c.b16 %v4439, %v4438
    %v4455 = vpack.c.b16 %v4441, %v4440
    %v4456 = vpack.c.b16 %v4443, %v4442
    %v4457 = vpack.c.b16 %v4445, %v4444
    %v4458 = vpack.c.b16 %v4447, %v4446
    %v4459 = vpack.c.b16 %v4449, %v4448
    %v4460 = vpack.c.b16 %v4451, %v4450
    %v4461 = vpack.c.b16 %v4453, %v4452
    %4470 = vmatprep.subr.bf16.mxu0 0
    %4471 = vmatpush1.bf16.msra.mxu0 %v4461
    %4472 = vmatprep.subr.bf16.mxu0 0
    %4473 = vmatpush1.bf16.msra.mxu0 %v4460
    %4474 = vmatprep.subr.bf16.mxu0 0
    %4475 = vmatpush1.bf16.msra.mxu0 %v4459
    %4476 = vmatprep.subr.bf16.mxu0 0
    %4477 = vmatpush1.bf16.msra.mxu0 %v4458
    %4478 = vmatprep.subr.bf16.mxu0 0
    %4479 = vmatpush1.bf16.msra.mxu0 %v4457
    %4480 = vmatprep.subr.bf16.mxu0 0
    %4481 = vmatpush1.bf16.msra.mxu0 %v4456
    %4482 = vmatprep.subr.bf16.mxu0 0
    %4483 = vmatpush1.bf16.msra.mxu0 %v4455
    %4484 = vmatprep.subr.bf16.mxu0 0
    %4485 = vmatpush1.bf16.msra.mxu0 %v4454
    %4486 = vmatprep.subr.bf16.mxu0 0
    %4487 = vmatpush2.bf16.msra.mxu0 0
    %4488 = vmatprep.subr.bf16.mxu0 0
    %4489 = vmatpush2.bf16.msra.mxu0 0
    %4490 = vmatprep.subr.bf16.mxu0 0
    %4491 = vmatpush2.bf16.msra.mxu0 0
    %4492 = vmatprep.subr.bf16.mxu0 0
    %4493 = vmatpush2.bf16.msra.mxu0 0
    %4494 = vmatprep.subr.bf16.mxu0 0
    %4495 = vmatpush2.bf16.msra.mxu0 0
    %4496 = vmatprep.subr.bf16.mxu0 0
    %4497 = vmatpush2.bf16.msra.mxu0 0
    %4498 = vmatprep.subr.bf16.mxu0 0
    %4499 = vmatpush2.bf16.msra.mxu0 0
    %4500 = vmatprep.subr.bf16.mxu0 0
    %4501 = vmatpush2.bf16.msra.mxu0 0
    %4502 = vmatprep.mubr.bf16.mxu0 0
    %4503 = vmatmul.mubr.bf16.gmra.mxu0 %v4400
    %v4504 = vpop.f32.mrf.mxu0
    %v4505 = vadd.f32 %v4421, %v4504
    %v4506 = vpop.f32.mrf.mxu0
    %v4507 = vpop.f32.mrf.mxu0
    %v4508 = vpop.f32.mrf.mxu0
    %4509 = vdwg.mxu0
    %v4510 = vadd.f32 %v4505, %v4288
    %4511 = vadd.xlane.f32.xlu0 %v4510
    %v4512 = vpop.xlane.xlu0 %4511
    %v4513 = vmul.f32 %v4512, %v1928
    %v4514 = vsub.f32 %v4510, %v4513
    %v4515 = vmul.f32 %v4514, %v4514
    %4516 = vadd.xlane.f32.xlu0 %v4515
    %v4517 = vpop.xlane.xlu0 %4516
    %v4518 = vmul.f32 %v4517, %v1928
    %v4519 = vadd.f32 %v4518, 1e-05
    %v4520 = vrsqrt.pop %v4519
    %v4521 = vmul.f32 %v4514, %v4520
    %v4522 = vlaneseq
    %v4523 = vshrl.u32 %v4522, 7
    %v4524 = vsub.s32 4, %v4523
    %v4525 = vrot.slane %v1812, %v4524
    %v4526 = vmul.f32 %v4521, %v4525
    %v4527 = vlaneseq
    %v4528 = vshrl.u32 %v4527, 7
    %v4529 = vsub.s32 5, %v4528
    %v4530 = vrot.slane %v1812, %v4529
    %v4531 = vadd.f32 %v4526, %v4530
    %v4532 = vadd.f32 %v4531, %v136
    %v4533 = vpack.c.bf16 %v4532, %v4532
    %v4534 = vld [vmem:[#allocation4 + $0x140] sm:$0xf]
    %v4535 = vld [vmem:[#allocation4 + $0x144] sm:$0xf]
    %v4536 = vld [vmem:[#allocation4 + $0x148] sm:$0xf]
    %v4537 = vld [vmem:[#allocation4 + $0x14c] sm:$0xf]
    %v4538 = vld [vmem:[#allocation4 + $0x150] sm:$0xf]
    %v4539 = vld [vmem:[#allocation4 + $0x154] sm:$0xf]
    %v4540 = vld [vmem:[#allocation4 + $0x158] sm:$0xf]
    %v4541 = vld [vmem:[#allocation4 + $0x15c] sm:$0xf]
    %v4542 = vld [vmem:[#allocation4 + $0x160] sm:$0xf]
    %v4543 = vld [vmem:[#allocation4 + $0x164] sm:$0xf]
    %v4544 = vld [vmem:[#allocation4 + $0x168] sm:$0xf]
    %v4545 = vld [vmem:[#allocation4 + $0x16c] sm:$0xf]
    %v4546 = vld [vmem:[#allocation4 + $0x170] sm:$0xf]
    %v4547 = vld [vmem:[#allocation4 + $0x174] sm:$0xf]
    %v4548 = vld [vmem:[#allocation4 + $0x178] sm:$0xf]
    %v4549 = vld [vmem:[#allocation4 + $0x17c] sm:$0xf]
    %v4566 = vunpack.c.l.b16 %v4534
    %v4567 = vunpack.c.l.b16 %v4535
    %v4568 = vunpack.c.l.b16 %v4536
    %v4569 = vunpack.c.l.b16 %v4537
    %v4570 = vunpack.c.l.b16 %v4538
    %v4571 = vunpack.c.l.b16 %v4539
    %v4572 = vunpack.c.l.b16 %v4540
    %v4573 = vunpack.c.l.b16 %v4541
    %v4574 = vunpack.c.l.b16 %v4542
    %v4575 = vunpack.c.l.b16 %v4543
    %v4576 = vunpack.c.l.b16 %v4544
    %v4577 = vunpack.c.l.b16 %v4545
    %v4578 = vunpack.c.l.b16 %v4546
    %v4579 = vunpack.c.l.b16 %v4547
    %v4580 = vunpack.c.l.b16 %v4548
    %v4581 = vunpack.c.l.b16 %v4549
    %v4582 = vpack.c.b16 %v4567, %v4566
    %v4583 = vpack.c.b16 %v4569, %v4568
    %v4584 = vpack.c.b16 %v4571, %v4570
    %v4585 = vpack.c.b16 %v4573, %v4572
    %v4586 = vpack.c.b16 %v4575, %v4574
    %v4587 = vpack.c.b16 %v4577, %v4576
    %v4588 = vpack.c.b16 %v4579, %v4578
    %v4589 = vpack.c.b16 %v4581, %v4580
    %4598 = vmatprep.subr.bf16.mxu0 0
    %4599 = vmatpush1.bf16.msra.mxu0 %v4589
    %4600 = vmatprep.subr.bf16.mxu0 0
    %4601 = vmatpush1.bf16.msra.mxu0 %v4588
    %4602 = vmatprep.subr.bf16.mxu0 0
    %4603 = vmatpush1.bf16.msra.mxu0 %v4587
    %4604 = vmatprep.subr.bf16.mxu0 0
    %4605 = vmatpush1.bf16.msra.mxu0 %v4586
    %4606 = vmatprep.subr.bf16.mxu0 0
    %4607 = vmatpush1.bf16.msra.mxu0 %v4585
    %4608 = vmatprep.subr.bf16.mxu0 0
    %4609 = vmatpush1.bf16.msra.mxu0 %v4584
    %4610 = vmatprep.subr.bf16.mxu0 0
    %4611 = vmatpush1.bf16.msra.mxu0 %v4583
    %4612 = vmatprep.subr.bf16.mxu0 0
    %4613 = vmatpush1.bf16.msra.mxu0 %v4582
    %4614 = vmatprep.subr.bf16.mxu0 0
    %4615 = vmatpush2.bf16.msra.mxu0 0
    %4616 = vmatprep.subr.bf16.mxu0 0
    %4617 = vmatpush2.bf16.msra.mxu0 0
    %4618 = vmatprep.subr.bf16.mxu0 0
    %4619 = vmatpush2.bf16.msra.mxu0 0
    %4620 = vmatprep.subr.bf16.mxu0 0
    %4621 = vmatpush2.bf16.msra.mxu0 0
    %4622 = vmatprep.subr.bf16.mxu0 0
    %4623 = vmatpush2.bf16.msra.mxu0 0
    %4624 = vmatprep.subr.bf16.mxu0 0
    %4625 = vmatpush2.bf16.msra.mxu0 0
    %4626 = vmatprep.subr.bf16.mxu0 0
    %4627 = vmatpush2.bf16.msra.mxu0 0
    %4628 = vmatprep.subr.bf16.mxu0 0
    %4629 = vmatpush2.bf16.msra.mxu0 0
    %4630 = vmatprep.mubr.bf16.mxu0 0
    %4631 = vmatmul.mubr.bf16.gmra.mxu0 %v4533
    %v4632 = vpop.f32.mrf.mxu0
    %v4633 = vadd.f32 0.0, %v4632
    %v4634 = vpop.f32.mrf.mxu0
    %v4635 = vpop.f32.mrf.mxu0
    %v4636 = vpop.f32.mrf.mxu0
    %4637 = vdwg.mxu0
    %v4638 = vadd.f32 %v4169, %v4633
    %4639 = vmatprep.subr.bf16.mxu0 0
    %4640 = vmatpush1.bf16.xpose.msra.mxu0 0
    %4641 = vmatprep.subr.bf16.mxu0 0
    %4642 = vmatpush1.bf16.xpose.msra.mxu0 0
    %4643 = vmatprep.subr.bf16.mxu0 0
    %4644 = vmatpush1.bf16.xpose.msra.mxu0 0
    %4645 = vmatprep.subr.bf16.mxu0 0
    %4646 = vmatpush1.bf16.xpose.msra.mxu0 0
    %4647 = vmatprep.subr.bf16.mxu0 0
    %4648 = vmatpush1.bf16.xpose.msra.mxu0 0
    %4649 = vmatprep.subr.bf16.mxu0 0
    %4650 = vmatpush1.bf16.xpose.msra.mxu0 0
    %4651 = vmatprep.subr.bf16.mxu0 0
    %4652 = vmatpush1.bf16.xpose.msra.mxu0 0
    %4653 = vmatprep.subr.bf16.mxu0 0
    %4654 = vmatpush1.bf16.xpose.msra.mxu0 %v1797
    %4655 = vmatprep.subr.bf16.mxu0 0
    %4656 = vmatpush2.bf16.xpose.msra.mxu0 0
    %4657 = vmatprep.subr.bf16.mxu0 0
    %4658 = vmatpush2.bf16.xpose.msra.mxu0 0
    %4659 = vmatprep.subr.bf16.mxu0 0
    %4660 = vmatpush2.bf16.xpose.msra.mxu0 0
    %4661 = vmatprep.subr.bf16.mxu0 0
    %4662 = vmatpush2.bf16.xpose.msra.mxu0 0
    %4663 = vmatprep.subr.bf16.mxu0 0
    %4664 = vmatpush2.bf16.xpose.msra.mxu0 0
    %4665 = vmatprep.subr.bf16.mxu0 0
    %4666 = vmatpush2.bf16.xpose.msra.mxu0 0
    %4667 = vmatprep.subr.bf16.mxu0 0
    %4668 = vmatpush2.bf16.xpose.msra.mxu0 0
    %4669 = vmatprep.subr.bf16.mxu0 0
    %4670 = vmatpush2.bf16.xpose.msra.mxu0 0
    %4671 = vmatprep.mubr.bf16.mxu0 0
    %4672 = vmatmul.mubr.bf16.gmra.mxu0 %v693
    %v4673 = vpop.f32.mrf.mxu0
    %v4674 = vadd.f32 0.0, %v4673
    %v4675 = vpop.f32.mrf.mxu0
    %v4676 = vpop.f32.mrf.mxu0
    %v4677 = vpop.f32.mrf.mxu0
    %4678 = vdwg.mxu0
    %v4679 = vsel %vm1866, %v4674, -inf
    %4680 = vmax.xlane.f32.xlu0 %v4679
    %v4681 = vpop.xlane.xlu0 %4680
    %v4682 = vsub.f32 %v4674, %v4681
    %v4683 = vmul.f32 %v4682, 1.442695
    %v4684 = vpow.pop %v4683
    %v4685 = vsel %vm1866, %v4684, 0.0
    %4686 = vadd.xlane.f32.xlu0 %v4685
    %v4687 = vpop.xlane.xlu0 %4686
    %v4688 = vrcp.pop %v4687
    %v4689 = vmul.f32 %v4684, %v4688
    %v4690 = vpack.c.bf16 %v4689, %v4689
    %v4692 = vsel %vm1866, %v4690, 0
    %v4695 = vsel %vm1882, %v1805, 0
    %4697 = vmatprep.subr.bf16.mxu0 0
    %4698 = vmatpush1.bf16.msra.mxu0 0
    %4699 = vmatprep.subr.bf16.mxu0 0
    %4700 = vmatpush1.bf16.msra.mxu0 0
    %4701 = vmatprep.subr.bf16.mxu0 0
    %4702 = vmatpush1.bf16.msra.mxu0 0
    %4703 = vmatprep.subr.bf16.mxu0 0
    %4704 = vmatpush1.bf16.msra.mxu0 0
    %4705 = vmatprep.subr.bf16.mxu0 0
    %4706 = vmatpush1.bf16.msra.mxu0 0
    %4707 = vmatprep.subr.bf16.mxu0 0
    %4708 = vmatpush1.bf16.msra.mxu0 0
    %4709 = vmatprep.subr.bf16.mxu0 0
    %4710 = vmatpush1.bf16.msra.mxu0 0
    %4711 = vmatprep.subr.bf16.mxu0 0
    %4712 = vmatpush1.bf16.msra.mxu0 %v4695
    %4713 = vmatprep.subr.bf16.mxu0 0
    %4714 = vmatpush2.bf16.msra.mxu0 0
    %4715 = vmatprep.subr.bf16.mxu0 0
    %4716 = vmatpush2.bf16.msra.mxu0 0
    %4717 = vmatprep.subr.bf16.mxu0 0
    %4718 = vmatpush2.bf16.msra.mxu0 0
    %4719 = vmatprep.subr.bf16.mxu0 0
    %4720 = vmatpush2.bf16.msra.mxu0 0
    %4721 = vmatprep.subr.bf16.mxu0 0
    %4722 = vmatpush2.bf16.msra.mxu0 0
    %4723 = vmatprep.subr.bf16.mxu0 0
    %4724 = vmatpush2.bf16.msra.mxu0 0
    %4725 = vmatprep.subr.bf16.mxu0 0
    %4726 = vmatpush2.bf16.msra.mxu0 0
    %4727 = vmatprep.subr.bf16.mxu0 0
    %4728 = vmatpush2.bf16.msra.mxu0 0
    %4729 = vmatprep.mubr.bf16.mxu0 0
    %4730 = vmatmul.mubr.bf16.gmra.mxu0 %v4692
    %v4731 = vpop.f32.mrf.mxu0
    %v4732 = vadd.f32 %v136, %v4731
    %v4733 = vpop.f32.mrf.mxu0
    %v4734 = vpop.f32.mrf.mxu0
    %v4735 = vpop.f32.mrf.mxu0
    %4736 = vdwg.mxu0
    %4737 = vadd.xlane.f32.xlu0 %v4732
    %v4738 = vpop.xlane.xlu0 %4737
    %v4739 = vmul.f32 %v4738, %v1928
    %v4740 = vsub.f32 %v4732, %v4739
    %v4741 = vmul.f32 %v4740, %v4740
    %4742 = vadd.xlane.f32.xlu0 %v4741
    %v4743 = vpop.xlane.xlu0 %4742
    %v4744 = vmul.f32 %v4743, %v1928
    %v4745 = vadd.f32 %v4744, 1e-05
    %v4746 = vrsqrt.pop %v4745
    %v4747 = vmul.f32 %v4740, %v4746
    %v4748 = vlaneseq
    %v4749 = vshrl.u32 %v4748, 7
    %v4750 = vsub.s32 0, %v4749
    %v4751 = vrot.slane %v1813, %v4750
    %v4752 = vmul.f32 %v4747, %v4751
    %v4753 = vlaneseq
    %v4754 = vshrl.u32 %v4753, 7
    %v4755 = vsub.s32 1, %v4754
    %v4756 = vrot.slane %v1813, %v4755
    %v4757 = vadd.f32 %v4752, %v4756
    %v4758 = vpack.c.bf16 %v4757, %v4757
    %s4759 = scalar_lea.vmem [#allocation2], 384
    %v4760 = vld [vmem:[%s4759] sm:$0xf]
    %v4761 = vld [vmem:[%s4759 + $0x4] sm:$0xf]
    %v4762 = vld [vmem:[%s4759 + $0x8] sm:$0xf]
    %v4763 = vld [vmem:[%s4759 + $0xc] sm:$0xf]
    %v4764 = vld [vmem:[%s4759 + $0x10] sm:$0xf]
    %v4765 = vld [vmem:[%s4759 + $0x14] sm:$0xf]
    %v4766 = vld [vmem:[%s4759 + $0x18] sm:$0xf]
    %v4767 = vld [vmem:[%s4759 + $0x1c] sm:$0xf]
    %v4768 = vld [vmem:[%s4759 + $0x20] sm:$0xf]
    %v4769 = vld [vmem:[%s4759 + $0x24] sm:$0xf]
    %v4770 = vld [vmem:[%s4759 + $0x28] sm:$0xf]
    %v4771 = vld [vmem:[%s4759 + $0x2c] sm:$0xf]
    %v4772 = vld [vmem:[%s4759 + $0x30] sm:$0xf]
    %v4773 = vld [vmem:[%s4759 + $0x34] sm:$0xf]
    %v4774 = vld [vmem:[%s4759 + $0x38] sm:$0xf]
    %v4775 = vld [vmem:[%s4759 + $0x3c] sm:$0xf]
    %v4776 = vlaneseq
    %v4777 = vshrl.u32 %v4776, 7
    %v4778 = vsub.s32 2, %v4777
    %v4779 = vrot.slane %v1813, %v4778
    %v4796 = vunpack.c.l.b16 %v4760
    %v4797 = vunpack.c.l.b16 %v4761
    %v4798 = vunpack.c.l.b16 %v4762
    %v4799 = vunpack.c.l.b16 %v4763
    %v4800 = vunpack.c.l.b16 %v4764
    %v4801 = vunpack.c.l.b16 %v4765
    %v4802 = vunpack.c.l.b16 %v4766
    %v4803 = vunpack.c.l.b16 %v4767
    %v4804 = vunpack.c.l.b16 %v4768
    %v4805 = vunpack.c.l.b16 %v4769
    %v4806 = vunpack.c.l.b16 %v4770
    %v4807 = vunpack.c.l.b16 %v4771
    %v4808 = vunpack.c.l.b16 %v4772
    %v4809 = vunpack.c.l.b16 %v4773
    %v4810 = vunpack.c.l.b16 %v4774
    %v4811 = vunpack.c.l.b16 %v4775
    %v4812 = vpack.c.b16 %v4797, %v4796
    %v4813 = vpack.c.b16 %v4799, %v4798
    %v4814 = vpack.c.b16 %v4801, %v4800
    %v4815 = vpack.c.b16 %v4803, %v4802
    %v4816 = vpack.c.b16 %v4805, %v4804
    %v4817 = vpack.c.b16 %v4807, %v4806
    %v4818 = vpack.c.b16 %v4809, %v4808
    %v4819 = vpack.c.b16 %v4811, %v4810
    %4828 = vmatprep.subr.bf16.mxu0 0
    %4829 = vmatpush1.bf16.msra.mxu0 %v4819
    %4830 = vmatprep.subr.bf16.mxu0 0
    %4831 = vmatpush1.bf16.msra.mxu0 %v4818
    %4832 = vmatprep.subr.bf16.mxu0 0
    %4833 = vmatpush1.bf16.msra.mxu0 %v4817
    %4834 = vmatprep.subr.bf16.mxu0 0
    %4835 = vmatpush1.bf16.msra.mxu0 %v4816
    %4836 = vmatprep.subr.bf16.mxu0 0
    %4837 = vmatpush1.bf16.msra.mxu0 %v4815
    %4838 = vmatprep.subr.bf16.mxu0 0
    %4839 = vmatpush1.bf16.msra.mxu0 %v4814
    %4840 = vmatprep.subr.bf16.mxu0 0
    %4841 = vmatpush1.bf16.msra.mxu0 %v4813
    %4842 = vmatprep.subr.bf16.mxu0 0
    %4843 = vmatpush1.bf16.msra.mxu0 %v4812
    %4844 = vmatprep.subr.bf16.mxu0 0
    %4845 = vmatpush2.bf16.msra.mxu0 0
    %4846 = vmatprep.subr.bf16.mxu0 0
    %4847 = vmatpush2.bf16.msra.mxu0 0
    %4848 = vmatprep.subr.bf16.mxu0 0
    %4849 = vmatpush2.bf16.msra.mxu0 0
    %4850 = vmatprep.subr.bf16.mxu0 0
    %4851 = vmatpush2.bf16.msra.mxu0 0
    %4852 = vmatprep.subr.bf16.mxu0 0
    %4853 = vmatpush2.bf16.msra.mxu0 0
    %4854 = vmatprep.subr.bf16.mxu0 0
    %4855 = vmatpush2.bf16.msra.mxu0 0
    %4856 = vmatprep.subr.bf16.mxu0 0
    %4857 = vmatpush2.bf16.msra.mxu0 0
    %4858 = vmatprep.subr.bf16.mxu0 0
    %4859 = vmatpush2.bf16.msra.mxu0 0
    %4860 = vmatprep.mubr.bf16.mxu0 0
    %4861 = vmatmul.mubr.bf16.gmra.mxu0 %v4758
    %v4862 = vpop.f32.mrf.mxu0
    %v4863 = vadd.f32 %v4779, %v4862
    %v4864 = vpop.f32.mrf.mxu0
    %v4865 = vpop.f32.mrf.mxu0
    %v4866 = vpop.f32.mrf.mxu0
    %4867 = vdwg.mxu0
    %v4868 = vmax.f32 %v4863, 0.0
    %v4869 = vpack.c.bf16 %v4868, %v4868
    %s4870 = scalar_lea.vmem [#allocation3], 384
    %v4871 = vld [vmem:[%s4870] sm:$0xf]
    %v4872 = vld [vmem:[%s4870 + $0x4] sm:$0xf]
    %v4873 = vld [vmem:[%s4870 + $0x8] sm:$0xf]
    %v4874 = vld [vmem:[%s4870 + $0xc] sm:$0xf]
    %v4875 = vld [vmem:[%s4870 + $0x10] sm:$0xf]
    %v4876 = vld [vmem:[%s4870 + $0x14] sm:$0xf]
    %v4877 = vld [vmem:[%s4870 + $0x18] sm:$0xf]
    %v4878 = vld [vmem:[%s4870 + $0x1c] sm:$0xf]
    %v4879 = vld [vmem:[%s4870 + $0x20] sm:$0xf]
    %v4880 = vld [vmem:[%s4870 + $0x24] sm:$0xf]
    %v4881 = vld [vmem:[%s4870 + $0x28] sm:$0xf]
    %v4882 = vld [vmem:[%s4870 + $0x2c] sm:$0xf]
    %v4883 = vld [vmem:[%s4870 + $0x30] sm:$0xf]
    %v4884 = vld [vmem:[%s4870 + $0x34] sm:$0xf]
    %v4885 = vld [vmem:[%s4870 + $0x38] sm:$0xf]
    %v4886 = vld [vmem:[%s4870 + $0x3c] sm:$0xf]
    %v4887 = vlaneseq
    %v4888 = vshrl.u32 %v4887, 7
    %v4889 = vsub.s32 3, %v4888
    %v4890 = vrot.slane %v1813, %v4889
    %v4907 = vunpack.c.l.b16 %v4871
    %v4908 = vunpack.c.l.b16 %v4872
    %v4909 = vunpack.c.l.b16 %v4873
    %v4910 = vunpack.c.l.b16 %v4874
    %v4911 = vunpack.c.l.b16 %v4875
    %v4912 = vunpack.c.l.b16 %v4876
    %v4913 = vunpack.c.l.b16 %v4877
    %v4914 = vunpack.c.l.b16 %v4878
    %v4915 = vunpack.c.l.b16 %v4879
    %v4916 = vunpack.c.l.b16 %v4880
    %v4917 = vunpack.c.l.b16 %v4881
    %v4918 = vunpack.c.l.b16 %v4882
    %v4919 = vunpack.c.l.b16 %v4883
    %v4920 = vunpack.c.l.b16 %v4884
    %v4921 = vunpack.c.l.b16 %v4885
    %v4922 = vunpack.c.l.b16 %v4886
    %v4923 = vpack.c.b16 %v4908, %v4907
    %v4924 = vpack.c.b16 %v4910, %v4909
    %v4925 = vpack.c.b16 %v4912, %v4911
    %v4926 = vpack.c.b16 %v4914, %v4913
    %v4927 = vpack.c.b16 %v4916, %v4915
    %v4928 = vpack.c.b16 %v4918, %v4917
    %v4929 = vpack.c.b16 %v4920, %v4919
    %v4930 = vpack.c.b16 %v4922, %v4921
    %4939 = vmatprep.subr.bf16.mxu0 0
    %4940 = vmatpush1.bf16.msra.mxu0 %v4930
    %4941 = vmatprep.subr.bf16.mxu0 0
    %4942 = vmatpush1.bf16.msra.mxu0 %v4929
    %4943 = vmatprep.subr.bf16.mxu0 0
    %4944 = vmatpush1.bf16.msra.mxu0 %v4928
    %4945 = vmatprep.subr.bf16.mxu0 0
    %4946 = vmatpush1.bf16.msra.mxu0 %v4927
    %4947 = vmatprep.subr.bf16.mxu0 0
    %4948 = vmatpush1.bf16.msra.mxu0 %v4926
    %4949 = vmatprep.subr.bf16.mxu0 0
    %4950 = vmatpush1.bf16.msra.mxu0 %v4925
    %4951 = vmatprep.subr.bf16.mxu0 0
    %4952 = vmatpush1.bf16.msra.mxu0 %v4924
    %4953 = vmatprep.subr.bf16.mxu0 0
    %4954 = vmatpush1.bf16.msra.mxu0 %v4923
    %4955 = vmatprep.subr.bf16.mxu0 0
    %4956 = vmatpush2.bf16.msra.mxu0 0
    %4957 = vmatprep.subr.bf16.mxu0 0
    %4958 = vmatpush2.bf16.msra.mxu0 0
    %4959 = vmatprep.subr.bf16.mxu0 0
    %4960 = vmatpush2.bf16.msra.mxu0 0
    %4961 = vmatprep.subr.bf16.mxu0 0
    %4962 = vmatpush2.bf16.msra.mxu0 0
    %4963 = vmatprep.subr.bf16.mxu0 0
    %4964 = vmatpush2.bf16.msra.mxu0 0
    %4965 = vmatprep.subr.bf16.mxu0 0
    %4966 = vmatpush2.bf16.msra.mxu0 0
    %4967 = vmatprep.subr.bf16.mxu0 0
    %4968 = vmatpush2.bf16.msra.mxu0 0
    %4969 = vmatprep.subr.bf16.mxu0 0
    %4970 = vmatpush2.bf16.msra.mxu0 0
    %4971 = vmatprep.mubr.bf16.mxu0 0
    %4972 = vmatmul.mubr.bf16.gmra.mxu0 %v4869
    %v4973 = vpop.f32.mrf.mxu0
    %v4974 = vadd.f32 %v4890, %v4973
    %v4975 = vpop.f32.mrf.mxu0
    %v4976 = vpop.f32.mrf.mxu0
    %v4977 = vpop.f32.mrf.mxu0
    %4978 = vdwg.mxu0
    %v4979 = vadd.f32 %v4974, %v4757
    %4980 = vadd.xlane.f32.xlu0 %v4979
    %v4981 = vpop.xlane.xlu0 %4980
    %v4982 = vmul.f32 %v4981, %v1928
    %v4983 = vsub.f32 %v4979, %v4982
    %v4984 = vmul.f32 %v4983, %v4983
    %4985 = vadd.xlane.f32.xlu0 %v4984
    %v4986 = vpop.xlane.xlu0 %4985
    %v4987 = vmul.f32 %v4986, %v1928
    %v4988 = vadd.f32 %v4987, 1e-05
    %v4989 = vrsqrt.pop %v4988
    %v4990 = vmul.f32 %v4983, %v4989
    %v4991 = vlaneseq
    %v4992 = vshrl.u32 %v4991, 7
    %v4993 = vsub.s32 4, %v4992
    %v4994 = vrot.slane %v1813, %v4993
    %v4995 = vmul.f32 %v4990, %v4994
    %v4996 = vlaneseq
    %v4997 = vshrl.u32 %v4996, 7
    %v4998 = vsub.s32 5, %v4997
    %v4999 = vrot.slane %v1813, %v4998
    %v5000 = vadd.f32 %v4995, %v4999
    %v5001 = vadd.f32 %v5000, %v136
    %v5002 = vpack.c.bf16 %v5001, %v5001
    %v5003 = vld [vmem:[#allocation4 + $0x180] sm:$0xf]
    %v5004 = vld [vmem:[#allocation4 + $0x184] sm:$0xf]
    %v5005 = vld [vmem:[#allocation4 + $0x188] sm:$0xf]
    %v5006 = vld [vmem:[#allocation4 + $0x18c] sm:$0xf]
    %v5007 = vld [vmem:[#allocation4 + $0x190] sm:$0xf]
    %v5008 = vld [vmem:[#allocation4 + $0x194] sm:$0xf]
    %v5009 = vld [vmem:[#allocation4 + $0x198] sm:$0xf]
    %v5010 = vld [vmem:[#allocation4 + $0x19c] sm:$0xf]
    %v5011 = vld [vmem:[#allocation4 + $0x1a0] sm:$0xf]
    %v5012 = vld [vmem:[#allocation4 + $0x1a4] sm:$0xf]
    %v5013 = vld [vmem:[#allocation4 + $0x1a8] sm:$0xf]
    %v5014 = vld [vmem:[#allocation4 + $0x1ac] sm:$0xf]
    %v5015 = vld [vmem:[#allocation4 + $0x1b0] sm:$0xf]
    %v5016 = vld [vmem:[#allocation4 + $0x1b4] sm:$0xf]
    %v5017 = vld [vmem:[#allocation4 + $0x1b8] sm:$0xf]
    %v5018 = vld [vmem:[#allocation4 + $0x1bc] sm:$0xf]
    %v5035 = vunpack.c.l.b16 %v5003
    %v5036 = vunpack.c.l.b16 %v5004
    %v5037 = vunpack.c.l.b16 %v5005
    %v5038 = vunpack.c.l.b16 %v5006
    %v5039 = vunpack.c.l.b16 %v5007
    %v5040 = vunpack.c.l.b16 %v5008
    %v5041 = vunpack.c.l.b16 %v5009
    %v5042 = vunpack.c.l.b16 %v5010
    %v5043 = vunpack.c.l.b16 %v5011
    %v5044 = vunpack.c.l.b16 %v5012
    %v5045 = vunpack.c.l.b16 %v5013
    %v5046 = vunpack.c.l.b16 %v5014
    %v5047 = vunpack.c.l.b16 %v5015
    %v5048 = vunpack.c.l.b16 %v5016
    %v5049 = vunpack.c.l.b16 %v5017
    %v5050 = vunpack.c.l.b16 %v5018
    %v5051 = vpack.c.b16 %v5036, %v5035
    %v5052 = vpack.c.b16 %v5038, %v5037
    %v5053 = vpack.c.b16 %v5040, %v5039
    %v5054 = vpack.c.b16 %v5042, %v5041
    %v5055 = vpack.c.b16 %v5044, %v5043
    %v5056 = vpack.c.b16 %v5046, %v5045
    %v5057 = vpack.c.b16 %v5048, %v5047
    %v5058 = vpack.c.b16 %v5050, %v5049
    %5067 = vmatprep.subr.bf16.mxu0 0
    %5068 = vmatpush1.bf16.msra.mxu0 %v5058
    %5069 = vmatprep.subr.bf16.mxu0 0
    %5070 = vmatpush1.bf16.msra.mxu0 %v5057
    %5071 = vmatprep.subr.bf16.mxu0 0
    %5072 = vmatpush1.bf16.msra.mxu0 %v5056
    %5073 = vmatprep.subr.bf16.mxu0 0
    %5074 = vmatpush1.bf16.msra.mxu0 %v5055
    %5075 = vmatprep.subr.bf16.mxu0 0
    %5076 = vmatpush1.bf16.msra.mxu0 %v5054
    %5077 = vmatprep.subr.bf16.mxu0 0
    %5078 = vmatpush1.bf16.msra.mxu0 %v5053
    %5079 = vmatprep.subr.bf16.mxu0 0
    %5080 = vmatpush1.bf16.msra.mxu0 %v5052
    %5081 = vmatprep.subr.bf16.mxu0 0
    %5082 = vmatpush1.bf16.msra.mxu0 %v5051
    %5083 = vmatprep.subr.bf16.mxu0 0
    %5084 = vmatpush2.bf16.msra.mxu0 0
    %5085 = vmatprep.subr.bf16.mxu0 0
    %5086 = vmatpush2.bf16.msra.mxu0 0
    %5087 = vmatprep.subr.bf16.mxu0 0
    %5088 = vmatpush2.bf16.msra.mxu0 0
    %5089 = vmatprep.subr.bf16.mxu0 0
    %5090 = vmatpush2.bf16.msra.mxu0 0
    %5091 = vmatprep.subr.bf16.mxu0 0
    %5092 = vmatpush2.bf16.msra.mxu0 0
    %5093 = vmatprep.subr.bf16.mxu0 0
    %5094 = vmatpush2.bf16.msra.mxu0 0
    %5095 = vmatprep.subr.bf16.mxu0 0
    %5096 = vmatpush2.bf16.msra.mxu0 0
    %5097 = vmatprep.subr.bf16.mxu0 0
    %5098 = vmatpush2.bf16.msra.mxu0 0
    %5099 = vmatprep.mubr.bf16.mxu0 0
    %5100 = vmatmul.mubr.bf16.gmra.mxu0 %v5002
    %v5101 = vpop.f32.mrf.mxu0
    %v5102 = vadd.f32 0.0, %v5101
    %v5103 = vpop.f32.mrf.mxu0
    %v5104 = vpop.f32.mrf.mxu0
    %v5105 = vpop.f32.mrf.mxu0
    %5106 = vdwg.mxu0
    %v5107 = vadd.f32 %v4638, %v5102
    %5108 = vmatprep.subr.bf16.mxu0 0
    %5109 = vmatpush1.bf16.xpose.msra.mxu0 0
    %5110 = vmatprep.subr.bf16.mxu0 0
    %5111 = vmatpush1.bf16.xpose.msra.mxu0 0
    %5112 = vmatprep.subr.bf16.mxu0 0
    %5113 = vmatpush1.bf16.xpose.msra.mxu0 0
    %5114 = vmatprep.subr.bf16.mxu0 0
    %5115 = vmatpush1.bf16.xpose.msra.mxu0 0
    %5116 = vmatprep.subr.bf16.mxu0 0
    %5117 = vmatpush1.bf16.xpose.msra.mxu0 0
    %5118 = vmatprep.subr.bf16.mxu0 0
    %5119 = vmatpush1.bf16.xpose.msra.mxu0 0
    %5120 = vmatprep.subr.bf16.mxu0 0
    %5121 = vmatpush1.bf16.xpose.msra.mxu0 0
    %5122 = vmatprep.subr.bf16.mxu0 0
    %5123 = vmatpush1.bf16.xpose.msra.mxu0 %v1798
    %5124 = vmatprep.subr.bf16.mxu0 0
    %5125 = vmatpush2.bf16.xpose.msra.mxu0 0
    %5126 = vmatprep.subr.bf16.mxu0 0
    %5127 = vmatpush2.bf16.xpose.msra.mxu0 0
    %5128 = vmatprep.subr.bf16.mxu0 0
    %5129 = vmatpush2.bf16.xpose.msra.mxu0 0
    %5130 = vmatprep.subr.bf16.mxu0 0
    %5131 = vmatpush2.bf16.xpose.msra.mxu0 0
    %5132 = vmatprep.subr.bf16.mxu0 0
    %5133 = vmatpush2.bf16.xpose.msra.mxu0 0
    %5134 = vmatprep.subr.bf16.mxu0 0
    %5135 = vmatpush2.bf16.xpose.msra.mxu0 0
    %5136 = vmatprep.subr.bf16.mxu0 0
    %5137 = vmatpush2.bf16.xpose.msra.mxu0 0
    %5138 = vmatprep.subr.bf16.mxu0 0
    %5139 = vmatpush2.bf16.xpose.msra.mxu0 0
    %5140 = vmatprep.mubr.bf16.mxu0 0
    %5141 = vmatmul.mubr.bf16.gmra.mxu0 %v694
    %v5142 = vpop.f32.mrf.mxu0
    %v5143 = vadd.f32 0.0, %v5142
    %v5144 = vpop.f32.mrf.mxu0
    %v5145 = vpop.f32.mrf.mxu0
    %v5146 = vpop.f32.mrf.mxu0
    %5147 = vdwg.mxu0
    %v5148 = vsel %vm1866, %v5143, -inf
    %5149 = vmax.xlane.f32.xlu0 %v5148
    %v5150 = vpop.xlane.xlu0 %5149
    %v5151 = vsub.f32 %v5143, %v5150
    %v5152 = vmul.f32 %v5151, 1.442695
    %v5153 = vpow.pop %v5152
    %v5154 = vsel %vm1866, %v5153, 0.0
    %5155 = vadd.xlane.f32.xlu0 %v5154
    %v5156 = vpop.xlane.xlu0 %5155
    %v5157 = vrcp.pop %v5156
    %v5158 = vmul.f32 %v5153, %v5157
    %v5159 = vpack.c.bf16 %v5158, %v5158
    %v5161 = vsel %vm1866, %v5159, 0
    %v5164 = vsel %vm1882, %v1806, 0
    %5166 = vmatprep.subr.bf16.mxu0 0
    %5167 = vmatpush1.bf16.msra.mxu0 0
    %5168 = vmatprep.subr.bf16.mxu0 0
    %5169 = vmatpush1.bf16.msra.mxu0 0
    %5170 = vmatprep.subr.bf16.mxu0 0
    %5171 = vmatpush1.bf16.msra.mxu0 0
    %5172 = vmatprep.subr.bf16.mxu0 0
    %5173 = vmatpush1.bf16.msra.mxu0 0
    %5174 = vmatprep.subr.bf16.mxu0 0
    %5175 = vmatpush1.bf16.msra.mxu0 0
    %5176 = vmatprep.subr.bf16.mxu0 0
    %5177 = vmatpush1.bf16.msra.mxu0 0
    %5178 = vmatprep.subr.bf16.mxu0 0
    %5179 = vmatpush1.bf16.msra.mxu0 0
    %5180 = vmatprep.subr.bf16.mxu0 0
    %5181 = vmatpush1.bf16.msra.mxu0 %v5164
    %5182 = vmatprep.subr.bf16.mxu0 0
    %5183 = vmatpush2.bf16.msra.mxu0 0
    %5184 = vmatprep.subr.bf16.mxu0 0
    %5185 = vmatpush2.bf16.msra.mxu0 0
    %5186 = vmatprep.subr.bf16.mxu0 0
    %5187 = vmatpush2.bf16.msra.mxu0 0
    %5188 = vmatprep.subr.bf16.mxu0 0
    %5189 = vmatpush2.bf16.msra.mxu0 0
    %5190 = vmatprep.subr.bf16.mxu0 0
    %5191 = vmatpush2.bf16.msra.mxu0 0
    %5192 = vmatprep.subr.bf16.mxu0 0
    %5193 = vmatpush2.bf16.msra.mxu0 0
    %5194 = vmatprep.subr.bf16.mxu0 0
    %5195 = vmatpush2.bf16.msra.mxu0 0
    %5196 = vmatprep.subr.bf16.mxu0 0
    %5197 = vmatpush2.bf16.msra.mxu0 0
    %5198 = vmatprep.mubr.bf16.mxu0 0
    %5199 = vmatmul.mubr.bf16.gmra.mxu0 %v5161
    %v5200 = vpop.f32.mrf.mxu0
    %v5201 = vadd.f32 %v136, %v5200
    %v5202 = vpop.f32.mrf.mxu0
    %v5203 = vpop.f32.mrf.mxu0
    %v5204 = vpop.f32.mrf.mxu0
    %5205 = vdwg.mxu0
    %5206 = vadd.xlane.f32.xlu0 %v5201
    %v5207 = vpop.xlane.xlu0 %5206
    %v5208 = vmul.f32 %v5207, %v1928
    %v5209 = vsub.f32 %v5201, %v5208
    %v5210 = vmul.f32 %v5209, %v5209
    %5211 = vadd.xlane.f32.xlu0 %v5210
    %v5212 = vpop.xlane.xlu0 %5211
    %v5213 = vmul.f32 %v5212, %v1928
    %v5214 = vadd.f32 %v5213, 1e-05
    %v5215 = vrsqrt.pop %v5214
    %v5216 = vmul.f32 %v5209, %v5215
    %v5217 = vlaneseq
    %v5218 = vshrl.u32 %v5217, 7
    %v5219 = vsub.s32 0, %v5218
    %v5220 = vrot.slane %v1814, %v5219
    %v5221 = vmul.f32 %v5216, %v5220
    %v5222 = vlaneseq
    %v5223 = vshrl.u32 %v5222, 7
    %v5224 = vsub.s32 1, %v5223
    %v5225 = vrot.slane %v1814, %v5224
    %v5226 = vadd.f32 %v5221, %v5225
    %v5227 = vpack.c.bf16 %v5226, %v5226
    %s5228 = scalar_lea.vmem [#allocation2], 448
    %v5229 = vld [vmem:[%s5228] sm:$0xf]
    %v5230 = vld [vmem:[%s5228 + $0x4] sm:$0xf]
    %v5231 = vld [vmem:[%s5228 + $0x8] sm:$0xf]
    %v5232 = vld [vmem:[%s5228 + $0xc] sm:$0xf]
    %v5233 = vld [vmem:[%s5228 + $0x10] sm:$0xf]
    %v5234 = vld [vmem:[%s5228 + $0x14] sm:$0xf]
    %v5235 = vld [vmem:[%s5228 + $0x18] sm:$0xf]
    %v5236 = vld [vmem:[%s5228 + $0x1c] sm:$0xf]
    %v5237 = vld [vmem:[%s5228 + $0x20] sm:$0xf]
    %v5238 = vld [vmem:[%s5228 + $0x24] sm:$0xf]
    %v5239 = vld [vmem:[%s5228 + $0x28] sm:$0xf]
    %v5240 = vld [vmem:[%s5228 + $0x2c] sm:$0xf]
    %v5241 = vld [vmem:[%s5228 + $0x30] sm:$0xf]
    %v5242 = vld [vmem:[%s5228 + $0x34] sm:$0xf]
    %v5243 = vld [vmem:[%s5228 + $0x38] sm:$0xf]
    %v5244 = vld [vmem:[%s5228 + $0x3c] sm:$0xf]
    %v5245 = vlaneseq
    %v5246 = vshrl.u32 %v5245, 7
    %v5247 = vsub.s32 2, %v5246
    %v5248 = vrot.slane %v1814, %v5247
    %v5265 = vunpack.c.l.b16 %v5229
    %v5266 = vunpack.c.l.b16 %v5230
    %v5267 = vunpack.c.l.b16 %v5231
    %v5268 = vunpack.c.l.b16 %v5232
    %v5269 = vunpack.c.l.b16 %v5233
    %v5270 = vunpack.c.l.b16 %v5234
    %v5271 = vunpack.c.l.b16 %v5235
    %v5272 = vunpack.c.l.b16 %v5236
    %v5273 = vunpack.c.l.b16 %v5237
    %v5274 = vunpack.c.l.b16 %v5238
    %v5275 = vunpack.c.l.b16 %v5239
    %v5276 = vunpack.c.l.b16 %v5240
    %v5277 = vunpack.c.l.b16 %v5241
    %v5278 = vunpack.c.l.b16 %v5242
    %v5279 = vunpack.c.l.b16 %v5243
    %v5280 = vunpack.c.l.b16 %v5244
    %v5281 = vpack.c.b16 %v5266, %v5265
    %v5282 = vpack.c.b16 %v5268, %v5267
    %v5283 = vpack.c.b16 %v5270, %v5269
    %v5284 = vpack.c.b16 %v5272, %v5271
    %v5285 = vpack.c.b16 %v5274, %v5273
    %v5286 = vpack.c.b16 %v5276, %v5275
    %v5287 = vpack.c.b16 %v5278, %v5277
    %v5288 = vpack.c.b16 %v5280, %v5279
    %5297 = vmatprep.subr.bf16.mxu0 0
    %5298 = vmatpush1.bf16.msra.mxu0 %v5288
    %5299 = vmatprep.subr.bf16.mxu0 0
    %5300 = vmatpush1.bf16.msra.mxu0 %v5287
    %5301 = vmatprep.subr.bf16.mxu0 0
    %5302 = vmatpush1.bf16.msra.mxu0 %v5286
    %5303 = vmatprep.subr.bf16.mxu0 0
    %5304 = vmatpush1.bf16.msra.mxu0 %v5285
    %5305 = vmatprep.subr.bf16.mxu0 0
    %5306 = vmatpush1.bf16.msra.mxu0 %v5284
    %5307 = vmatprep.subr.bf16.mxu0 0
    %5308 = vmatpush1.bf16.msra.mxu0 %v5283
    %5309 = vmatprep.subr.bf16.mxu0 0
    %5310 = vmatpush1.bf16.msra.mxu0 %v5282
    %5311 = vmatprep.subr.bf16.mxu0 0
    %5312 = vmatpush1.bf16.msra.mxu0 %v5281
    %5313 = vmatprep.subr.bf16.mxu0 0
    %5314 = vmatpush2.bf16.msra.mxu0 0
    %5315 = vmatprep.subr.bf16.mxu0 0
    %5316 = vmatpush2.bf16.msra.mxu0 0
    %5317 = vmatprep.subr.bf16.mxu0 0
    %5318 = vmatpush2.bf16.msra.mxu0 0
    %5319 = vmatprep.subr.bf16.mxu0 0
    %5320 = vmatpush2.bf16.msra.mxu0 0
    %5321 = vmatprep.subr.bf16.mxu0 0
    %5322 = vmatpush2.bf16.msra.mxu0 0
    %5323 = vmatprep.subr.bf16.mxu0 0
    %5324 = vmatpush2.bf16.msra.mxu0 0
    %5325 = vmatprep.subr.bf16.mxu0 0
    %5326 = vmatpush2.bf16.msra.mxu0 0
    %5327 = vmatprep.subr.bf16.mxu0 0
    %5328 = vmatpush2.bf16.msra.mxu0 0
    %5329 = vmatprep.mubr.bf16.mxu0 0
    %5330 = vmatmul.mubr.bf16.gmra.mxu0 %v5227
    %v5331 = vpop.f32.mrf.mxu0
    %v5332 = vadd.f32 %v5248, %v5331
    %v5333 = vpop.f32.mrf.mxu0
    %v5334 = vpop.f32.mrf.mxu0
    %v5335 = vpop.f32.mrf.mxu0
    %5336 = vdwg.mxu0
    %v5337 = vmax.f32 %v5332, 0.0
    %v5338 = vpack.c.bf16 %v5337, %v5337
    %s5339 = scalar_lea.vmem [#allocation3], 448
    %v5340 = vld [vmem:[%s5339] sm:$0xf]
    %v5341 = vld [vmem:[%s5339 + $0x4] sm:$0xf]
    %v5342 = vld [vmem:[%s5339 + $0x8] sm:$0xf]
    %v5343 = vld [vmem:[%s5339 + $0xc] sm:$0xf]
    %v5344 = vld [vmem:[%s5339 + $0x10] sm:$0xf]
    %v5345 = vld [vmem:[%s5339 + $0x14] sm:$0xf]
    %v5346 = vld [vmem:[%s5339 + $0x18] sm:$0xf]
    %v5347 = vld [vmem:[%s5339 + $0x1c] sm:$0xf]
    %v5348 = vld [vmem:[%s5339 + $0x20] sm:$0xf]
    %v5349 = vld [vmem:[%s5339 + $0x24] sm:$0xf]
    %v5350 = vld [vmem:[%s5339 + $0x28] sm:$0xf]
    %v5351 = vld [vmem:[%s5339 + $0x2c] sm:$0xf]
    %v5352 = vld [vmem:[%s5339 + $0x30] sm:$0xf]
    %v5353 = vld [vmem:[%s5339 + $0x34] sm:$0xf]
    %v5354 = vld [vmem:[%s5339 + $0x38] sm:$0xf]
    %v5355 = vld [vmem:[%s5339 + $0x3c] sm:$0xf]
    %v5356 = vlaneseq
    %v5357 = vshrl.u32 %v5356, 7
    %v5358 = vsub.s32 3, %v5357
    %v5359 = vrot.slane %v1814, %v5358
    %v5376 = vunpack.c.l.b16 %v5340
    %v5377 = vunpack.c.l.b16 %v5341
    %v5378 = vunpack.c.l.b16 %v5342
    %v5379 = vunpack.c.l.b16 %v5343
    %v5380 = vunpack.c.l.b16 %v5344
    %v5381 = vunpack.c.l.b16 %v5345
    %v5382 = vunpack.c.l.b16 %v5346
    %v5383 = vunpack.c.l.b16 %v5347
    %v5384 = vunpack.c.l.b16 %v5348
    %v5385 = vunpack.c.l.b16 %v5349
    %v5386 = vunpack.c.l.b16 %v5350
    %v5387 = vunpack.c.l.b16 %v5351
    %v5388 = vunpack.c.l.b16 %v5352
    %v5389 = vunpack.c.l.b16 %v5353
    %v5390 = vunpack.c.l.b16 %v5354
    %v5391 = vunpack.c.l.b16 %v5355
    %v5392 = vpack.c.b16 %v5377, %v5376
    %v5393 = vpack.c.b16 %v5379, %v5378
    %v5394 = vpack.c.b16 %v5381, %v5380
    %v5395 = vpack.c.b16 %v5383, %v5382
    %v5396 = vpack.c.b16 %v5385, %v5384
    %v5397 = vpack.c.b16 %v5387, %v5386
    %v5398 = vpack.c.b16 %v5389, %v5388
    %v5399 = vpack.c.b16 %v5391, %v5390
    %5408 = vmatprep.subr.bf16.mxu0 0
    %5409 = vmatpush1.bf16.msra.mxu0 %v5399
    %5410 = vmatprep.subr.bf16.mxu0 0
    %5411 = vmatpush1.bf16.msra.mxu0 %v5398
    %5412 = vmatprep.subr.bf16.mxu0 0
    %5413 = vmatpush1.bf16.msra.mxu0 %v5397
    %5414 = vmatprep.subr.bf16.mxu0 0
    %5415 = vmatpush1.bf16.msra.mxu0 %v5396
    %5416 = vmatprep.subr.bf16.mxu0 0
    %5417 = vmatpush1.bf16.msra.mxu0 %v5395
    %5418 = vmatprep.subr.bf16.mxu0 0
    %5419 = vmatpush1.bf16.msra.mxu0 %v5394
    %5420 = vmatprep.subr.bf16.mxu0 0
    %5421 = vmatpush1.bf16.msra.mxu0 %v5393
    %5422 = vmatprep.subr.bf16.mxu0 0
    %5423 = vmatpush1.bf16.msra.mxu0 %v5392
    %5424 = vmatprep.subr.bf16.mxu0 0
    %5425 = vmatpush2.bf16.msra.mxu0 0
    %5426 = vmatprep.subr.bf16.mxu0 0
    %5427 = vmatpush2.bf16.msra.mxu0 0
    %5428 = vmatprep.subr.bf16.mxu0 0
    %5429 = vmatpush2.bf16.msra.mxu0 0
    %5430 = vmatprep.subr.bf16.mxu0 0
    %5431 = vmatpush2.bf16.msra.mxu0 0
    %5432 = vmatprep.subr.bf16.mxu0 0
    %5433 = vmatpush2.bf16.msra.mxu0 0
    %5434 = vmatprep.subr.bf16.mxu0 0
    %5435 = vmatpush2.bf16.msra.mxu0 0
    %5436 = vmatprep.subr.bf16.mxu0 0
    %5437 = vmatpush2.bf16.msra.mxu0 0
    %5438 = vmatprep.subr.bf16.mxu0 0
    %5439 = vmatpush2.bf16.msra.mxu0 0
    %5440 = vmatprep.mubr.bf16.mxu0 0
    %5441 = vmatmul.mubr.bf16.gmra.mxu0 %v5338
    %v5442 = vpop.f32.mrf.mxu0
    %v5443 = vadd.f32 %v5359, %v5442
    %v5444 = vpop.f32.mrf.mxu0
    %v5445 = vpop.f32.mrf.mxu0
    %v5446 = vpop.f32.mrf.mxu0
    %5447 = vdwg.mxu0
    %v5448 = vadd.f32 %v5443, %v5226
    %5449 = vadd.xlane.f32.xlu0 %v5448
    %v5450 = vpop.xlane.xlu0 %5449
    %v5451 = vmul.f32 %v5450, %v1928
    %v5452 = vsub.f32 %v5448, %v5451
    %v5453 = vmul.f32 %v5452, %v5452
    %5454 = vadd.xlane.f32.xlu0 %v5453
    %v5455 = vpop.xlane.xlu0 %5454
    %v5456 = vmul.f32 %v5455, %v1928
    %v5457 = vadd.f32 %v5456, 1e-05
    %v5458 = vrsqrt.pop %v5457
    %v5459 = vmul.f32 %v5452, %v5458
    %v5460 = vlaneseq
    %v5461 = vshrl.u32 %v5460, 7
    %v5462 = vsub.s32 4, %v5461
    %v5463 = vrot.slane %v1814, %v5462
    %v5464 = vmul.f32 %v5459, %v5463
    %v5465 = vlaneseq
    %v5466 = vshrl.u32 %v5465, 7
    %v5467 = vsub.s32 5, %v5466
    %v5468 = vrot.slane %v1814, %v5467
    %v5469 = vadd.f32 %v5464, %v5468
    %v5470 = vadd.f32 %v5469, %v136
    %v5471 = vpack.c.bf16 %v5470, %v5470
    %v5472 = vld [vmem:[#allocation4 + $0x1c0] sm:$0xf]
    %v5473 = vld [vmem:[#allocation4 + $0x1c4] sm:$0xf]
    %v5474 = vld [vmem:[#allocation4 + $0x1c8] sm:$0xf]
    %v5475 = vld [vmem:[#allocation4 + $0x1cc] sm:$0xf]
    %v5476 = vld [vmem:[#allocation4 + $0x1d0] sm:$0xf]
    %v5477 = vld [vmem:[#allocation4 + $0x1d4] sm:$0xf]
    %v5478 = vld [vmem:[#allocation4 + $0x1d8] sm:$0xf]
    %v5479 = vld [vmem:[#allocation4 + $0x1dc] sm:$0xf]
    %v5480 = vld [vmem:[#allocation4 + $0x1e0] sm:$0xf]
    %v5481 = vld [vmem:[#allocation4 + $0x1e4] sm:$0xf]
    %v5482 = vld [vmem:[#allocation4 + $0x1e8] sm:$0xf]
    %v5483 = vld [vmem:[#allocation4 + $0x1ec] sm:$0xf]
    %v5484 = vld [vmem:[#allocation4 + $0x1f0] sm:$0xf]
    %v5485 = vld [vmem:[#allocation4 + $0x1f4] sm:$0xf]
    %v5486 = vld [vmem:[#allocation4 + $0x1f8] sm:$0xf]
    %v5487 = vld [vmem:[#allocation4 + $0x1fc] sm:$0xf]
    %v5504 = vunpack.c.l.b16 %v5472
    %v5505 = vunpack.c.l.b16 %v5473
    %v5506 = vunpack.c.l.b16 %v5474
    %v5507 = vunpack.c.l.b16 %v5475
    %v5508 = vunpack.c.l.b16 %v5476
    %v5509 = vunpack.c.l.b16 %v5477
    %v5510 = vunpack.c.l.b16 %v5478
    %v5511 = vunpack.c.l.b16 %v5479
    %v5512 = vunpack.c.l.b16 %v5480
    %v5513 = vunpack.c.l.b16 %v5481
    %v5514 = vunpack.c.l.b16 %v5482
    %v5515 = vunpack.c.l.b16 %v5483
    %v5516 = vunpack.c.l.b16 %v5484
    %v5517 = vunpack.c.l.b16 %v5485
    %v5518 = vunpack.c.l.b16 %v5486
    %v5519 = vunpack.c.l.b16 %v5487
    %v5520 = vpack.c.b16 %v5505, %v5504
    %v5521 = vpack.c.b16 %v5507, %v5506
    %v5522 = vpack.c.b16 %v5509, %v5508
    %v5523 = vpack.c.b16 %v5511, %v5510
    %v5524 = vpack.c.b16 %v5513, %v5512
    %v5525 = vpack.c.b16 %v5515, %v5514
    %v5526 = vpack.c.b16 %v5517, %v5516
    %v5527 = vpack.c.b16 %v5519, %v5518
    %5536 = vmatprep.subr.bf16.mxu0 0
    %5537 = vmatpush1.bf16.msra.mxu0 %v5527
    %5538 = vmatprep.subr.bf16.mxu0 0
    %5539 = vmatpush1.bf16.msra.mxu0 %v5526
    %5540 = vmatprep.subr.bf16.mxu0 0
    %5541 = vmatpush1.bf16.msra.mxu0 %v5525
    %5542 = vmatprep.subr.bf16.mxu0 0
    %5543 = vmatpush1.bf16.msra.mxu0 %v5524
    %5544 = vmatprep.subr.bf16.mxu0 0
    %5545 = vmatpush1.bf16.msra.mxu0 %v5523
    %5546 = vmatprep.subr.bf16.mxu0 0
    %5547 = vmatpush1.bf16.msra.mxu0 %v5522
    %5548 = vmatprep.subr.bf16.mxu0 0
    %5549 = vmatpush1.bf16.msra.mxu0 %v5521
    %5550 = vmatprep.subr.bf16.mxu0 0
    %5551 = vmatpush1.bf16.msra.mxu0 %v5520
    %5552 = vmatprep.subr.bf16.mxu0 0
    %5553 = vmatpush2.bf16.msra.mxu0 0
    %5554 = vmatprep.subr.bf16.mxu0 0
    %5555 = vmatpush2.bf16.msra.mxu0 0
    %5556 = vmatprep.subr.bf16.mxu0 0
    %5557 = vmatpush2.bf16.msra.mxu0 0
    %5558 = vmatprep.subr.bf16.mxu0 0
    %5559 = vmatpush2.bf16.msra.mxu0 0
    %5560 = vmatprep.subr.bf16.mxu0 0
    %5561 = vmatpush2.bf16.msra.mxu0 0
    %5562 = vmatprep.subr.bf16.mxu0 0
    %5563 = vmatpush2.bf16.msra.mxu0 0
    %5564 = vmatprep.subr.bf16.mxu0 0
    %5565 = vmatpush2.bf16.msra.mxu0 0
    %5566 = vmatprep.subr.bf16.mxu0 0
    %5567 = vmatpush2.bf16.msra.mxu0 0
    %5568 = vmatprep.mubr.bf16.mxu0 0
    %5569 = vmatmul.mubr.bf16.gmra.mxu0 %v5471
    %v5570 = vpop.f32.mrf.mxu0
    %v5571 = vadd.f32 0.0, %v5570
    %v5572 = vpop.f32.mrf.mxu0
    %v5573 = vpop.f32.mrf.mxu0
    %v5574 = vpop.f32.mrf.mxu0
    %5575 = vdwg.mxu0
    %v5576 = vadd.f32 %v5107, %v5571
    %v5577 = vlaneseq
    %v5578 = vshrl.u32 %v5577, 7
    %v5579 = vsub.s32 6, %v5578
    %v5580 = vrot.slane %v1807, %v5579
    %v5581 = vadd.f32 %v5576, %v5580
    %s5582 = smul.u32 4, 16
    %s5583 = smul.u32 %s5582, 2
    %s5584 = sshll.u32 %s5583, 4
    %5585 = dma.done %s123, %s5584
    %v5586 = vpack.c.bf16 %v5581, %v5581
    %v5587 = vld [vmem:[#allocation5] sm:$0xff]
    %v5588 = vld [vmem:[#allocation5 + $0x8] sm:$0xff]
    %v5589 = vld [vmem:[#allocation5 + $0x10] sm:$0xff]
    %v5590 = vld [vmem:[#allocation5 + $0x18] sm:$0xff]
    %v5591 = vld [vmem:[#allocation5 + $0x20] sm:$0xff]
    %v5592 = vld [vmem:[#allocation5 + $0x28] sm:$0xff]
    %v5593 = vld [vmem:[#allocation5 + $0x30] sm:$0xff]
    %v5594 = vld [vmem:[#allocation5 + $0x38] sm:$0xff]
    %v5595 = vld [vmem:[#allocation5 + $0x40] sm:$0xff]
    %v5596 = vld [vmem:[#allocation5 + $0x48] sm:$0xff]
    %v5597 = vld [vmem:[#allocation5 + $0x50] sm:$0xff]
    %v5598 = vld [vmem:[#allocation5 + $0x58] sm:$0xff]
    %v5599 = vld [vmem:[#allocation5 + $0x60] sm:$0xff]
    %v5600 = vld [vmem:[#allocation5 + $0x68] sm:$0xff]
    %v5601 = vld [vmem:[#allocation5 + $0x70] sm:$0xff]
    %v5602 = vld [vmem:[#allocation5 + $0x78] sm:$0xff]
    %v5619 = vunpack.c.l.b16 %v5587
    %v5620 = vunpack.c.h.b16 %v5587
    %v5621 = vunpack.c.l.b16 %v5588
    %v5622 = vunpack.c.h.b16 %v5588
    %v5623 = vunpack.c.l.b16 %v5589
    %v5624 = vunpack.c.h.b16 %v5589
    %v5625 = vunpack.c.l.b16 %v5590
    %v5626 = vunpack.c.h.b16 %v5590
    %v5627 = vunpack.c.l.b16 %v5591
    %v5628 = vunpack.c.h.b16 %v5591
    %v5629 = vunpack.c.l.b16 %v5592
    %v5630 = vunpack.c.h.b16 %v5592
    %v5631 = vunpack.c.l.b16 %v5593
    %v5632 = vunpack.c.h.b16 %v5593
    %v5633 = vunpack.c.l.b16 %v5594
    %v5634 = vunpack.c.h.b16 %v5594
    %v5635 = vunpack.c.l.b16 %v5595
    %v5636 = vunpack.c.h.b16 %v5595
    %v5637 = vunpack.c.l.b16 %v5596
    %v5638 = vunpack.c.h.b16 %v5596
    %v5639 = vunpack.c.l.b16 %v5597
    %v5640 = vunpack.c.h.b16 %v5597
    %v5641 = vunpack.c.l.b16 %v5598
    %v5642 = vunpack.c.h.b16 %v5598
    %v5643 = vunpack.c.l.b16 %v5599
    %v5644 = vunpack.c.h.b16 %v5599
    %v5645 = vunpack.c.l.b16 %v5600
    %v5646 = vunpack.c.h.b16 %v5600
    %v5647 = vunpack.c.l.b16 %v5601
    %v5648 = vunpack.c.h.b16 %v5601
    %v5649 = vunpack.c.l.b16 %v5602
    %v5650 = vunpack.c.h.b16 %v5602
    %v5651 = vpack.c.b16 %v5621, %v5619
    %v5652 = vpack.c.b16 %v5622, %v5620
    %v5653 = vpack.c.b16 %v5625, %v5623
    %v5654 = vpack.c.b16 %v5626, %v5624
    %v5655 = vpack.c.b16 %v5629, %v5627
    %v5656 = vpack.c.b16 %v5630, %v5628
    %v5657 = vpack.c.b16 %v5633, %v5631
    %v5658 = vpack.c.b16 %v5634, %v5632
    %v5659 = vpack.c.b16 %v5637, %v5635
    %v5660 = vpack.c.b16 %v5638, %v5636
    %v5661 = vpack.c.b16 %v5641, %v5639
    %v5662 = vpack.c.b16 %v5642, %v5640
    %v5663 = vpack.c.b16 %v5645, %v5643
    %v5664 = vpack.c.b16 %v5646, %v5644
    %v5665 = vpack.c.b16 %v5649, %v5647
    %v5666 = vpack.c.b16 %v5650, %v5648
    %5683 = vmatprep.subr.bf16.mxu0 %v5666
    %5684 = vmatpush1.bf16.msra.mxu0 %v5665
    %5685 = vmatprep.subr.bf16.mxu0 %v5664
    %5686 = vmatpush1.bf16.msra.mxu0 %v5663
    %5687 = vmatprep.subr.bf16.mxu0 %v5662
    %5688 = vmatpush1.bf16.msra.mxu0 %v5661
    %5689 = vmatprep.subr.bf16.mxu0 %v5660
    %5690 = vmatpush1.bf16.msra.mxu0 %v5659
    %5691 = vmatprep.subr.bf16.mxu0 %v5658
    %5692 = vmatpush1.bf16.msra.mxu0 %v5657
    %5693 = vmatprep.subr.bf16.mxu0 %v5656
    %5694 = vmatpush1.bf16.msra.mxu0 %v5655
    %5695 = vmatprep.subr.bf16.mxu0 %v5654
    %5696 = vmatpush1.bf16.msra.mxu0 %v5653
    %5697 = vmatprep.subr.bf16.mxu0 %v5652
    %5698 = vmatpush1.bf16.msra.mxu0 %v5651
    %5699 = vmatprep.subr.bf16.mxu0 0
    %5700 = vmatpush2.bf16.msra.mxu0 0
    %5701 = vmatprep.subr.bf16.mxu0 0
    %5702 = vmatpush2.bf16.msra.mxu0 0
    %5703 = vmatprep.subr.bf16.mxu0 0
    %5704 = vmatpush2.bf16.msra.mxu0 0
    %5705 = vmatprep.subr.bf16.mxu0 0
    %5706 = vmatpush2.bf16.msra.mxu0 0
    %5707 = vmatprep.subr.bf16.mxu0 0
    %5708 = vmatpush2.bf16.msra.mxu0 0
    %5709 = vmatprep.subr.bf16.mxu0 0
    %5710 = vmatpush2.bf16.msra.mxu0 0
    %5711 = vmatprep.subr.bf16.mxu0 0
    %5712 = vmatpush2.bf16.msra.mxu0 0
    %5713 = vmatprep.subr.bf16.mxu0 0
    %5714 = vmatpush2.bf16.msra.mxu0 0
    %5715 = vmatprep.mubr.bf16.mxu0 0
    %5716 = vmatmul.mubr.bf16.gmra.mxu0 %v5586
    %v5717 = vpop.f32.mrf.mxu0
    %v5718 = vadd.f32 0.0, %v5717
    %v5719 = vpop.f32.mrf.mxu0
    %v5720 = vadd.f32 0.0, %v5719
    %v5721 = vpop.f32.mrf.mxu0
    %v5722 = vpop.f32.mrf.mxu0
    %5723 = vdwg.mxu0
    %5724 = vst [vmem:[#allocation16] sm:$0xff] %v5718
    %5725 = vst [vmem:[#allocation16 + $0x8] sm:$0xff] %v5720
    // Predicated region
    $region58: #{wider_block_8.1} parent=1 // pred_check
      _
    $region59: #{wider_block_8.1} parent=1 // pred_check_branch
      %5727 = sbr.rel (0) target = $region61
    $region60: #{wider_block_8.1} parent=1 // pred_region
      %s5729 = ssub.s32 256, 256
      %5730 = vsyncadd [#allocation9], %s5729
      %s5732 = sshll.u32 [#allocation16], 4
      %s5733 = int_to_ptr.vmem [resolvable:$true] %s5732
      %5735 = dma.vmem_to_hbm [thread:$0]  %s5733, 256, %s9, [#allocation9]
    $region61: #{wider_block_8.1} parent=1 // pred_fallthru
      _
    // Predicated region
    $region62: #{wider_block_8.1} parent=1 // pred_check
      _
    $region63: #{wider_block_8.1} parent=1 // pred_check_branch
      %5737 = sbr.rel (0) target = $region65
    $region64: #{wider_block_8.1} parent=1 // pred_region
      %5738 = dma.done [#allocation9], 256
    $region65: #{wider_block_8.1} parent=1 // pred_fallthru
      _
    %5739 = vsyncpa [#allocation8], 1
    %5740 = vsyncpa [#allocation11], 1
    %5741 = vsyncpa [#allocation14], 1
    %5742 = vsyncpa [#allocation9], 1
  %5743 = vsyncmov [#allocation6]
  %s5744 = vpop.sfrf %5743
  %p5745 = scmp.eq.s32.totalorder %s5744, 0
  %p5746 = pneg %p5745
  %5748 = shalt.err (%p5746)
  %s5749 = scalar_lea.sflag [#allocation6], 1
  %5750 = vsyncmov %s5749
  %s5751 = vpop.sfrf %5750
  %p5752 = scmp.eq.s32.totalorder %s5751, 0
  %p5753 = pneg %p5752
  %5755 = shalt.err (%p5753)
  %s5756 = scalar_lea.sflag [#allocation6], 2
  %5757 = vsyncmov %s5756
  %s5758 = vpop.sfrf %5757
  %p5759 = scmp.eq.s32.totalorder %s5758, 0
  %p5760 = pneg %p5759
  %5762 = shalt.err (%p5760)
  %s5763 = scalar_lea.sflag [#allocation6], 3
  %5764 = vsyncmov %s5763
  %s5765 = vpop.sfrf %5764
  %p5766 = scmp.eq.s32.totalorder %s5765, 0
  %p5767 = pneg %p5766
  %5769 = shalt.err (%p5767)

</llo_original>
